<compile_context>
chip_gen: v7x
topology: tpu7x:2x2x1
jax: 0.10.0
libtpu: 0.0.40
codegen_flags: <defaults>
</compile_context>

<pallas_src>
import functools

import jax
import jax.numpy as jnp
from jax import lax
from jax.experimental import pallas as pl
from jax.experimental.pallas import tpu as pltpu

# ----------------------------- config (small, deterministic) ----------------
EMBED_DIM = 32
IMAGE_RES = 16
VISION_LAYERS = 2          # int -> VisionTransformer branch of CLIP.__init__
VISION_WIDTH = 64
VISION_PATCH = 8
VISION_HEADS = max(VISION_WIDTH // 64, 1)   # = 1
CONTEXT_LEN = 8
VOCAB_SIZE = 100
TEXT_WIDTH = 64
TEXT_HEADS = 2
TEXT_LAYERS = 2

N_PATCHES = (IMAGE_RES // VISION_PATCH) ** 2      # 4
VIS_SEQ = N_PATCHES + 1                           # 5 (cls + patches)
VIS_SEQ_PAD = ((VIS_SEQ + 7) // 8) * 8            # 8 (sublane aligned)

NEG_BIG = -1e30                                   # finite "masked" value

_BLOCK_PARAM_NAMES = ["ln1_g", "ln1_b", "wq", "wk", "wv", "bq", "bk", "bv",
                      "wo", "bo", "ln2_g", "ln2_b", "wfc", "bfc", "wpr", "bpr"]


# ----------------------------- in-kernel helpers ----------------------------
def _ln(x, g, b):
    # LayerNorm in float32 (matches CLIP's fp16-safe LayerNorm), eps = 1e-5.
    mu = jnp.mean(x, axis=-1, keepdims=True)
    xc = x - mu
    var = jnp.mean(xc * xc, axis=-1, keepdims=True)
    return xc * lax.rsqrt(var + 1e-5) * g + b


def _block(x, mask, heads,
           ln1g, ln1b, wq, wk, wv, bq, bk, bv, wo, bo,
           ln2g, ln2b, wfc, bfc, wpr, bpr):
    """One ResidualAttentionBlock on a flat (N*S, D) activation.

    Attention is a flat 2D formulation: scores are (N*S, N*S) per head with a
    block-diagonal batch mask folded into `mask` (plus causal / key padding).
    Per-head weights are contiguous slabs (major-dim indexed), no lane slices.
    """
    Dh = wq.shape[-1]
    scale = Dh ** -0.5

    h = _ln(x, ln1g[0], ln1b[0])

    attn = None
    for hh in range(heads):                              # static, heads is tiny
        q = jnp.dot(h, wq[0, hh], preferred_element_type=jnp.float32) + bq[0, hh]
        k = jnp.dot(h, wk[0, hh], preferred_element_type=jnp.float32) + bk[0, hh]
        v = jnp.dot(h, wv[0, hh], preferred_element_type=jnp.float32) + bv[0, hh]
        # contract last dims directly (no materialized k transpose)
        s = lax.dot_general(q, k, (((1,), (1,)), ((), ())),
                            preferred_element_type=jnp.float32) * scale + mask
        s = s - jnp.max(s, axis=-1, keepdims=True)
        p = jnp.exp(s)
        p = p * pl.reciprocal(jnp.sum(p, axis=-1, keepdims=True), approx=True)
        o = jnp.dot(p, v, preferred_element_type=jnp.float32)          # (NS, Dh)
        contrib = jnp.dot(o, wo[0, hh], preferred_element_type=jnp.float32)
        attn = contrib if attn is None else attn + contrib
    x = x + attn + bo[0]

    # ---- MLP branch ----
    h2 = _ln(x, ln2g[0], ln2b[0])
    h2 = jnp.dot(h2, wfc[0], preferred_element_type=jnp.float32) + bfc[0]
    h2 = h2 * jax.nn.sigmoid(1.702 * h2)                               # QuickGELU
    h2 = jnp.dot(h2, wpr[0], preferred_element_type=jnp.float32) + bpr[0]
    return x + h2


# ----------------------------- vision tower (fully fused) --------------------
def _vision_kernel(heads,
                   patch_ref, pw_ref, pos_ref, g_pre, b_pre, mask_ref, sel_ref,
                   ln1g, ln1b, wq, wk, wv, bq, bk, bv, wo, bo,
                   ln2g, ln2b, wfc, bfc, wpr, bpr,
                   g_post, b_post, proj_ref,
                   feat_ref, x_scr):
    l = pl.program_id(0)

    # prologue: patch embed + class/pos embedding + ln_pre (layer 0 only)
    @pl.when(l == 0)
    def _():
        emb = jnp.dot(patch_ref[...], pw_ref[...],
                      preferred_element_type=jnp.float32) + pos_ref[...]
        x_scr[...] = _ln(emb, g_pre[...], b_pre[...])

    mask = mask_ref[...]
    x = _block(x_scr[...], mask, heads,
               ln1g, ln1b, wq, wk, wv, bq, bk, bv, wo, bo,
               ln2g, ln2b, wfc, bfc, wpr, bpr)
    x_scr[...] = x

    # epilogue: CLS select (one-hot matmul) + ln_post + proj + L2 normalize
    @pl.when(l == pl.num_programs(0) - 1)
    def _():
        cls = jnp.dot(sel_ref[...], x, preferred_element_type=jnp.float32)
        f = _ln(cls, g_post[...], b_post[...])
        f = jnp.dot(f, proj_ref[...], preferred_element_type=jnp.float32)
        f = f * lax.rsqrt(jnp.sum(f * f, axis=-1, keepdims=True))
        feat_ref[...] = f.astype(feat_ref.dtype)


# ----------------------------- text tower (fully fused, emits logits) --------
def _text_kernel(heads,
                 x0_ref, mask_ref, sel_ref,
                 ln1g, ln1b, wq, wk, wv, bq, bk, bv, wo, bo,
                 ln2g, ln2b, wfc, bfc, wpr, bpr,
                 g_fin, b_fin, tproj_ref, img_ref, scale_ref,
                 logit_ref, x_scr):
    l = pl.program_id(0)

    @pl.when(l == 0)
    def _():
        x_scr[...] = x0_ref[...]

    mask = mask_ref[...]
    x = _block(x_scr[...], mask, heads,
               ln1g, ln1b, wq, wk, wv, bq, bk, bv, wo, bo,
               ln2g, ln2b, wfc, bfc, wpr, bpr)
    x_scr[...] = x

    # epilogue: EOT select + ln_final + text proj + L2 normalize + logits
    @pl.when(l == pl.num_programs(0) - 1)
    def _():
        tok = jnp.dot(sel_ref[...], x, preferred_element_type=jnp.float32)
        f = _ln(tok, g_fin[...], b_fin[...])
        f = jnp.dot(f, tproj_ref[...], preferred_element_type=jnp.float32)
        f = f * lax.rsqrt(jnp.sum(f * f, axis=-1, keepdims=True))
        logits = lax.dot_general(img_ref[...], f, (((1,), (1,)), ((), ())),
                                 preferred_element_type=jnp.float32)
        logit_ref[...] = (scale_ref[...] * logits).astype(logit_ref.dtype)


# ----------------------------- BlockSpec helpers -----------------------------
def _fullspec(a):
    nd = a.ndim
    return pl.BlockSpec(a.shape, lambda l: (0,) * nd)


def _lspec(a):
    rest = a.shape[1:]
    nz = len(rest)
    return pl.BlockSpec((1,) + rest, lambda l: (l,) + (0,) * nz)


# ----------------------------- wrappers --------------------------------------
def vision_tower(patches, pos_tiled, mask, sel, vp):
    NS, _ = patches.shape
    D = VISION_WIDTH
    E = vp["proj"].shape[1]
    N = sel.shape[0]
    blocks = vp["blocks"]
    L = blocks["wq"].shape[0]
    block_params = [blocks[n] for n in _BLOCK_PARAM_NAMES]

    return pl.pallas_call(
        functools.partial(_vision_kernel, VISION_HEADS),
        out_shape=jax.ShapeDtypeStruct((N, E), jnp.float32),
        grid=(L,),
        in_specs=([_fullspec(patches), _fullspec(vp["conv1_w"]), _fullspec(pos_tiled),
                   _fullspec(vp["ln_pre_g"]), _fullspec(vp["ln_pre_b"]),
                   _fullspec(mask), _fullspec(sel)]
                  + [_lspec(p) for p in block_params]
                  + [_fullspec(vp["ln_post_g"]), _fullspec(vp["ln_post_b"]),
                     _fullspec(vp["proj"])]),
        out_specs=pl.BlockSpec((N, E), lambda l: (0, 0)),
        scratch_shapes=[pltpu.VMEM((NS, D), jnp.float32)],
        compiler_params=pltpu.CompilerParams(
            dimension_semantics=("arbitrary",)),     # sequential layer dependency
    )(patches, vp["conv1_w"], pos_tiled, vp["ln_pre_g"], vp["ln_pre_b"], mask, sel,
      *block_params, vp["ln_post_g"], vp["ln_post_b"], vp["proj"])


def text_tower(x0, mask, sel, tp, img_feat, scale2d):
    NS, D = x0.shape
    N_img = img_feat.shape[0]
    N_txt = sel.shape[0]
    blocks = tp["blocks"]
    L = blocks["wq"].shape[0]
    block_params = [blocks[n] for n in _BLOCK_PARAM_NAMES]

    return pl.pallas_call(
        functools.partial(_text_kernel, TEXT_HEADS),
        out_shape=jax.ShapeDtypeStruct((N_img, N_txt), jnp.float32),
        grid=(L,),
        in_specs=([_fullspec(x0), _fullspec(mask), _fullspec(sel)]
                  + [_lspec(p) for p in block_params]
                  + [_fullspec(tp["ln_final_g"]), _fullspec(tp["ln_final_b"]),
                     _fullspec(tp["text_projection"]), _fullspec(img_feat),
                     _fullspec(scale2d)]),
        out_specs=pl.BlockSpec((N_img, N_txt), lambda l: (0, 0)),
        scratch_shapes=[pltpu.VMEM((NS, D), jnp.float32)],
        compiler_params=pltpu.CompilerParams(
            dimension_semantics=("arbitrary",)),
    )(x0, mask, sel, *block_params, tp["ln_final_g"], tp["ln_final_b"],
      tp["text_projection"], img_feat, scale2d)


# ----------------------------- model glue ------------------------------------
def encode_image(image, vp):
    # image: [N, 3, H, W] float32  -> normalized image features [N, E]
    N, C, H, W = image.shape
    ps = VISION_PATCH
    gh, gw = H // ps, W // ps
    P = gh * gw
    Cp = C * ps * ps
    S = VIS_SEQ_PAD
    NS = N * S

    # patchify (stride==kernel conv == reshape + matmul); row 0 (cls slot) and
    # padded rows are zero -> the class embedding arrives via pos_plus row 0.
    patches = (image.reshape(N, C, gh, ps, gw, ps)
               .transpose(0, 2, 4, 1, 3, 5)
               .reshape(N, P, Cp))
    patches = jnp.pad(patches, ((0, 0), (1, S - 1 - P), (0, 0))).reshape(NS, Cp)

    pos_tiled = jnp.tile(vp["pos_plus"], (N, 1))                      # (NS, D)

    # flat block-diagonal mask: same batch AND key slot is a real token.
    batch = jnp.arange(NS) // S
    key_pos = jnp.arange(NS) % S
    mask = jnp.where((batch[:, None] == batch[None, :]) & (key_pos[None, :] < (P + 1)),
                     0.0, NEG_BIG).astype(jnp.float32)

    # CLS-row selection as a one-hot matmul (rows n*S).
    sel = jax.nn.one_hot(jnp.arange(N) * S, NS, dtype=jnp.float32)

    return vision_tower(patches, pos_tiled, mask, sel, vp)            # [N, E]


def encode_text_and_logits(text, tp, img_feat, logit_scale):
    # text: [N, L] int32 token ids; returns logits_per_image [N_img, N_txt]
    N, Lc = text.shape
    D = TEXT_WIDTH
    NS = N * Lc

    # TODO(synk): token-embedding gather stays in JAX glue (no tiny Pallas gather win).
    x0 = (tp["token_embedding"][text] + tp["positional_embedding"][None]
          ).astype(jnp.float32).reshape(NS, D)

    # flat block-diagonal causal mask.
    batch = jnp.arange(NS) // Lc
    pos = jnp.arange(NS) % Lc
    mask = jnp.where((batch[:, None] == batch[None, :]) & (pos[None, :] <= pos[:, None]),
                     0.0, NEG_BIG).astype(jnp.float32)

    # EOT-row selection as a one-hot matmul (rows n*Lc + argmax(text[n])).
    eot = jnp.argmax(text, axis=-1)
    sel = jax.nn.one_hot(jnp.arange(N) * Lc + eot, NS, dtype=jnp.float32)

    scale2d = jnp.exp(logit_scale).reshape(1, 1).astype(jnp.float32)
    return text_tower(x0, mask, sel, tp, img_feat, scale2d)


def clip_forward(image, text, params):
    img_feat = encode_image(image, params["visual"])
    logits_per_image = encode_text_and_logits(text, params["text"], img_feat,
                                              params["logit_scale"])
    return logits_per_image, logits_per_image.T


# ----------------------------- parameter init --------------------------------
def init_params(key):
    kit = iter(jax.random.split(key, 64))

    def nrm(shape, std):
        return std * jax.random.normal(next(kit), shape, jnp.float32)

    def init_block_stack(width, layers, heads):
        # Weights pre-transposed ([in, out]), stacked per layer, split per head.
        dh = width // heads
        attn_std = width ** -0.5
        proj_std = (width ** -0.5) * ((2 * layers) ** -0.5)
        fc_std = (2 * width) ** -0.5
        L = layers
        return dict(
            ln1_g=jnp.ones((L, 1, width), jnp.float32),
            ln1_b=jnp.zeros((L, 1, width), jnp.float32),
            wq=nrm((L, heads, width, dh), attn_std),
            wk=nrm((L, heads, width, dh), attn_std),
            wv=nrm((L, heads, width, dh), attn_std),
            bq=jnp.zeros((L, heads, 1, dh), jnp.float32),
            bk=jnp.zeros((L, heads, 1, dh), jnp.float32),
            bv=jnp.zeros((L, heads, 1, dh), jnp.float32),
            wo=nrm((L, heads, dh, width), proj_std),
            bo=jnp.zeros((L, 1, width), jnp.float32),
            ln2_g=jnp.ones((L, 1, width), jnp.float32),
            ln2_b=jnp.zeros((L, 1, width), jnp.float32),
            wfc=nrm((L, width, 4 * width), fc_std),
            bfc=jnp.zeros((L, 1, 4 * width), jnp.float32),
            wpr=nrm((L, 4 * width, width), proj_std),
            bpr=jnp.zeros((L, 1, width), jnp.float32),
        )

    scale_v = VISION_WIDTH ** -0.5
    Cp = 3 * VISION_PATCH * VISION_PATCH

    cls = nrm((VISION_WIDTH,), scale_v)
    pos = nrm((VIS_SEQ, VISION_WIDTH), scale_v)
    pos_plus = jnp.zeros((VIS_SEQ_PAD, VISION_WIDTH), jnp.float32)
    pos_plus = pos_plus.at[:VIS_SEQ].set(pos).at[0].add(cls)   # cls folded into row 0

    visual = dict(
        conv1_w=nrm((Cp, VISION_WIDTH), 0.02),                 # pre-flattened/transposed
        pos_plus=pos_plus,
        ln_pre_g=jnp.ones((1, VISION_WIDTH), jnp.float32),
        ln_pre_b=jnp.zeros((1, VISION_WIDTH), jnp.float32),
        blocks=init_block_stack(VISION_WIDTH, VISION_LAYERS, VISION_HEADS),
        ln_post_g=jnp.ones((1, VISION_WIDTH), jnp.float32),
        ln_post_b=jnp.zeros((1, VISION_WIDTH), jnp.float32),
        proj=nrm((VISION_WIDTH, EMBED_DIM), scale_v),
    )

    text = dict(
        token_embedding=nrm((VOCAB_SIZE, TEXT_WIDTH), 0.02),
        positional_embedding=nrm((CONTEXT_LEN, TEXT_WIDTH), 0.01),
        blocks=init_block_stack(TEXT_WIDTH, TEXT_LAYERS, TEXT_HEADS),
        ln_final_g=jnp.ones((1, TEXT_WIDTH), jnp.float32),
        ln_final_b=jnp.zeros((1, TEXT_WIDTH), jnp.float32),
        text_projection=nrm((TEXT_WIDTH, EMBED_DIM), TEXT_WIDTH ** -0.5),
    )

    return dict(
        visual=visual,
        text=text,
        logit_scale=jnp.asarray(jnp.log(1.0 / 0.07), jnp.float32),
    )


# ----------------------------- main ------------------------------------------
if __name__ == "__main__":
    key = jax.random.PRNGKey(0)
    kp, ki, kt = jax.random.split(key, 3)

    params = init_params(kp)
    image = jax.random.normal(ki, (2, 3, IMAGE_RES, IMAGE_RES), jnp.float32)
    text = jax.random.randint(kt, (2, CONTEXT_LEN), 0, VOCAB_SIZE, dtype=jnp.int32)

    fwd = jax.jit(clip_forward)
    logits_per_image, logits_per_text = fwd(image, text, params)
    jax.block_until_ready((logits_per_image, logits_per_text))

    assert logits_per_image.shape == (2, 2)
    assert logits_per_text.shape == (2, 2)
    assert bool(jnp.all(jnp.isfinite(logits_per_image)))
    print("KERNEL_OK")
</pallas_src>

<mosaic_0001>
module attributes {stable_mosaic.version = 11 : i64} {
  func.func @_vision_kernel(%arg0: i32, %arg1: memref<16x192xf32, #tpu.memory_space<vmem>>, %arg2: memref<192x64xf32, #tpu.memory_space<vmem>>, %arg3: memref<16x64xf32, #tpu.memory_space<vmem>>, %arg4: memref<1x64xf32, #tpu.memory_space<vmem>>, %arg5: memref<1x64xf32, #tpu.memory_space<vmem>>, %arg6: memref<16x16xf32, #tpu.memory_space<vmem>>, %arg7: memref<2x16xf32, #tpu.memory_space<vmem>>, %arg8: memref<1x1x64xf32, #tpu.memory_space<vmem>>, %arg9: memref<1x1x64xf32, #tpu.memory_space<vmem>>, %arg10: memref<1x1x64x64xf32, #tpu.memory_space<vmem>>, %arg11: memref<1x1x64x64xf32, #tpu.memory_space<vmem>>, %arg12: memref<1x1x64x64xf32, #tpu.memory_space<vmem>>, %arg13: memref<1x1x1x64xf32, #tpu.memory_space<vmem>>, %arg14: memref<1x1x1x64xf32, #tpu.memory_space<vmem>>, %arg15: memref<1x1x1x64xf32, #tpu.memory_space<vmem>>, %arg16: memref<1x1x64x64xf32, #tpu.memory_space<vmem>>, %arg17: memref<1x1x64xf32, #tpu.memory_space<vmem>>, %arg18: memref<1x1x64xf32, #tpu.memory_space<vmem>>, %arg19: memref<1x1x64xf32, #tpu.memory_space<vmem>>, %arg20: memref<1x64x256xf32, #tpu.memory_space<vmem>>, %arg21: memref<1x1x256xf32, #tpu.memory_space<vmem>>, %arg22: memref<1x256x64xf32, #tpu.memory_space<vmem>>, %arg23: memref<1x1x64xf32, #tpu.memory_space<vmem>>, %arg24: memref<1x64xf32, #tpu.memory_space<vmem>>, %arg25: memref<1x64xf32, #tpu.memory_space<vmem>>, %arg26: memref<64x32xf32, #tpu.memory_space<vmem>>, %arg27: memref<2x32xf32, #tpu.memory_space<vmem>>, %arg28: memref<16x64xf32, #tpu.memory_space<vmem>>) attributes {dimension_semantics = [#tpu.dimension_semantics<arbitrary>], iteration_bounds = array<i64: 2>, scalar_prefetch = 0 : i64, scratch_operands = 1 : i64, tpu.core_type = #tpu.core_type<tc>, window_params = [{pipeline_mode = #tpu.pipeline_mode<synchronous>, transform_indices = @transform_0, window_bounds = array<i64: 16, 192>}, {pipeline_mode = #tpu.pipeline_mode<synchronous>, transform_indices = @transform_1, window_bounds = array<i64: 192, 64>}, {pipeline_mode = #tpu.pipeline_mode<synchronous>, transform_indices = @transform_2, window_bounds = array<i64: 16, 64>}, {pipeline_mode = #tpu.pipeline_mode<synchronous>, transform_indices = @transform_3, window_bounds = array<i64: 1, 64>}, {pipeline_mode = #tpu.pipeline_mode<synchronous>, transform_indices = @transform_4, window_bounds = array<i64: 1, 64>}, {pipeline_mode = #tpu.pipeline_mode<synchronous>, transform_indices = @transform_5, window_bounds = array<i64: 16, 16>}, {pipeline_mode = #tpu.pipeline_mode<synchronous>, transform_indices = @transform_6, window_bounds = array<i64: 2, 16>}, {transform_indices = @transform_7, window_bounds = array<i64: 1, 1, 64>}, {transform_indices = @transform_8, window_bounds = array<i64: 1, 1, 64>}, {transform_indices = @transform_9, window_bounds = array<i64: 1, 1, 64, 64>}, {transform_indices = @transform_10, window_bounds = array<i64: 1, 1, 64, 64>}, {transform_indices = @transform_11, window_bounds = array<i64: 1, 1, 64, 64>}, {transform_indices = @transform_12, window_bounds = array<i64: 1, 1, 1, 64>}, {transform_indices = @transform_13, window_bounds = array<i64: 1, 1, 1, 64>}, {transform_indices = @transform_14, window_bounds = array<i64: 1, 1, 1, 64>}, {transform_indices = @transform_15, window_bounds = array<i64: 1, 1, 64, 64>}, {transform_indices = @transform_16, window_bounds = array<i64: 1, 1, 64>}, {transform_indices = @transform_17, window_bounds = array<i64: 1, 1, 64>}, {transform_indices = @transform_18, window_bounds = array<i64: 1, 1, 64>}, {transform_indices = @transform_19, window_bounds = array<i64: 1, 64, 256>}, {transform_indices = @transform_20, window_bounds = array<i64: 1, 1, 256>}, {transform_indices = @transform_21, window_bounds = array<i64: 1, 256, 64>}, {transform_indices = @transform_22, window_bounds = array<i64: 1, 1, 64>}, {pipeline_mode = #tpu.pipeline_mode<synchronous>, transform_indices = @transform_23, window_bounds = array<i64: 1, 64>}, {pipeline_mode = #tpu.pipeline_mode<synchronous>, transform_indices = @transform_24, window_bounds = array<i64: 1, 64>}, {pipeline_mode = #tpu.pipeline_mode<synchronous>, transform_indices = @transform_25, window_bounds = array<i64: 64, 32>}, {pipeline_mode = #tpu.pipeline_mode<synchronous>, transform_indices = @transform_26, window_bounds = array<i64: 2, 32>}]} {
    %c0_i32 = arith.constant 0 : i32
    %0 = arith.cmpi eq, %arg0, %c0_i32 : i32
    %1 = arith.extui %0 : i1 to i32
    %c0_i32_0 = arith.constant 0 : i32
    %2 = arith.cmpi ne, %1, %c0_i32_0 : i32
    scf.if %2 {
      %c0_84 = arith.constant 0 : index
      %c0_85 = arith.constant 0 : index
      %124 = vector.load %arg1[%c0_84, %c0_85] : memref<16x192xf32, #tpu.memory_space<vmem>>, vector<16x192xf32>
      %c0_86 = arith.constant 0 : index
      %c0_87 = arith.constant 0 : index
      %125 = vector.load %arg2[%c0_86, %c0_87] : memref<192x64xf32, #tpu.memory_space<vmem>>, vector<192x64xf32>
      %cst_88 = arith.constant dense<0.000000e+00> : vector<16x64xf32>
      %126 = tpu.matmul %124, %125, %cst_88 {dimension_numbers = #tpu.dot_dimension_numbers<[1], [0], [0], [1], [0, 0, 1, 1], [], []>} : vector<16x192xf32>, vector<192x64xf32>, vector<16x64xf32> -> vector<16x64xf32>
      %c0_89 = arith.constant 0 : index
      %c0_90 = arith.constant 0 : index
      %127 = vector.load %arg3[%c0_89, %c0_90] : memref<16x64xf32, #tpu.memory_space<vmem>>, vector<16x64xf32>
      %128 = arith.addf %126, %127 : vector<16x64xf32>
      %c0_91 = arith.constant 0 : index
      %c0_92 = arith.constant 0 : index
      %129 = vector.load %arg4[%c0_91, %c0_92] : memref<1x64xf32, #tpu.memory_space<vmem>>, vector<1x64xf32>
      %c0_93 = arith.constant 0 : index
      %c0_94 = arith.constant 0 : index
      %130 = vector.load %arg5[%c0_93, %c0_94] : memref<1x64xf32, #tpu.memory_space<vmem>>, vector<1x64xf32>
      %cst_95 = arith.constant dense<0.000000e+00> : vector<16xf32>
      %131 = vector.multi_reduction <add>, %128, %cst_95 [1] : vector<16x64xf32> to vector<16xf32>
      %132 = vector.shape_cast %131 : vector<16xf32> to vector<16x1xf32>
      %cst_96 = arith.constant 6.400000e+01 : f32
      %133 = vector.broadcast %cst_96 : f32 to vector<16x1xf32>
      %134 = arith.divf %132, %133 : vector<16x1xf32>
      %135 = vector.broadcast %134 : vector<16x1xf32> to vector<16x64xf32>
      %136 = arith.subf %128, %135 : vector<16x64xf32>
      %137 = arith.mulf %136, %136 : vector<16x64xf32>
      %cst_97 = arith.constant dense<0.000000e+00> : vector<16xf32>
      %138 = vector.multi_reduction <add>, %137, %cst_97 [1] : vector<16x64xf32> to vector<16xf32>
      %139 = vector.shape_cast %138 : vector<16xf32> to vector<16x1xf32>
      %cst_98 = arith.constant 6.400000e+01 : f32
      %140 = vector.broadcast %cst_98 : f32 to vector<16x1xf32>
      %141 = arith.divf %139, %140 : vector<16x1xf32>
      %cst_99 = arith.constant 9.99999974E-6 : f32
      %142 = vector.broadcast %cst_99 : f32 to vector<16x1xf32>
      %143 = arith.addf %141, %142 : vector<16x1xf32>
      %144 = math.rsqrt %143 : vector<16x1xf32>
      %145 = vector.broadcast %144 : vector<16x1xf32> to vector<16x64xf32>
      %146 = arith.mulf %136, %145 : vector<16x64xf32>
      %147 = vector.broadcast %129 : vector<1x64xf32> to vector<16x64xf32>
      %148 = arith.mulf %146, %147 : vector<16x64xf32>
      %149 = vector.broadcast %130 : vector<1x64xf32> to vector<16x64xf32>
      %150 = arith.addf %148, %149 : vector<16x64xf32>
      %c0_100 = arith.constant 0 : index
      %c0_101 = arith.constant 0 : index
      %151 = vector.load %arg28[%c0_100, %c0_101] : memref<16x64xf32, #tpu.memory_space<vmem>>, vector<16x64xf32>
      tpu.vector_store %arg28[%c0_100, %c0_101], %150 {strides = array<i32>} : memref<16x64xf32, #tpu.memory_space<vmem>>, vector<16x64xf32>,
    } else {
    }
    %c0 = arith.constant 0 : index
    %c0_1 = arith.constant 0 : index
    %3 = vector.load %arg6[%c0, %c0_1] : memref<16x16xf32, #tpu.memory_space<vmem>>, vector<16x16xf32>
    %c0_2 = arith.constant 0 : index
    %c0_3 = arith.constant 0 : index
    %4 = vector.load %arg28[%c0_2, %c0_3] : memref<16x64xf32, #tpu.memory_space<vmem>>, vector<16x64xf32>
    %c0_4 = arith.constant 0 : index
    %c0_5 = arith.constant 0 : index
    %c0_6 = arith.constant 0 : index
    %5 = vector.load %arg8[%c0_4, %c0_5, %c0_6] : memref<1x1x64xf32, #tpu.memory_space<vmem>>, vector<1x1x64xf32>
    %6 = vector.shape_cast %5 : vector<1x1x64xf32> to vector<1x64xf32>
    %c0_7 = arith.constant 0 : index
    %c0_8 = arith.constant 0 : index
    %c0_9 = arith.constant 0 : index
    %7 = vector.load %arg9[%c0_7, %c0_8, %c0_9] : memref<1x1x64xf32, #tpu.memory_space<vmem>>, vector<1x1x64xf32>
    %8 = vector.shape_cast %7 : vector<1x1x64xf32> to vector<1x64xf32>
    %cst = arith.constant dense<0.000000e+00> : vector<16xf32>
    %9 = vector.multi_reduction <add>, %4, %cst [1] : vector<16x64xf32> to vector<16xf32>
    %10 = vector.shape_cast %9 : vector<16xf32> to vector<16x1xf32>
    %cst_10 = arith.constant 6.400000e+01 : f32
    %11 = vector.broadcast %cst_10 : f32 to vector<16x1xf32>
    %12 = arith.divf %10, %11 : vector<16x1xf32>
    %13 = vector.broadcast %12 : vector<16x1xf32> to vector<16x64xf32>
    %14 = arith.subf %4, %13 : vector<16x64xf32>
    %15 = arith.mulf %14, %14 : vector<16x64xf32>
    %cst_11 = arith.constant dense<0.000000e+00> : vector<16xf32>
    %16 = vector.multi_reduction <add>, %15, %cst_11 [1] : vector<16x64xf32> to vector<16xf32>
    %17 = vector.shape_cast %16 : vector<16xf32> to vector<16x1xf32>
    %cst_12 = arith.constant 6.400000e+01 : f32
    %18 = vector.broadcast %cst_12 : f32 to vector<16x1xf32>
    %19 = arith.divf %17, %18 : vector<16x1xf32>
    %cst_13 = arith.constant 9.99999974E-6 : f32
    %20 = vector.broadcast %cst_13 : f32 to vector<16x1xf32>
    %21 = arith.addf %19, %20 : vector<16x1xf32>
    %22 = math.rsqrt %21 : vector<16x1xf32>
    %23 = vector.broadcast %22 : vector<16x1xf32> to vector<16x64xf32>
    %24 = arith.mulf %14, %23 : vector<16x64xf32>
    %25 = vector.broadcast %6 : vector<1x64xf32> to vector<16x64xf32>
    %26 = arith.mulf %24, %25 : vector<16x64xf32>
    %27 = vector.broadcast %8 : vector<1x64xf32> to vector<16x64xf32>
    %28 = arith.addf %26, %27 : vector<16x64xf32>
    %c0_14 = arith.constant 0 : index
    %c0_15 = arith.constant 0 : index
    %c0_16 = arith.constant 0 : index
    %c0_17 = arith.constant 0 : index
    %29 = vector.load %arg10[%c0_14, %c0_15, %c0_16, %c0_17] : memref<1x1x64x64xf32, #tpu.memory_space<vmem>>, vector<1x1x64x64xf32>
    %30 = vector.shape_cast %29 : vector<1x1x64x64xf32> to vector<64x64xf32>
    %cst_18 = arith.constant dense<0.000000e+00> : vector<16x64xf32>
    %31 = tpu.matmul %28, %30, %cst_18 {dimension_numbers = #tpu.dot_dimension_numbers<[1], [0], [0], [1], [0, 0, 1, 1], [], []>} : vector<16x64xf32>, vector<64x64xf32>, vector<16x64xf32> -> vector<16x64xf32>
    %c0_19 = arith.constant 0 : index
    %c0_20 = arith.constant 0 : index
    %c0_21 = arith.constant 0 : index
    %c0_22 = arith.constant 0 : index
    %32 = vector.load %arg13[%c0_19, %c0_20, %c0_21, %c0_22] : memref<1x1x1x64xf32, #tpu.memory_space<vmem>>, vector<1x1x1x64xf32>
    %33 = vector.shape_cast %32 : vector<1x1x1x64xf32> to vector<1x64xf32>
    %34 = vector.broadcast %33 : vector<1x64xf32> to vector<16x64xf32>
    %35 = arith.addf %31, %34 : vector<16x64xf32>
    %c0_23 = arith.constant 0 : index
    %c0_24 = arith.constant 0 : index
    %c0_25 = arith.constant 0 : index
    %c0_26 = arith.constant 0 : index
    %36 = vector.load %arg11[%c0_23, %c0_24, %c0_25, %c0_26] : memref<1x1x64x64xf32, #tpu.memory_space<vmem>>, vector<1x1x64x64xf32>
    %37 = vector.shape_cast %36 : vector<1x1x64x64xf32> to vector<64x64xf32>
    %cst_27 = arith.constant dense<0.000000e+00> : vector<16x64xf32>
    %38 = tpu.matmul %28, %37, %cst_27 {dimension_numbers = #tpu.dot_dimension_numbers<[1], [0], [0], [1], [0, 0, 1, 1], [], []>} : vector<16x64xf32>, vector<64x64xf32>, vector<16x64xf32> -> vector<16x64xf32>
    %c0_28 = arith.constant 0 : index
    %c0_29 = arith.constant 0 : index
    %c0_30 = arith.constant 0 : index
    %c0_31 = arith.constant 0 : index
    %39 = vector.load %arg14[%c0_28, %c0_29, %c0_30, %c0_31] : memref<1x1x1x64xf32, #tpu.memory_space<vmem>>, vector<1x1x1x64xf32>
    %40 = vector.shape_cast %39 : vector<1x1x1x64xf32> to vector<1x64xf32>
    %41 = vector.broadcast %40 : vector<1x64xf32> to vector<16x64xf32>
    %42 = arith.addf %38, %41 : vector<16x64xf32>
    %c0_32 = arith.constant 0 : index
    %c0_33 = arith.constant 0 : index
    %c0_34 = arith.constant 0 : index
    %c0_35 = arith.constant 0 : index
    %43 = vector.load %arg12[%c0_32, %c0_33, %c0_34, %c0_35] : memref<1x1x64x64xf32, #tpu.memory_space<vmem>>, vector<1x1x64x64xf32>
    %44 = vector.shape_cast %43 : vector<1x1x64x64xf32> to vector<64x64xf32>
    %cst_36 = arith.constant dense<0.000000e+00> : vector<16x64xf32>
    %45 = tpu.matmul %28, %44, %cst_36 {dimension_numbers = #tpu.dot_dimension_numbers<[1], [0], [0], [1], [0, 0, 1, 1], [], []>} : vector<16x64xf32>, vector<64x64xf32>, vector<16x64xf32> -> vector<16x64xf32>
    %c0_37 = arith.constant 0 : index
    %c0_38 = arith.constant 0 : index
    %c0_39 = arith.constant 0 : index
    %c0_40 = arith.constant 0 : index
    %46 = vector.load %arg15[%c0_37, %c0_38, %c0_39, %c0_40] : memref<1x1x1x64xf32, #tpu.memory_space<vmem>>, vector<1x1x1x64xf32>
    %47 = vector.shape_cast %46 : vector<1x1x1x64xf32> to vector<1x64xf32>
    %48 = vector.broadcast %47 : vector<1x64xf32> to vector<16x64xf32>
    %49 = arith.addf %45, %48 : vector<16x64xf32>
    %cst_41 = arith.constant dense<0.000000e+00> : vector<16x16xf32>
    %50 = tpu.matmul %35, %42, %cst_41 {dimension_numbers = #tpu.dot_dimension_numbers<[1], [1], [0], [0], [0, 0, 1, 0], [], []>} : vector<16x64xf32>, vector<16x64xf32>, vector<16x16xf32> -> vector<16x16xf32>
    %cst_42 = arith.constant 1.250000e-01 : f32
    %51 = vector.broadcast %cst_42 : f32 to vector<16x16xf32>
    %52 = arith.mulf %50, %51 : vector<16x16xf32>
    %53 = arith.addf %52, %3 : vector<16x16xf32>
    %cst_43 = arith.constant dense<0xFF800000> : vector<16xf32>
    %54 = vector.multi_reduction <maximumf>, %53, %cst_43 [1] : vector<16x16xf32> to vector<16xf32>
    %55 = vector.shape_cast %54 : vector<16xf32> to vector<16x1xf32>
    %56 = vector.broadcast %55 : vector<16x1xf32> to vector<16x16xf32>
    %57 = arith.subf %53, %56 : vector<16x16xf32>
    %58 = math.exp %57 : vector<16x16xf32>
    %cst_44 = arith.constant dense<0.000000e+00> : vector<16xf32>
    %59 = vector.multi_reduction <add>, %58, %cst_44 [1] : vector<16x16xf32> to vector<16xf32>
    %60 = vector.shape_cast %59 : vector<16xf32> to vector<16x1xf32>
    %61 = tpu.reciprocal %60 {approx = true} : vector<16x1xf32> -> vector<16x1xf32>
    %62 = vector.broadcast %61 : vector<16x1xf32> to vector<16x16xf32>
    %63 = arith.mulf %58, %62 : vector<16x16xf32>
    %cst_45 = arith.constant dense<0.000000e+00> : vector<16x64xf32>
    %64 = tpu.matmul %63, %49, %cst_45 {dimension_numbers = #tpu.dot_dimension_numbers<[1], [0], [0], [1], [0, 0, 1, 1], [], []>} : vector<16x16xf32>, vector<16x64xf32>, vector<16x64xf32> -> vector<16x64xf32>
    %c0_46 = arith.constant 0 : index
    %c0_47 = arith.constant 0 : index
    %c0_48 = arith.constant 0 : index
    %c0_49 = arith.constant 0 : index
    %65 = vector.load %arg16[%c0_46, %c0_47, %c0_48, %c0_49] : memref<1x1x64x64xf32, #tpu.memory_space<vmem>>, vector<1x1x64x64xf32>
    %66 = vector.shape_cast %65 : vector<1x1x64x64xf32> to vector<64x64xf32>
    %cst_50 = arith.constant dense<0.000000e+00> : vector<16x64xf32>
    %67 = tpu.matmul %64, %66, %cst_50 {dimension_numbers = #tpu.dot_dimension_numbers<[1], [0], [0], [1], [0, 0, 1, 1], [], []>} : vector<16x64xf32>, vector<64x64xf32>, vector<16x64xf32> -> vector<16x64xf32>
    %68 = arith.addf %4, %67 : vector<16x64xf32>
    %c0_51 = arith.constant 0 : index
    %c0_52 = arith.constant 0 : index
    %c0_53 = arith.constant 0 : index
    %69 = vector.load %arg17[%c0_51, %c0_52, %c0_53] : memref<1x1x64xf32, #tpu.memory_space<vmem>>, vector<1x1x64xf32>
    %70 = vector.shape_cast %69 : vector<1x1x64xf32> to vector<1x64xf32>
    %71 = vector.broadcast %70 : vector<1x64xf32> to vector<16x64xf32>
    %72 = arith.addf %68, %71 : vector<16x64xf32>
    %c0_54 = arith.constant 0 : index
    %c0_55 = arith.constant 0 : index
    %c0_56 = arith.constant 0 : index
    %73 = vector.load %arg18[%c0_54, %c0_55, %c0_56] : memref<1x1x64xf32, #tpu.memory_space<vmem>>, vector<1x1x64xf32>
    %74 = vector.shape_cast %73 : vector<1x1x64xf32> to vector<1x64xf32>
    %c0_57 = arith.constant 0 : index
    %c0_58 = arith.constant 0 : index
    %c0_59 = arith.constant 0 : index
    %75 = vector.load %arg19[%c0_57, %c0_58, %c0_59] : memref<1x1x64xf32, #tpu.memory_space<vmem>>, vector<1x1x64xf32>
    %76 = vector.shape_cast %75 : vector<1x1x64xf32> to vector<1x64xf32>
    %cst_60 = arith.constant dense<0.000000e+00> : vector<16xf32>
    %77 = vector.multi_reduction <add>, %72, %cst_60 [1] : vector<16x64xf32> to vector<16xf32>
    %78 = vector.shape_cast %77 : vector<16xf32> to vector<16x1xf32>
    %cst_61 = arith.constant 6.400000e+01 : f32
    %79 = vector.broadcast %cst_61 : f32 to vector<16x1xf32>
    %80 = arith.divf %78, %79 : vector<16x1xf32>
    %81 = vector.broadcast %80 : vector<16x1xf32> to vector<16x64xf32>
    %82 = arith.subf %72, %81 : vector<16x64xf32>
    %83 = arith.mulf %82, %82 : vector<16x64xf32>
    %cst_62 = arith.constant dense<0.000000e+00> : vector<16xf32>
    %84 = vector.multi_reduction <add>, %83, %cst_62 [1] : vector<16x64xf32> to vector<16xf32>
    %85 = vector.shape_cast %84 : vector<16xf32> to vector<16x1xf32>
    %cst_63 = arith.constant 6.400000e+01 : f32
    %86 = vector.broadcast %cst_63 : f32 to vector<16x1xf32>
    %87 = arith.divf %85, %86 : vector<16x1xf32>
    %cst_64 = arith.constant 9.99999974E-6 : f32
    %88 = vector.broadcast %cst_64 : f32 to vector<16x1xf32>
    %89 = arith.addf %87, %88 : vector<16x1xf32>
    %90 = math.rsqrt %89 : vector<16x1xf32>
    %91 = vector.broadcast %90 : vector<16x1xf32> to vector<16x64xf32>
    %92 = arith.mulf %82, %91 : vector<16x64xf32>
    %93 = vector.broadcast %74 : vector<1x64xf32> to vector<16x64xf32>
    %94 = arith.mulf %92, %93 : vector<16x64xf32>
    %95 = vector.broadcast %76 : vector<1x64xf32> to vector<16x64xf32>
    %96 = arith.addf %94, %95 : vector<16x64xf32>
    %c0_65 = arith.constant 0 : index
    %c0_66 = arith.constant 0 : index
    %c0_67 = arith.constant 0 : index
    %97 = vector.load %arg20[%c0_65, %c0_66, %c0_67] : memref<1x64x256xf32, #tpu.memory_space<vmem>>, vector<1x64x256xf32>
    %98 = vector.shape_cast %97 : vector<1x64x256xf32> to vector<64x256xf32>
    %cst_68 = arith.constant dense<0.000000e+00> : vector<16x256xf32>
    %99 = tpu.matmul %96, %98, %cst_68 {dimension_numbers = #tpu.dot_dimension_numbers<[1], [0], [0], [1], [0, 0, 1, 1], [], []>} : vector<16x64xf32>, vector<64x256xf32>, vector<16x256xf32> -> vector<16x256xf32>
    %c0_69 = arith.constant 0 : index
    %c0_70 = arith.constant 0 : index
    %c0_71 = arith.constant 0 : index
    %100 = vector.load %arg21[%c0_69, %c0_70, %c0_71] : memref<1x1x256xf32, #tpu.memory_space<vmem>>, vector<1x1x256xf32>
    %101 = vector.shape_cast %100 : vector<1x1x256xf32> to vector<1x256xf32>
    %102 = vector.broadcast %101 : vector<1x256xf32> to vector<16x256xf32>
    %103 = arith.addf %99, %102 : vector<16x256xf32>
    %cst_72 = arith.constant 1.702000e+00 : f32
    %104 = vector.broadcast %cst_72 : f32 to vector<16x256xf32>
    %105 = arith.mulf %104, %103 : vector<16x256xf32>
    %106 = arith.negf %105 : vector<16x256xf32>
    %107 = math.exp %106 : vector<16x256xf32>
    %cst_73 = arith.constant 1.000000e+00 : f32
    %108 = vector.broadcast %cst_73 : f32 to vector<16x256xf32>
    %109 = arith.addf %108, %107 : vector<16x256xf32>
    %110 = arith.divf %108, %109 : vector<16x256xf32>
    %111 = arith.mulf %103, %110 : vector<16x256xf32>
    %c0_74 = arith.constant 0 : index
    %c0_75 = arith.constant 0 : index
    %c0_76 = arith.constant 0 : index
    %112 = vector.load %arg22[%c0_74, %c0_75, %c0_76] : memref<1x256x64xf32, #tpu.memory_space<vmem>>, vector<1x256x64xf32>
    %113 = vector.shape_cast %112 : vector<1x256x64xf32> to vector<256x64xf32>
    %cst_77 = arith.constant dense<0.000000e+00> : vector<16x64xf32>
    %114 = tpu.matmul %111, %113, %cst_77 {dimension_numbers = #tpu.dot_dimension_numbers<[1], [0], [0], [1], [0, 0, 1, 1], [], []>} : vector<16x256xf32>, vector<256x64xf32>, vector<16x64xf32> -> vector<16x64xf32>
    %c0_78 = arith.constant 0 : index
    %c0_79 = arith.constant 0 : index
    %c0_80 = arith.constant 0 : index
    %115 = vector.load %arg23[%c0_78, %c0_79, %c0_80] : memref<1x1x64xf32, #tpu.memory_space<vmem>>, vector<1x1x64xf32>
    %116 = vector.shape_cast %115 : vector<1x1x64xf32> to vector<1x64xf32>
    %117 = vector.broadcast %116 : vector<1x64xf32> to vector<16x64xf32>
    %118 = arith.addf %114, %117 : vector<16x64xf32>
    %119 = arith.addf %72, %118 : vector<16x64xf32>
    %c0_81 = arith.constant 0 : index
    %c0_82 = arith.constant 0 : index
    %120 = vector.load %arg28[%c0_81, %c0_82] : memref<16x64xf32, #tpu.memory_space<vmem>>, vector<16x64xf32>
    tpu.vector_store %arg28[%c0_81, %c0_82], %119 {strides = array<i32>} : memref<16x64xf32, #tpu.memory_space<vmem>>, vector<16x64xf32>,
    %c1_i32 = arith.constant 1 : i32
    %121 = arith.cmpi eq, %arg0, %c1_i32 : i32
    %122 = arith.extui %121 : i1 to i32
    %c0_i32_83 = arith.constant 0 : i32
    %123 = arith.cmpi ne, %122, %c0_i32_83 : i32
    scf.if %123 {
      %c0_84 = arith.constant 0 : index
      %c0_85 = arith.constant 0 : index
      %124 = vector.load %arg7[%c0_84, %c0_85] : memref<2x16xf32, #tpu.memory_space<vmem>>, vector<2x16xf32>
      %cst_86 = arith.constant dense<0.000000e+00> : vector<2x64xf32>
      %125 = tpu.matmul %124, %119, %cst_86 {dimension_numbers = #tpu.dot_dimension_numbers<[1], [0], [0], [1], [0, 0, 1, 1], [], []>} : vector<2x16xf32>, vector<16x64xf32>, vector<2x64xf32> -> vector<2x64xf32>
      %c0_87 = arith.constant 0 : index
      %c0_88 = arith.constant 0 : index
      %126 = vector.load %arg24[%c0_87, %c0_88] : memref<1x64xf32, #tpu.memory_space<vmem>>, vector<1x64xf32>
      %c0_89 = arith.constant 0 : index
      %c0_90 = arith.constant 0 : index
      %127 = vector.load %arg25[%c0_89, %c0_90] : memref<1x64xf32, #tpu.memory_space<vmem>>, vector<1x64xf32>
      %cst_91 = arith.constant dense<0.000000e+00> : vector<2xf32>
      %128 = vector.multi_reduction <add>, %125, %cst_91 [1] : vector<2x64xf32> to vector<2xf32>
      %129 = vector.shape_cast %128 : vector<2xf32> to vector<2x1xf32>
      %cst_92 = arith.constant 6.400000e+01 : f32
      %130 = vector.broadcast %cst_92 : f32 to vector<2x1xf32>
      %131 = arith.divf %129, %130 : vector<2x1xf32>
      %132 = vector.broadcast %131 : vector<2x1xf32> to vector<2x64xf32>
      %133 = arith.subf %125, %132 : vector<2x64xf32>
      %134 = arith.mulf %133, %133 : vector<2x64xf32>
      %cst_93 = arith.constant dense<0.000000e+00> : vector<2xf32>
      %135 = vector.multi_reduction <add>, %134, %cst_93 [1] : vector<2x64xf32> to vector<2xf32>
      %136 = vector.shape_cast %135 : vector<2xf32> to vector<2x1xf32>
      %cst_94 = arith.constant 6.400000e+01 : f32
      %137 = vector.broadcast %cst_94 : f32 to vector<2x1xf32>
      %138 = arith.divf %136, %137 : vector<2x1xf32>
      %cst_95 = arith.constant 9.99999974E-6 : f32
      %139 = vector.broadcast %cst_95 : f32 to vector<2x1xf32>
      %140 = arith.addf %138, %139 : vector<2x1xf32>
      %141 = math.rsqrt %140 : vector<2x1xf32>
      %142 = vector.broadcast %141 : vector<2x1xf32> to vector<2x64xf32>
      %143 = arith.mulf %133, %142 : vector<2x64xf32>
      %144 = vector.broadcast %126 : vector<1x64xf32> to vector<2x64xf32>
      %145 = arith.mulf %143, %144 : vector<2x64xf32>
      %146 = vector.broadcast %127 : vector<1x64xf32> to vector<2x64xf32>
      %147 = arith.addf %145, %146 : vector<2x64xf32>
      %c0_96 = arith.constant 0 : index
      %c0_97 = arith.constant 0 : index
      %148 = vector.load %arg26[%c0_96, %c0_97] : memref<64x32xf32, #tpu.memory_space<vmem>>, vector<64x32xf32>
      %cst_98 = arith.constant dense<0.000000e+00> : vector<2x32xf32>
      %149 = tpu.matmul %147, %148, %cst_98 {dimension_numbers = #tpu.dot_dimension_numbers<[1], [0], [0], [1], [0, 0, 1, 1], [], []>} : vector<2x64xf32>, vector<64x32xf32>, vector<2x32xf32> -> vector<2x32xf32>
      %150 = arith.mulf %149, %149 : vector<2x32xf32>
      %cst_99 = arith.constant dense<0.000000e+00> : vector<2xf32>
      %151 = vector.multi_reduction <add>, %150, %cst_99 [1] : vector<2x32xf32> to vector<2xf32>
      %152 = vector.shape_cast %151 : vector<2xf32> to vector<2x1xf32>
      %153 = math.rsqrt %152 : vector<2x1xf32>
      %154 = vector.broadcast %153 : vector<2x1xf32> to vector<2x32xf32>
      %155 = arith.mulf %149, %154 : vector<2x32xf32>
      %c0_100 = arith.constant 0 : index
      %c0_101 = arith.constant 0 : index
      %156 = vector.load %arg27[%c0_100, %c0_101] : memref<2x32xf32, #tpu.memory_space<vmem>>, vector<2x32xf32>
      tpu.vector_store %arg27[%c0_100, %c0_101], %155 {strides = array<i32>} : memref<2x32xf32, #tpu.memory_space<vmem>>, vector<2x32xf32>,
    } else {
    }
    return
  }
  func.func @transform_0(%arg0: i32) -> (i32, i32) {
    %c0_i32 = arith.constant 0 : i32
    %c0_i32_0 = arith.constant 0 : i32
    %c0_i32_1 = arith.constant 0 : i32
    return %c0_i32, %c0_i32_0 : i32, i32
  }
  func.func @transform_1(%arg0: i32) -> (i32, i32) {
    %c0_i32 = arith.constant 0 : i32
    %c0_i32_0 = arith.constant 0 : i32
    %c0_i32_1 = arith.constant 0 : i32
    return %c0_i32, %c0_i32_0 : i32, i32
  }
  func.func @transform_2(%arg0: i32) -> (i32, i32) {
    %c0_i32 = arith.constant 0 : i32
    %c0_i32_0 = arith.constant 0 : i32
    %c0_i32_1 = arith.constant 0 : i32
    return %c0_i32, %c0_i32_0 : i32, i32
  }
  func.func @transform_3(%arg0: i32) -> (i32, i32) {
    %c0_i32 = arith.constant 0 : i32
    %c0_i32_0 = arith.constant 0 : i32
    %c0_i32_1 = arith.constant 0 : i32
    return %c0_i32, %c0_i32_0 : i32, i32
  }
  func.func @transform_4(%arg0: i32) -> (i32, i32) {
    %c0_i32 = arith.constant 0 : i32
    %c0_i32_0 = arith.constant 0 : i32
    %c0_i32_1 = arith.constant 0 : i32
    return %c0_i32, %c0_i32_0 : i32, i32
  }
  func.func @transform_5(%arg0: i32) -> (i32, i32) {
    %c0_i32 = arith.constant 0 : i32
    %c0_i32_0 = arith.constant 0 : i32
    %c0_i32_1 = arith.constant 0 : i32
    return %c0_i32, %c0_i32_0 : i32, i32
  }
  func.func @transform_6(%arg0: i32) -> (i32, i32) {
    %c0_i32 = arith.constant 0 : i32
    %c0_i32_0 = arith.constant 0 : i32
    %c0_i32_1 = arith.constant 0 : i32
    return %c0_i32, %c0_i32_0 : i32, i32
  }
  func.func @transform_7(%arg0: i32) -> (i32, i32, i32) {
    %c0_i32 = arith.constant 0 : i32
    %c0_i32_0 = arith.constant 0 : i32
    %c0_i32_1 = arith.constant 0 : i32
    return %arg0, %c0_i32, %c0_i32_0 : i32, i32, i32
  }
  func.func @transform_8(%arg0: i32) -> (i32, i32, i32) {
    %c0_i32 = arith.constant 0 : i32
    %c0_i32_0 = arith.constant 0 : i32
    %c0_i32_1 = arith.constant 0 : i32
    return %arg0, %c0_i32, %c0_i32_0 : i32, i32, i32
  }
  func.func @transform_9(%arg0: i32) -> (i32, i32, i32, i32) {
    %c0_i32 = arith.constant 0 : i32
    %c0_i32_0 = arith.constant 0 : i32
    %c0_i32_1 = arith.constant 0 : i32
    %c0_i32_2 = arith.constant 0 : i32
    return %arg0, %c0_i32, %c0_i32_0, %c0_i32_1 : i32, i32, i32, i32
  }
  func.func @transform_10(%arg0: i32) -> (i32, i32, i32, i32) {
    %c0_i32 = arith.constant 0 : i32
    %c0_i32_0 = arith.constant 0 : i32
    %c0_i32_1 = arith.constant 0 : i32
    %c0_i32_2 = arith.constant 0 : i32
    return %arg0, %c0_i32, %c0_i32_0, %c0_i32_1 : i32, i32, i32, i32
  }
  func.func @transform_11(%arg0: i32) -> (i32, i32, i32, i32) {
    %c0_i32 = arith.constant 0 : i32
    %c0_i32_0 = arith.constant 0 : i32
    %c0_i32_1 = arith.constant 0 : i32
    %c0_i32_2 = arith.constant 0 : i32
    return %arg0, %c0_i32, %c0_i32_0, %c0_i32_1 : i32, i32, i32, i32
  }
  func.func @transform_12(%arg0: i32) -> (i32, i32, i32, i32) {
    %c0_i32 = arith.constant 0 : i32
    %c0_i32_0 = arith.constant 0 : i32
    %c0_i32_1 = arith.constant 0 : i32
    %c0_i32_2 = arith.constant 0 : i32
    return %arg0, %c0_i32, %c0_i32_0, %c0_i32_1 : i32, i32, i32, i32
  }
  func.func @transform_13(%arg0: i32) -> (i32, i32, i32, i32) {
    %c0_i32 = arith.constant 0 : i32
    %c0_i32_0 = arith.constant 0 : i32
    %c0_i32_1 = arith.constant 0 : i32
    %c0_i32_2 = arith.constant 0 : i32
    return %arg0, %c0_i32, %c0_i32_0, %c0_i32_1 : i32, i32, i32, i32
  }
  func.func @transform_14(%arg0: i32) -> (i32, i32, i32, i32) {
    %c0_i32 = arith.constant 0 : i32
    %c0_i32_0 = arith.constant 0 : i32
    %c0_i32_1 = arith.constant 0 : i32
    %c0_i32_2 = arith.constant 0 : i32
    return %arg0, %c0_i32, %c0_i32_0, %c0_i32_1 : i32, i32, i32, i32
  }
  func.func @transform_15(%arg0: i32) -> (i32, i32, i32, i32) {
    %c0_i32 = arith.constant 0 : i32
    %c0_i32_0 = arith.constant 0 : i32
    %c0_i32_1 = arith.constant 0 : i32
    %c0_i32_2 = arith.constant 0 : i32
    return %arg0, %c0_i32, %c0_i32_0, %c0_i32_1 : i32, i32, i32, i32
  }
  func.func @transform_16(%arg0: i32) -> (i32, i32, i32) {
    %c0_i32 = arith.constant 0 : i32
    %c0_i32_0 = arith.constant 0 : i32
    %c0_i32_1 = arith.constant 0 : i32
    return %arg0, %c0_i32, %c0_i32_0 : i32, i32, i32
  }
  func.func @transform_17(%arg0: i32) -> (i32, i32, i32) {
    %c0_i32 = arith.constant 0 : i32
    %c0_i32_0 = arith.constant 0 : i32
    %c0_i32_1 = arith.constant 0 : i32
    return %arg0, %c0_i32, %c0_i32_0 : i32, i32, i32
  }
  func.func @transform_18(%arg0: i32) -> (i32, i32, i32) {
    %c0_i32 = arith.constant 0 : i32
    %c0_i32_0 = arith.constant 0 : i32
    %c0_i32_1 = arith.constant 0 : i32
    return %arg0, %c0_i32, %c0_i32_0 : i32, i32, i32
  }
  func.func @transform_19(%arg0: i32) -> (i32, i32, i32) {
    %c0_i32 = arith.constant 0 : i32
    %c0_i32_0 = arith.constant 0 : i32
    %c0_i32_1 = arith.constant 0 : i32
    return %arg0, %c0_i32, %c0_i32_0 : i32, i32, i32
  }
  func.func @transform_20(%arg0: i32) -> (i32, i32, i32) {
    %c0_i32 = arith.constant 0 : i32
    %c0_i32_0 = arith.constant 0 : i32
    %c0_i32_1 = arith.constant 0 : i32
    return %arg0, %c0_i32, %c0_i32_0 : i32, i32, i32
  }
  func.func @transform_21(%arg0: i32) -> (i32, i32, i32) {
    %c0_i32 = arith.constant 0 : i32
    %c0_i32_0 = arith.constant 0 : i32
    %c0_i32_1 = arith.constant 0 : i32
    return %arg0, %c0_i32, %c0_i32_0 : i32, i32, i32
  }
  func.func @transform_22(%arg0: i32) -> (i32, i32, i32) {
    %c0_i32 = arith.constant 0 : i32
    %c0_i32_0 = arith.constant 0 : i32
    %c0_i32_1 = arith.constant 0 : i32
    return %arg0, %c0_i32, %c0_i32_0 : i32, i32, i32
  }
  func.func @transform_23(%arg0: i32) -> (i32, i32) {
    %c0_i32 = arith.constant 0 : i32
    %c0_i32_0 = arith.constant 0 : i32
    %c0_i32_1 = arith.constant 0 : i32
    return %c0_i32, %c0_i32_0 : i32, i32
  }
  func.func @transform_24(%arg0: i32) -> (i32, i32) {
    %c0_i32 = arith.constant 0 : i32
    %c0_i32_0 = arith.constant 0 : i32
    %c0_i32_1 = arith.constant 0 : i32
    return %c0_i32, %c0_i32_0 : i32, i32
  }
  func.func @transform_25(%arg0: i32) -> (i32, i32) {
    %c0_i32 = arith.constant 0 : i32
    %c0_i32_0 = arith.constant 0 : i32
    %c0_i32_1 = arith.constant 0 : i32
    return %c0_i32, %c0_i32_0 : i32, i32
  }
  func.func @transform_26(%arg0: i32) -> (i32, i32) {
    %c0_i32 = arith.constant 0 : i32
    %c0_i32_0 = arith.constant 0 : i32
    %c0_i32_1 = arith.constant 0 : i32
    return %c0_i32, %c0_i32_0 : i32, i32
  }
}

module attributes {stable_mosaic.version = 11 : i64} {
  func.func @_text_kernel(%arg0: i32, %arg1: memref<16x64xf32, #tpu.memory_space<vmem>>, %arg2: memref<16x16xf32, #tpu.memory_space<vmem>>, %arg3: memref<2x16xf32, #tpu.memory_space<vmem>>, %arg4: memref<1x1x64xf32, #tpu.memory_space<vmem>>, %arg5: memref<1x1x64xf32, #tpu.memory_space<vmem>>, %arg6: memref<1x2x64x32xf32, #tpu.memory_space<vmem>>, %arg7: memref<1x2x64x32xf32, #tpu.memory_space<vmem>>, %arg8: memref<1x2x64x32xf32, #tpu.memory_space<vmem>>, %arg9: memref<1x2x1x32xf32, #tpu.memory_space<vmem>>, %arg10: memref<1x2x1x32xf32, #tpu.memory_space<vmem>>, %arg11: memref<1x2x1x32xf32, #tpu.memory_space<vmem>>, %arg12: memref<1x2x32x64xf32, #tpu.memory_space<vmem>>, %arg13: memref<1x1x64xf32, #tpu.memory_space<vmem>>, %arg14: memref<1x1x64xf32, #tpu.memory_space<vmem>>, %arg15: memref<1x1x64xf32, #tpu.memory_space<vmem>>, %arg16: memref<1x64x256xf32, #tpu.memory_space<vmem>>, %arg17: memref<1x1x256xf32, #tpu.memory_space<vmem>>, %arg18: memref<1x256x64xf32, #tpu.memory_space<vmem>>, %arg19: memref<1x1x64xf32, #tpu.memory_space<vmem>>, %arg20: memref<1x64xf32, #tpu.memory_space<vmem>>, %arg21: memref<1x64xf32, #tpu.memory_space<vmem>>, %arg22: memref<64x32xf32, #tpu.memory_space<vmem>>, %arg23: memref<2x32xf32, #tpu.memory_space<vmem>>, %arg24: memref<1x1xf32, #tpu.memory_space<vmem>>, %arg25: memref<2x2xf32, #tpu.memory_space<vmem>>, %arg26: memref<16x64xf32, #tpu.memory_space<vmem>>) attributes {dimension_semantics = [#tpu.dimension_semantics<arbitrary>], iteration_bounds = array<i64: 2>, scalar_prefetch = 0 : i64, scratch_operands = 1 : i64, tpu.core_type = #tpu.core_type<tc>, window_params = [{pipeline_mode = #tpu.pipeline_mode<synchronous>, transform_indices = @transform_0, window_bounds = array<i64: 16, 64>}, {pipeline_mode = #tpu.pipeline_mode<synchronous>, transform_indices = @transform_1, window_bounds = array<i64: 16, 16>}, {pipeline_mode = #tpu.pipeline_mode<synchronous>, transform_indices = @transform_2, window_bounds = array<i64: 2, 16>}, {transform_indices = @transform_3, window_bounds = array<i64: 1, 1, 64>}, {transform_indices = @transform_4, window_bounds = array<i64: 1, 1, 64>}, {transform_indices = @transform_5, window_bounds = array<i64: 1, 2, 64, 32>}, {transform_indices = @transform_6, window_bounds = array<i64: 1, 2, 64, 32>}, {transform_indices = @transform_7, window_bounds = array<i64: 1, 2, 64, 32>}, {transform_indices = @transform_8, window_bounds = array<i64: 1, 2, 1, 32>}, {transform_indices = @transform_9, window_bounds = array<i64: 1, 2, 1, 32>}, {transform_indices = @transform_10, window_bounds = array<i64: 1, 2, 1, 32>}, {transform_indices = @transform_11, window_bounds = array<i64: 1, 2, 32, 64>}, {transform_indices = @transform_12, window_bounds = array<i64: 1, 1, 64>}, {transform_indices = @transform_13, window_bounds = array<i64: 1, 1, 64>}, {transform_indices = @transform_14, window_bounds = array<i64: 1, 1, 64>}, {transform_indices = @transform_15, window_bounds = array<i64: 1, 64, 256>}, {transform_indices = @transform_16, window_bounds = array<i64: 1, 1, 256>}, {transform_indices = @transform_17, window_bounds = array<i64: 1, 256, 64>}, {transform_indices = @transform_18, window_bounds = array<i64: 1, 1, 64>}, {pipeline_mode = #tpu.pipeline_mode<synchronous>, transform_indices = @transform_19, window_bounds = array<i64: 1, 64>}, {pipeline_mode = #tpu.pipeline_mode<synchronous>, transform_indices = @transform_20, window_bounds = array<i64: 1, 64>}, {pipeline_mode = #tpu.pipeline_mode<synchronous>, transform_indices = @transform_21, window_bounds = array<i64: 64, 32>}, {pipeline_mode = #tpu.pipeline_mode<synchronous>, transform_indices = @transform_22, window_bounds = array<i64: 2, 32>}, {pipeline_mode = #tpu.pipeline_mode<synchronous>, transform_indices = @transform_23, window_bounds = array<i64: 1, 1>}, {pipeline_mode = #tpu.pipeline_mode<synchronous>, transform_indices = @transform_24, window_bounds = array<i64: 2, 2>}]} {
    %c0_i32 = arith.constant 0 : i32
    %0 = arith.cmpi eq, %arg0, %c0_i32 : i32
    %1 = arith.extui %0 : i1 to i32
    %c0_i32_0 = arith.constant 0 : i32
    %2 = arith.cmpi ne, %1, %c0_i32_0 : i32
    scf.if %2 {
      %c0_120 = arith.constant 0 : index
      %c0_121 = arith.constant 0 : index
      %164 = vector.load %arg1[%c0_120, %c0_121] : memref<16x64xf32, #tpu.memory_space<vmem>>, vector<16x64xf32>
      %c0_122 = arith.constant 0 : index
      %c0_123 = arith.constant 0 : index
      %165 = vector.load %arg26[%c0_122, %c0_123] : memref<16x64xf32, #tpu.memory_space<vmem>>, vector<16x64xf32>
      tpu.vector_store %arg26[%c0_122, %c0_123], %164 {strides = array<i32>} : memref<16x64xf32, #tpu.memory_space<vmem>>, vector<16x64xf32>,
    } else {
    }
    %c0 = arith.constant 0 : index
    %c0_1 = arith.constant 0 : index
    %3 = vector.load %arg2[%c0, %c0_1] : memref<16x16xf32, #tpu.memory_space<vmem>>, vector<16x16xf32>
    %c0_2 = arith.constant 0 : index
    %c0_3 = arith.constant 0 : index
    %4 = vector.load %arg26[%c0_2, %c0_3] : memref<16x64xf32, #tpu.memory_space<vmem>>, vector<16x64xf32>
    %c0_4 = arith.constant 0 : index
    %c0_5 = arith.constant 0 : index
    %c0_6 = arith.constant 0 : index
    %5 = vector.load %arg4[%c0_4, %c0_5, %c0_6] : memref<1x1x64xf32, #tpu.memory_space<vmem>>, vector<1x1x64xf32>
    %6 = vector.shape_cast %5 : vector<1x1x64xf32> to vector<1x64xf32>
    %c0_7 = arith.constant 0 : index
    %c0_8 = arith.constant 0 : index
    %c0_9 = arith.constant 0 : index
    %7 = vector.load %arg5[%c0_7, %c0_8, %c0_9] : memref<1x1x64xf32, #tpu.memory_space<vmem>>, vector<1x1x64xf32>
    %8 = vector.shape_cast %7 : vector<1x1x64xf32> to vector<1x64xf32>
    %cst = arith.constant dense<0.000000e+00> : vector<16xf32>
    %9 = vector.multi_reduction <add>, %4, %cst [1] : vector<16x64xf32> to vector<16xf32>
    %10 = vector.shape_cast %9 : vector<16xf32> to vector<16x1xf32>
    %cst_10 = arith.constant 6.400000e+01 : f32
    %11 = vector.broadcast %cst_10 : f32 to vector<16x1xf32>
    %12 = arith.divf %10, %11 : vector<16x1xf32>
    %13 = vector.broadcast %12 : vector<16x1xf32> to vector<16x64xf32>
    %14 = arith.subf %4, %13 : vector<16x64xf32>
    %15 = arith.mulf %14, %14 : vector<16x64xf32>
    %cst_11 = arith.constant dense<0.000000e+00> : vector<16xf32>
    %16 = vector.multi_reduction <add>, %15, %cst_11 [1] : vector<16x64xf32> to vector<16xf32>
    %17 = vector.shape_cast %16 : vector<16xf32> to vector<16x1xf32>
    %cst_12 = arith.constant 6.400000e+01 : f32
    %18 = vector.broadcast %cst_12 : f32 to vector<16x1xf32>
    %19 = arith.divf %17, %18 : vector<16x1xf32>
    %cst_13 = arith.constant 9.99999974E-6 : f32
    %20 = vector.broadcast %cst_13 : f32 to vector<16x1xf32>
    %21 = arith.addf %19, %20 : vector<16x1xf32>
    %22 = math.rsqrt %21 : vector<16x1xf32>
    %23 = vector.broadcast %22 : vector<16x1xf32> to vector<16x64xf32>
    %24 = arith.mulf %14, %23 : vector<16x64xf32>
    %25 = vector.broadcast %6 : vector<1x64xf32> to vector<16x64xf32>
    %26 = arith.mulf %24, %25 : vector<16x64xf32>
    %27 = vector.broadcast %8 : vector<1x64xf32> to vector<16x64xf32>
    %28 = arith.addf %26, %27 : vector<16x64xf32>
    %c0_14 = arith.constant 0 : index
    %c0_15 = arith.constant 0 : index
    %c0_16 = arith.constant 0 : index
    %c0_17 = arith.constant 0 : index
    %29 = vector.load %arg6[%c0_14, %c0_15, %c0_16, %c0_17] : memref<1x2x64x32xf32, #tpu.memory_space<vmem>>, vector<1x1x64x32xf32>
    %30 = vector.shape_cast %29 : vector<1x1x64x32xf32> to vector<64x32xf32>
    %cst_18 = arith.constant dense<0.000000e+00> : vector<16x32xf32>
    %31 = tpu.matmul %28, %30, %cst_18 {dimension_numbers = #tpu.dot_dimension_numbers<[1], [0], [0], [1], [0, 0, 1, 1], [], []>} : vector<16x64xf32>, vector<64x32xf32>, vector<16x32xf32> -> vector<16x32xf32>
    %c0_19 = arith.constant 0 : index
    %c0_20 = arith.constant 0 : index
    %c0_21 = arith.constant 0 : index
    %c0_22 = arith.constant 0 : index
    %32 = vector.load %arg9[%c0_19, %c0_20, %c0_21, %c0_22] : memref<1x2x1x32xf32, #tpu.memory_space<vmem>>, vector<1x1x1x32xf32>
    %33 = vector.shape_cast %32 : vector<1x1x1x32xf32> to vector<1x32xf32>
    %34 = vector.broadcast %33 : vector<1x32xf32> to vector<16x32xf32>
    %35 = arith.addf %31, %34 : vector<16x32xf32>
    %c0_23 = arith.constant 0 : index
    %c0_24 = arith.constant 0 : index
    %c0_25 = arith.constant 0 : index
    %c0_26 = arith.constant 0 : index
    %36 = vector.load %arg7[%c0_23, %c0_24, %c0_25, %c0_26] : memref<1x2x64x32xf32, #tpu.memory_space<vmem>>, vector<1x1x64x32xf32>
    %37 = vector.shape_cast %36 : vector<1x1x64x32xf32> to vector<64x32xf32>
    %cst_27 = arith.constant dense<0.000000e+00> : vector<16x32xf32>
    %38 = tpu.matmul %28, %37, %cst_27 {dimension_numbers = #tpu.dot_dimension_numbers<[1], [0], [0], [1], [0, 0, 1, 1], [], []>} : vector<16x64xf32>, vector<64x32xf32>, vector<16x32xf32> -> vector<16x32xf32>
    %c0_28 = arith.constant 0 : index
    %c0_29 = arith.constant 0 : index
    %c0_30 = arith.constant 0 : index
    %c0_31 = arith.constant 0 : index
    %39 = vector.load %arg10[%c0_28, %c0_29, %c0_30, %c0_31] : memref<1x2x1x32xf32, #tpu.memory_space<vmem>>, vector<1x1x1x32xf32>
    %40 = vector.shape_cast %39 : vector<1x1x1x32xf32> to vector<1x32xf32>
    %41 = vector.broadcast %40 : vector<1x32xf32> to vector<16x32xf32>
    %42 = arith.addf %38, %41 : vector<16x32xf32>
    %c0_32 = arith.constant 0 : index
    %c0_33 = arith.constant 0 : index
    %c0_34 = arith.constant 0 : index
    %c0_35 = arith.constant 0 : index
    %43 = vector.load %arg8[%c0_32, %c0_33, %c0_34, %c0_35] : memref<1x2x64x32xf32, #tpu.memory_space<vmem>>, vector<1x1x64x32xf32>
    %44 = vector.shape_cast %43 : vector<1x1x64x32xf32> to vector<64x32xf32>
    %cst_36 = arith.constant dense<0.000000e+00> : vector<16x32xf32>
    %45 = tpu.matmul %28, %44, %cst_36 {dimension_numbers = #tpu.dot_dimension_numbers<[1], [0], [0], [1], [0, 0, 1, 1], [], []>} : vector<16x64xf32>, vector<64x32xf32>, vector<16x32xf32> -> vector<16x32xf32>
    %c0_37 = arith.constant 0 : index
    %c0_38 = arith.constant 0 : index
    %c0_39 = arith.constant 0 : index
    %c0_40 = arith.constant 0 : index
    %46 = vector.load %arg11[%c0_37, %c0_38, %c0_39, %c0_40] : memref<1x2x1x32xf32, #tpu.memory_space<vmem>>, vector<1x1x1x32xf32>
    %47 = vector.shape_cast %46 : vector<1x1x1x32xf32> to vector<1x32xf32>
    %48 = vector.broadcast %47 : vector<1x32xf32> to vector<16x32xf32>
    %49 = arith.addf %45, %48 : vector<16x32xf32>
    %cst_41 = arith.constant dense<0.000000e+00> : vector<16x16xf32>
    %50 = tpu.matmul %35, %42, %cst_41 {dimension_numbers = #tpu.dot_dimension_numbers<[1], [1], [0], [0], [0, 0, 1, 0], [], []>} : vector<16x32xf32>, vector<16x32xf32>, vector<16x16xf32> -> vector<16x16xf32>
    %cst_42 = arith.constant 0.176776692 : f32
    %51 = vector.broadcast %cst_42 : f32 to vector<16x16xf32>
    %52 = arith.mulf %50, %51 : vector<16x16xf32>
    %53 = arith.addf %52, %3 : vector<16x16xf32>
    %cst_43 = arith.constant dense<0xFF800000> : vector<16xf32>
    %54 = vector.multi_reduction <maximumf>, %53, %cst_43 [1] : vector<16x16xf32> to vector<16xf32>
    %55 = vector.shape_cast %54 : vector<16xf32> to vector<16x1xf32>
    %56 = vector.broadcast %55 : vector<16x1xf32> to vector<16x16xf32>
    %57 = arith.subf %53, %56 : vector<16x16xf32>
    %58 = math.exp %57 : vector<16x16xf32>
    %cst_44 = arith.constant dense<0.000000e+00> : vector<16xf32>
    %59 = vector.multi_reduction <add>, %58, %cst_44 [1] : vector<16x16xf32> to vector<16xf32>
    %60 = vector.shape_cast %59 : vector<16xf32> to vector<16x1xf32>
    %61 = tpu.reciprocal %60 {approx = true} : vector<16x1xf32> -> vector<16x1xf32>
    %62 = vector.broadcast %61 : vector<16x1xf32> to vector<16x16xf32>
    %63 = arith.mulf %58, %62 : vector<16x16xf32>
    %cst_45 = arith.constant dense<0.000000e+00> : vector<16x32xf32>
    %64 = tpu.matmul %63, %49, %cst_45 {dimension_numbers = #tpu.dot_dimension_numbers<[1], [0], [0], [1], [0, 0, 1, 1], [], []>} : vector<16x16xf32>, vector<16x32xf32>, vector<16x32xf32> -> vector<16x32xf32>
    %c0_46 = arith.constant 0 : index
    %c0_47 = arith.constant 0 : index
    %c0_48 = arith.constant 0 : index
    %c0_49 = arith.constant 0 : index
    %65 = vector.load %arg12[%c0_46, %c0_47, %c0_48, %c0_49] : memref<1x2x32x64xf32, #tpu.memory_space<vmem>>, vector<1x1x32x64xf32>
    %66 = vector.shape_cast %65 : vector<1x1x32x64xf32> to vector<32x64xf32>
    %cst_50 = arith.constant dense<0.000000e+00> : vector<16x64xf32>
    %67 = tpu.matmul %64, %66, %cst_50 {dimension_numbers = #tpu.dot_dimension_numbers<[1], [0], [0], [1], [0, 0, 1, 1], [], []>} : vector<16x32xf32>, vector<32x64xf32>, vector<16x64xf32> -> vector<16x64xf32>
    %c0_51 = arith.constant 0 : index
    %c1 = arith.constant 1 : index
    %c0_52 = arith.constant 0 : index
    %c0_53 = arith.constant 0 : index
    %68 = vector.load %arg6[%c0_51, %c1, %c0_52, %c0_53] : memref<1x2x64x32xf32, #tpu.memory_space<vmem>>, vector<1x1x64x32xf32>
    %69 = vector.shape_cast %68 : vector<1x1x64x32xf32> to vector<64x32xf32>
    %cst_54 = arith.constant dense<0.000000e+00> : vector<16x32xf32>
    %70 = tpu.matmul %28, %69, %cst_54 {dimension_numbers = #tpu.dot_dimension_numbers<[1], [0], [0], [1], [0, 0, 1, 1], [], []>} : vector<16x64xf32>, vector<64x32xf32>, vector<16x32xf32> -> vector<16x32xf32>
    %c0_55 = arith.constant 0 : index
    %c1_56 = arith.constant 1 : index
    %c0_57 = arith.constant 0 : index
    %c0_58 = arith.constant 0 : index
    %71 = vector.load %arg9[%c0_55, %c1_56, %c0_57, %c0_58] : memref<1x2x1x32xf32, #tpu.memory_space<vmem>>, vector<1x1x1x32xf32>
    %72 = vector.shape_cast %71 : vector<1x1x1x32xf32> to vector<1x32xf32>
    %73 = vector.broadcast %72 : vector<1x32xf32> to vector<16x32xf32>
    %74 = arith.addf %70, %73 : vector<16x32xf32>
    %c0_59 = arith.constant 0 : index
    %c1_60 = arith.constant 1 : index
    %c0_61 = arith.constant 0 : index
    %c0_62 = arith.constant 0 : index
    %75 = vector.load %arg7[%c0_59, %c1_60, %c0_61, %c0_62] : memref<1x2x64x32xf32, #tpu.memory_space<vmem>>, vector<1x1x64x32xf32>
    %76 = vector.shape_cast %75 : vector<1x1x64x32xf32> to vector<64x32xf32>
    %cst_63 = arith.constant dense<0.000000e+00> : vector<16x32xf32>
    %77 = tpu.matmul %28, %76, %cst_63 {dimension_numbers = #tpu.dot_dimension_numbers<[1], [0], [0], [1], [0, 0, 1, 1], [], []>} : vector<16x64xf32>, vector<64x32xf32>, vector<16x32xf32> -> vector<16x32xf32>
    %c0_64 = arith.constant 0 : index
    %c1_65 = arith.constant 1 : index
    %c0_66 = arith.constant 0 : index
    %c0_67 = arith.constant 0 : index
    %78 = vector.load %arg10[%c0_64, %c1_65, %c0_66, %c0_67] : memref<1x2x1x32xf32, #tpu.memory_space<vmem>>, vector<1x1x1x32xf32>
    %79 = vector.shape_cast %78 : vector<1x1x1x32xf32> to vector<1x32xf32>
    %80 = vector.broadcast %79 : vector<1x32xf32> to vector<16x32xf32>
    %81 = arith.addf %77, %80 : vector<16x32xf32>
    %c0_68 = arith.constant 0 : index
    %c1_69 = arith.constant 1 : index
    %c0_70 = arith.constant 0 : index
    %c0_71 = arith.constant 0 : index
    %82 = vector.load %arg8[%c0_68, %c1_69, %c0_70, %c0_71] : memref<1x2x64x32xf32, #tpu.memory_space<vmem>>, vector<1x1x64x32xf32>
    %83 = vector.shape_cast %82 : vector<1x1x64x32xf32> to vector<64x32xf32>
    %cst_72 = arith.constant dense<0.000000e+00> : vector<16x32xf32>
    %84 = tpu.matmul %28, %83, %cst_72 {dimension_numbers = #tpu.dot_dimension_numbers<[1], [0], [0], [1], [0, 0, 1, 1], [], []>} : vector<16x64xf32>, vector<64x32xf32>, vector<16x32xf32> -> vector<16x32xf32>
    %c0_73 = arith.constant 0 : index
    %c1_74 = arith.constant 1 : index
    %c0_75 = arith.constant 0 : index
    %c0_76 = arith.constant 0 : index
    %85 = vector.load %arg11[%c0_73, %c1_74, %c0_75, %c0_76] : memref<1x2x1x32xf32, #tpu.memory_space<vmem>>, vector<1x1x1x32xf32>
    %86 = vector.shape_cast %85 : vector<1x1x1x32xf32> to vector<1x32xf32>
    %87 = vector.broadcast %86 : vector<1x32xf32> to vector<16x32xf32>
    %88 = arith.addf %84, %87 : vector<16x32xf32>
    %cst_77 = arith.constant dense<0.000000e+00> : vector<16x16xf32>
    %89 = tpu.matmul %74, %81, %cst_77 {dimension_numbers = #tpu.dot_dimension_numbers<[1], [1], [0], [0], [0, 0, 1, 0], [], []>} : vector<16x32xf32>, vector<16x32xf32>, vector<16x16xf32> -> vector<16x16xf32>
    %cst_78 = arith.constant 0.176776692 : f32
    %90 = vector.broadcast %cst_78 : f32 to vector<16x16xf32>
    %91 = arith.mulf %89, %90 : vector<16x16xf32>
    %92 = arith.addf %91, %3 : vector<16x16xf32>
    %cst_79 = arith.constant dense<0xFF800000> : vector<16xf32>
    %93 = vector.multi_reduction <maximumf>, %92, %cst_79 [1] : vector<16x16xf32> to vector<16xf32>
    %94 = vector.shape_cast %93 : vector<16xf32> to vector<16x1xf32>
    %95 = vector.broadcast %94 : vector<16x1xf32> to vector<16x16xf32>
    %96 = arith.subf %92, %95 : vector<16x16xf32>
    %97 = math.exp %96 : vector<16x16xf32>
    %cst_80 = arith.constant dense<0.000000e+00> : vector<16xf32>
    %98 = vector.multi_reduction <add>, %97, %cst_80 [1] : vector<16x16xf32> to vector<16xf32>
    %99 = vector.shape_cast %98 : vector<16xf32> to vector<16x1xf32>
    %100 = tpu.reciprocal %99 {approx = true} : vector<16x1xf32> -> vector<16x1xf32>
    %101 = vector.broadcast %100 : vector<16x1xf32> to vector<16x16xf32>
    %102 = arith.mulf %97, %101 : vector<16x16xf32>
    %cst_81 = arith.constant dense<0.000000e+00> : vector<16x32xf32>
    %103 = tpu.matmul %102, %88, %cst_81 {dimension_numbers = #tpu.dot_dimension_numbers<[1], [0], [0], [1], [0, 0, 1, 1], [], []>} : vector<16x16xf32>, vector<16x32xf32>, vector<16x32xf32> -> vector<16x32xf32>
    %c0_82 = arith.constant 0 : index
    %c1_83 = arith.constant 1 : index
    %c0_84 = arith.constant 0 : index
    %c0_85 = arith.constant 0 : index
    %104 = vector.load %arg12[%c0_82, %c1_83, %c0_84, %c0_85] : memref<1x2x32x64xf32, #tpu.memory_space<vmem>>, vector<1x1x32x64xf32>
    %105 = vector.shape_cast %104 : vector<1x1x32x64xf32> to vector<32x64xf32>
    %cst_86 = arith.constant dense<0.000000e+00> : vector<16x64xf32>
    %106 = tpu.matmul %103, %105, %cst_86 {dimension_numbers = #tpu.dot_dimension_numbers<[1], [0], [0], [1], [0, 0, 1, 1], [], []>} : vector<16x32xf32>, vector<32x64xf32>, vector<16x64xf32> -> vector<16x64xf32>
    %107 = arith.addf %67, %106 : vector<16x64xf32>
    %108 = arith.addf %4, %107 : vector<16x64xf32>
    %c0_87 = arith.constant 0 : index
    %c0_88 = arith.constant 0 : index
    %c0_89 = arith.constant 0 : index
    %109 = vector.load %arg13[%c0_87, %c0_88, %c0_89] : memref<1x1x64xf32, #tpu.memory_space<vmem>>, vector<1x1x64xf32>
    %110 = vector.shape_cast %109 : vector<1x1x64xf32> to vector<1x64xf32>
    %111 = vector.broadcast %110 : vector<1x64xf32> to vector<16x64xf32>
    %112 = arith.addf %108, %111 : vector<16x64xf32>
    %c0_90 = arith.constant 0 : index
    %c0_91 = arith.constant 0 : index
    %c0_92 = arith.constant 0 : index
    %113 = vector.load %arg14[%c0_90, %c0_91, %c0_92] : memref<1x1x64xf32, #tpu.memory_space<vmem>>, vector<1x1x64xf32>
    %114 = vector.shape_cast %113 : vector<1x1x64xf32> to vector<1x64xf32>
    %c0_93 = arith.constant 0 : index
    %c0_94 = arith.constant 0 : index
    %c0_95 = arith.constant 0 : index
    %115 = vector.load %arg15[%c0_93, %c0_94, %c0_95] : memref<1x1x64xf32, #tpu.memory_space<vmem>>, vector<1x1x64xf32>
    %116 = vector.shape_cast %115 : vector<1x1x64xf32> to vector<1x64xf32>
    %cst_96 = arith.constant dense<0.000000e+00> : vector<16xf32>
    %117 = vector.multi_reduction <add>, %112, %cst_96 [1] : vector<16x64xf32> to vector<16xf32>
    %118 = vector.shape_cast %117 : vector<16xf32> to vector<16x1xf32>
    %cst_97 = arith.constant 6.400000e+01 : f32
    %119 = vector.broadcast %cst_97 : f32 to vector<16x1xf32>
    %120 = arith.divf %118, %119 : vector<16x1xf32>
    %121 = vector.broadcast %120 : vector<16x1xf32> to vector<16x64xf32>
    %122 = arith.subf %112, %121 : vector<16x64xf32>
    %123 = arith.mulf %122, %122 : vector<16x64xf32>
    %cst_98 = arith.constant dense<0.000000e+00> : vector<16xf32>
    %124 = vector.multi_reduction <add>, %123, %cst_98 [1] : vector<16x64xf32> to vector<16xf32>
    %125 = vector.shape_cast %124 : vector<16xf32> to vector<16x1xf32>
    %cst_99 = arith.constant 6.400000e+01 : f32
    %126 = vector.broadcast %cst_99 : f32 to vector<16x1xf32>
    %127 = arith.divf %125, %126 : vector<16x1xf32>
    %cst_100 = arith.constant 9.99999974E-6 : f32
    %128 = vector.broadcast %cst_100 : f32 to vector<16x1xf32>
    %129 = arith.addf %127, %128 : vector<16x1xf32>
    %130 = math.rsqrt %129 : vector<16x1xf32>
    %131 = vector.broadcast %130 : vector<16x1xf32> to vector<16x64xf32>
    %132 = arith.mulf %122, %131 : vector<16x64xf32>
    %133 = vector.broadcast %114 : vector<1x64xf32> to vector<16x64xf32>
    %134 = arith.mulf %132, %133 : vector<16x64xf32>
    %135 = vector.broadcast %116 : vector<1x64xf32> to vector<16x64xf32>
    %136 = arith.addf %134, %135 : vector<16x64xf32>
    %c0_101 = arith.constant 0 : index
    %c0_102 = arith.constant 0 : index
    %c0_103 = arith.constant 0 : index
    %137 = vector.load %arg16[%c0_101, %c0_102, %c0_103] : memref<1x64x256xf32, #tpu.memory_space<vmem>>, vector<1x64x256xf32>
    %138 = vector.shape_cast %137 : vector<1x64x256xf32> to vector<64x256xf32>
    %cst_104 = arith.constant dense<0.000000e+00> : vector<16x256xf32>
    %139 = tpu.matmul %136, %138, %cst_104 {dimension_numbers = #tpu.dot_dimension_numbers<[1], [0], [0], [1], [0, 0, 1, 1], [], []>} : vector<16x64xf32>, vector<64x256xf32>, vector<16x256xf32> -> vector<16x256xf32>
    %c0_105 = arith.constant 0 : index
    %c0_106 = arith.constant 0 : index
    %c0_107 = arith.constant 0 : index
    %140 = vector.load %arg17[%c0_105, %c0_106, %c0_107] : memref<1x1x256xf32, #tpu.memory_space<vmem>>, vector<1x1x256xf32>
    %141 = vector.shape_cast %140 : vector<1x1x256xf32> to vector<1x256xf32>
    %142 = vector.broadcast %141 : vector<1x256xf32> to vector<16x256xf32>
    %143 = arith.addf %139, %142 : vector<16x256xf32>
    %cst_108 = arith.constant 1.702000e+00 : f32
    %144 = vector.broadcast %cst_108 : f32 to vector<16x256xf32>
    %145 = arith.mulf %144, %143 : vector<16x256xf32>
    %146 = arith.negf %145 : vector<16x256xf32>
    %147 = math.exp %146 : vector<16x256xf32>
    %cst_109 = arith.constant 1.000000e+00 : f32
    %148 = vector.broadcast %cst_109 : f32 to vector<16x256xf32>
    %149 = arith.addf %148, %147 : vector<16x256xf32>
    %150 = arith.divf %148, %149 : vector<16x256xf32>
    %151 = arith.mulf %143, %150 : vector<16x256xf32>
    %c0_110 = arith.constant 0 : index
    %c0_111 = arith.constant 0 : index
    %c0_112 = arith.constant 0 : index
    %152 = vector.load %arg18[%c0_110, %c0_111, %c0_112] : memref<1x256x64xf32, #tpu.memory_space<vmem>>, vector<1x256x64xf32>
    %153 = vector.shape_cast %152 : vector<1x256x64xf32> to vector<256x64xf32>
    %cst_113 = arith.constant dense<0.000000e+00> : vector<16x64xf32>
    %154 = tpu.matmul %151, %153, %cst_113 {dimension_numbers = #tpu.dot_dimension_numbers<[1], [0], [0], [1], [0, 0, 1, 1], [], []>} : vector<16x256xf32>, vector<256x64xf32>, vector<16x64xf32> -> vector<16x64xf32>
    %c0_114 = arith.constant 0 : index
    %c0_115 = arith.constant 0 : index
    %c0_116 = arith.constant 0 : index
    %155 = vector.load %arg19[%c0_114, %c0_115, %c0_116] : memref<1x1x64xf32, #tpu.memory_space<vmem>>, vector<1x1x64xf32>
    %156 = vector.shape_cast %155 : vector<1x1x64xf32> to vector<1x64xf32>
    %157 = vector.broadcast %156 : vector<1x64xf32> to vector<16x64xf32>
    %158 = arith.addf %154, %157 : vector<16x64xf32>
    %159 = arith.addf %112, %158 : vector<16x64xf32>
    %c0_117 = arith.constant 0 : index
    %c0_118 = arith.constant 0 : index
    %160 = vector.load %arg26[%c0_117, %c0_118] : memref<16x64xf32, #tpu.memory_space<vmem>>, vector<16x64xf32>
    tpu.vector_store %arg26[%c0_117, %c0_118], %159 {strides = array<i32>} : memref<16x64xf32, #tpu.memory_space<vmem>>, vector<16x64xf32>,
    %c1_i32 = arith.constant 1 : i32
    %161 = arith.cmpi eq, %arg0, %c1_i32 : i32
    %162 = arith.extui %161 : i1 to i32
    %c0_i32_119 = arith.constant 0 : i32
    %163 = arith.cmpi ne, %162, %c0_i32_119 : i32
    scf.if %163 {
      %c0_120 = arith.constant 0 : index
      %c0_121 = arith.constant 0 : index
      %164 = vector.load %arg3[%c0_120, %c0_121] : memref<2x16xf32, #tpu.memory_space<vmem>>, vector<2x16xf32>
      %cst_122 = arith.constant dense<0.000000e+00> : vector<2x64xf32>
      %165 = tpu.matmul %164, %159, %cst_122 {dimension_numbers = #tpu.dot_dimension_numbers<[1], [0], [0], [1], [0, 0, 1, 1], [], []>} : vector<2x16xf32>, vector<16x64xf32>, vector<2x64xf32> -> vector<2x64xf32>
      %c0_123 = arith.constant 0 : index
      %c0_124 = arith.constant 0 : index
      %166 = vector.load %arg20[%c0_123, %c0_124] : memref<1x64xf32, #tpu.memory_space<vmem>>, vector<1x64xf32>
      %c0_125 = arith.constant 0 : index
      %c0_126 = arith.constant 0 : index
      %167 = vector.load %arg21[%c0_125, %c0_126] : memref<1x64xf32, #tpu.memory_space<vmem>>, vector<1x64xf32>
      %cst_127 = arith.constant dense<0.000000e+00> : vector<2xf32>
      %168 = vector.multi_reduction <add>, %165, %cst_127 [1] : vector<2x64xf32> to vector<2xf32>
      %169 = vector.shape_cast %168 : vector<2xf32> to vector<2x1xf32>
      %cst_128 = arith.constant 6.400000e+01 : f32
      %170 = vector.broadcast %cst_128 : f32 to vector<2x1xf32>
      %171 = arith.divf %169, %170 : vector<2x1xf32>
      %172 = vector.broadcast %171 : vector<2x1xf32> to vector<2x64xf32>
      %173 = arith.subf %165, %172 : vector<2x64xf32>
      %174 = arith.mulf %173, %173 : vector<2x64xf32>
      %cst_129 = arith.constant dense<0.000000e+00> : vector<2xf32>
      %175 = vector.multi_reduction <add>, %174, %cst_129 [1] : vector<2x64xf32> to vector<2xf32>
      %176 = vector.shape_cast %175 : vector<2xf32> to vector<2x1xf32>
      %cst_130 = arith.constant 6.400000e+01 : f32
      %177 = vector.broadcast %cst_130 : f32 to vector<2x1xf32>
      %178 = arith.divf %176, %177 : vector<2x1xf32>
      %cst_131 = arith.constant 9.99999974E-6 : f32
      %179 = vector.broadcast %cst_131 : f32 to vector<2x1xf32>
      %180 = arith.addf %178, %179 : vector<2x1xf32>
      %181 = math.rsqrt %180 : vector<2x1xf32>
      %182 = vector.broadcast %181 : vector<2x1xf32> to vector<2x64xf32>
      %183 = arith.mulf %173, %182 : vector<2x64xf32>
      %184 = vector.broadcast %166 : vector<1x64xf32> to vector<2x64xf32>
      %185 = arith.mulf %183, %184 : vector<2x64xf32>
      %186 = vector.broadcast %167 : vector<1x64xf32> to vector<2x64xf32>
      %187 = arith.addf %185, %186 : vector<2x64xf32>
      %c0_132 = arith.constant 0 : index
      %c0_133 = arith.constant 0 : index
      %188 = vector.load %arg22[%c0_132, %c0_133] : memref<64x32xf32, #tpu.memory_space<vmem>>, vector<64x32xf32>
      %cst_134 = arith.constant dense<0.000000e+00> : vector<2x32xf32>
      %189 = tpu.matmul %187, %188, %cst_134 {dimension_numbers = #tpu.dot_dimension_numbers<[1], [0], [0], [1], [0, 0, 1, 1], [], []>} : vector<2x64xf32>, vector<64x32xf32>, vector<2x32xf32> -> vector<2x32xf32>
      %190 = arith.mulf %189, %189 : vector<2x32xf32>
      %cst_135 = arith.constant dense<0.000000e+00> : vector<2xf32>
      %191 = vector.multi_reduction <add>, %190, %cst_135 [1] : vector<2x32xf32> to vector<2xf32>
      %192 = vector.shape_cast %191 : vector<2xf32> to vector<2x1xf32>
      %193 = math.rsqrt %192 : vector<2x1xf32>
      %194 = vector.broadcast %193 : vector<2x1xf32> to vector<2x32xf32>
      %195 = arith.mulf %189, %194 : vector<2x32xf32>
      %c0_136 = arith.constant 0 : index
      %c0_137 = arith.constant 0 : index
      %196 = vector.load %arg23[%c0_136, %c0_137] : memref<2x32xf32, #tpu.memory_space<vmem>>, vector<2x32xf32>
      %cst_138 = arith.constant dense<0.000000e+00> : vector<2x2xf32>
      %197 = tpu.matmul %196, %195, %cst_138 {dimension_numbers = #tpu.dot_dimension_numbers<[1], [1], [0], [0], [0, 0, 1, 0], [], []>} : vector<2x32xf32>, vector<2x32xf32>, vector<2x2xf32> -> vector<2x2xf32>
      %c0_139 = arith.constant 0 : index
      %c0_140 = arith.constant 0 : index
      %198 = vector.load %arg24[%c0_139, %c0_140] : memref<1x1xf32, #tpu.memory_space<vmem>>, vector<1x1xf32>
      %199 = vector.broadcast %198 : vector<1x1xf32> to vector<2x2xf32>
      %200 = arith.mulf %199, %197 : vector<2x2xf32>
      %c0_141 = arith.constant 0 : index
      %c0_142 = arith.constant 0 : index
      %201 = vector.load %arg25[%c0_141, %c0_142] : memref<2x2xf32, #tpu.memory_space<vmem>>, vector<2x2xf32>
      tpu.vector_store %arg25[%c0_141, %c0_142], %200 {strides = array<i32>} : memref<2x2xf32, #tpu.memory_space<vmem>>, vector<2x2xf32>,
    } else {
    }
    return
  }
  func.func @transform_0(%arg0: i32) -> (i32, i32) {
    %c0_i32 = arith.constant 0 : i32
    %c0_i32_0 = arith.constant 0 : i32
    %c0_i32_1 = arith.constant 0 : i32
    return %c0_i32, %c0_i32_0 : i32, i32
  }
  func.func @transform_1(%arg0: i32) -> (i32, i32) {
    %c0_i32 = arith.constant 0 : i32
    %c0_i32_0 = arith.constant 0 : i32
    %c0_i32_1 = arith.constant 0 : i32
    return %c0_i32, %c0_i32_0 : i32, i32
  }
  func.func @transform_2(%arg0: i32) -> (i32, i32) {
    %c0_i32 = arith.constant 0 : i32
    %c0_i32_0 = arith.constant 0 : i32
    %c0_i32_1 = arith.constant 0 : i32
    return %c0_i32, %c0_i32_0 : i32, i32
  }
  func.func @transform_3(%arg0: i32) -> (i32, i32, i32) {
    %c0_i32 = arith.constant 0 : i32
    %c0_i32_0 = arith.constant 0 : i32
    %c0_i32_1 = arith.constant 0 : i32
    return %arg0, %c0_i32, %c0_i32_0 : i32, i32, i32
  }
  func.func @transform_4(%arg0: i32) -> (i32, i32, i32) {
    %c0_i32 = arith.constant 0 : i32
    %c0_i32_0 = arith.constant 0 : i32
    %c0_i32_1 = arith.constant 0 : i32
    return %arg0, %c0_i32, %c0_i32_0 : i32, i32, i32
  }
  func.func @transform_5(%arg0: i32) -> (i32, i32, i32, i32) {
    %c0_i32 = arith.constant 0 : i32
    %c0_i32_0 = arith.constant 0 : i32
    %c0_i32_1 = arith.constant 0 : i32
    %c0_i32_2 = arith.constant 0 : i32
    return %arg0, %c0_i32, %c0_i32_0, %c0_i32_1 : i32, i32, i32, i32
  }
  func.func @transform_6(%arg0: i32) -> (i32, i32, i32, i32) {
    %c0_i32 = arith.constant 0 : i32
    %c0_i32_0 = arith.constant 0 : i32
    %c0_i32_1 = arith.constant 0 : i32
    %c0_i32_2 = arith.constant 0 : i32
    return %arg0, %c0_i32, %c0_i32_0, %c0_i32_1 : i32, i32, i32, i32
  }
  func.func @transform_7(%arg0: i32) -> (i32, i32, i32, i32) {
    %c0_i32 = arith.constant 0 : i32
    %c0_i32_0 = arith.constant 0 : i32
    %c0_i32_1 = arith.constant 0 : i32
    %c0_i32_2 = arith.constant 0 : i32
    return %arg0, %c0_i32, %c0_i32_0, %c0_i32_1 : i32, i32, i32, i32
  }
  func.func @transform_8(%arg0: i32) -> (i32, i32, i32, i32) {
    %c0_i32 = arith.constant 0 : i32
    %c0_i32_0 = arith.constant 0 : i32
    %c0_i32_1 = arith.constant 0 : i32
    %c0_i32_2 = arith.constant 0 : i32
    return %arg0, %c0_i32, %c0_i32_0, %c0_i32_1 : i32, i32, i32, i32
  }
  func.func @transform_9(%arg0: i32) -> (i32, i32, i32, i32) {
    %c0_i32 = arith.constant 0 : i32
    %c0_i32_0 = arith.constant 0 : i32
    %c0_i32_1 = arith.constant 0 : i32
    %c0_i32_2 = arith.constant 0 : i32
    return %arg0, %c0_i32, %c0_i32_0, %c0_i32_1 : i32, i32, i32, i32
  }
  func.func @transform_10(%arg0: i32) -> (i32, i32, i32, i32) {
    %c0_i32 = arith.constant 0 : i32
    %c0_i32_0 = arith.constant 0 : i32
    %c0_i32_1 = arith.constant 0 : i32
    %c0_i32_2 = arith.constant 0 : i32
    return %arg0, %c0_i32, %c0_i32_0, %c0_i32_1 : i32, i32, i32, i32
  }
  func.func @transform_11(%arg0: i32) -> (i32, i32, i32, i32) {
    %c0_i32 = arith.constant 0 : i32
    %c0_i32_0 = arith.constant 0 : i32
    %c0_i32_1 = arith.constant 0 : i32
    %c0_i32_2 = arith.constant 0 : i32
    return %arg0, %c0_i32, %c0_i32_0, %c0_i32_1 : i32, i32, i32, i32
  }
  func.func @transform_12(%arg0: i32) -> (i32, i32, i32) {
    %c0_i32 = arith.constant 0 : i32
    %c0_i32_0 = arith.constant 0 : i32
    %c0_i32_1 = arith.constant 0 : i32
    return %arg0, %c0_i32, %c0_i32_0 : i32, i32, i32
  }
  func.func @transform_13(%arg0: i32) -> (i32, i32, i32) {
    %c0_i32 = arith.constant 0 : i32
    %c0_i32_0 = arith.constant 0 : i32
    %c0_i32_1 = arith.constant 0 : i32
    return %arg0, %c0_i32, %c0_i32_0 : i32, i32, i32
  }
  func.func @transform_14(%arg0: i32) -> (i32, i32, i32) {
    %c0_i32 = arith.constant 0 : i32
    %c0_i32_0 = arith.constant 0 : i32
    %c0_i32_1 = arith.constant 0 : i32
    return %arg0, %c0_i32, %c0_i32_0 : i32, i32, i32
  }
  func.func @transform_15(%arg0: i32) -> (i32, i32, i32) {
    %c0_i32 = arith.constant 0 : i32
    %c0_i32_0 = arith.constant 0 : i32
    %c0_i32_1 = arith.constant 0 : i32
    return %arg0, %c0_i32, %c0_i32_0 : i32, i32, i32
  }
  func.func @transform_16(%arg0: i32) -> (i32, i32, i32) {
    %c0_i32 = arith.constant 0 : i32
    %c0_i32_0 = arith.constant 0 : i32
    %c0_i32_1 = arith.constant 0 : i32
    return %arg0, %c0_i32, %c0_i32_0 : i32, i32, i32
  }
  func.func @transform_17(%arg0: i32) -> (i32, i32, i32) {
    %c0_i32 = arith.constant 0 : i32
    %c0_i32_0 = arith.constant 0 : i32
    %c0_i32_1 = arith.constant 0 : i32
    return %arg0, %c0_i32, %c0_i32_0 : i32, i32, i32
  }
  func.func @transform_18(%arg0: i32) -> (i32, i32, i32) {
    %c0_i32 = arith.constant 0 : i32
    %c0_i32_0 = arith.constant 0 : i32
    %c0_i32_1 = arith.constant 0 : i32
    return %arg0, %c0_i32, %c0_i32_0 : i32, i32, i32
  }
  func.func @transform_19(%arg0: i32) -> (i32, i32) {
    %c0_i32 = arith.constant 0 : i32
    %c0_i32_0 = arith.constant 0 : i32
    %c0_i32_1 = arith.constant 0 : i32
    return %c0_i32, %c0_i32_0 : i32, i32
  }
  func.func @transform_20(%arg0: i32) -> (i32, i32) {
    %c0_i32 = arith.constant 0 : i32
    %c0_i32_0 = arith.constant 0 : i32
    %c0_i32_1 = arith.constant 0 : i32
    return %c0_i32, %c0_i32_0 : i32, i32
  }
  func.func @transform_21(%arg0: i32) -> (i32, i32) {
    %c0_i32 = arith.constant 0 : i32
    %c0_i32_0 = arith.constant 0 : i32
    %c0_i32_1 = arith.constant 0 : i32
    return %c0_i32, %c0_i32_0 : i32, i32
  }
  func.func @transform_22(%arg0: i32) -> (i32, i32) {
    %c0_i32 = arith.constant 0 : i32
    %c0_i32_0 = arith.constant 0 : i32
    %c0_i32_1 = arith.constant 0 : i32
    return %c0_i32, %c0_i32_0 : i32, i32
  }
  func.func @transform_23(%arg0: i32) -> (i32, i32) {
    %c0_i32 = arith.constant 0 : i32
    %c0_i32_0 = arith.constant 0 : i32
    %c0_i32_1 = arith.constant 0 : i32
    return %c0_i32, %c0_i32_0 : i32, i32
  }
  func.func @transform_24(%arg0: i32) -> (i32, i32) {
    %c0_i32 = arith.constant 0 : i32
    %c0_i32_0 = arith.constant 0 : i32
    %c0_i32_1 = arith.constant 0 : i32
    return %c0_i32, %c0_i32_0 : i32, i32
  }
}

</mosaic_0001>

<llo_original>
// kernel: clip_forward.2
$region0: #{clip_forward.2}
  #allocation0 [shape = 'u32[]', space=smem, size = 0x4, offset = 0x4, fixed_abs, tag = 'smem constant byte address 0x4 - core index']
  #allocation1 [shape = 'u32[144,128]{1,0:T(1,128)}', space=vmem, size = 0x12000, scoped, tag = 'internal scratch']
  #allocation2 [shape = 'f32[16,64]{1,0:T(8,128)}', space=vmem, size = 0x2000, scoped, tag = 'scratch operand']
  %s0 = inlined_call_operand.vmem [shape: f32[16,192], index: 0, kind: input, shape index: {}]
  %s1 = inlined_call_operand.vmem [shape: f32[192,64], index: 1, kind: input, shape index: {}]
  %s2 = inlined_call_operand.vmem [shape: f32[16,64], index: 2, kind: input, shape index: {}]
  %s3 = inlined_call_operand.vmem [shape: f32[1,64], index: 3, kind: input, shape index: {}]
  %s4 = inlined_call_operand.vmem [shape: f32[1,64], index: 4, kind: input, shape index: {}]
  %s5 = inlined_call_operand.vmem [shape: f32[16,16], index: 5, kind: input, shape index: {}]
  %s6 = inlined_call_operand.vmem [shape: f32[2,16], index: 6, kind: input, shape index: {}]
  %s7 = inlined_call_operand.vmem [shape: f32[2,1,64], index: 7, kind: input, shape index: {}]
  %s8 = inlined_call_operand.vmem [shape: f32[2,1,64], index: 8, kind: input, shape index: {}]
  %s9 = inlined_call_operand.vmem [shape: f32[2,1,64,64], index: 9, kind: input, shape index: {}]
  %s10 = inlined_call_operand.vmem [shape: f32[2,1,64,64], index: 10, kind: input, shape index: {}]
  %s11 = inlined_call_operand.vmem [shape: f32[2,1,64,64], index: 11, kind: input, shape index: {}]
  %s12 = inlined_call_operand.vmem [shape: f32[2,1,1,64], index: 12, kind: input, shape index: {}]
  %s13 = inlined_call_operand.vmem [shape: f32[2,1,1,64], index: 13, kind: input, shape index: {}]
  %s14 = inlined_call_operand.vmem [shape: f32[2,1,1,64], index: 14, kind: input, shape index: {}]
  %s15 = inlined_call_operand.vmem [shape: f32[2,1,64,64], index: 15, kind: input, shape index: {}]
  %s16 = inlined_call_operand.vmem [shape: f32[2,1,64], index: 16, kind: input, shape index: {}]
  %s17 = inlined_call_operand.vmem [shape: f32[2,1,64], index: 17, kind: input, shape index: {}]
  %s18 = inlined_call_operand.vmem [shape: f32[2,1,64], index: 18, kind: input, shape index: {}]
  %s19 = inlined_call_operand.vmem [shape: f32[2,64,256], index: 19, kind: input, shape index: {}]
  %s20 = inlined_call_operand.vmem [shape: f32[2,1,256], index: 20, kind: input, shape index: {}]
  %s21 = inlined_call_operand.vmem [shape: f32[2,256,64], index: 21, kind: input, shape index: {}]
  %s22 = inlined_call_operand.vmem [shape: f32[2,1,64], index: 22, kind: input, shape index: {}]
  %s23 = inlined_call_operand.vmem [shape: f32[1,64], index: 23, kind: input, shape index: {}]
  %s24 = inlined_call_operand.vmem [shape: f32[1,64], index: 24, kind: input, shape index: {}]
  %s25 = inlined_call_operand.vmem [shape: f32[64,32], index: 25, kind: input, shape index: {}]
  %s26 = inlined_call_operand.vmem [shape: f32[2,32], index: 26, kind: output, shape index: {}]
  %s27 = sld [smem:[#allocation0]]
  $region145: #{clip_forward.2} parent=0
    _
  %s29 = ssub.s32 1, %s27
  %s30 = scalar_select 0, %s29, %s27
  loop: start=0, step=1, limit=4
  $region2: #{clip_forward.2} parent=0 // loop_pre_header
    _
  $region3: #{clip_forward.2} parent=0 // loop_header
    %s32 = sphi 0, %s36
    %p33 = scmp.ge.s32.totalorder %s32, 4
    %s40 = sphi 0, %s40
    %s42 = sphi 0, %s40
    %s43 = sphi 0, %s42
    %s57 = sphi 0, %s43
    %s61 = sphi 0, %s61
    %s63 = sphi 0, %s61
    %s64 = sphi 0, %s63
    %s78 = sphi 0, %s64
    %s82 = sphi 0, %s82
    %s84 = sphi 0, %s82
    %s85 = sphi 0, %s84
    %s99 = sphi 0, %s85
    %s103 = sphi 0, %s103
    %s105 = sphi 0, %s103
    %s106 = sphi 0, %s105
    %s120 = sphi 0, %s106
    %s124 = sphi 0, %s124
    %s126 = sphi 0, %s124
    %s127 = sphi 0, %s126
    %s141 = sphi 0, %s127
    %s145 = sphi 0, %s145
    %s147 = sphi 0, %s145
    %s148 = sphi 0, %s147
    %s162 = sphi 0, %s148
    %s166 = sphi 0, %s166
    %s168 = sphi 0, %s166
    %s169 = sphi 0, %s168
    %s183 = sphi 0, %s169
    %s189 = sphi 0, %s191
    %s192 = sphi 0, %s189
    %s193 = sphi 0, %s192
    %s209 = sphi 0, %s193
    %s215 = sphi 0, %s217
    %s218 = sphi 0, %s215
    %s219 = sphi 0, %s218
    %s235 = sphi 0, %s219
    %s241 = sphi 0, %s243
    %s244 = sphi 0, %s241
    %s245 = sphi 0, %s244
    %s261 = sphi 0, %s245
    %s267 = sphi 0, %s269
    %s270 = sphi 0, %s267
    %s271 = sphi 0, %s270
    %s287 = sphi 0, %s271
    %s293 = sphi 0, %s295
    %s296 = sphi 0, %s293
    %s297 = sphi 0, %s296
    %s313 = sphi 0, %s297
    %s319 = sphi 0, %s321
    %s322 = sphi 0, %s319
    %s323 = sphi 0, %s322
    %s339 = sphi 0, %s323
    %s345 = sphi 0, %s347
    %s348 = sphi 0, %s345
    %s349 = sphi 0, %s348
    %s365 = sphi 0, %s349
    %s371 = sphi 0, %s373
    %s374 = sphi 0, %s371
    %s375 = sphi 0, %s374
    %s391 = sphi 0, %s375
    %s397 = sphi 0, %s399
    %s400 = sphi 0, %s397
    %s401 = sphi 0, %s400
    %s417 = sphi 0, %s401
    %s423 = sphi 0, %s425
    %s426 = sphi 0, %s423
    %s427 = sphi 0, %s426
    %s443 = sphi 0, %s427
    %s449 = sphi 0, %s451
    %s452 = sphi 0, %s449
    %s453 = sphi 0, %s452
    %s469 = sphi 0, %s453
    %s475 = sphi 0, %s477
    %s478 = sphi 0, %s475
    %s479 = sphi 0, %s478
    %s495 = sphi 0, %s479
    %s501 = sphi 0, %s503
    %s504 = sphi 0, %s501
    %s505 = sphi 0, %s504
    %s521 = sphi 0, %s505
    %s527 = sphi 0, %s529
    %s530 = sphi 0, %s527
    %s531 = sphi 0, %s530
    %s547 = sphi 0, %s531
    %s553 = sphi 0, %s555
    %s556 = sphi 0, %s553
    %s557 = sphi 0, %s556
    %s573 = sphi 0, %s557
    %s579 = sphi 0, %s581
    %s582 = sphi 0, %s579
    %s583 = sphi 0, %s582
    %s599 = sphi 0, %s583
    %s603 = sphi 0, %s603
    %s605 = sphi 0, %s603
    %s606 = sphi 0, %s605
    %s620 = sphi 0, %s606
    %s624 = sphi 0, %s624
    %s626 = sphi 0, %s624
    %s627 = sphi 0, %s626
    %s641 = sphi 0, %s627
    %s645 = sphi 0, %s645
    %s647 = sphi 0, %s645
    %s648 = sphi 0, %s647
    %s662 = sphi 0, %s648
    %s666 = sphi 0, %s666
    %s668 = sphi 0, %s666
    %s669 = sphi 0, %s668
    %s683 = sphi 0, %s669
  $region4: #{clip_forward.2} parent=0 // loop_header_branch
    %35 = sbr.rel (%p33) target = $region8
  $region5: #{clip_forward.2} parent=0 // loop_body
    %s37 = ssub.s32 %s32, 1
    %s38 = ssub.s32 %s32, 2
    %s39 = sadd.s32 %s32, 1
    %s41 = sadd.s32 %s40, 1
    %p44 = scmp.eq.s32.totalorder %s32, 1
    %p45 = scmp.ne.s32.totalorder %s40, %s42
    %p46 = scmp.eq.s32.totalorder %s32, 0
    %p47 = por %p45, %p46
    %p48 = scmp.ne.s32.totalorder %s40, %s42
    %p49 = scmp.eq.s32.totalorder %s37, 1
    %p50 = por %p48, %p49
    %p51 = scmp.ne.s32.totalorder %s42, %s43
    %p52 = scmp.eq.s32.totalorder %s37, 0
    %p53 = por %p51, %p52
    %p54 = scmp.ne.s32.totalorder %s42, %s43
    %p55 = scmp.eq.s32.totalorder %s38, 1
    %p56 = por %p54, %p55
    %p58 = scmp.ne.s32.totalorder %s43, %s57
    %p59 = scmp.eq.s32.totalorder %s38, 0
    %p60 = por %p58, %p59
    %s62 = sadd.s32 %s61, 1
    %p65 = scmp.eq.s32.totalorder %s32, 1
    %p66 = scmp.ne.s32.totalorder %s61, %s63
    %p67 = scmp.eq.s32.totalorder %s32, 0
    %p68 = por %p66, %p67
    %p69 = scmp.ne.s32.totalorder %s61, %s63
    %p70 = scmp.eq.s32.totalorder %s37, 1
    %p71 = por %p69, %p70
    %p72 = scmp.ne.s32.totalorder %s63, %s64
    %p73 = scmp.eq.s32.totalorder %s37, 0
    %p74 = por %p72, %p73
    %p75 = scmp.ne.s32.totalorder %s63, %s64
    %p76 = scmp.eq.s32.totalorder %s38, 1
    %p77 = por %p75, %p76
    %p79 = scmp.ne.s32.totalorder %s64, %s78
    %p80 = scmp.eq.s32.totalorder %s38, 0
    %p81 = por %p79, %p80
    %s83 = sadd.s32 %s82, 1
    %p86 = scmp.eq.s32.totalorder %s32, 1
    %p87 = scmp.ne.s32.totalorder %s82, %s84
    %p88 = scmp.eq.s32.totalorder %s32, 0
    %p89 = por %p87, %p88
    %p90 = scmp.ne.s32.totalorder %s82, %s84
    %p91 = scmp.eq.s32.totalorder %s37, 1
    %p92 = por %p90, %p91
    %p93 = scmp.ne.s32.totalorder %s84, %s85
    %p94 = scmp.eq.s32.totalorder %s37, 0
    %p95 = por %p93, %p94
    %p96 = scmp.ne.s32.totalorder %s84, %s85
    %p97 = scmp.eq.s32.totalorder %s38, 1
    %p98 = por %p96, %p97
    %p100 = scmp.ne.s32.totalorder %s85, %s99
    %p101 = scmp.eq.s32.totalorder %s38, 0
    %p102 = por %p100, %p101
    %s104 = sadd.s32 %s103, 1
    %p107 = scmp.eq.s32.totalorder %s32, 1
    %p108 = scmp.ne.s32.totalorder %s103, %s105
    %p109 = scmp.eq.s32.totalorder %s32, 0
    %p110 = por %p108, %p109
    %p111 = scmp.ne.s32.totalorder %s103, %s105
    %p112 = scmp.eq.s32.totalorder %s37, 1
    %p113 = por %p111, %p112
    %p114 = scmp.ne.s32.totalorder %s105, %s106
    %p115 = scmp.eq.s32.totalorder %s37, 0
    %p116 = por %p114, %p115
    %p117 = scmp.ne.s32.totalorder %s105, %s106
    %p118 = scmp.eq.s32.totalorder %s38, 1
    %p119 = por %p117, %p118
    %p121 = scmp.ne.s32.totalorder %s106, %s120
    %p122 = scmp.eq.s32.totalorder %s38, 0
    %p123 = por %p121, %p122
    %s125 = sadd.s32 %s124, 1
    %p128 = scmp.eq.s32.totalorder %s32, 1
    %p129 = scmp.ne.s32.totalorder %s124, %s126
    %p130 = scmp.eq.s32.totalorder %s32, 0
    %p131 = por %p129, %p130
    %p132 = scmp.ne.s32.totalorder %s124, %s126
    %p133 = scmp.eq.s32.totalorder %s37, 1
    %p134 = por %p132, %p133
    %p135 = scmp.ne.s32.totalorder %s126, %s127
    %p136 = scmp.eq.s32.totalorder %s37, 0
    %p137 = por %p135, %p136
    %p138 = scmp.ne.s32.totalorder %s126, %s127
    %p139 = scmp.eq.s32.totalorder %s38, 1
    %p140 = por %p138, %p139
    %p142 = scmp.ne.s32.totalorder %s127, %s141
    %p143 = scmp.eq.s32.totalorder %s38, 0
    %p144 = por %p142, %p143
    %s146 = sadd.s32 %s145, 1
    %p149 = scmp.eq.s32.totalorder %s32, 1
    %p150 = scmp.ne.s32.totalorder %s145, %s147
    %p151 = scmp.eq.s32.totalorder %s32, 0
    %p152 = por %p150, %p151
    %p153 = scmp.ne.s32.totalorder %s145, %s147
    %p154 = scmp.eq.s32.totalorder %s37, 1
    %p155 = por %p153, %p154
    %p156 = scmp.ne.s32.totalorder %s147, %s148
    %p157 = scmp.eq.s32.totalorder %s37, 0
    %p158 = por %p156, %p157
    %p159 = scmp.ne.s32.totalorder %s147, %s148
    %p160 = scmp.eq.s32.totalorder %s38, 1
    %p161 = por %p159, %p160
    %p163 = scmp.ne.s32.totalorder %s148, %s162
    %p164 = scmp.eq.s32.totalorder %s38, 0
    %p165 = por %p163, %p164
    %s167 = sadd.s32 %s166, 1
    %p170 = scmp.eq.s32.totalorder %s32, 1
    %p171 = scmp.ne.s32.totalorder %s166, %s168
    %p172 = scmp.eq.s32.totalorder %s32, 0
    %p173 = por %p171, %p172
    %p174 = scmp.ne.s32.totalorder %s166, %s168
    %p175 = scmp.eq.s32.totalorder %s37, 1
    %p176 = por %p174, %p175
    %p177 = scmp.ne.s32.totalorder %s168, %s169
    %p178 = scmp.eq.s32.totalorder %s37, 0
    %p179 = por %p177, %p178
    %p180 = scmp.ne.s32.totalorder %s168, %s169
    %p181 = scmp.eq.s32.totalorder %s38, 1
    %p182 = por %p180, %p181
    %p184 = scmp.ne.s32.totalorder %s169, %s183
    %p185 = scmp.eq.s32.totalorder %s38, 0
    %p186 = por %p184, %p185
    %s187 = ssub.s32 %s32, %s39
    %p188 = scmp.eq.s32.totalorder %s187, 0
    %s190 = sadd.s32 %s189, 1
    %s191 = scalar_select %p188, %s189, %s190
    %p194 = pneg %p188
    %p195 = scmp.eq.s32.totalorder %s32, 1
    %p196 = por %p194, %p195
    %p197 = scmp.ne.s32.totalorder %s189, %s192
    %p198 = scmp.eq.s32.totalorder %s32, 0
    %p199 = por %p197, %p198
    %p200 = scmp.ne.s32.totalorder %s189, %s192
    %p201 = scmp.eq.s32.totalorder %s37, 1
    %p202 = por %p200, %p201
    %p203 = scmp.ne.s32.totalorder %s192, %s193
    %p204 = scmp.eq.s32.totalorder %s37, 0
    %p205 = por %p203, %p204
    %p206 = scmp.ne.s32.totalorder %s192, %s193
    %p207 = scmp.eq.s32.totalorder %s38, 1
    %p208 = por %p206, %p207
    %p210 = scmp.ne.s32.totalorder %s193, %s209
    %p211 = scmp.eq.s32.totalorder %s38, 0
    %p212 = por %p210, %p211
    %s213 = ssub.s32 %s32, %s39
    %p214 = scmp.eq.s32.totalorder %s213, 0
    %s216 = sadd.s32 %s215, 1
    %s217 = scalar_select %p214, %s215, %s216
    %p220 = pneg %p214
    %p221 = scmp.eq.s32.totalorder %s32, 1
    %p222 = por %p220, %p221
    %p223 = scmp.ne.s32.totalorder %s215, %s218
    %p224 = scmp.eq.s32.totalorder %s32, 0
    %p225 = por %p223, %p224
    %p226 = scmp.ne.s32.totalorder %s215, %s218
    %p227 = scmp.eq.s32.totalorder %s37, 1
    %p228 = por %p226, %p227
    %p229 = scmp.ne.s32.totalorder %s218, %s219
    %p230 = scmp.eq.s32.totalorder %s37, 0
    %p231 = por %p229, %p230
    %p232 = scmp.ne.s32.totalorder %s218, %s219
    %p233 = scmp.eq.s32.totalorder %s38, 1
    %p234 = por %p232, %p233
    %p236 = scmp.ne.s32.totalorder %s219, %s235
    %p237 = scmp.eq.s32.totalorder %s38, 0
    %p238 = por %p236, %p237
    %s239 = ssub.s32 %s32, %s39
    %p240 = scmp.eq.s32.totalorder %s239, 0
    %s242 = sadd.s32 %s241, 1
    %s243 = scalar_select %p240, %s241, %s242
    %p246 = pneg %p240
    %p247 = scmp.eq.s32.totalorder %s32, 1
    %p248 = por %p246, %p247
    %p249 = scmp.ne.s32.totalorder %s241, %s244
    %p250 = scmp.eq.s32.totalorder %s32, 0
    %p251 = por %p249, %p250
    %p252 = scmp.ne.s32.totalorder %s241, %s244
    %p253 = scmp.eq.s32.totalorder %s37, 1
    %p254 = por %p252, %p253
    %p255 = scmp.ne.s32.totalorder %s244, %s245
    %p256 = scmp.eq.s32.totalorder %s37, 0
    %p257 = por %p255, %p256
    %p258 = scmp.ne.s32.totalorder %s244, %s245
    %p259 = scmp.eq.s32.totalorder %s38, 1
    %p260 = por %p258, %p259
    %p262 = scmp.ne.s32.totalorder %s245, %s261
    %p263 = scmp.eq.s32.totalorder %s38, 0
    %p264 = por %p262, %p263
    %s265 = ssub.s32 %s32, %s39
    %p266 = scmp.eq.s32.totalorder %s265, 0
    %s268 = sadd.s32 %s267, 1
    %s269 = scalar_select %p266, %s267, %s268
    %p272 = pneg %p266
    %p273 = scmp.eq.s32.totalorder %s32, 1
    %p274 = por %p272, %p273
    %p275 = scmp.ne.s32.totalorder %s267, %s270
    %p276 = scmp.eq.s32.totalorder %s32, 0
    %p277 = por %p275, %p276
    %p278 = scmp.ne.s32.totalorder %s267, %s270
    %p279 = scmp.eq.s32.totalorder %s37, 1
    %p280 = por %p278, %p279
    %p281 = scmp.ne.s32.totalorder %s270, %s271
    %p282 = scmp.eq.s32.totalorder %s37, 0
    %p283 = por %p281, %p282
    %p284 = scmp.ne.s32.totalorder %s270, %s271
    %p285 = scmp.eq.s32.totalorder %s38, 1
    %p286 = por %p284, %p285
    %p288 = scmp.ne.s32.totalorder %s271, %s287
    %p289 = scmp.eq.s32.totalorder %s38, 0
    %p290 = por %p288, %p289
    %s291 = ssub.s32 %s32, %s39
    %p292 = scmp.eq.s32.totalorder %s291, 0
    %s294 = sadd.s32 %s293, 1
    %s295 = scalar_select %p292, %s293, %s294
    %p298 = pneg %p292
    %p299 = scmp.eq.s32.totalorder %s32, 1
    %p300 = por %p298, %p299
    %p301 = scmp.ne.s32.totalorder %s293, %s296
    %p302 = scmp.eq.s32.totalorder %s32, 0
    %p303 = por %p301, %p302
    %p304 = scmp.ne.s32.totalorder %s293, %s296
    %p305 = scmp.eq.s32.totalorder %s37, 1
    %p306 = por %p304, %p305
    %p307 = scmp.ne.s32.totalorder %s296, %s297
    %p308 = scmp.eq.s32.totalorder %s37, 0
    %p309 = por %p307, %p308
    %p310 = scmp.ne.s32.totalorder %s296, %s297
    %p311 = scmp.eq.s32.totalorder %s38, 1
    %p312 = por %p310, %p311
    %p314 = scmp.ne.s32.totalorder %s297, %s313
    %p315 = scmp.eq.s32.totalorder %s38, 0
    %p316 = por %p314, %p315
    %s317 = ssub.s32 %s32, %s39
    %p318 = scmp.eq.s32.totalorder %s317, 0
    %s320 = sadd.s32 %s319, 1
    %s321 = scalar_select %p318, %s319, %s320
    %p324 = pneg %p318
    %p325 = scmp.eq.s32.totalorder %s32, 1
    %p326 = por %p324, %p325
    %p327 = scmp.ne.s32.totalorder %s319, %s322
    %p328 = scmp.eq.s32.totalorder %s32, 0
    %p329 = por %p327, %p328
    %p330 = scmp.ne.s32.totalorder %s319, %s322
    %p331 = scmp.eq.s32.totalorder %s37, 1
    %p332 = por %p330, %p331
    %p333 = scmp.ne.s32.totalorder %s322, %s323
    %p334 = scmp.eq.s32.totalorder %s37, 0
    %p335 = por %p333, %p334
    %p336 = scmp.ne.s32.totalorder %s322, %s323
    %p337 = scmp.eq.s32.totalorder %s38, 1
    %p338 = por %p336, %p337
    %p340 = scmp.ne.s32.totalorder %s323, %s339
    %p341 = scmp.eq.s32.totalorder %s38, 0
    %p342 = por %p340, %p341
    %s343 = ssub.s32 %s32, %s39
    %p344 = scmp.eq.s32.totalorder %s343, 0
    %s346 = sadd.s32 %s345, 1
    %s347 = scalar_select %p344, %s345, %s346
    %p350 = pneg %p344
    %p351 = scmp.eq.s32.totalorder %s32, 1
    %p352 = por %p350, %p351
    %p353 = scmp.ne.s32.totalorder %s345, %s348
    %p354 = scmp.eq.s32.totalorder %s32, 0
    %p355 = por %p353, %p354
    %p356 = scmp.ne.s32.totalorder %s345, %s348
    %p357 = scmp.eq.s32.totalorder %s37, 1
    %p358 = por %p356, %p357
    %p359 = scmp.ne.s32.totalorder %s348, %s349
    %p360 = scmp.eq.s32.totalorder %s37, 0
    %p361 = por %p359, %p360
    %p362 = scmp.ne.s32.totalorder %s348, %s349
    %p363 = scmp.eq.s32.totalorder %s38, 1
    %p364 = por %p362, %p363
    %p366 = scmp.ne.s32.totalorder %s349, %s365
    %p367 = scmp.eq.s32.totalorder %s38, 0
    %p368 = por %p366, %p367
    %s369 = ssub.s32 %s32, %s39
    %p370 = scmp.eq.s32.totalorder %s369, 0
    %s372 = sadd.s32 %s371, 1
    %s373 = scalar_select %p370, %s371, %s372
    %p376 = pneg %p370
    %p377 = scmp.eq.s32.totalorder %s32, 1
    %p378 = por %p376, %p377
    %p379 = scmp.ne.s32.totalorder %s371, %s374
    %p380 = scmp.eq.s32.totalorder %s32, 0
    %p381 = por %p379, %p380
    %p382 = scmp.ne.s32.totalorder %s371, %s374
    %p383 = scmp.eq.s32.totalorder %s37, 1
    %p384 = por %p382, %p383
    %p385 = scmp.ne.s32.totalorder %s374, %s375
    %p386 = scmp.eq.s32.totalorder %s37, 0
    %p387 = por %p385, %p386
    %p388 = scmp.ne.s32.totalorder %s374, %s375
    %p389 = scmp.eq.s32.totalorder %s38, 1
    %p390 = por %p388, %p389
    %p392 = scmp.ne.s32.totalorder %s375, %s391
    %p393 = scmp.eq.s32.totalorder %s38, 0
    %p394 = por %p392, %p393
    %s395 = ssub.s32 %s32, %s39
    %p396 = scmp.eq.s32.totalorder %s395, 0
    %s398 = sadd.s32 %s397, 1
    %s399 = scalar_select %p396, %s397, %s398
    %p402 = pneg %p396
    %p403 = scmp.eq.s32.totalorder %s32, 1
    %p404 = por %p402, %p403
    %p405 = scmp.ne.s32.totalorder %s397, %s400
    %p406 = scmp.eq.s32.totalorder %s32, 0
    %p407 = por %p405, %p406
    %p408 = scmp.ne.s32.totalorder %s397, %s400
    %p409 = scmp.eq.s32.totalorder %s37, 1
    %p410 = por %p408, %p409
    %p411 = scmp.ne.s32.totalorder %s400, %s401
    %p412 = scmp.eq.s32.totalorder %s37, 0
    %p413 = por %p411, %p412
    %p414 = scmp.ne.s32.totalorder %s400, %s401
    %p415 = scmp.eq.s32.totalorder %s38, 1
    %p416 = por %p414, %p415
    %p418 = scmp.ne.s32.totalorder %s401, %s417
    %p419 = scmp.eq.s32.totalorder %s38, 0
    %p420 = por %p418, %p419
    %s421 = ssub.s32 %s32, %s39
    %p422 = scmp.eq.s32.totalorder %s421, 0
    %s424 = sadd.s32 %s423, 1
    %s425 = scalar_select %p422, %s423, %s424
    %p428 = pneg %p422
    %p429 = scmp.eq.s32.totalorder %s32, 1
    %p430 = por %p428, %p429
    %p431 = scmp.ne.s32.totalorder %s423, %s426
    %p432 = scmp.eq.s32.totalorder %s32, 0
    %p433 = por %p431, %p432
    %p434 = scmp.ne.s32.totalorder %s423, %s426
    %p435 = scmp.eq.s32.totalorder %s37, 1
    %p436 = por %p434, %p435
    %p437 = scmp.ne.s32.totalorder %s426, %s427
    %p438 = scmp.eq.s32.totalorder %s37, 0
    %p439 = por %p437, %p438
    %p440 = scmp.ne.s32.totalorder %s426, %s427
    %p441 = scmp.eq.s32.totalorder %s38, 1
    %p442 = por %p440, %p441
    %p444 = scmp.ne.s32.totalorder %s427, %s443
    %p445 = scmp.eq.s32.totalorder %s38, 0
    %p446 = por %p444, %p445
    %s447 = ssub.s32 %s32, %s39
    %p448 = scmp.eq.s32.totalorder %s447, 0
    %s450 = sadd.s32 %s449, 1
    %s451 = scalar_select %p448, %s449, %s450
    %p454 = pneg %p448
    %p455 = scmp.eq.s32.totalorder %s32, 1
    %p456 = por %p454, %p455
    %p457 = scmp.ne.s32.totalorder %s449, %s452
    %p458 = scmp.eq.s32.totalorder %s32, 0
    %p459 = por %p457, %p458
    %p460 = scmp.ne.s32.totalorder %s449, %s452
    %p461 = scmp.eq.s32.totalorder %s37, 1
    %p462 = por %p460, %p461
    %p463 = scmp.ne.s32.totalorder %s452, %s453
    %p464 = scmp.eq.s32.totalorder %s37, 0
    %p465 = por %p463, %p464
    %p466 = scmp.ne.s32.totalorder %s452, %s453
    %p467 = scmp.eq.s32.totalorder %s38, 1
    %p468 = por %p466, %p467
    %p470 = scmp.ne.s32.totalorder %s453, %s469
    %p471 = scmp.eq.s32.totalorder %s38, 0
    %p472 = por %p470, %p471
    %s473 = ssub.s32 %s32, %s39
    %p474 = scmp.eq.s32.totalorder %s473, 0
    %s476 = sadd.s32 %s475, 1
    %s477 = scalar_select %p474, %s475, %s476
    %p480 = pneg %p474
    %p481 = scmp.eq.s32.totalorder %s32, 1
    %p482 = por %p480, %p481
    %p483 = scmp.ne.s32.totalorder %s475, %s478
    %p484 = scmp.eq.s32.totalorder %s32, 0
    %p485 = por %p483, %p484
    %p486 = scmp.ne.s32.totalorder %s475, %s478
    %p487 = scmp.eq.s32.totalorder %s37, 1
    %p488 = por %p486, %p487
    %p489 = scmp.ne.s32.totalorder %s478, %s479
    %p490 = scmp.eq.s32.totalorder %s37, 0
    %p491 = por %p489, %p490
    %p492 = scmp.ne.s32.totalorder %s478, %s479
    %p493 = scmp.eq.s32.totalorder %s38, 1
    %p494 = por %p492, %p493
    %p496 = scmp.ne.s32.totalorder %s479, %s495
    %p497 = scmp.eq.s32.totalorder %s38, 0
    %p498 = por %p496, %p497
    %s499 = ssub.s32 %s32, %s39
    %p500 = scmp.eq.s32.totalorder %s499, 0
    %s502 = sadd.s32 %s501, 1
    %s503 = scalar_select %p500, %s501, %s502
    %p506 = pneg %p500
    %p507 = scmp.eq.s32.totalorder %s32, 1
    %p508 = por %p506, %p507
    %p509 = scmp.ne.s32.totalorder %s501, %s504
    %p510 = scmp.eq.s32.totalorder %s32, 0
    %p511 = por %p509, %p510
    %p512 = scmp.ne.s32.totalorder %s501, %s504
    %p513 = scmp.eq.s32.totalorder %s37, 1
    %p514 = por %p512, %p513
    %p515 = scmp.ne.s32.totalorder %s504, %s505
    %p516 = scmp.eq.s32.totalorder %s37, 0
    %p517 = por %p515, %p516
    %p518 = scmp.ne.s32.totalorder %s504, %s505
    %p519 = scmp.eq.s32.totalorder %s38, 1
    %p520 = por %p518, %p519
    %p522 = scmp.ne.s32.totalorder %s505, %s521
    %p523 = scmp.eq.s32.totalorder %s38, 0
    %p524 = por %p522, %p523
    %s525 = ssub.s32 %s32, %s39
    %p526 = scmp.eq.s32.totalorder %s525, 0
    %s528 = sadd.s32 %s527, 1
    %s529 = scalar_select %p526, %s527, %s528
    %p532 = pneg %p526
    %p533 = scmp.eq.s32.totalorder %s32, 1
    %p534 = por %p532, %p533
    %p535 = scmp.ne.s32.totalorder %s527, %s530
    %p536 = scmp.eq.s32.totalorder %s32, 0
    %p537 = por %p535, %p536
    %p538 = scmp.ne.s32.totalorder %s527, %s530
    %p539 = scmp.eq.s32.totalorder %s37, 1
    %p540 = por %p538, %p539
    %p541 = scmp.ne.s32.totalorder %s530, %s531
    %p542 = scmp.eq.s32.totalorder %s37, 0
    %p543 = por %p541, %p542
    %p544 = scmp.ne.s32.totalorder %s530, %s531
    %p545 = scmp.eq.s32.totalorder %s38, 1
    %p546 = por %p544, %p545
    %p548 = scmp.ne.s32.totalorder %s531, %s547
    %p549 = scmp.eq.s32.totalorder %s38, 0
    %p550 = por %p548, %p549
    %s551 = ssub.s32 %s32, %s39
    %p552 = scmp.eq.s32.totalorder %s551, 0
    %s554 = sadd.s32 %s553, 1
    %s555 = scalar_select %p552, %s553, %s554
    %p558 = pneg %p552
    %p559 = scmp.eq.s32.totalorder %s32, 1
    %p560 = por %p558, %p559
    %p561 = scmp.ne.s32.totalorder %s553, %s556
    %p562 = scmp.eq.s32.totalorder %s32, 0
    %p563 = por %p561, %p562
    %p564 = scmp.ne.s32.totalorder %s553, %s556
    %p565 = scmp.eq.s32.totalorder %s37, 1
    %p566 = por %p564, %p565
    %p567 = scmp.ne.s32.totalorder %s556, %s557
    %p568 = scmp.eq.s32.totalorder %s37, 0
    %p569 = por %p567, %p568
    %p570 = scmp.ne.s32.totalorder %s556, %s557
    %p571 = scmp.eq.s32.totalorder %s38, 1
    %p572 = por %p570, %p571
    %p574 = scmp.ne.s32.totalorder %s557, %s573
    %p575 = scmp.eq.s32.totalorder %s38, 0
    %p576 = por %p574, %p575
    %s577 = ssub.s32 %s32, %s39
    %p578 = scmp.eq.s32.totalorder %s577, 0
    %s580 = sadd.s32 %s579, 1
    %s581 = scalar_select %p578, %s579, %s580
    %p584 = pneg %p578
    %p585 = scmp.eq.s32.totalorder %s32, 1
    %p586 = por %p584, %p585
    %p587 = scmp.ne.s32.totalorder %s579, %s582
    %p588 = scmp.eq.s32.totalorder %s32, 0
    %p589 = por %p587, %p588
    %p590 = scmp.ne.s32.totalorder %s579, %s582
    %p591 = scmp.eq.s32.totalorder %s37, 1
    %p592 = por %p590, %p591
    %p593 = scmp.ne.s32.totalorder %s582, %s583
    %p594 = scmp.eq.s32.totalorder %s37, 0
    %p595 = por %p593, %p594
    %p596 = scmp.ne.s32.totalorder %s582, %s583
    %p597 = scmp.eq.s32.totalorder %s38, 1
    %p598 = por %p596, %p597
    %p600 = scmp.ne.s32.totalorder %s583, %s599
    %p601 = scmp.eq.s32.totalorder %s38, 0
    %p602 = por %p600, %p601
    %s604 = sadd.s32 %s603, 1
    %p607 = scmp.eq.s32.totalorder %s32, 1
    %p608 = scmp.ne.s32.totalorder %s603, %s605
    %p609 = scmp.eq.s32.totalorder %s32, 0
    %p610 = por %p608, %p609
    %p611 = scmp.ne.s32.totalorder %s603, %s605
    %p612 = scmp.eq.s32.totalorder %s37, 1
    %p613 = por %p611, %p612
    %p614 = scmp.ne.s32.totalorder %s605, %s606
    %p615 = scmp.eq.s32.totalorder %s37, 0
    %p616 = por %p614, %p615
    %p617 = scmp.ne.s32.totalorder %s605, %s606
    %p618 = scmp.eq.s32.totalorder %s38, 1
    %p619 = por %p617, %p618
    %p621 = scmp.ne.s32.totalorder %s606, %s620
    %p622 = scmp.eq.s32.totalorder %s38, 0
    %p623 = por %p621, %p622
    %s625 = sadd.s32 %s624, 1
    %p628 = scmp.eq.s32.totalorder %s32, 1
    %p629 = scmp.ne.s32.totalorder %s624, %s626
    %p630 = scmp.eq.s32.totalorder %s32, 0
    %p631 = por %p629, %p630
    %p632 = scmp.ne.s32.totalorder %s624, %s626
    %p633 = scmp.eq.s32.totalorder %s37, 1
    %p634 = por %p632, %p633
    %p635 = scmp.ne.s32.totalorder %s626, %s627
    %p636 = scmp.eq.s32.totalorder %s37, 0
    %p637 = por %p635, %p636
    %p638 = scmp.ne.s32.totalorder %s626, %s627
    %p639 = scmp.eq.s32.totalorder %s38, 1
    %p640 = por %p638, %p639
    %p642 = scmp.ne.s32.totalorder %s627, %s641
    %p643 = scmp.eq.s32.totalorder %s38, 0
    %p644 = por %p642, %p643
    %s646 = sadd.s32 %s645, 1
    %p649 = scmp.eq.s32.totalorder %s32, 1
    %p650 = scmp.ne.s32.totalorder %s645, %s647
    %p651 = scmp.eq.s32.totalorder %s32, 0
    %p652 = por %p650, %p651
    %p653 = scmp.ne.s32.totalorder %s645, %s647
    %p654 = scmp.eq.s32.totalorder %s37, 1
    %p655 = por %p653, %p654
    %p656 = scmp.ne.s32.totalorder %s647, %s648
    %p657 = scmp.eq.s32.totalorder %s37, 0
    %p658 = por %p656, %p657
    %p659 = scmp.ne.s32.totalorder %s647, %s648
    %p660 = scmp.eq.s32.totalorder %s38, 1
    %p661 = por %p659, %p660
    %p663 = scmp.ne.s32.totalorder %s648, %s662
    %p664 = scmp.eq.s32.totalorder %s38, 0
    %p665 = por %p663, %p664
    %s667 = sadd.s32 %s666, 1
    %p670 = scmp.eq.s32.totalorder %s32, 1
    %p671 = scmp.ne.s32.totalorder %s666, %s668
    %p672 = scmp.eq.s32.totalorder %s32, 0
    %p673 = por %p671, %p672
    %p674 = scmp.ne.s32.totalorder %s666, %s668
    %p675 = scmp.eq.s32.totalorder %s37, 1
    %p676 = por %p674, %p675
    %p677 = scmp.ne.s32.totalorder %s668, %s669
    %p678 = scmp.eq.s32.totalorder %s37, 0
    %p679 = por %p677, %p678
    %p680 = scmp.ne.s32.totalorder %s668, %s669
    %p681 = scmp.eq.s32.totalorder %s38, 1
    %p682 = por %p680, %p681
    %p684 = scmp.ne.s32.totalorder %s669, %s683
    %p685 = scmp.eq.s32.totalorder %s38, 0
    %p686 = por %p684, %p685
    %p687 = scmp.le.s32.totalorder 1, %s32
    %p688 = scmp.lt.s32.totalorder %s32, 3
    %p689 = pnand %p687, %p688
    %p690 = pneg %p689
    // Predicated region
    $region9: #{clip_forward.2} parent=5 // pred_check
      _
    $region10: #{clip_forward.2} parent=5 // pred_check_branch
      %692 = sbr.rel (%p689) target = $region12
    $region11: #{clip_forward.2} parent=5 // pred_region
      %s693 = ssub.s32 %s32, 1
      // Predicated region
      $region13: #{clip_forward.2} parent=11 // pred_check
        %p694 = pneg %p53
      $region14: #{clip_forward.2} parent=11 // pred_check_branch
        %696 = sbr.rel (%p694) target = $region16
      $region15: #{clip_forward.2} parent=11 // pred_region
        _
      $region16: #{clip_forward.2} parent=11 // pred_fallthru
        _
      // Predicated region
      $region17: #{clip_forward.2} parent=11 // pred_check
        %p697 = pneg %p74
      $region18: #{clip_forward.2} parent=11 // pred_check_branch
        %699 = sbr.rel (%p697) target = $region20
      $region19: #{clip_forward.2} parent=11 // pred_region
        _
      $region20: #{clip_forward.2} parent=11 // pred_fallthru
        _
      // Predicated region
      $region21: #{clip_forward.2} parent=11 // pred_check
        %p700 = pneg %p95
      $region22: #{clip_forward.2} parent=11 // pred_check_branch
        %702 = sbr.rel (%p700) target = $region24
      $region23: #{clip_forward.2} parent=11 // pred_region
        _
      $region24: #{clip_forward.2} parent=11 // pred_fallthru
        _
      // Predicated region
      $region25: #{clip_forward.2} parent=11 // pred_check
        %p703 = pneg %p116
      $region26: #{clip_forward.2} parent=11 // pred_check_branch
        %705 = sbr.rel (%p703) target = $region28
      $region27: #{clip_forward.2} parent=11 // pred_region
        _
      $region28: #{clip_forward.2} parent=11 // pred_fallthru
        _
      // Predicated region
      $region29: #{clip_forward.2} parent=11 // pred_check
        %p706 = pneg %p137
      $region30: #{clip_forward.2} parent=11 // pred_check_branch
        %708 = sbr.rel (%p706) target = $region32
      $region31: #{clip_forward.2} parent=11 // pred_region
        _
      $region32: #{clip_forward.2} parent=11 // pred_fallthru
        _
      // Predicated region
      $region33: #{clip_forward.2} parent=11 // pred_check
        %p709 = pneg %p158
      $region34: #{clip_forward.2} parent=11 // pred_check_branch
        %711 = sbr.rel (%p709) target = $region36
      $region35: #{clip_forward.2} parent=11 // pred_region
        _
      $region36: #{clip_forward.2} parent=11 // pred_fallthru
        _
      // Predicated region
      $region37: #{clip_forward.2} parent=11 // pred_check
        %p712 = pneg %p179
      $region38: #{clip_forward.2} parent=11 // pred_check_branch
        %714 = sbr.rel (%p712) target = $region40
      $region39: #{clip_forward.2} parent=11 // pred_region
        _
      $region40: #{clip_forward.2} parent=11 // pred_fallthru
        _
      // Predicated region
      $region41: #{clip_forward.2} parent=11 // pred_check
        %p715 = pneg %p616
      $region42: #{clip_forward.2} parent=11 // pred_check_branch
        %717 = sbr.rel (%p715) target = $region44
      $region43: #{clip_forward.2} parent=11 // pred_region
        _
      $region44: #{clip_forward.2} parent=11 // pred_fallthru
        _
      // Predicated region
      $region45: #{clip_forward.2} parent=11 // pred_check
        %p718 = pneg %p637
      $region46: #{clip_forward.2} parent=11 // pred_check_branch
        %720 = sbr.rel (%p718) target = $region48
      $region47: #{clip_forward.2} parent=11 // pred_region
        _
      $region48: #{clip_forward.2} parent=11 // pred_fallthru
        _
      // Predicated region
      $region49: #{clip_forward.2} parent=11 // pred_check
        %p721 = pneg %p658
      $region50: #{clip_forward.2} parent=11 // pred_check_branch
        %723 = sbr.rel (%p721) target = $region52
      $region51: #{clip_forward.2} parent=11 // pred_region
        _
      $region52: #{clip_forward.2} parent=11 // pred_fallthru
        _
    $region12: #{clip_forward.2} parent=5 // pred_fallthru
      _
    %p724 = scmp.lt.s32.totalorder %s32, 2
    // Predicated region
    $region53: #{clip_forward.2} parent=5 // pred_check
      %p725 = pneg %p724
    $region54: #{clip_forward.2} parent=5 // pred_check_branch
      %727 = sbr.rel (%p725) target = $region56
    $region55: #{clip_forward.2} parent=5 // pred_region
      // Predicated region
      $region57: #{clip_forward.2} parent=55 // pred_check
        %p728 = pneg %p199
      $region58: #{clip_forward.2} parent=55 // pred_check_branch
        %730 = sbr.rel (%p728) target = $region60
      $region59: #{clip_forward.2} parent=55 // pred_region
        %p731 = scmp.lt.s32.totalorder %s32, 1
        %s732 = scalar_select %p731, %s32, 1
        %s733 = scalar_lea.vmem %s7, %s732
      $region60: #{clip_forward.2} parent=55 // pred_fallthru
        _
      // Predicated region
      $region61: #{clip_forward.2} parent=55 // pred_check
        %p734 = pneg %p225
      $region62: #{clip_forward.2} parent=55 // pred_check_branch
        %736 = sbr.rel (%p734) target = $region64
      $region63: #{clip_forward.2} parent=55 // pred_region
        %p737 = scmp.lt.s32.totalorder %s32, 1
        %s738 = scalar_select %p737, %s32, 1
        %s739 = scalar_lea.vmem %s8, %s738
      $region64: #{clip_forward.2} parent=55 // pred_fallthru
        _
      // Predicated region
      $region65: #{clip_forward.2} parent=55 // pred_check
        %p740 = pneg %p251
      $region66: #{clip_forward.2} parent=55 // pred_check_branch
        %742 = sbr.rel (%p740) target = $region68
      $region67: #{clip_forward.2} parent=55 // pred_region
        %p743 = scmp.lt.s32.totalorder %s32, 1
        %s744 = scalar_select %p743, %s32, 1
        %s745 = smul.addr %s744, 8
        %s746 = smul.addr %s745, 8
        %s747 = scalar_lea.vmem %s9, %s746
      $region68: #{clip_forward.2} parent=55 // pred_fallthru
        _
      // Predicated region
      $region69: #{clip_forward.2} parent=55 // pred_check
        %p748 = pneg %p277
      $region70: #{clip_forward.2} parent=55 // pred_check_branch
        %750 = sbr.rel (%p748) target = $region72
      $region71: #{clip_forward.2} parent=55 // pred_region
        %p751 = scmp.lt.s32.totalorder %s32, 1
        %s752 = scalar_select %p751, %s32, 1
        %s753 = smul.addr %s752, 8
        %s754 = smul.addr %s753, 8
        %s755 = scalar_lea.vmem %s10, %s754
      $region72: #{clip_forward.2} parent=55 // pred_fallthru
        _
      // Predicated region
      $region73: #{clip_forward.2} parent=55 // pred_check
        %p756 = pneg %p303
      $region74: #{clip_forward.2} parent=55 // pred_check_branch
        %758 = sbr.rel (%p756) target = $region76
      $region75: #{clip_forward.2} parent=55 // pred_region
        %p759 = scmp.lt.s32.totalorder %s32, 1
        %s760 = scalar_select %p759, %s32, 1
        %s761 = smul.addr %s760, 8
        %s762 = smul.addr %s761, 8
        %s763 = scalar_lea.vmem %s11, %s762
      $region76: #{clip_forward.2} parent=55 // pred_fallthru
        _
      // Predicated region
      $region77: #{clip_forward.2} parent=55 // pred_check
        %p764 = pneg %p329
      $region78: #{clip_forward.2} parent=55 // pred_check_branch
        %766 = sbr.rel (%p764) target = $region80
      $region79: #{clip_forward.2} parent=55 // pred_region
        %p767 = scmp.lt.s32.totalorder %s32, 1
        %s768 = scalar_select %p767, %s32, 1
        %s769 = scalar_lea.vmem %s12, %s768
      $region80: #{clip_forward.2} parent=55 // pred_fallthru
        _
      // Predicated region
      $region81: #{clip_forward.2} parent=55 // pred_check
        %p770 = pneg %p355
      $region82: #{clip_forward.2} parent=55 // pred_check_branch
        %772 = sbr.rel (%p770) target = $region84
      $region83: #{clip_forward.2} parent=55 // pred_region
        %p773 = scmp.lt.s32.totalorder %s32, 1
        %s774 = scalar_select %p773, %s32, 1
        %s775 = scalar_lea.vmem %s13, %s774
      $region84: #{clip_forward.2} parent=55 // pred_fallthru
        _
      // Predicated region
      $region85: #{clip_forward.2} parent=55 // pred_check
        %p776 = pneg %p381
      $region86: #{clip_forward.2} parent=55 // pred_check_branch
        %778 = sbr.rel (%p776) target = $region88
      $region87: #{clip_forward.2} parent=55 // pred_region
        %p779 = scmp.lt.s32.totalorder %s32, 1
        %s780 = scalar_select %p779, %s32, 1
        %s781 = scalar_lea.vmem %s14, %s780
      $region88: #{clip_forward.2} parent=55 // pred_fallthru
        _
      // Predicated region
      $region89: #{clip_forward.2} parent=55 // pred_check
        %p782 = pneg %p407
      $region90: #{clip_forward.2} parent=55 // pred_check_branch
        %784 = sbr.rel (%p782) target = $region92
      $region91: #{clip_forward.2} parent=55 // pred_region
        %p785 = scmp.lt.s32.totalorder %s32, 1
        %s786 = scalar_select %p785, %s32, 1
        %s787 = smul.addr %s786, 8
        %s788 = smul.addr %s787, 8
        %s789 = scalar_lea.vmem %s15, %s788
      $region92: #{clip_forward.2} parent=55 // pred_fallthru
        _
      // Predicated region
      $region93: #{clip_forward.2} parent=55 // pred_check
        %p790 = pneg %p433
      $region94: #{clip_forward.2} parent=55 // pred_check_branch
        %792 = sbr.rel (%p790) target = $region96
      $region95: #{clip_forward.2} parent=55 // pred_region
        %p793 = scmp.lt.s32.totalorder %s32, 1
        %s794 = scalar_select %p793, %s32, 1
        %s795 = scalar_lea.vmem %s16, %s794
      $region96: #{clip_forward.2} parent=55 // pred_fallthru
        _
      // Predicated region
      $region97: #{clip_forward.2} parent=55 // pred_check
        %p796 = pneg %p459
      $region98: #{clip_forward.2} parent=55 // pred_check_branch
        %798 = sbr.rel (%p796) target = $region100
      $region99: #{clip_forward.2} parent=55 // pred_region
        %p799 = scmp.lt.s32.totalorder %s32, 1
        %s800 = scalar_select %p799, %s32, 1
        %s801 = scalar_lea.vmem %s17, %s800
      $region100: #{clip_forward.2} parent=55 // pred_fallthru
        _
      // Predicated region
      $region101: #{clip_forward.2} parent=55 // pred_check
        %p802 = pneg %p485
      $region102: #{clip_forward.2} parent=55 // pred_check_branch
        %804 = sbr.rel (%p802) target = $region104
      $region103: #{clip_forward.2} parent=55 // pred_region
        %p805 = scmp.lt.s32.totalorder %s32, 1
        %s806 = scalar_select %p805, %s32, 1
        %s807 = scalar_lea.vmem %s18, %s806
      $region104: #{clip_forward.2} parent=55 // pred_fallthru
        _
      // Predicated region
      $region105: #{clip_forward.2} parent=55 // pred_check
        %p808 = pneg %p511
      $region106: #{clip_forward.2} parent=55 // pred_check_branch
        %810 = sbr.rel (%p808) target = $region108
      $region107: #{clip_forward.2} parent=55 // pred_region
        %p811 = scmp.lt.s32.totalorder %s32, 1
        %s812 = scalar_select %p811, %s32, 1
        %s813 = smul.addr %s812, 16
        %s814 = smul.addr %s813, 8
        %s815 = scalar_lea.vmem %s19, %s814
      $region108: #{clip_forward.2} parent=55 // pred_fallthru
        _
      // Predicated region
      $region109: #{clip_forward.2} parent=55 // pred_check
        %p816 = pneg %p537
      $region110: #{clip_forward.2} parent=55 // pred_check_branch
        %818 = sbr.rel (%p816) target = $region112
      $region111: #{clip_forward.2} parent=55 // pred_region
        %p819 = scmp.lt.s32.totalorder %s32, 1
        %s820 = scalar_select %p819, %s32, 1
        %s821 = smul.addr %s820, 2
        %s822 = scalar_lea.vmem %s20, %s821
      $region112: #{clip_forward.2} parent=55 // pred_fallthru
        _
      // Predicated region
      $region113: #{clip_forward.2} parent=55 // pred_check
        %p823 = pneg %p563
      $region114: #{clip_forward.2} parent=55 // pred_check_branch
        %825 = sbr.rel (%p823) target = $region116
      $region115: #{clip_forward.2} parent=55 // pred_region
        %p826 = scmp.lt.s32.totalorder %s32, 1
        %s827 = scalar_select %p826, %s32, 1
        %s828 = smul.addr %s827, 32
        %s829 = smul.addr %s828, 8
        %s830 = scalar_lea.vmem %s21, %s829
      $region116: #{clip_forward.2} parent=55 // pred_fallthru
        _
      // Predicated region
      $region117: #{clip_forward.2} parent=55 // pred_check
        %p831 = pneg %p589
      $region118: #{clip_forward.2} parent=55 // pred_check_branch
        %833 = sbr.rel (%p831) target = $region120
      $region119: #{clip_forward.2} parent=55 // pred_region
        %p834 = scmp.lt.s32.totalorder %s32, 1
        %s835 = scalar_select %p834, %s32, 1
        %s836 = scalar_lea.vmem %s22, %s835
      $region120: #{clip_forward.2} parent=55 // pred_fallthru
        _
    $region56: #{clip_forward.2} parent=5 // pred_fallthru
      _
    %p837 = scmp.le.s32.totalorder 1, %s32
    %p838 = scmp.lt.s32.totalorder %s32, 3
    %p839 = pnand %p837, %p838
    %p840 = pneg %p839
    // Predicated region
    $region121: #{clip_forward.2} parent=5 // pred_check
      _
    $region122: #{clip_forward.2} parent=5 // pred_check_branch
      %842 = sbr.rel (%p839) target = $region124
    $region123: #{clip_forward.2} parent=5 // pred_region
      %s843 = ssub.s32 %s32, 1
      %p844 = pneg %p53
      %p845 = pneg %p50
      %p846 = pneg %p74
      %p847 = pneg %p71
      %p848 = pneg %p95
      %p849 = pneg %p92
      %p850 = pneg %p116
      %p851 = pneg %p113
      %p852 = pneg %p137
      %p853 = pneg %p134
      %p854 = pneg %p158
      %p855 = pneg %p155
      %p856 = pneg %p179
      %p857 = pneg %p176
      %p858 = scmp.lt.s32.totalorder %s37, 1
      %s859 = scalar_select %p858, %s37, 1
      %s860 = scalar_lea.vmem %s7, %s859
      %p861 = pneg %p205
      %p862 = pneg %p202
      %p863 = scmp.lt.s32.totalorder %s37, 1
      %s864 = scalar_select %p863, %s37, 1
      %s865 = scalar_lea.vmem %s8, %s864
      %p866 = pneg %p231
      %p867 = pneg %p228
      %p868 = scmp.lt.s32.totalorder %s37, 1
      %s869 = scalar_select %p868, %s37, 1
      %s870 = smul.addr %s869, 8
      %s871 = smul.addr %s870, 8
      %s872 = scalar_lea.vmem %s9, %s871
      %p873 = pneg %p257
      %p874 = pneg %p254
      %p875 = scmp.lt.s32.totalorder %s37, 1
      %s876 = scalar_select %p875, %s37, 1
      %s877 = smul.addr %s876, 8
      %s878 = smul.addr %s877, 8
      %s879 = scalar_lea.vmem %s10, %s878
      %p880 = pneg %p283
      %p881 = pneg %p280
      %p882 = scmp.lt.s32.totalorder %s37, 1
      %s883 = scalar_select %p882, %s37, 1
      %s884 = smul.addr %s883, 8
      %s885 = smul.addr %s884, 8
      %s886 = scalar_lea.vmem %s11, %s885
      %p887 = pneg %p309
      %p888 = pneg %p306
      %p889 = scmp.lt.s32.totalorder %s37, 1
      %s890 = scalar_select %p889, %s37, 1
      %s891 = scalar_lea.vmem %s12, %s890
      %p892 = pneg %p335
      %p893 = pneg %p332
      %p894 = scmp.lt.s32.totalorder %s37, 1
      %s895 = scalar_select %p894, %s37, 1
      %s896 = scalar_lea.vmem %s13, %s895
      %p897 = pneg %p361
      %p898 = pneg %p358
      %p899 = scmp.lt.s32.totalorder %s37, 1
      %s900 = scalar_select %p899, %s37, 1
      %s901 = scalar_lea.vmem %s14, %s900
      %p902 = pneg %p387
      %p903 = pneg %p384
      %p904 = scmp.lt.s32.totalorder %s37, 1
      %s905 = scalar_select %p904, %s37, 1
      %s906 = smul.addr %s905, 8
      %s907 = smul.addr %s906, 8
      %s908 = scalar_lea.vmem %s15, %s907
      %p909 = pneg %p413
      %p910 = pneg %p410
      %p911 = scmp.lt.s32.totalorder %s37, 1
      %s912 = scalar_select %p911, %s37, 1
      %s913 = scalar_lea.vmem %s16, %s912
      %p914 = pneg %p439
      %p915 = pneg %p436
      %p916 = scmp.lt.s32.totalorder %s37, 1
      %s917 = scalar_select %p916, %s37, 1
      %s918 = scalar_lea.vmem %s17, %s917
      %p919 = pneg %p465
      %p920 = pneg %p462
      %p921 = scmp.lt.s32.totalorder %s37, 1
      %s922 = scalar_select %p921, %s37, 1
      %s923 = scalar_lea.vmem %s18, %s922
      %p924 = pneg %p491
      %p925 = pneg %p488
      %p926 = scmp.lt.s32.totalorder %s37, 1
      %s927 = scalar_select %p926, %s37, 1
      %s928 = smul.addr %s927, 16
      %s929 = smul.addr %s928, 8
      %s930 = scalar_lea.vmem %s19, %s929
      %p931 = pneg %p517
      %p932 = pneg %p514
      %p933 = scmp.lt.s32.totalorder %s37, 1
      %s934 = scalar_select %p933, %s37, 1
      %s935 = smul.addr %s934, 2
      %s936 = scalar_lea.vmem %s20, %s935
      %p937 = pneg %p543
      %p938 = pneg %p540
      %p939 = scmp.lt.s32.totalorder %s37, 1
      %s940 = scalar_select %p939, %s37, 1
      %s941 = smul.addr %s940, 32
      %s942 = smul.addr %s941, 8
      %s943 = scalar_lea.vmem %s21, %s942
      %p944 = pneg %p569
      %p945 = pneg %p566
      %p946 = scmp.lt.s32.totalorder %s37, 1
      %s947 = scalar_select %p946, %s37, 1
      %s948 = scalar_lea.vmem %s22, %s947
      %p949 = pneg %p595
      %p950 = pneg %p592
      %p951 = pneg %p616
      %p952 = pneg %p613
      %p953 = pneg %p637
      %p954 = pneg %p634
      %p955 = pneg %p658
      %p956 = pneg %p655
      %p957 = pneg %p679
      %p958 = pneg %p676
      %p959 = scmp.lt.s32.totalorder %s37, 1
      %s960 = scalar_select %p959, %s37, 1
      %s961 = scalar_lea.vmem %s7, %s960
      %p962 = scmp.lt.s32.totalorder %s37, 1
      %s963 = scalar_select %p962, %s37, 1
      %s964 = scalar_lea.vmem %s8, %s963
      %p965 = scmp.lt.s32.totalorder %s37, 1
      %s966 = scalar_select %p965, %s37, 1
      %s967 = smul.addr %s966, 8
      %s968 = smul.addr %s967, 8
      %s969 = scalar_lea.vmem %s9, %s968
      %p970 = scmp.lt.s32.totalorder %s37, 1
      %s971 = scalar_select %p970, %s37, 1
      %s972 = smul.addr %s971, 8
      %s973 = smul.addr %s972, 8
      %s974 = scalar_lea.vmem %s10, %s973
      %p975 = scmp.lt.s32.totalorder %s37, 1
      %s976 = scalar_select %p975, %s37, 1
      %s977 = smul.addr %s976, 8
      %s978 = smul.addr %s977, 8
      %s979 = scalar_lea.vmem %s11, %s978
      %p980 = scmp.lt.s32.totalorder %s37, 1
      %s981 = scalar_select %p980, %s37, 1
      %s982 = scalar_lea.vmem %s12, %s981
      %p983 = scmp.lt.s32.totalorder %s37, 1
      %s984 = scalar_select %p983, %s37, 1
      %s985 = scalar_lea.vmem %s13, %s984
      %p986 = scmp.lt.s32.totalorder %s37, 1
      %s987 = scalar_select %p986, %s37, 1
      %s988 = scalar_lea.vmem %s14, %s987
      %p989 = scmp.lt.s32.totalorder %s37, 1
      %s990 = scalar_select %p989, %s37, 1
      %s991 = smul.addr %s990, 8
      %s992 = smul.addr %s991, 8
      %s993 = scalar_lea.vmem %s15, %s992
      %p994 = scmp.lt.s32.totalorder %s37, 1
      %s995 = scalar_select %p994, %s37, 1
      %s996 = scalar_lea.vmem %s16, %s995
      %p997 = scmp.lt.s32.totalorder %s37, 1
      %s998 = scalar_select %p997, %s37, 1
      %s999 = scalar_lea.vmem %s17, %s998
      %p1000 = scmp.lt.s32.totalorder %s37, 1
      %s1001 = scalar_select %p1000, %s37, 1
      %s1002 = scalar_lea.vmem %s18, %s1001
      %p1003 = scmp.lt.s32.totalorder %s37, 1
      %s1004 = scalar_select %p1003, %s37, 1
      %s1005 = smul.addr %s1004, 16
      %s1006 = smul.addr %s1005, 8
      %s1007 = scalar_lea.vmem %s19, %s1006
      %p1008 = scmp.lt.s32.totalorder %s37, 1
      %s1009 = scalar_select %p1008, %s37, 1
      %s1010 = smul.addr %s1009, 2
      %s1011 = scalar_lea.vmem %s20, %s1010
      %p1012 = scmp.lt.s32.totalorder %s37, 1
      %s1013 = scalar_select %p1012, %s37, 1
      %s1014 = smul.addr %s1013, 32
      %s1015 = smul.addr %s1014, 8
      %s1016 = scalar_lea.vmem %s21, %s1015
      %p1017 = scmp.lt.s32.totalorder %s37, 1
      %s1018 = scalar_select %p1017, %s37, 1
      %s1019 = scalar_lea.vmem %s22, %s1018
      %p1020 = scmp.eq.s32.totalorder %s37, 0
      // Predicated region
      $region125: #{clip_forward.2} parent=123 // pred_check
        %p1021 = pneg %p1020
      $region126: #{clip_forward.2} parent=123 // pred_check_branch
        %1023 = sbr.rel (%p1021) target = $region128
      $region127: #{clip_forward.2} parent=123 // pred_region
        %v1024 = vld [vmem:[%s0] sm:$0xff]
        %v1025 = vld [vmem:[%s0 + $0x8] sm:$0xff]
        %v1026 = vld [vmem:[%s0 + $0x10] sm:$0xff]
        %v1027 = vld [vmem:[%s0 + $0x18] sm:$0xff]
        %v1028 = vld [vmem:[%s1] sm:$0xff]
        %v1029 = vld [vmem:[%s1 + $0x8] sm:$0xff]
        %v1030 = vld [vmem:[%s1 + $0x10] sm:$0xff]
        %v1031 = vld [vmem:[%s1 + $0x18] sm:$0xff]
        %v1032 = vld [vmem:[%s1 + $0x20] sm:$0xff]
        %v1033 = vld [vmem:[%s1 + $0x28] sm:$0xff]
        %v1034 = vld [vmem:[%s1 + $0x30] sm:$0xff]
        %v1035 = vld [vmem:[%s1 + $0x38] sm:$0xff]
        %v1036 = vld [vmem:[%s1 + $0x40] sm:$0xff]
        %v1037 = vld [vmem:[%s1 + $0x48] sm:$0xff]
        %v1038 = vld [vmem:[%s1 + $0x50] sm:$0xff]
        %v1039 = vld [vmem:[%s1 + $0x58] sm:$0xff]
        %v1040 = vld [vmem:[%s1 + $0x60] sm:$0xff]
        %v1041 = vld [vmem:[%s1 + $0x68] sm:$0xff]
        %v1042 = vld [vmem:[%s1 + $0x70] sm:$0xff]
        %v1043 = vld [vmem:[%s1 + $0x78] sm:$0xff]
        %v1044 = vld [vmem:[%s1 + $0x80] sm:$0xff]
        %v1045 = vld [vmem:[%s1 + $0x88] sm:$0xff]
        %v1046 = vld [vmem:[%s1 + $0x90] sm:$0xff]
        %v1047 = vld [vmem:[%s1 + $0x98] sm:$0xff]
        %v1048 = vld [vmem:[%s1 + $0xa0] sm:$0xff]
        %v1049 = vld [vmem:[%s1 + $0xa8] sm:$0xff]
        %v1050 = vld [vmem:[%s1 + $0xb0] sm:$0xff]
        %v1051 = vld [vmem:[%s1 + $0xb8] sm:$0xff]
        %v1052 = vld [vmem:[%s2] sm:$0xff]
        %v1053 = vld [vmem:[%s2 + $0x8] sm:$0xff]
        %vm1054 = vcmask 523264
        %v1056 = vsel %vm1054, %v1025, 0
        %v1059 = vsel %vm1054, %v1027, 0
        %1061 = vmatprep.subr.mxu0 0.0
        %1062 = vmatpush1.msra.mxu0 %v1028
        %1063 = vmatprep.subr.mxu0 0.0
        %1064 = vmatpush1.msra.mxu0 %v1029
        %1065 = vmatprep.subr.mxu0 0.0
        %1066 = vmatpush1.msra.mxu0 %v1030
        %1067 = vmatprep.subr.mxu0 0.0
        %1068 = vmatpush1.msra.mxu0 %v1031
        %1069 = vmatprep.subr.mxu0 0.0
        %1070 = vmatpush1.msra.mxu0 %v1032
        %1071 = vmatprep.subr.mxu0 0.0
        %1072 = vmatpush1.msra.mxu0 %v1033
        %1073 = vmatprep.subr.mxu0 0.0
        %1074 = vmatpush1.msra.mxu0 %v1034
        %1075 = vmatprep.subr.mxu0 0.0
        %1076 = vmatpush1.msra.mxu0 %v1035
        %1077 = vmatprep.subr.mxu0 0.0
        %1078 = vmatpush1.msra.mxu0 %v1036
        %1079 = vmatprep.subr.mxu0 0.0
        %1080 = vmatpush1.msra.mxu0 %v1037
        %1081 = vmatprep.subr.mxu0 0.0
        %1082 = vmatpush1.msra.mxu0 %v1038
        %1083 = vmatprep.subr.mxu0 0.0
        %1084 = vmatpush1.msra.mxu0 %v1039
        %1085 = vmatprep.subr.mxu0 0.0
        %1086 = vmatpush1.msra.mxu0 %v1040
        %1087 = vmatprep.subr.mxu0 0.0
        %1088 = vmatpush1.msra.mxu0 %v1041
        %1089 = vmatprep.subr.mxu0 0.0
        %1090 = vmatpush1.msra.mxu0 %v1042
        %1091 = vmatprep.subr.mxu0 0.0
        %1092 = vmatpush1.msra.mxu0 %v1043
        %1093 = vmatprep.subr.mxu0 0.0
        %1094 = vmatpush1.msra.mxu0 %v1044
        %1095 = vmatprep.subr.mxu0 0.0
        %1096 = vmatpush1.msra.mxu0 %v1045
        %1097 = vmatprep.subr.mxu0 0.0
        %1098 = vmatpush1.msra.mxu0 %v1046
        %1099 = vmatprep.subr.mxu0 0.0
        %1100 = vmatpush1.msra.mxu0 %v1047
        %1101 = vmatprep.subr.mxu0 0.0
        %1102 = vmatpush1.msra.mxu0 %v1048
        %1103 = vmatprep.subr.mxu0 0.0
        %1104 = vmatpush1.msra.mxu0 %v1049
        %1105 = vmatprep.subr.mxu0 0.0
        %1106 = vmatpush1.msra.mxu0 %v1050
        %1107 = vmatprep.subr.mxu0 0.0
        %1108 = vmatpush1.msra.mxu0 %v1051
        %1109 = vmatprep.subr.mxu0 0.0
        %1110 = vmatpush1.msra.mxu0 0.0
        %1111 = vmatprep.subr.mxu0 0.0
        %1112 = vmatpush1.msra.mxu0 0.0
        %1113 = vmatprep.subr.mxu0 0.0
        %1114 = vmatpush1.msra.mxu0 0.0
        %1115 = vmatprep.subr.mxu0 0.0
        %1116 = vmatpush1.msra.mxu0 0.0
        %1117 = vmatprep.subr.mxu0 0.0
        %1118 = vmatpush1.msra.mxu0 0.0
        %1119 = vmatprep.subr.mxu0 0.0
        %1120 = vmatpush1.msra.mxu0 0.0
        %1121 = vmatprep.subr.mxu0 0.0
        %1122 = vmatpush1.msra.mxu0 0.0
        %1123 = vmatprep.subr.mxu0 0.0
        %1124 = vmatpush1.msra.mxu0 0.0
        %1125 = vmatprep.mubr.f32.mxu0 %v1056
        %1126 = vmatmul.mubr.f32.gmra.mrb[0].mxu0 %v1024
        %v1127 = vpop.f32.mrb[0].mxu0
        %v1128 = vadd.f32 %v1052, %v1127
        %v1129 = vpop.f32.mrb[0].mxu0
        %1130 = vmatprep.mubr.f32.mxu0 %v1059
        %1131 = vmatmul.mubr.f32.gmra.mrb[0].mxu0 %v1026
        %v1132 = vpop.f32.mrb[0].mxu0
        %v1133 = vadd.f32 %v1053, %v1132
        %v1134 = vpop.f32.mrb[0].mxu0
        %1135 = vdwg.mxu0
        %v1136 = vld [vmem:[%s3] sm:$0x1]
        %v1137 = vld [vmem:[%s4] sm:$0x1]
        %v1138 = vsel %vm1054, %v1128, 0.0
        %1139 = vadd.xlane.f32.xlu0 %v1138
        %v1140 = vpop.xlane.xlu0 %1139
        %v1141 = vsel %vm1054, %v1133, 0.0
        %1142 = vadd.xlane.f32.xlu0 %v1141
        %v1143 = vpop.xlane.xlu0 %1142
        %v1144 = vrcp.pop 64.0
        %v1145 = vmul.f32 %v1140, %v1144
        %v1146 = vmul.f32 %v1143, %v1144
        %v1147 = vsub.f32 %v1128, %v1145
        %v1148 = vsub.f32 %v1133, %v1146
        %v1149 = vmul.f32 %v1147, %v1147
        %v1150 = vmul.f32 %v1148, %v1148
        %v1151 = vsel %vm1054, %v1149, 0.0
        %1152 = vadd.xlane.f32.xlu0 %v1151
        %v1153 = vpop.xlane.xlu0 %1152
        %v1154 = vsel %vm1054, %v1150, 0.0
        %1155 = vadd.xlane.f32.xlu0 %v1154
        %v1156 = vpop.xlane.xlu0 %1155
        %v1157 = vmul.f32 %v1153, %v1144
        %v1158 = vmul.f32 %v1156, %v1144
        %v1159 = vadd.f32 %v1157, 1e-05
        %v1160 = vadd.f32 %v1158, 1e-05
        %v1161 = vrsqrt.pop %v1159
        %v1162 = vrsqrt.pop %v1160
        %v1163 = vmul.f32 %v1147, %v1161
        %v1164 = vmul.f32 %v1148, %v1162
        %v1166 = vlaneseq
        %v1167 = vshrl.u32 %v1166, 7
        %v1168 = vsub.s32 0, %v1167
        %v1169 = vrot.slane %v1136, %v1168
        %v1171 = vmul.f32 %v1163, %v1169
        %v1172 = vmul.f32 %v1164, %v1169
        %v1174 = vlaneseq
        %v1175 = vshrl.u32 %v1174, 7
        %v1176 = vsub.s32 0, %v1175
        %v1177 = vrot.slane %v1137, %v1176
        %v1179 = vadd.f32 %v1171, %v1177
        %v1180 = vadd.f32 %v1172, %v1177
        %1181 = vst.msk [vmem:[#allocation2] sm:$0xff] %vm1054, %v1179
        %1182 = vst.msk [vmem:[#allocation2 + $0x8] sm:$0xff] %vm1054, %v1180
      $region128: #{clip_forward.2} parent=123 // pred_fallthru
        _
      %v1183 = vld [vmem:[%s5] sm:$0xff]
      %v1184 = vld [vmem:[%s5 + $0x8] sm:$0xff]
      %v1185 = vld [vmem:[#allocation2] sm:$0xff]
      %v1186 = vld [vmem:[#allocation2 + $0x8] sm:$0xff]
      %v1187 = vld [vmem:[%s961] sm:$0x1]
      %v1188 = vld [vmem:[%s964] sm:$0x1]
      %vm1189 = vcmask 523264
      %v1190 = vsel %vm1189, %v1185, 0.0
      %1191 = vadd.xlane.f32.xlu0 %v1190
      %v1192 = vpop.xlane.xlu0 %1191
      %v1193 = vsel %vm1189, %v1186, 0.0
      %1194 = vadd.xlane.f32.xlu0 %v1193
      %v1195 = vpop.xlane.xlu0 %1194
      %v1196 = vrcp.pop 64.0
      %v1197 = vmul.f32 %v1192, %v1196
      %v1198 = vmul.f32 %v1195, %v1196
      %v1199 = vsub.f32 %v1185, %v1197
      %v1200 = vsub.f32 %v1186, %v1198
      %v1201 = vmul.f32 %v1199, %v1199
      %v1202 = vmul.f32 %v1200, %v1200
      %v1203 = vsel %vm1189, %v1201, 0.0
      %1204 = vadd.xlane.f32.xlu0 %v1203
      %v1205 = vpop.xlane.xlu0 %1204
      %v1206 = vsel %vm1189, %v1202, 0.0
      %1207 = vadd.xlane.f32.xlu0 %v1206
      %v1208 = vpop.xlane.xlu0 %1207
      %v1209 = vmul.f32 %v1205, %v1196
      %v1210 = vmul.f32 %v1208, %v1196
      %v1211 = vadd.f32 %v1209, 1e-05
      %v1212 = vadd.f32 %v1210, 1e-05
      %v1213 = vrsqrt.pop %v1211
      %v1214 = vrsqrt.pop %v1212
      %v1215 = vmul.f32 %v1199, %v1213
      %v1216 = vmul.f32 %v1200, %v1214
      %v1218 = vlaneseq
      %v1219 = vshrl.u32 %v1218, 7
      %v1220 = vsub.s32 0, %v1219
      %v1221 = vrot.slane %v1187, %v1220
      %v1223 = vmul.f32 %v1215, %v1221
      %v1224 = vmul.f32 %v1216, %v1221
      %v1226 = vlaneseq
      %v1227 = vshrl.u32 %v1226, 7
      %v1228 = vsub.s32 0, %v1227
      %v1229 = vrot.slane %v1188, %v1228
      %v1231 = vadd.f32 %v1223, %v1229
      %v1232 = vadd.f32 %v1224, %v1229
      %v1233 = vld [vmem:[%s969] sm:$0xff]
      %v1234 = vld [vmem:[%s969 + $0x8] sm:$0xff]
      %v1235 = vld [vmem:[%s969 + $0x10] sm:$0xff]
      %v1236 = vld [vmem:[%s969 + $0x18] sm:$0xff]
      %v1237 = vld [vmem:[%s969 + $0x20] sm:$0xff]
      %v1238 = vld [vmem:[%s969 + $0x28] sm:$0xff]
      %v1239 = vld [vmem:[%s969 + $0x30] sm:$0xff]
      %v1240 = vld [vmem:[%s969 + $0x38] sm:$0xff]
      %v1241 = vld [vmem:[%s982] sm:$0x1]
      %v1243 = vlaneseq
      %v1244 = vshrl.u32 %v1243, 7
      %v1245 = vsub.s32 0, %v1244
      %v1246 = vrot.slane %v1241, %v1245
      %v1249 = vsel %vm1189, %v1231, 0
      %v1252 = vsel %vm1189, %v1232, 0
      %1254 = vmatprep.subr.mxu0 0.0
      %1255 = vmatpush1.msra.mxu0 %v1233
      %1256 = vmatprep.subr.mxu0 0.0
      %1257 = vmatpush1.msra.mxu0 %v1234
      %1258 = vmatprep.subr.mxu0 0.0
      %1259 = vmatpush1.msra.mxu0 %v1235
      %1260 = vmatprep.subr.mxu0 0.0
      %1261 = vmatpush1.msra.mxu0 %v1236
      %1262 = vmatprep.subr.mxu0 0.0
      %1263 = vmatpush1.msra.mxu0 %v1237
      %1264 = vmatprep.subr.mxu0 0.0
      %1265 = vmatpush1.msra.mxu0 %v1238
      %1266 = vmatprep.subr.mxu0 0.0
      %1267 = vmatpush1.msra.mxu0 %v1239
      %1268 = vmatprep.subr.mxu0 0.0
      %1269 = vmatpush1.msra.mxu0 %v1240
      %1270 = vmatprep.subr.mxu0 0.0
      %1271 = vmatpush1.msra.mxu0 0.0
      %1272 = vmatprep.subr.mxu0 0.0
      %1273 = vmatpush1.msra.mxu0 0.0
      %1274 = vmatprep.subr.mxu0 0.0
      %1275 = vmatpush1.msra.mxu0 0.0
      %1276 = vmatprep.subr.mxu0 0.0
      %1277 = vmatpush1.msra.mxu0 0.0
      %1278 = vmatprep.subr.mxu0 0.0
      %1279 = vmatpush1.msra.mxu0 0.0
      %1280 = vmatprep.subr.mxu0 0.0
      %1281 = vmatpush1.msra.mxu0 0.0
      %1282 = vmatprep.subr.mxu0 0.0
      %1283 = vmatpush1.msra.mxu0 0.0
      %1284 = vmatprep.subr.mxu0 0.0
      %1285 = vmatpush1.msra.mxu0 0.0
      %1286 = vmatprep.subr.mxu0 0.0
      %1287 = vmatpush1.msra.mxu0 0.0
      %1288 = vmatprep.subr.mxu0 0.0
      %1289 = vmatpush1.msra.mxu0 0.0
      %1290 = vmatprep.subr.mxu0 0.0
      %1291 = vmatpush1.msra.mxu0 0.0
      %1292 = vmatprep.subr.mxu0 0.0
      %1293 = vmatpush1.msra.mxu0 0.0
      %1294 = vmatprep.subr.mxu0 0.0
      %1295 = vmatpush1.msra.mxu0 0.0
      %1296 = vmatprep.subr.mxu0 0.0
      %1297 = vmatpush1.msra.mxu0 0.0
      %1298 = vmatprep.subr.mxu0 0.0
      %1299 = vmatpush1.msra.mxu0 0.0
      %1300 = vmatprep.subr.mxu0 0.0
      %1301 = vmatpush1.msra.mxu0 0.0
      %1302 = vmatprep.subr.mxu0 0.0
      %1303 = vmatpush1.msra.mxu0 0.0
      %1304 = vmatprep.subr.mxu0 0.0
      %1305 = vmatpush1.msra.mxu0 0.0
      %1306 = vmatprep.subr.mxu0 0.0
      %1307 = vmatpush1.msra.mxu0 0.0
      %1308 = vmatprep.subr.mxu0 0.0
      %1309 = vmatpush1.msra.mxu0 0.0
      %1310 = vmatprep.subr.mxu0 0.0
      %1311 = vmatpush1.msra.mxu0 0.0
      %1312 = vmatprep.subr.mxu0 0.0
      %1313 = vmatpush1.msra.mxu0 0.0
      %1314 = vmatprep.subr.mxu0 0.0
      %1315 = vmatpush1.msra.mxu0 0.0
      %1316 = vmatprep.subr.mxu0 0.0
      %1317 = vmatpush1.msra.mxu0 0.0
      %1318 = vmatprep.mubr.f32.mxu0 0.0
      %1319 = vmatmul.mubr.f32.gmra.mrb[0].mxu0 %v1249
      %v1320 = vpop.f32.mrb[0].mxu0
      %v1321 = vadd.f32 %v1246, %v1320
      %v1322 = vpop.f32.mrb[0].mxu0
      %1323 = vmatprep.mubr.f32.mxu0 0.0
      %1324 = vmatmul.mubr.f32.gmra.mrb[0].mxu0 %v1252
      %v1325 = vpop.f32.mrb[0].mxu0
      %v1326 = vadd.f32 %v1246, %v1325
      %v1327 = vpop.f32.mrb[0].mxu0
      %1328 = vdwg.mxu0
      %v1329 = vld [vmem:[%s974] sm:$0xff]
      %v1330 = vld [vmem:[%s974 + $0x8] sm:$0xff]
      %v1331 = vld [vmem:[%s974 + $0x10] sm:$0xff]
      %v1332 = vld [vmem:[%s974 + $0x18] sm:$0xff]
      %v1333 = vld [vmem:[%s974 + $0x20] sm:$0xff]
      %v1334 = vld [vmem:[%s974 + $0x28] sm:$0xff]
      %v1335 = vld [vmem:[%s974 + $0x30] sm:$0xff]
      %v1336 = vld [vmem:[%s974 + $0x38] sm:$0xff]
      %v1337 = vld [vmem:[%s985] sm:$0x1]
      %v1339 = vlaneseq
      %v1340 = vshrl.u32 %v1339, 7
      %v1341 = vsub.s32 0, %v1340
      %v1342 = vrot.slane %v1337, %v1341
      %1344 = vmatprep.subr.mxu0 0.0
      %1345 = vmatpush1.msra.mxu0 %v1329
      %1346 = vmatprep.subr.mxu0 0.0
      %1347 = vmatpush1.msra.mxu0 %v1330
      %1348 = vmatprep.subr.mxu0 0.0
      %1349 = vmatpush1.msra.mxu0 %v1331
      %1350 = vmatprep.subr.mxu0 0.0
      %1351 = vmatpush1.msra.mxu0 %v1332
      %1352 = vmatprep.subr.mxu0 0.0
      %1353 = vmatpush1.msra.mxu0 %v1333
      %1354 = vmatprep.subr.mxu0 0.0
      %1355 = vmatpush1.msra.mxu0 %v1334
      %1356 = vmatprep.subr.mxu0 0.0
      %1357 = vmatpush1.msra.mxu0 %v1335
      %1358 = vmatprep.subr.mxu0 0.0
      %1359 = vmatpush1.msra.mxu0 %v1336
      %1360 = vmatprep.subr.mxu0 0.0
      %1361 = vmatpush1.msra.mxu0 0.0
      %1362 = vmatprep.subr.mxu0 0.0
      %1363 = vmatpush1.msra.mxu0 0.0
      %1364 = vmatprep.subr.mxu0 0.0
      %1365 = vmatpush1.msra.mxu0 0.0
      %1366 = vmatprep.subr.mxu0 0.0
      %1367 = vmatpush1.msra.mxu0 0.0
      %1368 = vmatprep.subr.mxu0 0.0
      %1369 = vmatpush1.msra.mxu0 0.0
      %1370 = vmatprep.subr.mxu0 0.0
      %1371 = vmatpush1.msra.mxu0 0.0
      %1372 = vmatprep.subr.mxu0 0.0
      %1373 = vmatpush1.msra.mxu0 0.0
      %1374 = vmatprep.subr.mxu0 0.0
      %1375 = vmatpush1.msra.mxu0 0.0
      %1376 = vmatprep.subr.mxu0 0.0
      %1377 = vmatpush1.msra.mxu0 0.0
      %1378 = vmatprep.subr.mxu0 0.0
      %1379 = vmatpush1.msra.mxu0 0.0
      %1380 = vmatprep.subr.mxu0 0.0
      %1381 = vmatpush1.msra.mxu0 0.0
      %1382 = vmatprep.subr.mxu0 0.0
      %1383 = vmatpush1.msra.mxu0 0.0
      %1384 = vmatprep.subr.mxu0 0.0
      %1385 = vmatpush1.msra.mxu0 0.0
      %1386 = vmatprep.subr.mxu0 0.0
      %1387 = vmatpush1.msra.mxu0 0.0
      %1388 = vmatprep.subr.mxu0 0.0
      %1389 = vmatpush1.msra.mxu0 0.0
      %1390 = vmatprep.subr.mxu0 0.0
      %1391 = vmatpush1.msra.mxu0 0.0
      %1392 = vmatprep.subr.mxu0 0.0
      %1393 = vmatpush1.msra.mxu0 0.0
      %1394 = vmatprep.subr.mxu0 0.0
      %1395 = vmatpush1.msra.mxu0 0.0
      %1396 = vmatprep.subr.mxu0 0.0
      %1397 = vmatpush1.msra.mxu0 0.0
      %1398 = vmatprep.subr.mxu0 0.0
      %1399 = vmatpush1.msra.mxu0 0.0
      %1400 = vmatprep.subr.mxu0 0.0
      %1401 = vmatpush1.msra.mxu0 0.0
      %1402 = vmatprep.subr.mxu0 0.0
      %1403 = vmatpush1.msra.mxu0 0.0
      %1404 = vmatprep.subr.mxu0 0.0
      %1405 = vmatpush1.msra.mxu0 0.0
      %1406 = vmatprep.subr.mxu0 0.0
      %1407 = vmatpush1.msra.mxu0 0.0
      %1408 = vmatprep.mubr.f32.mxu0 0.0
      %1409 = vmatmul.mubr.f32.gmra.mrb[0].mxu0 %v1249
      %v1410 = vpop.f32.mrb[0].mxu0
      %v1411 = vadd.f32 %v1342, %v1410
      %v1412 = vpop.f32.mrb[0].mxu0
      %1413 = vmatprep.mubr.f32.mxu0 0.0
      %1414 = vmatmul.mubr.f32.gmra.mrb[0].mxu0 %v1252
      %v1415 = vpop.f32.mrb[0].mxu0
      %v1416 = vadd.f32 %v1342, %v1415
      %v1417 = vpop.f32.mrb[0].mxu0
      %1418 = vdwg.mxu0
      %v1419 = vld [vmem:[%s979] sm:$0xff]
      %v1420 = vld [vmem:[%s979 + $0x8] sm:$0xff]
      %v1421 = vld [vmem:[%s979 + $0x10] sm:$0xff]
      %v1422 = vld [vmem:[%s979 + $0x18] sm:$0xff]
      %v1423 = vld [vmem:[%s979 + $0x20] sm:$0xff]
      %v1424 = vld [vmem:[%s979 + $0x28] sm:$0xff]
      %v1425 = vld [vmem:[%s979 + $0x30] sm:$0xff]
      %v1426 = vld [vmem:[%s979 + $0x38] sm:$0xff]
      %v1427 = vld [vmem:[%s988] sm:$0x1]
      %v1429 = vlaneseq
      %v1430 = vshrl.u32 %v1429, 7
      %v1431 = vsub.s32 0, %v1430
      %v1432 = vrot.slane %v1427, %v1431
      %1434 = vmatprep.subr.mxu0 0.0
      %1435 = vmatpush1.msra.mxu0 %v1419
      %1436 = vmatprep.subr.mxu0 0.0
      %1437 = vmatpush1.msra.mxu0 %v1420
      %1438 = vmatprep.subr.mxu0 0.0
      %1439 = vmatpush1.msra.mxu0 %v1421
      %1440 = vmatprep.subr.mxu0 0.0
      %1441 = vmatpush1.msra.mxu0 %v1422
      %1442 = vmatprep.subr.mxu0 0.0
      %1443 = vmatpush1.msra.mxu0 %v1423
      %1444 = vmatprep.subr.mxu0 0.0
      %1445 = vmatpush1.msra.mxu0 %v1424
      %1446 = vmatprep.subr.mxu0 0.0
      %1447 = vmatpush1.msra.mxu0 %v1425
      %1448 = vmatprep.subr.mxu0 0.0
      %1449 = vmatpush1.msra.mxu0 %v1426
      %1450 = vmatprep.subr.mxu0 0.0
      %1451 = vmatpush1.msra.mxu0 0.0
      %1452 = vmatprep.subr.mxu0 0.0
      %1453 = vmatpush1.msra.mxu0 0.0
      %1454 = vmatprep.subr.mxu0 0.0
      %1455 = vmatpush1.msra.mxu0 0.0
      %1456 = vmatprep.subr.mxu0 0.0
      %1457 = vmatpush1.msra.mxu0 0.0
      %1458 = vmatprep.subr.mxu0 0.0
      %1459 = vmatpush1.msra.mxu0 0.0
      %1460 = vmatprep.subr.mxu0 0.0
      %1461 = vmatpush1.msra.mxu0 0.0
      %1462 = vmatprep.subr.mxu0 0.0
      %1463 = vmatpush1.msra.mxu0 0.0
      %1464 = vmatprep.subr.mxu0 0.0
      %1465 = vmatpush1.msra.mxu0 0.0
      %1466 = vmatprep.subr.mxu0 0.0
      %1467 = vmatpush1.msra.mxu0 0.0
      %1468 = vmatprep.subr.mxu0 0.0
      %1469 = vmatpush1.msra.mxu0 0.0
      %1470 = vmatprep.subr.mxu0 0.0
      %1471 = vmatpush1.msra.mxu0 0.0
      %1472 = vmatprep.subr.mxu0 0.0
      %1473 = vmatpush1.msra.mxu0 0.0
      %1474 = vmatprep.subr.mxu0 0.0
      %1475 = vmatpush1.msra.mxu0 0.0
      %1476 = vmatprep.subr.mxu0 0.0
      %1477 = vmatpush1.msra.mxu0 0.0
      %1478 = vmatprep.subr.mxu0 0.0
      %1479 = vmatpush1.msra.mxu0 0.0
      %1480 = vmatprep.subr.mxu0 0.0
      %1481 = vmatpush1.msra.mxu0 0.0
      %1482 = vmatprep.subr.mxu0 0.0
      %1483 = vmatpush1.msra.mxu0 0.0
      %1484 = vmatprep.subr.mxu0 0.0
      %1485 = vmatpush1.msra.mxu0 0.0
      %1486 = vmatprep.subr.mxu0 0.0
      %1487 = vmatpush1.msra.mxu0 0.0
      %1488 = vmatprep.subr.mxu0 0.0
      %1489 = vmatpush1.msra.mxu0 0.0
      %1490 = vmatprep.subr.mxu0 0.0
      %1491 = vmatpush1.msra.mxu0 0.0
      %1492 = vmatprep.subr.mxu0 0.0
      %1493 = vmatpush1.msra.mxu0 0.0
      %1494 = vmatprep.subr.mxu0 0.0
      %1495 = vmatpush1.msra.mxu0 0.0
      %1496 = vmatprep.subr.mxu0 0.0
      %1497 = vmatpush1.msra.mxu0 0.0
      %1498 = vmatprep.mubr.f32.mxu0 0.0
      %1499 = vmatmul.mubr.f32.gmra.mrb[0].mxu0 %v1249
      %v1500 = vpop.f32.mrb[0].mxu0
      %v1501 = vadd.f32 %v1432, %v1500
      %v1502 = vpop.f32.mrb[0].mxu0
      %1503 = vmatprep.mubr.f32.mxu0 0.0
      %1504 = vmatmul.mubr.f32.gmra.mrb[0].mxu0 %v1252
      %v1505 = vpop.f32.mrb[0].mxu0
      %v1506 = vadd.f32 %v1432, %v1505
      %v1507 = vpop.f32.mrb[0].mxu0
      %1508 = vdwg.mxu0
      %v1510 = vsel %vm1189, %v1321, 0
      %v1513 = vsel %vm1189, %v1326, 0
      %v1516 = vsel %vm1189, %v1411, 0
      %v1519 = vsel %vm1189, %v1416, 0
      %1521 = vmatprep.subr.mxu0 0.0
      %1522 = vmatpush1.xpose.msra.mxu0 %v1516
      %1523 = vmatprep.subr.mxu0 0.0
      %1524 = vmatpush1.xpose.msra.mxu0 %v1519
      %1525 = vmatprep.subr.mxu0 0.0
      %1526 = vmatpush1.xpose.msra.mxu0 0.0
      %1527 = vmatprep.subr.mxu0 0.0
      %1528 = vmatpush1.xpose.msra.mxu0 0.0
      %1529 = vmatprep.subr.mxu0 0.0
      %1530 = vmatpush1.xpose.msra.mxu0 0.0
      %1531 = vmatprep.subr.mxu0 0.0
      %1532 = vmatpush1.xpose.msra.mxu0 0.0
      %1533 = vmatprep.subr.mxu0 0.0
      %1534 = vmatpush1.xpose.msra.mxu0 0.0
      %1535 = vmatprep.subr.mxu0 0.0
      %1536 = vmatpush1.xpose.msra.mxu0 0.0
      %1537 = vmatprep.subr.mxu0 0.0
      %1538 = vmatpush1.xpose.msra.mxu0 0.0
      %1539 = vmatprep.subr.mxu0 0.0
      %1540 = vmatpush1.xpose.msra.mxu0 0.0
      %1541 = vmatprep.subr.mxu0 0.0
      %1542 = vmatpush1.xpose.msra.mxu0 0.0
      %1543 = vmatprep.subr.mxu0 0.0
      %1544 = vmatpush1.xpose.msra.mxu0 0.0
      %1545 = vmatprep.subr.mxu0 0.0
      %1546 = vmatpush1.xpose.msra.mxu0 0.0
      %1547 = vmatprep.subr.mxu0 0.0
      %1548 = vmatpush1.xpose.msra.mxu0 0.0
      %1549 = vmatprep.subr.mxu0 0.0
      %1550 = vmatpush1.xpose.msra.mxu0 0.0
      %1551 = vmatprep.subr.mxu0 0.0
      %1552 = vmatpush1.xpose.msra.mxu0 0.0
      %1553 = vmatprep.subr.mxu0 0.0
      %1554 = vmatpush1.xpose.msra.mxu0 0.0
      %1555 = vmatprep.subr.mxu0 0.0
      %1556 = vmatpush1.xpose.msra.mxu0 0.0
      %1557 = vmatprep.subr.mxu0 0.0
      %1558 = vmatpush1.xpose.msra.mxu0 0.0
      %1559 = vmatprep.subr.mxu0 0.0
      %1560 = vmatpush1.xpose.msra.mxu0 0.0
      %1561 = vmatprep.subr.mxu0 0.0
      %1562 = vmatpush1.xpose.msra.mxu0 0.0
      %1563 = vmatprep.subr.mxu0 0.0
      %1564 = vmatpush1.xpose.msra.mxu0 0.0
      %1565 = vmatprep.subr.mxu0 0.0
      %1566 = vmatpush1.xpose.msra.mxu0 0.0
      %1567 = vmatprep.subr.mxu0 0.0
      %1568 = vmatpush1.xpose.msra.mxu0 0.0
      %1569 = vmatprep.subr.mxu0 0.0
      %1570 = vmatpush1.xpose.msra.mxu0 0.0
      %1571 = vmatprep.subr.mxu0 0.0
      %1572 = vmatpush1.xpose.msra.mxu0 0.0
      %1573 = vmatprep.subr.mxu0 0.0
      %1574 = vmatpush1.xpose.msra.mxu0 0.0
      %1575 = vmatprep.subr.mxu0 0.0
      %1576 = vmatpush1.xpose.msra.mxu0 0.0
      %1577 = vmatprep.subr.mxu0 0.0
      %1578 = vmatpush1.xpose.msra.mxu0 0.0
      %1579 = vmatprep.subr.mxu0 0.0
      %1580 = vmatpush1.xpose.msra.mxu0 0.0
      %1581 = vmatprep.subr.mxu0 0.0
      %1582 = vmatpush1.xpose.msra.mxu0 0.0
      %1583 = vmatprep.subr.mxu0 0.0
      %1584 = vmatpush1.xpose.msra.mxu0 0.0
      %1585 = vmatprep.mubr.f32.mxu0 0.0
      %1586 = vmatmul.mubr.f32.gmra.mrb[0].mxu0 %v1510
      %v1587 = vpop.f32.mrb[0].mxu0
      %v1588 = vadd.f32 0.0, %v1587
      %v1589 = vpop.f32.mrb[0].mxu0
      %1590 = vmatprep.mubr.f32.mxu0 0.0
      %1591 = vmatmul.mubr.f32.gmra.mrb[0].mxu0 %v1513
      %v1592 = vpop.f32.mrb[0].mxu0
      %v1593 = vadd.f32 0.0, %v1592
      %v1594 = vpop.f32.mrb[0].mxu0
      %1595 = vdwg.mxu0
      %v1596 = vmul.f32 %v1588, 0.125
      %v1597 = vmul.f32 %v1593, 0.125
      %v1598 = vadd.f32 %v1596, %v1183
      %v1599 = vadd.f32 %v1597, %v1184
      %vm1600 = vcmask 130048
      %v1601 = vsel %vm1600, %v1598, -inf
      %1602 = vmax.xlane.f32.xlu0 %v1601
      %v1603 = vpop.xlane.xlu0 %1602
      %v1604 = vsel %vm1600, %v1599, -inf
      %1605 = vmax.xlane.f32.xlu0 %v1604
      %v1606 = vpop.xlane.xlu0 %1605
      %v1607 = vsub.f32 %v1598, %v1603
      %v1608 = vsub.f32 %v1599, %v1606
      %v1609 = vmul.f32 %v1607, 1.442695
      %v1610 = vpow.pop %v1609
      %v1611 = vmul.f32 %v1608, 1.442695
      %v1612 = vpow.pop %v1611
      %v1613 = vsel %vm1600, %v1610, 0.0
      %1614 = vadd.xlane.f32.xlu0 %v1613
      %v1615 = vpop.xlane.xlu0 %1614
      %v1616 = vsel %vm1600, %v1612, 0.0
      %1617 = vadd.xlane.f32.xlu0 %v1616
      %v1618 = vpop.xlane.xlu0 %1617
      %v1619 = vrcp.pop %v1615
      %v1620 = vrcp.pop %v1618
      %v1621 = vmul.f32 %v1610, %v1619
      %v1622 = vmul.f32 %v1612, %v1620
      %v1624 = vsel %vm1600, %v1621, 0
      %v1627 = vsel %vm1600, %v1622, 0
      %1629 = vmatprep.subr.mxu0 0.0
      %1630 = vmatpush1.msra.mxu0 %v1501
      %1631 = vmatprep.subr.mxu0 0.0
      %1632 = vmatpush1.msra.mxu0 %v1506
      %1633 = vmatprep.subr.mxu0 0.0
      %1634 = vmatpush1.msra.mxu0 0.0
      %1635 = vmatprep.subr.mxu0 0.0
      %1636 = vmatpush1.msra.mxu0 0.0
      %1637 = vmatprep.subr.mxu0 0.0
      %1638 = vmatpush1.msra.mxu0 0.0
      %1639 = vmatprep.subr.mxu0 0.0
      %1640 = vmatpush1.msra.mxu0 0.0
      %1641 = vmatprep.subr.mxu0 0.0
      %1642 = vmatpush1.msra.mxu0 0.0
      %1643 = vmatprep.subr.mxu0 0.0
      %1644 = vmatpush1.msra.mxu0 0.0
      %1645 = vmatprep.subr.mxu0 0.0
      %1646 = vmatpush1.msra.mxu0 0.0
      %1647 = vmatprep.subr.mxu0 0.0
      %1648 = vmatpush1.msra.mxu0 0.0
      %1649 = vmatprep.subr.mxu0 0.0
      %1650 = vmatpush1.msra.mxu0 0.0
      %1651 = vmatprep.subr.mxu0 0.0
      %1652 = vmatpush1.msra.mxu0 0.0
      %1653 = vmatprep.subr.mxu0 0.0
      %1654 = vmatpush1.msra.mxu0 0.0
      %1655 = vmatprep.subr.mxu0 0.0
      %1656 = vmatpush1.msra.mxu0 0.0
      %1657 = vmatprep.subr.mxu0 0.0
      %1658 = vmatpush1.msra.mxu0 0.0
      %1659 = vmatprep.subr.mxu0 0.0
      %1660 = vmatpush1.msra.mxu0 0.0
      %1661 = vmatprep.subr.mxu0 0.0
      %1662 = vmatpush1.msra.mxu0 0.0
      %1663 = vmatprep.subr.mxu0 0.0
      %1664 = vmatpush1.msra.mxu0 0.0
      %1665 = vmatprep.subr.mxu0 0.0
      %1666 = vmatpush1.msra.mxu0 0.0
      %1667 = vmatprep.subr.mxu0 0.0
      %1668 = vmatpush1.msra.mxu0 0.0
      %1669 = vmatprep.subr.mxu0 0.0
      %1670 = vmatpush1.msra.mxu0 0.0
      %1671 = vmatprep.subr.mxu0 0.0
      %1672 = vmatpush1.msra.mxu0 0.0
      %1673 = vmatprep.subr.mxu0 0.0
      %1674 = vmatpush1.msra.mxu0 0.0
      %1675 = vmatprep.subr.mxu0 0.0
      %1676 = vmatpush1.msra.mxu0 0.0
      %1677 = vmatprep.subr.mxu0 0.0
      %1678 = vmatpush1.msra.mxu0 0.0
      %1679 = vmatprep.subr.mxu0 0.0
      %1680 = vmatpush1.msra.mxu0 0.0
      %1681 = vmatprep.subr.mxu0 0.0
      %1682 = vmatpush1.msra.mxu0 0.0
      %1683 = vmatprep.subr.mxu0 0.0
      %1684 = vmatpush1.msra.mxu0 0.0
      %1685 = vmatprep.subr.mxu0 0.0
      %1686 = vmatpush1.msra.mxu0 0.0
      %1687 = vmatprep.subr.mxu0 0.0
      %1688 = vmatpush1.msra.mxu0 0.0
      %1689 = vmatprep.subr.mxu0 0.0
      %1690 = vmatpush1.msra.mxu0 0.0
      %1691 = vmatprep.subr.mxu0 0.0
      %1692 = vmatpush1.msra.mxu0 0.0
      %1693 = vmatprep.mubr.f32.mxu0 0.0
      %1694 = vmatmul.mubr.f32.gmra.mrb[0].mxu0 %v1624
      %v1695 = vpop.f32.mrb[0].mxu0
      %v1696 = vadd.f32 0.0, %v1695
      %v1697 = vpop.f32.mrb[0].mxu0
      %1698 = vmatprep.mubr.f32.mxu0 0.0
      %1699 = vmatmul.mubr.f32.gmra.mrb[0].mxu0 %v1627
      %v1700 = vpop.f32.mrb[0].mxu0
      %v1701 = vadd.f32 0.0, %v1700
      %v1702 = vpop.f32.mrb[0].mxu0
      %1703 = vdwg.mxu0
      %v1704 = vld [vmem:[%s993] sm:$0xff]
      %v1705 = vld [vmem:[%s993 + $0x8] sm:$0xff]
      %v1706 = vld [vmem:[%s993 + $0x10] sm:$0xff]
      %v1707 = vld [vmem:[%s993 + $0x18] sm:$0xff]
      %v1708 = vld [vmem:[%s993 + $0x20] sm:$0xff]
      %v1709 = vld [vmem:[%s993 + $0x28] sm:$0xff]
      %v1710 = vld [vmem:[%s993 + $0x30] sm:$0xff]
      %v1711 = vld [vmem:[%s993 + $0x38] sm:$0xff]
      %v1713 = vsel %vm1189, %v1696, 0
      %v1716 = vsel %vm1189, %v1701, 0
      %1718 = vmatprep.subr.mxu0 0.0
      %1719 = vmatpush1.msra.mxu0 %v1704
      %1720 = vmatprep.subr.mxu0 0.0
      %1721 = vmatpush1.msra.mxu0 %v1705
      %1722 = vmatprep.subr.mxu0 0.0
      %1723 = vmatpush1.msra.mxu0 %v1706
      %1724 = vmatprep.subr.mxu0 0.0
      %1725 = vmatpush1.msra.mxu0 %v1707
      %1726 = vmatprep.subr.mxu0 0.0
      %1727 = vmatpush1.msra.mxu0 %v1708
      %1728 = vmatprep.subr.mxu0 0.0
      %1729 = vmatpush1.msra.mxu0 %v1709
      %1730 = vmatprep.subr.mxu0 0.0
      %1731 = vmatpush1.msra.mxu0 %v1710
      %1732 = vmatprep.subr.mxu0 0.0
      %1733 = vmatpush1.msra.mxu0 %v1711
      %1734 = vmatprep.subr.mxu0 0.0
      %1735 = vmatpush1.msra.mxu0 0.0
      %1736 = vmatprep.subr.mxu0 0.0
      %1737 = vmatpush1.msra.mxu0 0.0
      %1738 = vmatprep.subr.mxu0 0.0
      %1739 = vmatpush1.msra.mxu0 0.0
      %1740 = vmatprep.subr.mxu0 0.0
      %1741 = vmatpush1.msra.mxu0 0.0
      %1742 = vmatprep.subr.mxu0 0.0
      %1743 = vmatpush1.msra.mxu0 0.0
      %1744 = vmatprep.subr.mxu0 0.0
      %1745 = vmatpush1.msra.mxu0 0.0
      %1746 = vmatprep.subr.mxu0 0.0
      %1747 = vmatpush1.msra.mxu0 0.0
      %1748 = vmatprep.subr.mxu0 0.0
      %1749 = vmatpush1.msra.mxu0 0.0
      %1750 = vmatprep.subr.mxu0 0.0
      %1751 = vmatpush1.msra.mxu0 0.0
      %1752 = vmatprep.subr.mxu0 0.0
      %1753 = vmatpush1.msra.mxu0 0.0
      %1754 = vmatprep.subr.mxu0 0.0
      %1755 = vmatpush1.msra.mxu0 0.0
      %1756 = vmatprep.subr.mxu0 0.0
      %1757 = vmatpush1.msra.mxu0 0.0
      %1758 = vmatprep.subr.mxu0 0.0
      %1759 = vmatpush1.msra.mxu0 0.0
      %1760 = vmatprep.subr.mxu0 0.0
      %1761 = vmatpush1.msra.mxu0 0.0
      %1762 = vmatprep.subr.mxu0 0.0
      %1763 = vmatpush1.msra.mxu0 0.0
      %1764 = vmatprep.subr.mxu0 0.0
      %1765 = vmatpush1.msra.mxu0 0.0
      %1766 = vmatprep.subr.mxu0 0.0
      %1767 = vmatpush1.msra.mxu0 0.0
      %1768 = vmatprep.subr.mxu0 0.0
      %1769 = vmatpush1.msra.mxu0 0.0
      %1770 = vmatprep.subr.mxu0 0.0
      %1771 = vmatpush1.msra.mxu0 0.0
      %1772 = vmatprep.subr.mxu0 0.0
      %1773 = vmatpush1.msra.mxu0 0.0
      %1774 = vmatprep.subr.mxu0 0.0
      %1775 = vmatpush1.msra.mxu0 0.0
      %1776 = vmatprep.subr.mxu0 0.0
      %1777 = vmatpush1.msra.mxu0 0.0
      %1778 = vmatprep.subr.mxu0 0.0
      %1779 = vmatpush1.msra.mxu0 0.0
      %1780 = vmatprep.subr.mxu0 0.0
      %1781 = vmatpush1.msra.mxu0 0.0
      %1782 = vmatprep.mubr.f32.mxu0 0.0
      %1783 = vmatmul.mubr.f32.gmra.mrb[0].mxu0 %v1713
      %v1784 = vpop.f32.mrb[0].mxu0
      %v1785 = vadd.f32 0.0, %v1784
      %v1786 = vpop.f32.mrb[0].mxu0
      %1787 = vmatprep.mubr.f32.mxu0 0.0
      %1788 = vmatmul.mubr.f32.gmra.mrb[0].mxu0 %v1716
      %v1789 = vpop.f32.mrb[0].mxu0
      %v1790 = vadd.f32 0.0, %v1789
      %v1791 = vpop.f32.mrb[0].mxu0
      %1792 = vdwg.mxu0
      %v1793 = vadd.f32 %v1185, %v1785
      %v1794 = vadd.f32 %v1186, %v1790
      %v1795 = vld [vmem:[%s996] sm:$0x1]
      %v1797 = vlaneseq
      %v1798 = vshrl.u32 %v1797, 7
      %v1799 = vsub.s32 0, %v1798
      %v1800 = vrot.slane %v1795, %v1799
      %v1802 = vadd.f32 %v1793, %v1800
      %v1803 = vadd.f32 %v1794, %v1800
      %v1804 = vld [vmem:[%s999] sm:$0x1]
      %v1805 = vld [vmem:[%s1002] sm:$0x1]
      %v1806 = vsel %vm1189, %v1802, 0.0
      %1807 = vadd.xlane.f32.xlu0 %v1806
      %v1808 = vpop.xlane.xlu0 %1807
      %v1809 = vsel %vm1189, %v1803, 0.0
      %1810 = vadd.xlane.f32.xlu0 %v1809
      %v1811 = vpop.xlane.xlu0 %1810
      %v1812 = vmul.f32 %v1808, %v1196
      %v1813 = vmul.f32 %v1811, %v1196
      %v1814 = vsub.f32 %v1802, %v1812
      %v1815 = vsub.f32 %v1803, %v1813
      %v1816 = vmul.f32 %v1814, %v1814
      %v1817 = vmul.f32 %v1815, %v1815
      %v1818 = vsel %vm1189, %v1816, 0.0
      %1819 = vadd.xlane.f32.xlu0 %v1818
      %v1820 = vpop.xlane.xlu0 %1819
      %v1821 = vsel %vm1189, %v1817, 0.0
      %1822 = vadd.xlane.f32.xlu0 %v1821
      %v1823 = vpop.xlane.xlu0 %1822
      %v1824 = vmul.f32 %v1820, %v1196
      %v1825 = vmul.f32 %v1823, %v1196
      %v1826 = vadd.f32 %v1824, 1e-05
      %v1827 = vadd.f32 %v1825, 1e-05
      %v1828 = vrsqrt.pop %v1826
      %v1829 = vrsqrt.pop %v1827
      %v1830 = vmul.f32 %v1814, %v1828
      %v1831 = vmul.f32 %v1815, %v1829
      %v1833 = vlaneseq
      %v1834 = vshrl.u32 %v1833, 7
      %v1835 = vsub.s32 0, %v1834
      %v1836 = vrot.slane %v1804, %v1835
      %v1838 = vmul.f32 %v1830, %v1836
      %v1839 = vmul.f32 %v1831, %v1836
      %v1841 = vlaneseq
      %v1842 = vshrl.u32 %v1841, 7
      %v1843 = vsub.s32 0, %v1842
      %v1844 = vrot.slane %v1805, %v1843
      %v1846 = vadd.f32 %v1838, %v1844
      %v1847 = vadd.f32 %v1839, %v1844
      %v1848 = vld [vmem:[%s1007] sm:$0xff]
      %v1849 = vld [vmem:[%s1007 + $0x8] sm:$0xff]
      %v1850 = vld [vmem:[%s1007 + $0x10] sm:$0xff]
      %v1851 = vld [vmem:[%s1007 + $0x18] sm:$0xff]
      %v1852 = vld [vmem:[%s1007 + $0x20] sm:$0xff]
      %v1853 = vld [vmem:[%s1007 + $0x28] sm:$0xff]
      %v1854 = vld [vmem:[%s1007 + $0x30] sm:$0xff]
      %v1855 = vld [vmem:[%s1007 + $0x38] sm:$0xff]
      %v1856 = vld [vmem:[%s1007 + $0x40] sm:$0xff]
      %v1857 = vld [vmem:[%s1007 + $0x48] sm:$0xff]
      %v1858 = vld [vmem:[%s1007 + $0x50] sm:$0xff]
      %v1859 = vld [vmem:[%s1007 + $0x58] sm:$0xff]
      %v1860 = vld [vmem:[%s1007 + $0x60] sm:$0xff]
      %v1861 = vld [vmem:[%s1007 + $0x68] sm:$0xff]
      %v1862 = vld [vmem:[%s1007 + $0x70] sm:$0xff]
      %v1863 = vld [vmem:[%s1007 + $0x78] sm:$0xff]
      %v1864 = vld [vmem:[%s1011] sm:$0x3]
      %v1866 = vlaneseq
      %v1867 = vshrl.u32 %v1866, 7
      %v1868 = vsub.s32 0, %v1867
      %v1869 = vrot.slane %v1864, %v1868
      %v1870 = vlaneseq
      %v1871 = vshrl.u32 %v1870, 7
      %v1872 = vsub.s32 1, %v1871
      %v1873 = vrot.slane %v1864, %v1872
      %v1877 = vsel %vm1189, %v1846, 0
      %v1880 = vsel %vm1189, %v1847, 0
      %1882 = vmatprep.subr.mxu0 %v1849
      %1883 = vmatpush1.msra.mxu0 %v1848
      %1884 = vmatprep.subr.mxu0 %v1851
      %1885 = vmatpush1.msra.mxu0 %v1850
      %1886 = vmatprep.subr.mxu0 %v1853
      %1887 = vmatpush1.msra.mxu0 %v1852
      %1888 = vmatprep.subr.mxu0 %v1855
      %1889 = vmatpush1.msra.mxu0 %v1854
      %1890 = vmatprep.subr.mxu0 %v1857
      %1891 = vmatpush1.msra.mxu0 %v1856
      %1892 = vmatprep.subr.mxu0 %v1859
      %1893 = vmatpush1.msra.mxu0 %v1858
      %1894 = vmatprep.subr.mxu0 %v1861
      %1895 = vmatpush1.msra.mxu0 %v1860
      %1896 = vmatprep.subr.mxu0 %v1863
      %1897 = vmatpush1.msra.mxu0 %v1862
      %1898 = vmatprep.subr.mxu0 0.0
      %1899 = vmatpush1.msra.mxu0 0.0
      %1900 = vmatprep.subr.mxu0 0.0
      %1901 = vmatpush1.msra.mxu0 0.0
      %1902 = vmatprep.subr.mxu0 0.0
      %1903 = vmatpush1.msra.mxu0 0.0
      %1904 = vmatprep.subr.mxu0 0.0
      %1905 = vmatpush1.msra.mxu0 0.0
      %1906 = vmatprep.subr.mxu0 0.0
      %1907 = vmatpush1.msra.mxu0 0.0
      %1908 = vmatprep.subr.mxu0 0.0
      %1909 = vmatpush1.msra.mxu0 0.0
      %1910 = vmatprep.subr.mxu0 0.0
      %1911 = vmatpush1.msra.mxu0 0.0
      %1912 = vmatprep.subr.mxu0 0.0
      %1913 = vmatpush1.msra.mxu0 0.0
      %1914 = vmatprep.subr.mxu0 0.0
      %1915 = vmatpush1.msra.mxu0 0.0
      %1916 = vmatprep.subr.mxu0 0.0
      %1917 = vmatpush1.msra.mxu0 0.0
      %1918 = vmatprep.subr.mxu0 0.0
      %1919 = vmatpush1.msra.mxu0 0.0
      %1920 = vmatprep.subr.mxu0 0.0
      %1921 = vmatpush1.msra.mxu0 0.0
      %1922 = vmatprep.subr.mxu0 0.0
      %1923 = vmatpush1.msra.mxu0 0.0
      %1924 = vmatprep.subr.mxu0 0.0
      %1925 = vmatpush1.msra.mxu0 0.0
      %1926 = vmatprep.subr.mxu0 0.0
      %1927 = vmatpush1.msra.mxu0 0.0
      %1928 = vmatprep.subr.mxu0 0.0
      %1929 = vmatpush1.msra.mxu0 0.0
      %1930 = vmatprep.subr.mxu0 0.0
      %1931 = vmatpush1.msra.mxu0 0.0
      %1932 = vmatprep.subr.mxu0 0.0
      %1933 = vmatpush1.msra.mxu0 0.0
      %1934 = vmatprep.subr.mxu0 0.0
      %1935 = vmatpush1.msra.mxu0 0.0
      %1936 = vmatprep.subr.mxu0 0.0
      %1937 = vmatpush1.msra.mxu0 0.0
      %1938 = vmatprep.subr.mxu0 0.0
      %1939 = vmatpush1.msra.mxu0 0.0
      %1940 = vmatprep.subr.mxu0 0.0
      %1941 = vmatpush1.msra.mxu0 0.0
      %1942 = vmatprep.subr.mxu0 0.0
      %1943 = vmatpush1.msra.mxu0 0.0
      %1944 = vmatprep.subr.mxu0 0.0
      %1945 = vmatpush1.msra.mxu0 0.0
      %1946 = vmatprep.mubr.f32.mxu0 0.0
      %1947 = vmatmul.mubr.f32.gmra.mrb[0].mxu0 %v1877
      %v1948 = vpop.f32.mrb[0].mxu0
      %v1949 = vadd.f32 %v1869, %v1948
      %v1950 = vpop.f32.mrb[0].mxu0
      %v1951 = vadd.f32 %v1873, %v1950
      %1952 = vmatprep.mubr.f32.mxu0 0.0
      %1953 = vmatmul.mubr.f32.gmra.mrb[0].mxu0 %v1880
      %v1954 = vpop.f32.mrb[0].mxu0
      %v1955 = vadd.f32 %v1869, %v1954
      %v1956 = vpop.f32.mrb[0].mxu0
      %v1957 = vadd.f32 %v1873, %v1956
      %1958 = vdwg.mxu0
      %v1959 = vmul.f32 %v1949, 1.702
      %v1960 = vmul.f32 %v1951, 1.702
      %v1961 = vmul.f32 %v1955, 1.702
      %v1962 = vmul.f32 %v1957, 1.702
      %v1963 = vxor.u32 %v1959, 2147483648
      %v1964 = vxor.u32 %v1960, 2147483648
      %v1965 = vxor.u32 %v1961, 2147483648
      %v1966 = vxor.u32 %v1962, 2147483648
      %v1967 = vmul.f32 %v1963, 1.442695
      %v1968 = vpow.pop %v1967
      %v1969 = vmul.f32 %v1964, 1.442695
      %v1970 = vpow.pop %v1969
      %v1971 = vmul.f32 %v1965, 1.442695
      %v1972 = vpow.pop %v1971
      %v1973 = vmul.f32 %v1966, 1.442695
      %v1974 = vpow.pop %v1973
      %v1975 = vadd.f32 %v1968, 1.0
      %v1976 = vadd.f32 %v1970, 1.0
      %v1977 = vadd.f32 %v1972, 1.0
      %v1978 = vadd.f32 %v1974, 1.0
      %v1979 = vrcp.pop %v1975
      %v1980 = vmul.f32 1.0, %v1979
      %v1981 = vrcp.pop %v1976
      %v1982 = vmul.f32 1.0, %v1981
      %v1983 = vrcp.pop %v1977
      %v1984 = vmul.f32 1.0, %v1983
      %v1985 = vrcp.pop %v1978
      %v1986 = vmul.f32 1.0, %v1985
      %v1987 = vmul.f32 %v1949, %v1980
      %v1988 = vmul.f32 %v1951, %v1982
      %v1989 = vmul.f32 %v1955, %v1984
      %v1990 = vmul.f32 %v1957, %v1986
      %v1991 = vld [vmem:[%s1016] sm:$0xff]
      %v1992 = vld [vmem:[%s1016 + $0x8] sm:$0xff]
      %v1993 = vld [vmem:[%s1016 + $0x10] sm:$0xff]
      %v1994 = vld [vmem:[%s1016 + $0x18] sm:$0xff]
      %v1995 = vld [vmem:[%s1016 + $0x20] sm:$0xff]
      %v1996 = vld [vmem:[%s1016 + $0x28] sm:$0xff]
      %v1997 = vld [vmem:[%s1016 + $0x30] sm:$0xff]
      %v1998 = vld [vmem:[%s1016 + $0x38] sm:$0xff]
      %v1999 = vld [vmem:[%s1016 + $0x40] sm:$0xff]
      %v2000 = vld [vmem:[%s1016 + $0x48] sm:$0xff]
      %v2001 = vld [vmem:[%s1016 + $0x50] sm:$0xff]
      %v2002 = vld [vmem:[%s1016 + $0x58] sm:$0xff]
      %v2003 = vld [vmem:[%s1016 + $0x60] sm:$0xff]
      %v2004 = vld [vmem:[%s1016 + $0x68] sm:$0xff]
      %v2005 = vld [vmem:[%s1016 + $0x70] sm:$0xff]
      %v2006 = vld [vmem:[%s1016 + $0x78] sm:$0xff]
      %v2007 = vld [vmem:[%s1016 + $0x80] sm:$0xff]
      %v2008 = vld [vmem:[%s1016 + $0x88] sm:$0xff]
      %v2009 = vld [vmem:[%s1016 + $0x90] sm:$0xff]
      %v2010 = vld [vmem:[%s1016 + $0x98] sm:$0xff]
      %v2011 = vld [vmem:[%s1016 + $0xa0] sm:$0xff]
      %v2012 = vld [vmem:[%s1016 + $0xa8] sm:$0xff]
      %v2013 = vld [vmem:[%s1016 + $0xb0] sm:$0xff]
      %v2014 = vld [vmem:[%s1016 + $0xb8] sm:$0xff]
      %v2015 = vld [vmem:[%s1016 + $0xc0] sm:$0xff]
      %v2016 = vld [vmem:[%s1016 + $0xc8] sm:$0xff]
      %v2017 = vld [vmem:[%s1016 + $0xd0] sm:$0xff]
      %v2018 = vld [vmem:[%s1016 + $0xd8] sm:$0xff]
      %v2019 = vld [vmem:[%s1016 + $0xe0] sm:$0xff]
      %v2020 = vld [vmem:[%s1016 + $0xe8] sm:$0xff]
      %v2021 = vld [vmem:[%s1016 + $0xf0] sm:$0xff]
      %v2022 = vld [vmem:[%s1016 + $0xf8] sm:$0xff]
      %v2023 = vld [vmem:[%s1019] sm:$0x1]
      %v2025 = vlaneseq
      %v2026 = vshrl.u32 %v2025, 7
      %v2027 = vsub.s32 0, %v2026
      %v2028 = vrot.slane %v2023, %v2027
      %2030 = vmatprep.subr.mxu0 0.0
      %2031 = vmatpush1.msra.mxu0 %v1991
      %2032 = vmatprep.subr.mxu0 0.0
      %2033 = vmatpush1.msra.mxu0 %v1992
      %2034 = vmatprep.subr.mxu0 0.0
      %2035 = vmatpush1.msra.mxu0 %v1993
      %2036 = vmatprep.subr.mxu0 0.0
      %2037 = vmatpush1.msra.mxu0 %v1994
      %2038 = vmatprep.subr.mxu0 0.0
      %2039 = vmatpush1.msra.mxu0 %v1995
      %2040 = vmatprep.subr.mxu0 0.0
      %2041 = vmatpush1.msra.mxu0 %v1996
      %2042 = vmatprep.subr.mxu0 0.0
      %2043 = vmatpush1.msra.mxu0 %v1997
      %2044 = vmatprep.subr.mxu0 0.0
      %2045 = vmatpush1.msra.mxu0 %v1998
      %2046 = vmatprep.subr.mxu0 0.0
      %2047 = vmatpush1.msra.mxu0 %v1999
      %2048 = vmatprep.subr.mxu0 0.0
      %2049 = vmatpush1.msra.mxu0 %v2000
      %2050 = vmatprep.subr.mxu0 0.0
      %2051 = vmatpush1.msra.mxu0 %v2001
      %2052 = vmatprep.subr.mxu0 0.0
      %2053 = vmatpush1.msra.mxu0 %v2002
      %2054 = vmatprep.subr.mxu0 0.0
      %2055 = vmatpush1.msra.mxu0 %v2003
      %2056 = vmatprep.subr.mxu0 0.0
      %2057 = vmatpush1.msra.mxu0 %v2004
      %2058 = vmatprep.subr.mxu0 0.0
      %2059 = vmatpush1.msra.mxu0 %v2005
      %2060 = vmatprep.subr.mxu0 0.0
      %2061 = vmatpush1.msra.mxu0 %v2006
      %2062 = vmatprep.subr.mxu0 0.0
      %2063 = vmatpush1.msra.mxu0 %v2007
      %2064 = vmatprep.subr.mxu0 0.0
      %2065 = vmatpush1.msra.mxu0 %v2008
      %2066 = vmatprep.subr.mxu0 0.0
      %2067 = vmatpush1.msra.mxu0 %v2009
      %2068 = vmatprep.subr.mxu0 0.0
      %2069 = vmatpush1.msra.mxu0 %v2010
      %2070 = vmatprep.subr.mxu0 0.0
      %2071 = vmatpush1.msra.mxu0 %v2011
      %2072 = vmatprep.subr.mxu0 0.0
      %2073 = vmatpush1.msra.mxu0 %v2012
      %2074 = vmatprep.subr.mxu0 0.0
      %2075 = vmatpush1.msra.mxu0 %v2013
      %2076 = vmatprep.subr.mxu0 0.0
      %2077 = vmatpush1.msra.mxu0 %v2014
      %2078 = vmatprep.subr.mxu0 0.0
      %2079 = vmatpush1.msra.mxu0 %v2015
      %2080 = vmatprep.subr.mxu0 0.0
      %2081 = vmatpush1.msra.mxu0 %v2016
      %2082 = vmatprep.subr.mxu0 0.0
      %2083 = vmatpush1.msra.mxu0 %v2017
      %2084 = vmatprep.subr.mxu0 0.0
      %2085 = vmatpush1.msra.mxu0 %v2018
      %2086 = vmatprep.subr.mxu0 0.0
      %2087 = vmatpush1.msra.mxu0 %v2019
      %2088 = vmatprep.subr.mxu0 0.0
      %2089 = vmatpush1.msra.mxu0 %v2020
      %2090 = vmatprep.subr.mxu0 0.0
      %2091 = vmatpush1.msra.mxu0 %v2021
      %2092 = vmatprep.subr.mxu0 0.0
      %2093 = vmatpush1.msra.mxu0 %v2022
      %2094 = vmatprep.mubr.f32.mxu0 %v1988
      %2095 = vmatmul.mubr.f32.gmra.mrb[0].mxu0 %v1987
      %v2096 = vpop.f32.mrb[0].mxu0
      %v2097 = vadd.f32 %v2028, %v2096
      %v2098 = vpop.f32.mrb[0].mxu0
      %2099 = vmatprep.mubr.f32.mxu0 %v1990
      %2100 = vmatmul.mubr.f32.gmra.mrb[0].mxu0 %v1989
      %v2101 = vpop.f32.mrb[0].mxu0
      %v2102 = vadd.f32 %v2028, %v2101
      %v2103 = vpop.f32.mrb[0].mxu0
      %2104 = vdwg.mxu0
      %v2105 = vadd.f32 %v1802, %v2097
      %v2106 = vadd.f32 %v1803, %v2102
      %2107 = vst.msk [vmem:[#allocation2] sm:$0xff] %vm1189, %v2105
      %2108 = vst.msk [vmem:[#allocation2 + $0x8] sm:$0xff] %vm1189, %v2106
      %p2109 = scmp.eq.s32.totalorder %s37, 1
      // Predicated region
      $region129: #{clip_forward.2} parent=123 // pred_check
        %p2110 = pneg %p2109
      $region130: #{clip_forward.2} parent=123 // pred_check_branch
        %2112 = sbr.rel (%p2110) target = $region132
      $region131: #{clip_forward.2} parent=123 // pred_region
        %v2113 = vld [vmem:[%s6] sm:$0x3]
        %v2115 = vsel %vm1600, %v2113, 0
        %2117 = vmatprep.subr.mxu0 0.0
        %2118 = vmatpush1.msra.mxu0 %v2105
        %2119 = vmatprep.subr.mxu0 0.0
        %2120 = vmatpush1.msra.mxu0 %v2106
        %2121 = vmatprep.subr.mxu0 0.0
        %2122 = vmatpush1.msra.mxu0 0.0
        %2123 = vmatprep.subr.mxu0 0.0
        %2124 = vmatpush1.msra.mxu0 0.0
        %2125 = vmatprep.subr.mxu0 0.0
        %2126 = vmatpush1.msra.mxu0 0.0
        %2127 = vmatprep.subr.mxu0 0.0
        %2128 = vmatpush1.msra.mxu0 0.0
        %2129 = vmatprep.subr.mxu0 0.0
        %2130 = vmatpush1.msra.mxu0 0.0
        %2131 = vmatprep.subr.mxu0 0.0
        %2132 = vmatpush1.msra.mxu0 0.0
        %2133 = vmatprep.subr.mxu0 0.0
        %2134 = vmatpush1.msra.mxu0 0.0
        %2135 = vmatprep.subr.mxu0 0.0
        %2136 = vmatpush1.msra.mxu0 0.0
        %2137 = vmatprep.subr.mxu0 0.0
        %2138 = vmatpush1.msra.mxu0 0.0
        %2139 = vmatprep.subr.mxu0 0.0
        %2140 = vmatpush1.msra.mxu0 0.0
        %2141 = vmatprep.subr.mxu0 0.0
        %2142 = vmatpush1.msra.mxu0 0.0
        %2143 = vmatprep.subr.mxu0 0.0
        %2144 = vmatpush1.msra.mxu0 0.0
        %2145 = vmatprep.subr.mxu0 0.0
        %2146 = vmatpush1.msra.mxu0 0.0
        %2147 = vmatprep.subr.mxu0 0.0
        %2148 = vmatpush1.msra.mxu0 0.0
        %2149 = vmatprep.subr.mxu0 0.0
        %2150 = vmatpush1.msra.mxu0 0.0
        %2151 = vmatprep.subr.mxu0 0.0
        %2152 = vmatpush1.msra.mxu0 0.0
        %2153 = vmatprep.subr.mxu0 0.0
        %2154 = vmatpush1.msra.mxu0 0.0
        %2155 = vmatprep.subr.mxu0 0.0
        %2156 = vmatpush1.msra.mxu0 0.0
        %2157 = vmatprep.subr.mxu0 0.0
        %2158 = vmatpush1.msra.mxu0 0.0
        %2159 = vmatprep.subr.mxu0 0.0
        %2160 = vmatpush1.msra.mxu0 0.0
        %2161 = vmatprep.subr.mxu0 0.0
        %2162 = vmatpush1.msra.mxu0 0.0
        %2163 = vmatprep.subr.mxu0 0.0
        %2164 = vmatpush1.msra.mxu0 0.0
        %2165 = vmatprep.subr.mxu0 0.0
        %2166 = vmatpush1.msra.mxu0 0.0
        %2167 = vmatprep.subr.mxu0 0.0
        %2168 = vmatpush1.msra.mxu0 0.0
        %2169 = vmatprep.subr.mxu0 0.0
        %2170 = vmatpush1.msra.mxu0 0.0
        %2171 = vmatprep.subr.mxu0 0.0
        %2172 = vmatpush1.msra.mxu0 0.0
        %2173 = vmatprep.subr.mxu0 0.0
        %2174 = vmatpush1.msra.mxu0 0.0
        %2175 = vmatprep.subr.mxu0 0.0
        %2176 = vmatpush1.msra.mxu0 0.0
        %2177 = vmatprep.subr.mxu0 0.0
        %2178 = vmatpush1.msra.mxu0 0.0
        %2179 = vmatprep.subr.mxu0 0.0
        %2180 = vmatpush1.msra.mxu0 0.0
        %2181 = vmatprep.mubr.f32.mxu0 0.0
        %2182 = vmatmul.mubr.f32.gmra.mrb[0].mxu0 %v2115
        %v2183 = vpop.f32.mrb[0].mxu0
        %v2184 = vadd.f32 0.0, %v2183
        %v2185 = vpop.f32.mrb[0].mxu0
        %2186 = vdwg.mxu0
        %v2187 = vld [vmem:[%s23] sm:$0x1]
        %v2188 = vld [vmem:[%s24] sm:$0x1]
        %vm2189 = vcmask 517120
        %v2190 = vsel %vm2189, %v2184, 0.0
        %2191 = vadd.xlane.f32.xlu0 %v2190
        %v2192 = vpop.xlane.xlu0 %2191
        %v2193 = vmul.f32 %v2192, %v1196
        %v2194 = vsub.f32 %v2184, %v2193
        %v2195 = vmul.f32 %v2194, %v2194
        %v2196 = vsel %vm2189, %v2195, 0.0
        %2197 = vadd.xlane.f32.xlu0 %v2196
        %v2198 = vpop.xlane.xlu0 %2197
        %v2199 = vmul.f32 %v2198, %v1196
        %v2200 = vadd.f32 %v2199, 1e-05
        %v2201 = vrsqrt.pop %v2200
        %v2202 = vmul.f32 %v2194, %v2201
        %v2204 = vlaneseq
        %v2205 = vshrl.u32 %v2204, 7
        %v2206 = vsub.s32 0, %v2205
        %v2207 = vrot.slane %v2187, %v2206
        %v2209 = vmul.f32 %v2202, %v2207
        %v2211 = vlaneseq
        %v2212 = vshrl.u32 %v2211, 7
        %v2213 = vsub.s32 0, %v2212
        %v2214 = vrot.slane %v2188, %v2213
        %v2216 = vadd.f32 %v2209, %v2214
        %v2217 = vld [vmem:[%s25] sm:$0xff]
        %v2218 = vld [vmem:[%s25 + $0x8] sm:$0xff]
        %v2219 = vld [vmem:[%s25 + $0x10] sm:$0xff]
        %v2220 = vld [vmem:[%s25 + $0x18] sm:$0xff]
        %v2221 = vld [vmem:[%s25 + $0x20] sm:$0xff]
        %v2222 = vld [vmem:[%s25 + $0x28] sm:$0xff]
        %v2223 = vld [vmem:[%s25 + $0x30] sm:$0xff]
        %v2224 = vld [vmem:[%s25 + $0x38] sm:$0xff]
        %v2226 = vsel %vm1189, %v2216, 0
        %2228 = vmatprep.subr.mxu0 0.0
        %2229 = vmatpush1.msra.mxu0 %v2217
        %2230 = vmatprep.subr.mxu0 0.0
        %2231 = vmatpush1.msra.mxu0 %v2218
        %2232 = vmatprep.subr.mxu0 0.0
        %2233 = vmatpush1.msra.mxu0 %v2219
        %2234 = vmatprep.subr.mxu0 0.0
        %2235 = vmatpush1.msra.mxu0 %v2220
        %2236 = vmatprep.subr.mxu0 0.0
        %2237 = vmatpush1.msra.mxu0 %v2221
        %2238 = vmatprep.subr.mxu0 0.0
        %2239 = vmatpush1.msra.mxu0 %v2222
        %2240 = vmatprep.subr.mxu0 0.0
        %2241 = vmatpush1.msra.mxu0 %v2223
        %2242 = vmatprep.subr.mxu0 0.0
        %2243 = vmatpush1.msra.mxu0 %v2224
        %2244 = vmatprep.subr.mxu0 0.0
        %2245 = vmatpush1.msra.mxu0 0.0
        %2246 = vmatprep.subr.mxu0 0.0
        %2247 = vmatpush1.msra.mxu0 0.0
        %2248 = vmatprep.subr.mxu0 0.0
        %2249 = vmatpush1.msra.mxu0 0.0
        %2250 = vmatprep.subr.mxu0 0.0
        %2251 = vmatpush1.msra.mxu0 0.0
        %2252 = vmatprep.subr.mxu0 0.0
        %2253 = vmatpush1.msra.mxu0 0.0
        %2254 = vmatprep.subr.mxu0 0.0
        %2255 = vmatpush1.msra.mxu0 0.0
        %2256 = vmatprep.subr.mxu0 0.0
        %2257 = vmatpush1.msra.mxu0 0.0
        %2258 = vmatprep.subr.mxu0 0.0
        %2259 = vmatpush1.msra.mxu0 0.0
        %2260 = vmatprep.subr.mxu0 0.0
        %2261 = vmatpush1.msra.mxu0 0.0
        %2262 = vmatprep.subr.mxu0 0.0
        %2263 = vmatpush1.msra.mxu0 0.0
        %2264 = vmatprep.subr.mxu0 0.0
        %2265 = vmatpush1.msra.mxu0 0.0
        %2266 = vmatprep.subr.mxu0 0.0
        %2267 = vmatpush1.msra.mxu0 0.0
        %2268 = vmatprep.subr.mxu0 0.0
        %2269 = vmatpush1.msra.mxu0 0.0
        %2270 = vmatprep.subr.mxu0 0.0
        %2271 = vmatpush1.msra.mxu0 0.0
        %2272 = vmatprep.subr.mxu0 0.0
        %2273 = vmatpush1.msra.mxu0 0.0
        %2274 = vmatprep.subr.mxu0 0.0
        %2275 = vmatpush1.msra.mxu0 0.0
        %2276 = vmatprep.subr.mxu0 0.0
        %2277 = vmatpush1.msra.mxu0 0.0
        %2278 = vmatprep.subr.mxu0 0.0
        %2279 = vmatpush1.msra.mxu0 0.0
        %2280 = vmatprep.subr.mxu0 0.0
        %2281 = vmatpush1.msra.mxu0 0.0
        %2282 = vmatprep.subr.mxu0 0.0
        %2283 = vmatpush1.msra.mxu0 0.0
        %2284 = vmatprep.subr.mxu0 0.0
        %2285 = vmatpush1.msra.mxu0 0.0
        %2286 = vmatprep.subr.mxu0 0.0
        %2287 = vmatpush1.msra.mxu0 0.0
        %2288 = vmatprep.subr.mxu0 0.0
        %2289 = vmatpush1.msra.mxu0 0.0
        %2290 = vmatprep.subr.mxu0 0.0
        %2291 = vmatpush1.msra.mxu0 0.0
        %2292 = vmatprep.mubr.f32.mxu0 0.0
        %2293 = vmatmul.mubr.f32.gmra.mrb[0].mxu0 %v2226
        %v2294 = vpop.f32.mrb[0].mxu0
        %v2295 = vadd.f32 0.0, %v2294
        %v2296 = vpop.f32.mrb[0].mxu0
        %2297 = vdwg.mxu0
        %v2298 = vmul.f32 %v2295, %v2295
        %vm2299 = vcmask 254976
        %v2300 = vsel %vm2299, %v2298, 0.0
        %2301 = vadd.xlane.f32.xlu0 %v2300
        %v2302 = vpop.xlane.xlu0 %2301
        %v2303 = vrsqrt.pop %v2302
        %v2304 = vmul.f32 %v2295, %v2303
        %2305 = vst.msk [vmem:[%s26] sm:$0x3] %vm2299, %v2304
      $region132: #{clip_forward.2} parent=123 // pred_fallthru
        _
      // Predicated region
      $region133: #{clip_forward.2} parent=123 // pred_check
        %p2306 = pneg %p676
      $region134: #{clip_forward.2} parent=123 // pred_check_branch
        %2308 = sbr.rel (%p2306) target = $region136
      $region135: #{clip_forward.2} parent=123 // pred_region
        _
      $region136: #{clip_forward.2} parent=123 // pred_fallthru
        _
      // Predicated region
      $region137: #{clip_forward.2} parent=123 // pred_check
        %p2309 = pneg %p676
      $region138: #{clip_forward.2} parent=123 // pred_check_branch
        %2311 = sbr.rel (%p2309) target = $region140
      $region139: #{clip_forward.2} parent=123 // pred_region
        _
      $region140: #{clip_forward.2} parent=123 // pred_fallthru
        _
    $region124: #{clip_forward.2} parent=5 // pred_fallthru
      _
    %p2312 = scmp.le.s32.totalorder 2, %s32
    // Predicated region
    $region141: #{clip_forward.2} parent=5 // pred_check
      %p2313 = pneg %p2312
    $region142: #{clip_forward.2} parent=5 // pred_check_branch
      %2315 = sbr.rel (%p2313) target = $region144
    $region143: #{clip_forward.2} parent=5 // pred_region
      %s2316 = ssub.s32 %s32, 2
    $region144: #{clip_forward.2} parent=5 // pred_fallthru
      _
  $region6: #{clip_forward.2} parent=0 // loop_footer
    %s36 = sadd.s32 1, %s32
  $region7: #{clip_forward.2} parent=0 // loop_footer_branch
    %31 = sbr.rel target = $region3
  $region8: #{clip_forward.2} parent=0 // loop_exit
    _

// kernel: clip_forward.3
$region0: #{clip_forward.3}
  #allocation0 [shape = 'u32[]', space=smem, size = 0x4, offset = 0x4, fixed_abs, tag = 'smem constant byte address 0x4 - core index']
  #allocation1 [shape = 'u32[144,128]{1,0:T(1,128)}', space=vmem, size = 0x12000, scoped, tag = 'internal scratch']
  #allocation2 [shape = 'f32[16,64]{1,0:T(8,128)}', space=vmem, size = 0x2000, scoped, tag = 'scratch operand']
  #allocation3 [shape = 'f32[1,1]{1,0:T(1,128)S(1)}', space=vmem, size = 0x200, scoped, tag = 'scoped memory for clip_forward.3']
  %s0 = inlined_call_operand.vmem [shape: f32[16,64], index: 0, kind: input, shape index: {}]
  %s1 = inlined_call_operand.vmem [shape: f32[16,16], index: 1, kind: input, shape index: {}]
  %s2 = inlined_call_operand.vmem [shape: f32[2,16], index: 2, kind: input, shape index: {}]
  %s3 = inlined_call_operand.vmem [shape: f32[2,1,64], index: 3, kind: input, shape index: {}]
  %s4 = inlined_call_operand.vmem [shape: f32[2,1,64], index: 4, kind: input, shape index: {}]
  %s5 = inlined_call_operand.vmem [shape: f32[2,2,64,32], index: 5, kind: input, shape index: {}]
  %s6 = inlined_call_operand.vmem [shape: f32[2,2,64,32], index: 6, kind: input, shape index: {}]
  %s7 = inlined_call_operand.vmem [shape: f32[2,2,64,32], index: 7, kind: input, shape index: {}]
  %s8 = inlined_call_operand.vmem [shape: f32[2,2,1,32], index: 8, kind: input, shape index: {}]
  %s9 = inlined_call_operand.vmem [shape: f32[2,2,1,32], index: 9, kind: input, shape index: {}]
  %s10 = inlined_call_operand.vmem [shape: f32[2,2,1,32], index: 10, kind: input, shape index: {}]
  %s11 = inlined_call_operand.vmem [shape: f32[2,2,32,64], index: 11, kind: input, shape index: {}]
  %s12 = inlined_call_operand.vmem [shape: f32[2,1,64], index: 12, kind: input, shape index: {}]
  %s13 = inlined_call_operand.vmem [shape: f32[2,1,64], index: 13, kind: input, shape index: {}]
  %s14 = inlined_call_operand.vmem [shape: f32[2,1,64], index: 14, kind: input, shape index: {}]
  %s15 = inlined_call_operand.vmem [shape: f32[2,64,256], index: 15, kind: input, shape index: {}]
  %s16 = inlined_call_operand.vmem [shape: f32[2,1,256], index: 16, kind: input, shape index: {}]
  %s17 = inlined_call_operand.vmem [shape: f32[2,256,64], index: 17, kind: input, shape index: {}]
  %s18 = inlined_call_operand.vmem [shape: f32[2,1,64], index: 18, kind: input, shape index: {}]
  %s19 = inlined_call_operand.vmem [shape: f32[1,64], index: 19, kind: input, shape index: {}]
  %s20 = inlined_call_operand.vmem [shape: f32[1,64], index: 20, kind: input, shape index: {}]
  %s21 = inlined_call_operand.vmem [shape: f32[64,32], index: 21, kind: input, shape index: {}]
  %s22 = inlined_call_operand.vmem [shape: f32[2,32], index: 22, kind: input, shape index: {}]
  %s23 = inlined_call_operand.<no memory space> [shape: f32[1,1], index: 23, kind: input, shape index: {}]
  %s24 = inlined_call_operand.vmem [shape: f32[2,2], index: 24, kind: output, shape index: {}]
  %s25 = sld [smem:[#allocation0]]
  $region137: #{clip_forward.3} parent=0
    _
  %s27 = ssub.s32 1, %s25
  %s28 = scalar_select 0, %s27, %s25
  %v29 = vstv %s23
  %30 = vst [vmem:[#allocation3] sm:$0x1] %v29
  loop: start=0, step=1, limit=4
  $region2: #{clip_forward.3} parent=0 // loop_pre_header
    _
  $region3: #{clip_forward.3} parent=0 // loop_header
    %s32 = sphi 0, %s36
    %p33 = scmp.ge.s32.totalorder %s32, 4
    %s40 = sphi 0, %s40
    %s42 = sphi 0, %s40
    %s43 = sphi 0, %s42
    %s57 = sphi 0, %s43
    %s61 = sphi 0, %s61
    %s63 = sphi 0, %s61
    %s64 = sphi 0, %s63
    %s78 = sphi 0, %s64
    %s82 = sphi 0, %s82
    %s84 = sphi 0, %s82
    %s85 = sphi 0, %s84
    %s99 = sphi 0, %s85
    %s105 = sphi 0, %s107
    %s108 = sphi 0, %s105
    %s109 = sphi 0, %s108
    %s125 = sphi 0, %s109
    %s131 = sphi 0, %s133
    %s134 = sphi 0, %s131
    %s135 = sphi 0, %s134
    %s151 = sphi 0, %s135
    %s157 = sphi 0, %s159
    %s160 = sphi 0, %s157
    %s161 = sphi 0, %s160
    %s177 = sphi 0, %s161
    %s183 = sphi 0, %s185
    %s186 = sphi 0, %s183
    %s187 = sphi 0, %s186
    %s203 = sphi 0, %s187
    %s209 = sphi 0, %s211
    %s212 = sphi 0, %s209
    %s213 = sphi 0, %s212
    %s229 = sphi 0, %s213
    %s235 = sphi 0, %s237
    %s238 = sphi 0, %s235
    %s239 = sphi 0, %s238
    %s255 = sphi 0, %s239
    %s261 = sphi 0, %s263
    %s264 = sphi 0, %s261
    %s265 = sphi 0, %s264
    %s281 = sphi 0, %s265
    %s287 = sphi 0, %s289
    %s290 = sphi 0, %s287
    %s291 = sphi 0, %s290
    %s307 = sphi 0, %s291
    %s313 = sphi 0, %s315
    %s316 = sphi 0, %s313
    %s317 = sphi 0, %s316
    %s333 = sphi 0, %s317
    %s339 = sphi 0, %s341
    %s342 = sphi 0, %s339
    %s343 = sphi 0, %s342
    %s359 = sphi 0, %s343
    %s365 = sphi 0, %s367
    %s368 = sphi 0, %s365
    %s369 = sphi 0, %s368
    %s385 = sphi 0, %s369
    %s391 = sphi 0, %s393
    %s394 = sphi 0, %s391
    %s395 = sphi 0, %s394
    %s411 = sphi 0, %s395
    %s417 = sphi 0, %s419
    %s420 = sphi 0, %s417
    %s421 = sphi 0, %s420
    %s437 = sphi 0, %s421
    %s443 = sphi 0, %s445
    %s446 = sphi 0, %s443
    %s447 = sphi 0, %s446
    %s463 = sphi 0, %s447
    %s469 = sphi 0, %s471
    %s472 = sphi 0, %s469
    %s473 = sphi 0, %s472
    %s489 = sphi 0, %s473
    %s495 = sphi 0, %s497
    %s498 = sphi 0, %s495
    %s499 = sphi 0, %s498
    %s515 = sphi 0, %s499
    %s519 = sphi 0, %s519
    %s521 = sphi 0, %s519
    %s522 = sphi 0, %s521
    %s536 = sphi 0, %s522
    %s540 = sphi 0, %s540
    %s542 = sphi 0, %s540
    %s543 = sphi 0, %s542
    %s557 = sphi 0, %s543
    %s561 = sphi 0, %s561
    %s563 = sphi 0, %s561
    %s564 = sphi 0, %s563
    %s578 = sphi 0, %s564
    %s582 = sphi 0, %s582
    %s584 = sphi 0, %s582
    %s585 = sphi 0, %s584
    %s599 = sphi 0, %s585
    %s603 = sphi 0, %s603
    %s605 = sphi 0, %s603
    %s606 = sphi 0, %s605
    %s620 = sphi 0, %s606
    %s624 = sphi 0, %s624
    %s626 = sphi 0, %s624
    %s627 = sphi 0, %s626
    %s641 = sphi 0, %s627
  $region4: #{clip_forward.3} parent=0 // loop_header_branch
    %35 = sbr.rel (%p33) target = $region8
  $region5: #{clip_forward.3} parent=0 // loop_body
    %s37 = ssub.s32 %s32, 1
    %s38 = ssub.s32 %s32, 2
    %s39 = sadd.s32 %s32, 1
    %s41 = sadd.s32 %s40, 1
    %p44 = scmp.eq.s32.totalorder %s32, 1
    %p45 = scmp.ne.s32.totalorder %s40, %s42
    %p46 = scmp.eq.s32.totalorder %s32, 0
    %p47 = por %p45, %p46
    %p48 = scmp.ne.s32.totalorder %s40, %s42
    %p49 = scmp.eq.s32.totalorder %s37, 1
    %p50 = por %p48, %p49
    %p51 = scmp.ne.s32.totalorder %s42, %s43
    %p52 = scmp.eq.s32.totalorder %s37, 0
    %p53 = por %p51, %p52
    %p54 = scmp.ne.s32.totalorder %s42, %s43
    %p55 = scmp.eq.s32.totalorder %s38, 1
    %p56 = por %p54, %p55
    %p58 = scmp.ne.s32.totalorder %s43, %s57
    %p59 = scmp.eq.s32.totalorder %s38, 0
    %p60 = por %p58, %p59
    %s62 = sadd.s32 %s61, 1
    %p65 = scmp.eq.s32.totalorder %s32, 1
    %p66 = scmp.ne.s32.totalorder %s61, %s63
    %p67 = scmp.eq.s32.totalorder %s32, 0
    %p68 = por %p66, %p67
    %p69 = scmp.ne.s32.totalorder %s61, %s63
    %p70 = scmp.eq.s32.totalorder %s37, 1
    %p71 = por %p69, %p70
    %p72 = scmp.ne.s32.totalorder %s63, %s64
    %p73 = scmp.eq.s32.totalorder %s37, 0
    %p74 = por %p72, %p73
    %p75 = scmp.ne.s32.totalorder %s63, %s64
    %p76 = scmp.eq.s32.totalorder %s38, 1
    %p77 = por %p75, %p76
    %p79 = scmp.ne.s32.totalorder %s64, %s78
    %p80 = scmp.eq.s32.totalorder %s38, 0
    %p81 = por %p79, %p80
    %s83 = sadd.s32 %s82, 1
    %p86 = scmp.eq.s32.totalorder %s32, 1
    %p87 = scmp.ne.s32.totalorder %s82, %s84
    %p88 = scmp.eq.s32.totalorder %s32, 0
    %p89 = por %p87, %p88
    %p90 = scmp.ne.s32.totalorder %s82, %s84
    %p91 = scmp.eq.s32.totalorder %s37, 1
    %p92 = por %p90, %p91
    %p93 = scmp.ne.s32.totalorder %s84, %s85
    %p94 = scmp.eq.s32.totalorder %s37, 0
    %p95 = por %p93, %p94
    %p96 = scmp.ne.s32.totalorder %s84, %s85
    %p97 = scmp.eq.s32.totalorder %s38, 1
    %p98 = por %p96, %p97
    %p100 = scmp.ne.s32.totalorder %s85, %s99
    %p101 = scmp.eq.s32.totalorder %s38, 0
    %p102 = por %p100, %p101
    %s103 = ssub.s32 %s32, %s39
    %p104 = scmp.eq.s32.totalorder %s103, 0
    %s106 = sadd.s32 %s105, 1
    %s107 = scalar_select %p104, %s105, %s106
    %p110 = pneg %p104
    %p111 = scmp.eq.s32.totalorder %s32, 1
    %p112 = por %p110, %p111
    %p113 = scmp.ne.s32.totalorder %s105, %s108
    %p114 = scmp.eq.s32.totalorder %s32, 0
    %p115 = por %p113, %p114
    %p116 = scmp.ne.s32.totalorder %s105, %s108
    %p117 = scmp.eq.s32.totalorder %s37, 1
    %p118 = por %p116, %p117
    %p119 = scmp.ne.s32.totalorder %s108, %s109
    %p120 = scmp.eq.s32.totalorder %s37, 0
    %p121 = por %p119, %p120
    %p122 = scmp.ne.s32.totalorder %s108, %s109
    %p123 = scmp.eq.s32.totalorder %s38, 1
    %p124 = por %p122, %p123
    %p126 = scmp.ne.s32.totalorder %s109, %s125
    %p127 = scmp.eq.s32.totalorder %s38, 0
    %p128 = por %p126, %p127
    %s129 = ssub.s32 %s32, %s39
    %p130 = scmp.eq.s32.totalorder %s129, 0
    %s132 = sadd.s32 %s131, 1
    %s133 = scalar_select %p130, %s131, %s132
    %p136 = pneg %p130
    %p137 = scmp.eq.s32.totalorder %s32, 1
    %p138 = por %p136, %p137
    %p139 = scmp.ne.s32.totalorder %s131, %s134
    %p140 = scmp.eq.s32.totalorder %s32, 0
    %p141 = por %p139, %p140
    %p142 = scmp.ne.s32.totalorder %s131, %s134
    %p143 = scmp.eq.s32.totalorder %s37, 1
    %p144 = por %p142, %p143
    %p145 = scmp.ne.s32.totalorder %s134, %s135
    %p146 = scmp.eq.s32.totalorder %s37, 0
    %p147 = por %p145, %p146
    %p148 = scmp.ne.s32.totalorder %s134, %s135
    %p149 = scmp.eq.s32.totalorder %s38, 1
    %p150 = por %p148, %p149
    %p152 = scmp.ne.s32.totalorder %s135, %s151
    %p153 = scmp.eq.s32.totalorder %s38, 0
    %p154 = por %p152, %p153
    %s155 = ssub.s32 %s32, %s39
    %p156 = scmp.eq.s32.totalorder %s155, 0
    %s158 = sadd.s32 %s157, 1
    %s159 = scalar_select %p156, %s157, %s158
    %p162 = pneg %p156
    %p163 = scmp.eq.s32.totalorder %s32, 1
    %p164 = por %p162, %p163
    %p165 = scmp.ne.s32.totalorder %s157, %s160
    %p166 = scmp.eq.s32.totalorder %s32, 0
    %p167 = por %p165, %p166
    %p168 = scmp.ne.s32.totalorder %s157, %s160
    %p169 = scmp.eq.s32.totalorder %s37, 1
    %p170 = por %p168, %p169
    %p171 = scmp.ne.s32.totalorder %s160, %s161
    %p172 = scmp.eq.s32.totalorder %s37, 0
    %p173 = por %p171, %p172
    %p174 = scmp.ne.s32.totalorder %s160, %s161
    %p175 = scmp.eq.s32.totalorder %s38, 1
    %p176 = por %p174, %p175
    %p178 = scmp.ne.s32.totalorder %s161, %s177
    %p179 = scmp.eq.s32.totalorder %s38, 0
    %p180 = por %p178, %p179
    %s181 = ssub.s32 %s32, %s39
    %p182 = scmp.eq.s32.totalorder %s181, 0
    %s184 = sadd.s32 %s183, 1
    %s185 = scalar_select %p182, %s183, %s184
    %p188 = pneg %p182
    %p189 = scmp.eq.s32.totalorder %s32, 1
    %p190 = por %p188, %p189
    %p191 = scmp.ne.s32.totalorder %s183, %s186
    %p192 = scmp.eq.s32.totalorder %s32, 0
    %p193 = por %p191, %p192
    %p194 = scmp.ne.s32.totalorder %s183, %s186
    %p195 = scmp.eq.s32.totalorder %s37, 1
    %p196 = por %p194, %p195
    %p197 = scmp.ne.s32.totalorder %s186, %s187
    %p198 = scmp.eq.s32.totalorder %s37, 0
    %p199 = por %p197, %p198
    %p200 = scmp.ne.s32.totalorder %s186, %s187
    %p201 = scmp.eq.s32.totalorder %s38, 1
    %p202 = por %p200, %p201
    %p204 = scmp.ne.s32.totalorder %s187, %s203
    %p205 = scmp.eq.s32.totalorder %s38, 0
    %p206 = por %p204, %p205
    %s207 = ssub.s32 %s32, %s39
    %p208 = scmp.eq.s32.totalorder %s207, 0
    %s210 = sadd.s32 %s209, 1
    %s211 = scalar_select %p208, %s209, %s210
    %p214 = pneg %p208
    %p215 = scmp.eq.s32.totalorder %s32, 1
    %p216 = por %p214, %p215
    %p217 = scmp.ne.s32.totalorder %s209, %s212
    %p218 = scmp.eq.s32.totalorder %s32, 0
    %p219 = por %p217, %p218
    %p220 = scmp.ne.s32.totalorder %s209, %s212
    %p221 = scmp.eq.s32.totalorder %s37, 1
    %p222 = por %p220, %p221
    %p223 = scmp.ne.s32.totalorder %s212, %s213
    %p224 = scmp.eq.s32.totalorder %s37, 0
    %p225 = por %p223, %p224
    %p226 = scmp.ne.s32.totalorder %s212, %s213
    %p227 = scmp.eq.s32.totalorder %s38, 1
    %p228 = por %p226, %p227
    %p230 = scmp.ne.s32.totalorder %s213, %s229
    %p231 = scmp.eq.s32.totalorder %s38, 0
    %p232 = por %p230, %p231
    %s233 = ssub.s32 %s32, %s39
    %p234 = scmp.eq.s32.totalorder %s233, 0
    %s236 = sadd.s32 %s235, 1
    %s237 = scalar_select %p234, %s235, %s236
    %p240 = pneg %p234
    %p241 = scmp.eq.s32.totalorder %s32, 1
    %p242 = por %p240, %p241
    %p243 = scmp.ne.s32.totalorder %s235, %s238
    %p244 = scmp.eq.s32.totalorder %s32, 0
    %p245 = por %p243, %p244
    %p246 = scmp.ne.s32.totalorder %s235, %s238
    %p247 = scmp.eq.s32.totalorder %s37, 1
    %p248 = por %p246, %p247
    %p249 = scmp.ne.s32.totalorder %s238, %s239
    %p250 = scmp.eq.s32.totalorder %s37, 0
    %p251 = por %p249, %p250
    %p252 = scmp.ne.s32.totalorder %s238, %s239
    %p253 = scmp.eq.s32.totalorder %s38, 1
    %p254 = por %p252, %p253
    %p256 = scmp.ne.s32.totalorder %s239, %s255
    %p257 = scmp.eq.s32.totalorder %s38, 0
    %p258 = por %p256, %p257
    %s259 = ssub.s32 %s32, %s39
    %p260 = scmp.eq.s32.totalorder %s259, 0
    %s262 = sadd.s32 %s261, 1
    %s263 = scalar_select %p260, %s261, %s262
    %p266 = pneg %p260
    %p267 = scmp.eq.s32.totalorder %s32, 1
    %p268 = por %p266, %p267
    %p269 = scmp.ne.s32.totalorder %s261, %s264
    %p270 = scmp.eq.s32.totalorder %s32, 0
    %p271 = por %p269, %p270
    %p272 = scmp.ne.s32.totalorder %s261, %s264
    %p273 = scmp.eq.s32.totalorder %s37, 1
    %p274 = por %p272, %p273
    %p275 = scmp.ne.s32.totalorder %s264, %s265
    %p276 = scmp.eq.s32.totalorder %s37, 0
    %p277 = por %p275, %p276
    %p278 = scmp.ne.s32.totalorder %s264, %s265
    %p279 = scmp.eq.s32.totalorder %s38, 1
    %p280 = por %p278, %p279
    %p282 = scmp.ne.s32.totalorder %s265, %s281
    %p283 = scmp.eq.s32.totalorder %s38, 0
    %p284 = por %p282, %p283
    %s285 = ssub.s32 %s32, %s39
    %p286 = scmp.eq.s32.totalorder %s285, 0
    %s288 = sadd.s32 %s287, 1
    %s289 = scalar_select %p286, %s287, %s288
    %p292 = pneg %p286
    %p293 = scmp.eq.s32.totalorder %s32, 1
    %p294 = por %p292, %p293
    %p295 = scmp.ne.s32.totalorder %s287, %s290
    %p296 = scmp.eq.s32.totalorder %s32, 0
    %p297 = por %p295, %p296
    %p298 = scmp.ne.s32.totalorder %s287, %s290
    %p299 = scmp.eq.s32.totalorder %s37, 1
    %p300 = por %p298, %p299
    %p301 = scmp.ne.s32.totalorder %s290, %s291
    %p302 = scmp.eq.s32.totalorder %s37, 0
    %p303 = por %p301, %p302
    %p304 = scmp.ne.s32.totalorder %s290, %s291
    %p305 = scmp.eq.s32.totalorder %s38, 1
    %p306 = por %p304, %p305
    %p308 = scmp.ne.s32.totalorder %s291, %s307
    %p309 = scmp.eq.s32.totalorder %s38, 0
    %p310 = por %p308, %p309
    %s311 = ssub.s32 %s32, %s39
    %p312 = scmp.eq.s32.totalorder %s311, 0
    %s314 = sadd.s32 %s313, 1
    %s315 = scalar_select %p312, %s313, %s314
    %p318 = pneg %p312
    %p319 = scmp.eq.s32.totalorder %s32, 1
    %p320 = por %p318, %p319
    %p321 = scmp.ne.s32.totalorder %s313, %s316
    %p322 = scmp.eq.s32.totalorder %s32, 0
    %p323 = por %p321, %p322
    %p324 = scmp.ne.s32.totalorder %s313, %s316
    %p325 = scmp.eq.s32.totalorder %s37, 1
    %p326 = por %p324, %p325
    %p327 = scmp.ne.s32.totalorder %s316, %s317
    %p328 = scmp.eq.s32.totalorder %s37, 0
    %p329 = por %p327, %p328
    %p330 = scmp.ne.s32.totalorder %s316, %s317
    %p331 = scmp.eq.s32.totalorder %s38, 1
    %p332 = por %p330, %p331
    %p334 = scmp.ne.s32.totalorder %s317, %s333
    %p335 = scmp.eq.s32.totalorder %s38, 0
    %p336 = por %p334, %p335
    %s337 = ssub.s32 %s32, %s39
    %p338 = scmp.eq.s32.totalorder %s337, 0
    %s340 = sadd.s32 %s339, 1
    %s341 = scalar_select %p338, %s339, %s340
    %p344 = pneg %p338
    %p345 = scmp.eq.s32.totalorder %s32, 1
    %p346 = por %p344, %p345
    %p347 = scmp.ne.s32.totalorder %s339, %s342
    %p348 = scmp.eq.s32.totalorder %s32, 0
    %p349 = por %p347, %p348
    %p350 = scmp.ne.s32.totalorder %s339, %s342
    %p351 = scmp.eq.s32.totalorder %s37, 1
    %p352 = por %p350, %p351
    %p353 = scmp.ne.s32.totalorder %s342, %s343
    %p354 = scmp.eq.s32.totalorder %s37, 0
    %p355 = por %p353, %p354
    %p356 = scmp.ne.s32.totalorder %s342, %s343
    %p357 = scmp.eq.s32.totalorder %s38, 1
    %p358 = por %p356, %p357
    %p360 = scmp.ne.s32.totalorder %s343, %s359
    %p361 = scmp.eq.s32.totalorder %s38, 0
    %p362 = por %p360, %p361
    %s363 = ssub.s32 %s32, %s39
    %p364 = scmp.eq.s32.totalorder %s363, 0
    %s366 = sadd.s32 %s365, 1
    %s367 = scalar_select %p364, %s365, %s366
    %p370 = pneg %p364
    %p371 = scmp.eq.s32.totalorder %s32, 1
    %p372 = por %p370, %p371
    %p373 = scmp.ne.s32.totalorder %s365, %s368
    %p374 = scmp.eq.s32.totalorder %s32, 0
    %p375 = por %p373, %p374
    %p376 = scmp.ne.s32.totalorder %s365, %s368
    %p377 = scmp.eq.s32.totalorder %s37, 1
    %p378 = por %p376, %p377
    %p379 = scmp.ne.s32.totalorder %s368, %s369
    %p380 = scmp.eq.s32.totalorder %s37, 0
    %p381 = por %p379, %p380
    %p382 = scmp.ne.s32.totalorder %s368, %s369
    %p383 = scmp.eq.s32.totalorder %s38, 1
    %p384 = por %p382, %p383
    %p386 = scmp.ne.s32.totalorder %s369, %s385
    %p387 = scmp.eq.s32.totalorder %s38, 0
    %p388 = por %p386, %p387
    %s389 = ssub.s32 %s32, %s39
    %p390 = scmp.eq.s32.totalorder %s389, 0
    %s392 = sadd.s32 %s391, 1
    %s393 = scalar_select %p390, %s391, %s392
    %p396 = pneg %p390
    %p397 = scmp.eq.s32.totalorder %s32, 1
    %p398 = por %p396, %p397
    %p399 = scmp.ne.s32.totalorder %s391, %s394
    %p400 = scmp.eq.s32.totalorder %s32, 0
    %p401 = por %p399, %p400
    %p402 = scmp.ne.s32.totalorder %s391, %s394
    %p403 = scmp.eq.s32.totalorder %s37, 1
    %p404 = por %p402, %p403
    %p405 = scmp.ne.s32.totalorder %s394, %s395
    %p406 = scmp.eq.s32.totalorder %s37, 0
    %p407 = por %p405, %p406
    %p408 = scmp.ne.s32.totalorder %s394, %s395
    %p409 = scmp.eq.s32.totalorder %s38, 1
    %p410 = por %p408, %p409
    %p412 = scmp.ne.s32.totalorder %s395, %s411
    %p413 = scmp.eq.s32.totalorder %s38, 0
    %p414 = por %p412, %p413
    %s415 = ssub.s32 %s32, %s39
    %p416 = scmp.eq.s32.totalorder %s415, 0
    %s418 = sadd.s32 %s417, 1
    %s419 = scalar_select %p416, %s417, %s418
    %p422 = pneg %p416
    %p423 = scmp.eq.s32.totalorder %s32, 1
    %p424 = por %p422, %p423
    %p425 = scmp.ne.s32.totalorder %s417, %s420
    %p426 = scmp.eq.s32.totalorder %s32, 0
    %p427 = por %p425, %p426
    %p428 = scmp.ne.s32.totalorder %s417, %s420
    %p429 = scmp.eq.s32.totalorder %s37, 1
    %p430 = por %p428, %p429
    %p431 = scmp.ne.s32.totalorder %s420, %s421
    %p432 = scmp.eq.s32.totalorder %s37, 0
    %p433 = por %p431, %p432
    %p434 = scmp.ne.s32.totalorder %s420, %s421
    %p435 = scmp.eq.s32.totalorder %s38, 1
    %p436 = por %p434, %p435
    %p438 = scmp.ne.s32.totalorder %s421, %s437
    %p439 = scmp.eq.s32.totalorder %s38, 0
    %p440 = por %p438, %p439
    %s441 = ssub.s32 %s32, %s39
    %p442 = scmp.eq.s32.totalorder %s441, 0
    %s444 = sadd.s32 %s443, 1
    %s445 = scalar_select %p442, %s443, %s444
    %p448 = pneg %p442
    %p449 = scmp.eq.s32.totalorder %s32, 1
    %p450 = por %p448, %p449
    %p451 = scmp.ne.s32.totalorder %s443, %s446
    %p452 = scmp.eq.s32.totalorder %s32, 0
    %p453 = por %p451, %p452
    %p454 = scmp.ne.s32.totalorder %s443, %s446
    %p455 = scmp.eq.s32.totalorder %s37, 1
    %p456 = por %p454, %p455
    %p457 = scmp.ne.s32.totalorder %s446, %s447
    %p458 = scmp.eq.s32.totalorder %s37, 0
    %p459 = por %p457, %p458
    %p460 = scmp.ne.s32.totalorder %s446, %s447
    %p461 = scmp.eq.s32.totalorder %s38, 1
    %p462 = por %p460, %p461
    %p464 = scmp.ne.s32.totalorder %s447, %s463
    %p465 = scmp.eq.s32.totalorder %s38, 0
    %p466 = por %p464, %p465
    %s467 = ssub.s32 %s32, %s39
    %p468 = scmp.eq.s32.totalorder %s467, 0
    %s470 = sadd.s32 %s469, 1
    %s471 = scalar_select %p468, %s469, %s470
    %p474 = pneg %p468
    %p475 = scmp.eq.s32.totalorder %s32, 1
    %p476 = por %p474, %p475
    %p477 = scmp.ne.s32.totalorder %s469, %s472
    %p478 = scmp.eq.s32.totalorder %s32, 0
    %p479 = por %p477, %p478
    %p480 = scmp.ne.s32.totalorder %s469, %s472
    %p481 = scmp.eq.s32.totalorder %s37, 1
    %p482 = por %p480, %p481
    %p483 = scmp.ne.s32.totalorder %s472, %s473
    %p484 = scmp.eq.s32.totalorder %s37, 0
    %p485 = por %p483, %p484
    %p486 = scmp.ne.s32.totalorder %s472, %s473
    %p487 = scmp.eq.s32.totalorder %s38, 1
    %p488 = por %p486, %p487
    %p490 = scmp.ne.s32.totalorder %s473, %s489
    %p491 = scmp.eq.s32.totalorder %s38, 0
    %p492 = por %p490, %p491
    %s493 = ssub.s32 %s32, %s39
    %p494 = scmp.eq.s32.totalorder %s493, 0
    %s496 = sadd.s32 %s495, 1
    %s497 = scalar_select %p494, %s495, %s496
    %p500 = pneg %p494
    %p501 = scmp.eq.s32.totalorder %s32, 1
    %p502 = por %p500, %p501
    %p503 = scmp.ne.s32.totalorder %s495, %s498
    %p504 = scmp.eq.s32.totalorder %s32, 0
    %p505 = por %p503, %p504
    %p506 = scmp.ne.s32.totalorder %s495, %s498
    %p507 = scmp.eq.s32.totalorder %s37, 1
    %p508 = por %p506, %p507
    %p509 = scmp.ne.s32.totalorder %s498, %s499
    %p510 = scmp.eq.s32.totalorder %s37, 0
    %p511 = por %p509, %p510
    %p512 = scmp.ne.s32.totalorder %s498, %s499
    %p513 = scmp.eq.s32.totalorder %s38, 1
    %p514 = por %p512, %p513
    %p516 = scmp.ne.s32.totalorder %s499, %s515
    %p517 = scmp.eq.s32.totalorder %s38, 0
    %p518 = por %p516, %p517
    %s520 = sadd.s32 %s519, 1
    %p523 = scmp.eq.s32.totalorder %s32, 1
    %p524 = scmp.ne.s32.totalorder %s519, %s521
    %p525 = scmp.eq.s32.totalorder %s32, 0
    %p526 = por %p524, %p525
    %p527 = scmp.ne.s32.totalorder %s519, %s521
    %p528 = scmp.eq.s32.totalorder %s37, 1
    %p529 = por %p527, %p528
    %p530 = scmp.ne.s32.totalorder %s521, %s522
    %p531 = scmp.eq.s32.totalorder %s37, 0
    %p532 = por %p530, %p531
    %p533 = scmp.ne.s32.totalorder %s521, %s522
    %p534 = scmp.eq.s32.totalorder %s38, 1
    %p535 = por %p533, %p534
    %p537 = scmp.ne.s32.totalorder %s522, %s536
    %p538 = scmp.eq.s32.totalorder %s38, 0
    %p539 = por %p537, %p538
    %s541 = sadd.s32 %s540, 1
    %p544 = scmp.eq.s32.totalorder %s32, 1
    %p545 = scmp.ne.s32.totalorder %s540, %s542
    %p546 = scmp.eq.s32.totalorder %s32, 0
    %p547 = por %p545, %p546
    %p548 = scmp.ne.s32.totalorder %s540, %s542
    %p549 = scmp.eq.s32.totalorder %s37, 1
    %p550 = por %p548, %p549
    %p551 = scmp.ne.s32.totalorder %s542, %s543
    %p552 = scmp.eq.s32.totalorder %s37, 0
    %p553 = por %p551, %p552
    %p554 = scmp.ne.s32.totalorder %s542, %s543
    %p555 = scmp.eq.s32.totalorder %s38, 1
    %p556 = por %p554, %p555
    %p558 = scmp.ne.s32.totalorder %s543, %s557
    %p559 = scmp.eq.s32.totalorder %s38, 0
    %p560 = por %p558, %p559
    %s562 = sadd.s32 %s561, 1
    %p565 = scmp.eq.s32.totalorder %s32, 1
    %p566 = scmp.ne.s32.totalorder %s561, %s563
    %p567 = scmp.eq.s32.totalorder %s32, 0
    %p568 = por %p566, %p567
    %p569 = scmp.ne.s32.totalorder %s561, %s563
    %p570 = scmp.eq.s32.totalorder %s37, 1
    %p571 = por %p569, %p570
    %p572 = scmp.ne.s32.totalorder %s563, %s564
    %p573 = scmp.eq.s32.totalorder %s37, 0
    %p574 = por %p572, %p573
    %p575 = scmp.ne.s32.totalorder %s563, %s564
    %p576 = scmp.eq.s32.totalorder %s38, 1
    %p577 = por %p575, %p576
    %p579 = scmp.ne.s32.totalorder %s564, %s578
    %p580 = scmp.eq.s32.totalorder %s38, 0
    %p581 = por %p579, %p580
    %s583 = sadd.s32 %s582, 1
    %p586 = scmp.eq.s32.totalorder %s32, 1
    %p587 = scmp.ne.s32.totalorder %s582, %s584
    %p588 = scmp.eq.s32.totalorder %s32, 0
    %p589 = por %p587, %p588
    %p590 = scmp.ne.s32.totalorder %s582, %s584
    %p591 = scmp.eq.s32.totalorder %s37, 1
    %p592 = por %p590, %p591
    %p593 = scmp.ne.s32.totalorder %s584, %s585
    %p594 = scmp.eq.s32.totalorder %s37, 0
    %p595 = por %p593, %p594
    %p596 = scmp.ne.s32.totalorder %s584, %s585
    %p597 = scmp.eq.s32.totalorder %s38, 1
    %p598 = por %p596, %p597
    %p600 = scmp.ne.s32.totalorder %s585, %s599
    %p601 = scmp.eq.s32.totalorder %s38, 0
    %p602 = por %p600, %p601
    %s604 = sadd.s32 %s603, 1
    %p607 = scmp.eq.s32.totalorder %s32, 1
    %p608 = scmp.ne.s32.totalorder %s603, %s605
    %p609 = scmp.eq.s32.totalorder %s32, 0
    %p610 = por %p608, %p609
    %p611 = scmp.ne.s32.totalorder %s603, %s605
    %p612 = scmp.eq.s32.totalorder %s37, 1
    %p613 = por %p611, %p612
    %p614 = scmp.ne.s32.totalorder %s605, %s606
    %p615 = scmp.eq.s32.totalorder %s37, 0
    %p616 = por %p614, %p615
    %p617 = scmp.ne.s32.totalorder %s605, %s606
    %p618 = scmp.eq.s32.totalorder %s38, 1
    %p619 = por %p617, %p618
    %p621 = scmp.ne.s32.totalorder %s606, %s620
    %p622 = scmp.eq.s32.totalorder %s38, 0
    %p623 = por %p621, %p622
    %s625 = sadd.s32 %s624, 1
    %p628 = scmp.eq.s32.totalorder %s32, 1
    %p629 = scmp.ne.s32.totalorder %s624, %s626
    %p630 = scmp.eq.s32.totalorder %s32, 0
    %p631 = por %p629, %p630
    %p632 = scmp.ne.s32.totalorder %s624, %s626
    %p633 = scmp.eq.s32.totalorder %s37, 1
    %p634 = por %p632, %p633
    %p635 = scmp.ne.s32.totalorder %s626, %s627
    %p636 = scmp.eq.s32.totalorder %s37, 0
    %p637 = por %p635, %p636
    %p638 = scmp.ne.s32.totalorder %s626, %s627
    %p639 = scmp.eq.s32.totalorder %s38, 1
    %p640 = por %p638, %p639
    %p642 = scmp.ne.s32.totalorder %s627, %s641
    %p643 = scmp.eq.s32.totalorder %s38, 0
    %p644 = por %p642, %p643
    %p645 = scmp.le.s32.totalorder 1, %s32
    %p646 = scmp.lt.s32.totalorder %s32, 3
    %p647 = pnand %p645, %p646
    %p648 = pneg %p647
    // Predicated region
    $region9: #{clip_forward.3} parent=5 // pred_check
      _
    $region10: #{clip_forward.3} parent=5 // pred_check_branch
      %650 = sbr.rel (%p647) target = $region12
    $region11: #{clip_forward.3} parent=5 // pred_region
      %s651 = ssub.s32 %s32, 1
      // Predicated region
      $region13: #{clip_forward.3} parent=11 // pred_check
        %p652 = pneg %p53
      $region14: #{clip_forward.3} parent=11 // pred_check_branch
        %654 = sbr.rel (%p652) target = $region16
      $region15: #{clip_forward.3} parent=11 // pred_region
        _
      $region16: #{clip_forward.3} parent=11 // pred_fallthru
        _
      // Predicated region
      $region17: #{clip_forward.3} parent=11 // pred_check
        %p655 = pneg %p74
      $region18: #{clip_forward.3} parent=11 // pred_check_branch
        %657 = sbr.rel (%p655) target = $region20
      $region19: #{clip_forward.3} parent=11 // pred_region
        _
      $region20: #{clip_forward.3} parent=11 // pred_fallthru
        _
      // Predicated region
      $region21: #{clip_forward.3} parent=11 // pred_check
        %p658 = pneg %p95
      $region22: #{clip_forward.3} parent=11 // pred_check_branch
        %660 = sbr.rel (%p658) target = $region24
      $region23: #{clip_forward.3} parent=11 // pred_region
        _
      $region24: #{clip_forward.3} parent=11 // pred_fallthru
        _
      // Predicated region
      $region25: #{clip_forward.3} parent=11 // pred_check
        %p661 = pneg %p532
      $region26: #{clip_forward.3} parent=11 // pred_check_branch
        %663 = sbr.rel (%p661) target = $region28
      $region27: #{clip_forward.3} parent=11 // pred_region
        _
      $region28: #{clip_forward.3} parent=11 // pred_fallthru
        _
      // Predicated region
      $region29: #{clip_forward.3} parent=11 // pred_check
        %p664 = pneg %p553
      $region30: #{clip_forward.3} parent=11 // pred_check_branch
        %666 = sbr.rel (%p664) target = $region32
      $region31: #{clip_forward.3} parent=11 // pred_region
        _
      $region32: #{clip_forward.3} parent=11 // pred_fallthru
        _
      // Predicated region
      $region33: #{clip_forward.3} parent=11 // pred_check
        %p667 = pneg %p574
      $region34: #{clip_forward.3} parent=11 // pred_check_branch
        %669 = sbr.rel (%p667) target = $region36
      $region35: #{clip_forward.3} parent=11 // pred_region
        _
      $region36: #{clip_forward.3} parent=11 // pred_fallthru
        _
      // Predicated region
      $region37: #{clip_forward.3} parent=11 // pred_check
        %p670 = pneg %p595
      $region38: #{clip_forward.3} parent=11 // pred_check_branch
        %672 = sbr.rel (%p670) target = $region40
      $region39: #{clip_forward.3} parent=11 // pred_region
        _
      $region40: #{clip_forward.3} parent=11 // pred_fallthru
        _
      // Predicated region
      $region41: #{clip_forward.3} parent=11 // pred_check
        %p673 = pneg %p616
      $region42: #{clip_forward.3} parent=11 // pred_check_branch
        %675 = sbr.rel (%p673) target = $region44
      $region43: #{clip_forward.3} parent=11 // pred_region
        _
      $region44: #{clip_forward.3} parent=11 // pred_fallthru
        _
    $region12: #{clip_forward.3} parent=5 // pred_fallthru
      _
    %p676 = scmp.lt.s32.totalorder %s32, 2
    // Predicated region
    $region45: #{clip_forward.3} parent=5 // pred_check
      %p677 = pneg %p676
    $region46: #{clip_forward.3} parent=5 // pred_check_branch
      %679 = sbr.rel (%p677) target = $region48
    $region47: #{clip_forward.3} parent=5 // pred_region
      // Predicated region
      $region49: #{clip_forward.3} parent=47 // pred_check
        %p680 = pneg %p115
      $region50: #{clip_forward.3} parent=47 // pred_check_branch
        %682 = sbr.rel (%p680) target = $region52
      $region51: #{clip_forward.3} parent=47 // pred_region
        %p683 = scmp.lt.s32.totalorder %s32, 1
        %s684 = scalar_select %p683, %s32, 1
        %s685 = scalar_lea.vmem %s3, %s684
      $region52: #{clip_forward.3} parent=47 // pred_fallthru
        _
      // Predicated region
      $region53: #{clip_forward.3} parent=47 // pred_check
        %p686 = pneg %p141
      $region54: #{clip_forward.3} parent=47 // pred_check_branch
        %688 = sbr.rel (%p686) target = $region56
      $region55: #{clip_forward.3} parent=47 // pred_region
        %p689 = scmp.lt.s32.totalorder %s32, 1
        %s690 = scalar_select %p689, %s32, 1
        %s691 = scalar_lea.vmem %s4, %s690
      $region56: #{clip_forward.3} parent=47 // pred_fallthru
        _
      // Predicated region
      $region57: #{clip_forward.3} parent=47 // pred_check
        %p692 = pneg %p167
      $region58: #{clip_forward.3} parent=47 // pred_check_branch
        %694 = sbr.rel (%p692) target = $region60
      $region59: #{clip_forward.3} parent=47 // pred_region
        %p695 = scmp.lt.s32.totalorder %s32, 1
        %s696 = scalar_select %p695, %s32, 1
        %s697 = smul.addr %s696, 16
        %s698 = smul.addr %s697, 8
        %s699 = scalar_lea.vmem %s5, %s698
      $region60: #{clip_forward.3} parent=47 // pred_fallthru
        _
      // Predicated region
      $region61: #{clip_forward.3} parent=47 // pred_check
        %p700 = pneg %p193
      $region62: #{clip_forward.3} parent=47 // pred_check_branch
        %702 = sbr.rel (%p700) target = $region64
      $region63: #{clip_forward.3} parent=47 // pred_region
        %p703 = scmp.lt.s32.totalorder %s32, 1
        %s704 = scalar_select %p703, %s32, 1
        %s705 = smul.addr %s704, 16
        %s706 = smul.addr %s705, 8
        %s707 = scalar_lea.vmem %s6, %s706
      $region64: #{clip_forward.3} parent=47 // pred_fallthru
        _
      // Predicated region
      $region65: #{clip_forward.3} parent=47 // pred_check
        %p708 = pneg %p219
      $region66: #{clip_forward.3} parent=47 // pred_check_branch
        %710 = sbr.rel (%p708) target = $region68
      $region67: #{clip_forward.3} parent=47 // pred_region
        %p711 = scmp.lt.s32.totalorder %s32, 1
        %s712 = scalar_select %p711, %s32, 1
        %s713 = smul.addr %s712, 16
        %s714 = smul.addr %s713, 8
        %s715 = scalar_lea.vmem %s7, %s714
      $region68: #{clip_forward.3} parent=47 // pred_fallthru
        _
      // Predicated region
      $region69: #{clip_forward.3} parent=47 // pred_check
        %p716 = pneg %p245
      $region70: #{clip_forward.3} parent=47 // pred_check_branch
        %718 = sbr.rel (%p716) target = $region72
      $region71: #{clip_forward.3} parent=47 // pred_region
        %p719 = scmp.lt.s32.totalorder %s32, 1
        %s720 = scalar_select %p719, %s32, 1
        %s721 = smul.addr %s720, 2
        %s722 = scalar_lea.vmem %s8, %s721
      $region72: #{clip_forward.3} parent=47 // pred_fallthru
        _
      // Predicated region
      $region73: #{clip_forward.3} parent=47 // pred_check
        %p723 = pneg %p271
      $region74: #{clip_forward.3} parent=47 // pred_check_branch
        %725 = sbr.rel (%p723) target = $region76
      $region75: #{clip_forward.3} parent=47 // pred_region
        %p726 = scmp.lt.s32.totalorder %s32, 1
        %s727 = scalar_select %p726, %s32, 1
        %s728 = smul.addr %s727, 2
        %s729 = scalar_lea.vmem %s9, %s728
      $region76: #{clip_forward.3} parent=47 // pred_fallthru
        _
      // Predicated region
      $region77: #{clip_forward.3} parent=47 // pred_check
        %p730 = pneg %p297
      $region78: #{clip_forward.3} parent=47 // pred_check_branch
        %732 = sbr.rel (%p730) target = $region80
      $region79: #{clip_forward.3} parent=47 // pred_region
        %p733 = scmp.lt.s32.totalorder %s32, 1
        %s734 = scalar_select %p733, %s32, 1
        %s735 = smul.addr %s734, 2
        %s736 = scalar_lea.vmem %s10, %s735
      $region80: #{clip_forward.3} parent=47 // pred_fallthru
        _
      // Predicated region
      $region81: #{clip_forward.3} parent=47 // pred_check
        %p737 = pneg %p323
      $region82: #{clip_forward.3} parent=47 // pred_check_branch
        %739 = sbr.rel (%p737) target = $region84
      $region83: #{clip_forward.3} parent=47 // pred_region
        %p740 = scmp.lt.s32.totalorder %s32, 1
        %s741 = scalar_select %p740, %s32, 1
        %s742 = smul.addr %s741, 8
        %s743 = smul.addr %s742, 8
        %s744 = scalar_lea.vmem %s11, %s743
      $region84: #{clip_forward.3} parent=47 // pred_fallthru
        _
      // Predicated region
      $region85: #{clip_forward.3} parent=47 // pred_check
        %p745 = pneg %p349
      $region86: #{clip_forward.3} parent=47 // pred_check_branch
        %747 = sbr.rel (%p745) target = $region88
      $region87: #{clip_forward.3} parent=47 // pred_region
        %p748 = scmp.lt.s32.totalorder %s32, 1
        %s749 = scalar_select %p748, %s32, 1
        %s750 = scalar_lea.vmem %s12, %s749
      $region88: #{clip_forward.3} parent=47 // pred_fallthru
        _
      // Predicated region
      $region89: #{clip_forward.3} parent=47 // pred_check
        %p751 = pneg %p375
      $region90: #{clip_forward.3} parent=47 // pred_check_branch
        %753 = sbr.rel (%p751) target = $region92
      $region91: #{clip_forward.3} parent=47 // pred_region
        %p754 = scmp.lt.s32.totalorder %s32, 1
        %s755 = scalar_select %p754, %s32, 1
        %s756 = scalar_lea.vmem %s13, %s755
      $region92: #{clip_forward.3} parent=47 // pred_fallthru
        _
      // Predicated region
      $region93: #{clip_forward.3} parent=47 // pred_check
        %p757 = pneg %p401
      $region94: #{clip_forward.3} parent=47 // pred_check_branch
        %759 = sbr.rel (%p757) target = $region96
      $region95: #{clip_forward.3} parent=47 // pred_region
        %p760 = scmp.lt.s32.totalorder %s32, 1
        %s761 = scalar_select %p760, %s32, 1
        %s762 = scalar_lea.vmem %s14, %s761
      $region96: #{clip_forward.3} parent=47 // pred_fallthru
        _
      // Predicated region
      $region97: #{clip_forward.3} parent=47 // pred_check
        %p763 = pneg %p427
      $region98: #{clip_forward.3} parent=47 // pred_check_branch
        %765 = sbr.rel (%p763) target = $region100
      $region99: #{clip_forward.3} parent=47 // pred_region
        %p766 = scmp.lt.s32.totalorder %s32, 1
        %s767 = scalar_select %p766, %s32, 1
        %s768 = smul.addr %s767, 16
        %s769 = smul.addr %s768, 8
        %s770 = scalar_lea.vmem %s15, %s769
      $region100: #{clip_forward.3} parent=47 // pred_fallthru
        _
      // Predicated region
      $region101: #{clip_forward.3} parent=47 // pred_check
        %p771 = pneg %p453
      $region102: #{clip_forward.3} parent=47 // pred_check_branch
        %773 = sbr.rel (%p771) target = $region104
      $region103: #{clip_forward.3} parent=47 // pred_region
        %p774 = scmp.lt.s32.totalorder %s32, 1
        %s775 = scalar_select %p774, %s32, 1
        %s776 = smul.addr %s775, 2
        %s777 = scalar_lea.vmem %s16, %s776
      $region104: #{clip_forward.3} parent=47 // pred_fallthru
        _
      // Predicated region
      $region105: #{clip_forward.3} parent=47 // pred_check
        %p778 = pneg %p479
      $region106: #{clip_forward.3} parent=47 // pred_check_branch
        %780 = sbr.rel (%p778) target = $region108
      $region107: #{clip_forward.3} parent=47 // pred_region
        %p781 = scmp.lt.s32.totalorder %s32, 1
        %s782 = scalar_select %p781, %s32, 1
        %s783 = smul.addr %s782, 32
        %s784 = smul.addr %s783, 8
        %s785 = scalar_lea.vmem %s17, %s784
      $region108: #{clip_forward.3} parent=47 // pred_fallthru
        _
      // Predicated region
      $region109: #{clip_forward.3} parent=47 // pred_check
        %p786 = pneg %p505
      $region110: #{clip_forward.3} parent=47 // pred_check_branch
        %788 = sbr.rel (%p786) target = $region112
      $region111: #{clip_forward.3} parent=47 // pred_region
        %p789 = scmp.lt.s32.totalorder %s32, 1
        %s790 = scalar_select %p789, %s32, 1
        %s791 = scalar_lea.vmem %s18, %s790
      $region112: #{clip_forward.3} parent=47 // pred_fallthru
        _
    $region48: #{clip_forward.3} parent=5 // pred_fallthru
      _
    %p792 = scmp.le.s32.totalorder 1, %s32
    %p793 = scmp.lt.s32.totalorder %s32, 3
    %p794 = pnand %p792, %p793
    %p795 = pneg %p794
    // Predicated region
    $region113: #{clip_forward.3} parent=5 // pred_check
      _
    $region114: #{clip_forward.3} parent=5 // pred_check_branch
      %797 = sbr.rel (%p794) target = $region116
    $region115: #{clip_forward.3} parent=5 // pred_region
      %s798 = ssub.s32 %s32, 1
      %p799 = pneg %p53
      %p800 = pneg %p50
      %p801 = pneg %p74
      %p802 = pneg %p71
      %p803 = pneg %p95
      %p804 = pneg %p92
      %p805 = scmp.lt.s32.totalorder %s37, 1
      %s806 = scalar_select %p805, %s37, 1
      %s807 = scalar_lea.vmem %s3, %s806
      %p808 = pneg %p121
      %p809 = pneg %p118
      %p810 = scmp.lt.s32.totalorder %s37, 1
      %s811 = scalar_select %p810, %s37, 1
      %s812 = scalar_lea.vmem %s4, %s811
      %p813 = pneg %p147
      %p814 = pneg %p144
      %p815 = scmp.lt.s32.totalorder %s37, 1
      %s816 = scalar_select %p815, %s37, 1
      %s817 = smul.addr %s816, 16
      %s818 = smul.addr %s817, 8
      %s819 = scalar_lea.vmem %s5, %s818
      %p820 = pneg %p173
      %p821 = pneg %p170
      %p822 = scmp.lt.s32.totalorder %s37, 1
      %s823 = scalar_select %p822, %s37, 1
      %s824 = smul.addr %s823, 16
      %s825 = smul.addr %s824, 8
      %s826 = scalar_lea.vmem %s6, %s825
      %p827 = pneg %p199
      %p828 = pneg %p196
      %p829 = scmp.lt.s32.totalorder %s37, 1
      %s830 = scalar_select %p829, %s37, 1
      %s831 = smul.addr %s830, 16
      %s832 = smul.addr %s831, 8
      %s833 = scalar_lea.vmem %s7, %s832
      %p834 = pneg %p225
      %p835 = pneg %p222
      %p836 = scmp.lt.s32.totalorder %s37, 1
      %s837 = scalar_select %p836, %s37, 1
      %s838 = smul.addr %s837, 2
      %s839 = scalar_lea.vmem %s8, %s838
      %p840 = pneg %p251
      %p841 = pneg %p248
      %p842 = scmp.lt.s32.totalorder %s37, 1
      %s843 = scalar_select %p842, %s37, 1
      %s844 = smul.addr %s843, 2
      %s845 = scalar_lea.vmem %s9, %s844
      %p846 = pneg %p277
      %p847 = pneg %p274
      %p848 = scmp.lt.s32.totalorder %s37, 1
      %s849 = scalar_select %p848, %s37, 1
      %s850 = smul.addr %s849, 2
      %s851 = scalar_lea.vmem %s10, %s850
      %p852 = pneg %p303
      %p853 = pneg %p300
      %p854 = scmp.lt.s32.totalorder %s37, 1
      %s855 = scalar_select %p854, %s37, 1
      %s856 = smul.addr %s855, 8
      %s857 = smul.addr %s856, 8
      %s858 = scalar_lea.vmem %s11, %s857
      %p859 = pneg %p329
      %p860 = pneg %p326
      %p861 = scmp.lt.s32.totalorder %s37, 1
      %s862 = scalar_select %p861, %s37, 1
      %s863 = scalar_lea.vmem %s12, %s862
      %p864 = pneg %p355
      %p865 = pneg %p352
      %p866 = scmp.lt.s32.totalorder %s37, 1
      %s867 = scalar_select %p866, %s37, 1
      %s868 = scalar_lea.vmem %s13, %s867
      %p869 = pneg %p381
      %p870 = pneg %p378
      %p871 = scmp.lt.s32.totalorder %s37, 1
      %s872 = scalar_select %p871, %s37, 1
      %s873 = scalar_lea.vmem %s14, %s872
      %p874 = pneg %p407
      %p875 = pneg %p404
      %p876 = scmp.lt.s32.totalorder %s37, 1
      %s877 = scalar_select %p876, %s37, 1
      %s878 = smul.addr %s877, 16
      %s879 = smul.addr %s878, 8
      %s880 = scalar_lea.vmem %s15, %s879
      %p881 = pneg %p433
      %p882 = pneg %p430
      %p883 = scmp.lt.s32.totalorder %s37, 1
      %s884 = scalar_select %p883, %s37, 1
      %s885 = smul.addr %s884, 2
      %s886 = scalar_lea.vmem %s16, %s885
      %p887 = pneg %p459
      %p888 = pneg %p456
      %p889 = scmp.lt.s32.totalorder %s37, 1
      %s890 = scalar_select %p889, %s37, 1
      %s891 = smul.addr %s890, 32
      %s892 = smul.addr %s891, 8
      %s893 = scalar_lea.vmem %s17, %s892
      %p894 = pneg %p485
      %p895 = pneg %p482
      %p896 = scmp.lt.s32.totalorder %s37, 1
      %s897 = scalar_select %p896, %s37, 1
      %s898 = scalar_lea.vmem %s18, %s897
      %p899 = pneg %p511
      %p900 = pneg %p508
      %p901 = pneg %p532
      %p902 = pneg %p529
      %p903 = pneg %p553
      %p904 = pneg %p550
      %p905 = pneg %p574
      %p906 = pneg %p571
      %p907 = pneg %p595
      %p908 = pneg %p592
      %p909 = pneg %p616
      %p910 = pneg %p613
      %p911 = pneg %p637
      %p912 = pneg %p634
      %p913 = scmp.lt.s32.totalorder %s37, 1
      %s914 = scalar_select %p913, %s37, 1
      %s915 = scalar_lea.vmem %s3, %s914
      %p916 = scmp.lt.s32.totalorder %s37, 1
      %s917 = scalar_select %p916, %s37, 1
      %s918 = scalar_lea.vmem %s4, %s917
      %p919 = scmp.lt.s32.totalorder %s37, 1
      %s920 = scalar_select %p919, %s37, 1
      %s921 = smul.addr %s920, 16
      %s922 = smul.addr %s921, 8
      %s923 = scalar_lea.vmem %s5, %s922
      %p924 = scmp.lt.s32.totalorder %s37, 1
      %s925 = scalar_select %p924, %s37, 1
      %s926 = smul.addr %s925, 16
      %s927 = smul.addr %s926, 8
      %s928 = scalar_lea.vmem %s6, %s927
      %p929 = scmp.lt.s32.totalorder %s37, 1
      %s930 = scalar_select %p929, %s37, 1
      %s931 = smul.addr %s930, 16
      %s932 = smul.addr %s931, 8
      %s933 = scalar_lea.vmem %s7, %s932
      %p934 = scmp.lt.s32.totalorder %s37, 1
      %s935 = scalar_select %p934, %s37, 1
      %s936 = smul.addr %s935, 2
      %s937 = scalar_lea.vmem %s8, %s936
      %p938 = scmp.lt.s32.totalorder %s37, 1
      %s939 = scalar_select %p938, %s37, 1
      %s940 = smul.addr %s939, 2
      %s941 = scalar_lea.vmem %s9, %s940
      %p942 = scmp.lt.s32.totalorder %s37, 1
      %s943 = scalar_select %p942, %s37, 1
      %s944 = smul.addr %s943, 2
      %s945 = scalar_lea.vmem %s10, %s944
      %p946 = scmp.lt.s32.totalorder %s37, 1
      %s947 = scalar_select %p946, %s37, 1
      %s948 = smul.addr %s947, 8
      %s949 = smul.addr %s948, 8
      %s950 = scalar_lea.vmem %s11, %s949
      %p951 = scmp.lt.s32.totalorder %s37, 1
      %s952 = scalar_select %p951, %s37, 1
      %s953 = scalar_lea.vmem %s12, %s952
      %p954 = scmp.lt.s32.totalorder %s37, 1
      %s955 = scalar_select %p954, %s37, 1
      %s956 = scalar_lea.vmem %s13, %s955
      %p957 = scmp.lt.s32.totalorder %s37, 1
      %s958 = scalar_select %p957, %s37, 1
      %s959 = scalar_lea.vmem %s14, %s958
      %p960 = scmp.lt.s32.totalorder %s37, 1
      %s961 = scalar_select %p960, %s37, 1
      %s962 = smul.addr %s961, 16
      %s963 = smul.addr %s962, 8
      %s964 = scalar_lea.vmem %s15, %s963
      %p965 = scmp.lt.s32.totalorder %s37, 1
      %s966 = scalar_select %p965, %s37, 1
      %s967 = smul.addr %s966, 2
      %s968 = scalar_lea.vmem %s16, %s967
      %p969 = scmp.lt.s32.totalorder %s37, 1
      %s970 = scalar_select %p969, %s37, 1
      %s971 = smul.addr %s970, 32
      %s972 = smul.addr %s971, 8
      %s973 = scalar_lea.vmem %s17, %s972
      %p974 = scmp.lt.s32.totalorder %s37, 1
      %s975 = scalar_select %p974, %s37, 1
      %s976 = scalar_lea.vmem %s18, %s975
      %p977 = scmp.eq.s32.totalorder %s37, 0
      // Predicated region
      $region117: #{clip_forward.3} parent=115 // pred_check
        %p978 = pneg %p977
      $region118: #{clip_forward.3} parent=115 // pred_check_branch
        %980 = sbr.rel (%p978) target = $region120
      $region119: #{clip_forward.3} parent=115 // pred_region
        %v981 = vld [vmem:[%s0] sm:$0xff]
        %v982 = vld [vmem:[%s0 + $0x8] sm:$0xff]
        %vm983 = vcmask 523264
        %984 = vst.msk [vmem:[#allocation2] sm:$0xff] %vm983, %v981
        %985 = vst.msk [vmem:[#allocation2 + $0x8] sm:$0xff] %vm983, %v982
      $region120: #{clip_forward.3} parent=115 // pred_fallthru
        _
      %v986 = vld [vmem:[%s1] sm:$0xff]
      %v987 = vld [vmem:[%s1 + $0x8] sm:$0xff]
      %v988 = vld [vmem:[#allocation2] sm:$0xff]
      %v989 = vld [vmem:[#allocation2 + $0x8] sm:$0xff]
      %v990 = vld [vmem:[%s915] sm:$0x1]
      %v991 = vld [vmem:[%s918] sm:$0x1]
      %vm992 = vcmask 523264
      %v993 = vsel %vm992, %v988, 0.0
      %994 = vadd.xlane.f32.xlu0 %v993
      %v995 = vpop.xlane.xlu0 %994
      %v996 = vsel %vm992, %v989, 0.0
      %997 = vadd.xlane.f32.xlu0 %v996
      %v998 = vpop.xlane.xlu0 %997
      %v999 = vrcp.pop 64.0
      %v1000 = vmul.f32 %v995, %v999
      %v1001 = vmul.f32 %v998, %v999
      %v1002 = vsub.f32 %v988, %v1000
      %v1003 = vsub.f32 %v989, %v1001
      %v1004 = vmul.f32 %v1002, %v1002
      %v1005 = vmul.f32 %v1003, %v1003
      %v1006 = vsel %vm992, %v1004, 0.0
      %1007 = vadd.xlane.f32.xlu0 %v1006
      %v1008 = vpop.xlane.xlu0 %1007
      %v1009 = vsel %vm992, %v1005, 0.0
      %1010 = vadd.xlane.f32.xlu0 %v1009
      %v1011 = vpop.xlane.xlu0 %1010
      %v1012 = vmul.f32 %v1008, %v999
      %v1013 = vmul.f32 %v1011, %v999
      %v1014 = vadd.f32 %v1012, 1e-05
      %v1015 = vadd.f32 %v1013, 1e-05
      %v1016 = vrsqrt.pop %v1014
      %v1017 = vrsqrt.pop %v1015
      %v1018 = vmul.f32 %v1002, %v1016
      %v1019 = vmul.f32 %v1003, %v1017
      %v1021 = vlaneseq
      %v1022 = vshrl.u32 %v1021, 7
      %v1023 = vsub.s32 0, %v1022
      %v1024 = vrot.slane %v990, %v1023
      %v1026 = vmul.f32 %v1018, %v1024
      %v1027 = vmul.f32 %v1019, %v1024
      %v1029 = vlaneseq
      %v1030 = vshrl.u32 %v1029, 7
      %v1031 = vsub.s32 0, %v1030
      %v1032 = vrot.slane %v991, %v1031
      %v1034 = vadd.f32 %v1026, %v1032
      %v1035 = vadd.f32 %v1027, %v1032
      %v1036 = vld [vmem:[%s923] sm:$0xff]
      %v1037 = vld [vmem:[%s923 + $0x8] sm:$0xff]
      %v1038 = vld [vmem:[%s923 + $0x10] sm:$0xff]
      %v1039 = vld [vmem:[%s923 + $0x18] sm:$0xff]
      %v1040 = vld [vmem:[%s923 + $0x20] sm:$0xff]
      %v1041 = vld [vmem:[%s923 + $0x28] sm:$0xff]
      %v1042 = vld [vmem:[%s923 + $0x30] sm:$0xff]
      %v1043 = vld [vmem:[%s923 + $0x38] sm:$0xff]
      %v1044 = vld [vmem:[%s937] sm:$0x1]
      %v1046 = vlaneseq
      %v1047 = vshrl.u32 %v1046, 7
      %v1048 = vsub.s32 0, %v1047
      %v1049 = vrot.slane %v1044, %v1048
      %v1052 = vsel %vm992, %v1034, 0
      %v1055 = vsel %vm992, %v1035, 0
      %1057 = vmatprep.subr.mxu0 0.0
      %1058 = vmatpush1.msra.mxu0 %v1036
      %1059 = vmatprep.subr.mxu0 0.0
      %1060 = vmatpush1.msra.mxu0 %v1037
      %1061 = vmatprep.subr.mxu0 0.0
      %1062 = vmatpush1.msra.mxu0 %v1038
      %1063 = vmatprep.subr.mxu0 0.0
      %1064 = vmatpush1.msra.mxu0 %v1039
      %1065 = vmatprep.subr.mxu0 0.0
      %1066 = vmatpush1.msra.mxu0 %v1040
      %1067 = vmatprep.subr.mxu0 0.0
      %1068 = vmatpush1.msra.mxu0 %v1041
      %1069 = vmatprep.subr.mxu0 0.0
      %1070 = vmatpush1.msra.mxu0 %v1042
      %1071 = vmatprep.subr.mxu0 0.0
      %1072 = vmatpush1.msra.mxu0 %v1043
      %1073 = vmatprep.subr.mxu0 0.0
      %1074 = vmatpush1.msra.mxu0 0.0
      %1075 = vmatprep.subr.mxu0 0.0
      %1076 = vmatpush1.msra.mxu0 0.0
      %1077 = vmatprep.subr.mxu0 0.0
      %1078 = vmatpush1.msra.mxu0 0.0
      %1079 = vmatprep.subr.mxu0 0.0
      %1080 = vmatpush1.msra.mxu0 0.0
      %1081 = vmatprep.subr.mxu0 0.0
      %1082 = vmatpush1.msra.mxu0 0.0
      %1083 = vmatprep.subr.mxu0 0.0
      %1084 = vmatpush1.msra.mxu0 0.0
      %1085 = vmatprep.subr.mxu0 0.0
      %1086 = vmatpush1.msra.mxu0 0.0
      %1087 = vmatprep.subr.mxu0 0.0
      %1088 = vmatpush1.msra.mxu0 0.0
      %1089 = vmatprep.subr.mxu0 0.0
      %1090 = vmatpush1.msra.mxu0 0.0
      %1091 = vmatprep.subr.mxu0 0.0
      %1092 = vmatpush1.msra.mxu0 0.0
      %1093 = vmatprep.subr.mxu0 0.0
      %1094 = vmatpush1.msra.mxu0 0.0
      %1095 = vmatprep.subr.mxu0 0.0
      %1096 = vmatpush1.msra.mxu0 0.0
      %1097 = vmatprep.subr.mxu0 0.0
      %1098 = vmatpush1.msra.mxu0 0.0
      %1099 = vmatprep.subr.mxu0 0.0
      %1100 = vmatpush1.msra.mxu0 0.0
      %1101 = vmatprep.subr.mxu0 0.0
      %1102 = vmatpush1.msra.mxu0 0.0
      %1103 = vmatprep.subr.mxu0 0.0
      %1104 = vmatpush1.msra.mxu0 0.0
      %1105 = vmatprep.subr.mxu0 0.0
      %1106 = vmatpush1.msra.mxu0 0.0
      %1107 = vmatprep.subr.mxu0 0.0
      %1108 = vmatpush1.msra.mxu0 0.0
      %1109 = vmatprep.subr.mxu0 0.0
      %1110 = vmatpush1.msra.mxu0 0.0
      %1111 = vmatprep.subr.mxu0 0.0
      %1112 = vmatpush1.msra.mxu0 0.0
      %1113 = vmatprep.subr.mxu0 0.0
      %1114 = vmatpush1.msra.mxu0 0.0
      %1115 = vmatprep.subr.mxu0 0.0
      %1116 = vmatpush1.msra.mxu0 0.0
      %1117 = vmatprep.subr.mxu0 0.0
      %1118 = vmatpush1.msra.mxu0 0.0
      %1119 = vmatprep.subr.mxu0 0.0
      %1120 = vmatpush1.msra.mxu0 0.0
      %1121 = vmatprep.mubr.f32.mxu0 0.0
      %1122 = vmatmul.mubr.f32.gmra.mrb[0].mxu0 %v1052
      %v1123 = vpop.f32.mrb[0].mxu0
      %v1124 = vadd.f32 %v1049, %v1123
      %v1125 = vpop.f32.mrb[0].mxu0
      %1126 = vmatprep.mubr.f32.mxu0 0.0
      %1127 = vmatmul.mubr.f32.gmra.mrb[0].mxu0 %v1055
      %v1128 = vpop.f32.mrb[0].mxu0
      %v1129 = vadd.f32 %v1049, %v1128
      %v1130 = vpop.f32.mrb[0].mxu0
      %1131 = vdwg.mxu0
      %v1132 = vld [vmem:[%s928] sm:$0xff]
      %v1133 = vld [vmem:[%s928 + $0x8] sm:$0xff]
      %v1134 = vld [vmem:[%s928 + $0x10] sm:$0xff]
      %v1135 = vld [vmem:[%s928 + $0x18] sm:$0xff]
      %v1136 = vld [vmem:[%s928 + $0x20] sm:$0xff]
      %v1137 = vld [vmem:[%s928 + $0x28] sm:$0xff]
      %v1138 = vld [vmem:[%s928 + $0x30] sm:$0xff]
      %v1139 = vld [vmem:[%s928 + $0x38] sm:$0xff]
      %v1140 = vld [vmem:[%s941] sm:$0x1]
      %v1142 = vlaneseq
      %v1143 = vshrl.u32 %v1142, 7
      %v1144 = vsub.s32 0, %v1143
      %v1145 = vrot.slane %v1140, %v1144
      %1147 = vmatprep.subr.mxu0 0.0
      %1148 = vmatpush1.msra.mxu0 %v1132
      %1149 = vmatprep.subr.mxu0 0.0
      %1150 = vmatpush1.msra.mxu0 %v1133
      %1151 = vmatprep.subr.mxu0 0.0
      %1152 = vmatpush1.msra.mxu0 %v1134
      %1153 = vmatprep.subr.mxu0 0.0
      %1154 = vmatpush1.msra.mxu0 %v1135
      %1155 = vmatprep.subr.mxu0 0.0
      %1156 = vmatpush1.msra.mxu0 %v1136
      %1157 = vmatprep.subr.mxu0 0.0
      %1158 = vmatpush1.msra.mxu0 %v1137
      %1159 = vmatprep.subr.mxu0 0.0
      %1160 = vmatpush1.msra.mxu0 %v1138
      %1161 = vmatprep.subr.mxu0 0.0
      %1162 = vmatpush1.msra.mxu0 %v1139
      %1163 = vmatprep.subr.mxu0 0.0
      %1164 = vmatpush1.msra.mxu0 0.0
      %1165 = vmatprep.subr.mxu0 0.0
      %1166 = vmatpush1.msra.mxu0 0.0
      %1167 = vmatprep.subr.mxu0 0.0
      %1168 = vmatpush1.msra.mxu0 0.0
      %1169 = vmatprep.subr.mxu0 0.0
      %1170 = vmatpush1.msra.mxu0 0.0
      %1171 = vmatprep.subr.mxu0 0.0
      %1172 = vmatpush1.msra.mxu0 0.0
      %1173 = vmatprep.subr.mxu0 0.0
      %1174 = vmatpush1.msra.mxu0 0.0
      %1175 = vmatprep.subr.mxu0 0.0
      %1176 = vmatpush1.msra.mxu0 0.0
      %1177 = vmatprep.subr.mxu0 0.0
      %1178 = vmatpush1.msra.mxu0 0.0
      %1179 = vmatprep.subr.mxu0 0.0
      %1180 = vmatpush1.msra.mxu0 0.0
      %1181 = vmatprep.subr.mxu0 0.0
      %1182 = vmatpush1.msra.mxu0 0.0
      %1183 = vmatprep.subr.mxu0 0.0
      %1184 = vmatpush1.msra.mxu0 0.0
      %1185 = vmatprep.subr.mxu0 0.0
      %1186 = vmatpush1.msra.mxu0 0.0
      %1187 = vmatprep.subr.mxu0 0.0
      %1188 = vmatpush1.msra.mxu0 0.0
      %1189 = vmatprep.subr.mxu0 0.0
      %1190 = vmatpush1.msra.mxu0 0.0
      %1191 = vmatprep.subr.mxu0 0.0
      %1192 = vmatpush1.msra.mxu0 0.0
      %1193 = vmatprep.subr.mxu0 0.0
      %1194 = vmatpush1.msra.mxu0 0.0
      %1195 = vmatprep.subr.mxu0 0.0
      %1196 = vmatpush1.msra.mxu0 0.0
      %1197 = vmatprep.subr.mxu0 0.0
      %1198 = vmatpush1.msra.mxu0 0.0
      %1199 = vmatprep.subr.mxu0 0.0
      %1200 = vmatpush1.msra.mxu0 0.0
      %1201 = vmatprep.subr.mxu0 0.0
      %1202 = vmatpush1.msra.mxu0 0.0
      %1203 = vmatprep.subr.mxu0 0.0
      %1204 = vmatpush1.msra.mxu0 0.0
      %1205 = vmatprep.subr.mxu0 0.0
      %1206 = vmatpush1.msra.mxu0 0.0
      %1207 = vmatprep.subr.mxu0 0.0
      %1208 = vmatpush1.msra.mxu0 0.0
      %1209 = vmatprep.subr.mxu0 0.0
      %1210 = vmatpush1.msra.mxu0 0.0
      %1211 = vmatprep.mubr.f32.mxu0 0.0
      %1212 = vmatmul.mubr.f32.gmra.mrb[0].mxu0 %v1052
      %v1213 = vpop.f32.mrb[0].mxu0
      %v1214 = vadd.f32 %v1145, %v1213
      %v1215 = vpop.f32.mrb[0].mxu0
      %1216 = vmatprep.mubr.f32.mxu0 0.0
      %1217 = vmatmul.mubr.f32.gmra.mrb[0].mxu0 %v1055
      %v1218 = vpop.f32.mrb[0].mxu0
      %v1219 = vadd.f32 %v1145, %v1218
      %v1220 = vpop.f32.mrb[0].mxu0
      %1221 = vdwg.mxu0
      %v1222 = vld [vmem:[%s933] sm:$0xff]
      %v1223 = vld [vmem:[%s933 + $0x8] sm:$0xff]
      %v1224 = vld [vmem:[%s933 + $0x10] sm:$0xff]
      %v1225 = vld [vmem:[%s933 + $0x18] sm:$0xff]
      %v1226 = vld [vmem:[%s933 + $0x20] sm:$0xff]
      %v1227 = vld [vmem:[%s933 + $0x28] sm:$0xff]
      %v1228 = vld [vmem:[%s933 + $0x30] sm:$0xff]
      %v1229 = vld [vmem:[%s933 + $0x38] sm:$0xff]
      %v1230 = vld [vmem:[%s945] sm:$0x1]
      %v1232 = vlaneseq
      %v1233 = vshrl.u32 %v1232, 7
      %v1234 = vsub.s32 0, %v1233
      %v1235 = vrot.slane %v1230, %v1234
      %1237 = vmatprep.subr.mxu0 0.0
      %1238 = vmatpush1.msra.mxu0 %v1222
      %1239 = vmatprep.subr.mxu0 0.0
      %1240 = vmatpush1.msra.mxu0 %v1223
      %1241 = vmatprep.subr.mxu0 0.0
      %1242 = vmatpush1.msra.mxu0 %v1224
      %1243 = vmatprep.subr.mxu0 0.0
      %1244 = vmatpush1.msra.mxu0 %v1225
      %1245 = vmatprep.subr.mxu0 0.0
      %1246 = vmatpush1.msra.mxu0 %v1226
      %1247 = vmatprep.subr.mxu0 0.0
      %1248 = vmatpush1.msra.mxu0 %v1227
      %1249 = vmatprep.subr.mxu0 0.0
      %1250 = vmatpush1.msra.mxu0 %v1228
      %1251 = vmatprep.subr.mxu0 0.0
      %1252 = vmatpush1.msra.mxu0 %v1229
      %1253 = vmatprep.subr.mxu0 0.0
      %1254 = vmatpush1.msra.mxu0 0.0
      %1255 = vmatprep.subr.mxu0 0.0
      %1256 = vmatpush1.msra.mxu0 0.0
      %1257 = vmatprep.subr.mxu0 0.0
      %1258 = vmatpush1.msra.mxu0 0.0
      %1259 = vmatprep.subr.mxu0 0.0
      %1260 = vmatpush1.msra.mxu0 0.0
      %1261 = vmatprep.subr.mxu0 0.0
      %1262 = vmatpush1.msra.mxu0 0.0
      %1263 = vmatprep.subr.mxu0 0.0
      %1264 = vmatpush1.msra.mxu0 0.0
      %1265 = vmatprep.subr.mxu0 0.0
      %1266 = vmatpush1.msra.mxu0 0.0
      %1267 = vmatprep.subr.mxu0 0.0
      %1268 = vmatpush1.msra.mxu0 0.0
      %1269 = vmatprep.subr.mxu0 0.0
      %1270 = vmatpush1.msra.mxu0 0.0
      %1271 = vmatprep.subr.mxu0 0.0
      %1272 = vmatpush1.msra.mxu0 0.0
      %1273 = vmatprep.subr.mxu0 0.0
      %1274 = vmatpush1.msra.mxu0 0.0
      %1275 = vmatprep.subr.mxu0 0.0
      %1276 = vmatpush1.msra.mxu0 0.0
      %1277 = vmatprep.subr.mxu0 0.0
      %1278 = vmatpush1.msra.mxu0 0.0
      %1279 = vmatprep.subr.mxu0 0.0
      %1280 = vmatpush1.msra.mxu0 0.0
      %1281 = vmatprep.subr.mxu0 0.0
      %1282 = vmatpush1.msra.mxu0 0.0
      %1283 = vmatprep.subr.mxu0 0.0
      %1284 = vmatpush1.msra.mxu0 0.0
      %1285 = vmatprep.subr.mxu0 0.0
      %1286 = vmatpush1.msra.mxu0 0.0
      %1287 = vmatprep.subr.mxu0 0.0
      %1288 = vmatpush1.msra.mxu0 0.0
      %1289 = vmatprep.subr.mxu0 0.0
      %1290 = vmatpush1.msra.mxu0 0.0
      %1291 = vmatprep.subr.mxu0 0.0
      %1292 = vmatpush1.msra.mxu0 0.0
      %1293 = vmatprep.subr.mxu0 0.0
      %1294 = vmatpush1.msra.mxu0 0.0
      %1295 = vmatprep.subr.mxu0 0.0
      %1296 = vmatpush1.msra.mxu0 0.0
      %1297 = vmatprep.subr.mxu0 0.0
      %1298 = vmatpush1.msra.mxu0 0.0
      %1299 = vmatprep.subr.mxu0 0.0
      %1300 = vmatpush1.msra.mxu0 0.0
      %1301 = vmatprep.mubr.f32.mxu0 0.0
      %1302 = vmatmul.mubr.f32.gmra.mrb[0].mxu0 %v1052
      %v1303 = vpop.f32.mrb[0].mxu0
      %v1304 = vadd.f32 %v1235, %v1303
      %v1305 = vpop.f32.mrb[0].mxu0
      %1306 = vmatprep.mubr.f32.mxu0 0.0
      %1307 = vmatmul.mubr.f32.gmra.mrb[0].mxu0 %v1055
      %v1308 = vpop.f32.mrb[0].mxu0
      %v1309 = vadd.f32 %v1235, %v1308
      %v1310 = vpop.f32.mrb[0].mxu0
      %1311 = vdwg.mxu0
      %vm1312 = vcmask 261120
      %v1314 = vsel %vm1312, %v1124, 0
      %v1317 = vsel %vm1312, %v1129, 0
      %v1320 = vsel %vm1312, %v1214, 0
      %v1323 = vsel %vm1312, %v1219, 0
      %1325 = vmatprep.subr.mxu0 0.0
      %1326 = vmatpush1.xpose.msra.mxu0 %v1320
      %1327 = vmatprep.subr.mxu0 0.0
      %1328 = vmatpush1.xpose.msra.mxu0 %v1323
      %1329 = vmatprep.subr.mxu0 0.0
      %1330 = vmatpush1.xpose.msra.mxu0 0.0
      %1331 = vmatprep.subr.mxu0 0.0
      %1332 = vmatpush1.xpose.msra.mxu0 0.0
      %1333 = vmatprep.subr.mxu0 0.0
      %1334 = vmatpush1.xpose.msra.mxu0 0.0
      %1335 = vmatprep.subr.mxu0 0.0
      %1336 = vmatpush1.xpose.msra.mxu0 0.0
      %1337 = vmatprep.subr.mxu0 0.0
      %1338 = vmatpush1.xpose.msra.mxu0 0.0
      %1339 = vmatprep.subr.mxu0 0.0
      %1340 = vmatpush1.xpose.msra.mxu0 0.0
      %1341 = vmatprep.subr.mxu0 0.0
      %1342 = vmatpush1.xpose.msra.mxu0 0.0
      %1343 = vmatprep.subr.mxu0 0.0
      %1344 = vmatpush1.xpose.msra.mxu0 0.0
      %1345 = vmatprep.subr.mxu0 0.0
      %1346 = vmatpush1.xpose.msra.mxu0 0.0
      %1347 = vmatprep.subr.mxu0 0.0
      %1348 = vmatpush1.xpose.msra.mxu0 0.0
      %1349 = vmatprep.subr.mxu0 0.0
      %1350 = vmatpush1.xpose.msra.mxu0 0.0
      %1351 = vmatprep.subr.mxu0 0.0
      %1352 = vmatpush1.xpose.msra.mxu0 0.0
      %1353 = vmatprep.subr.mxu0 0.0
      %1354 = vmatpush1.xpose.msra.mxu0 0.0
      %1355 = vmatprep.subr.mxu0 0.0
      %1356 = vmatpush1.xpose.msra.mxu0 0.0
      %1357 = vmatprep.subr.mxu0 0.0
      %1358 = vmatpush1.xpose.msra.mxu0 0.0
      %1359 = vmatprep.subr.mxu0 0.0
      %1360 = vmatpush1.xpose.msra.mxu0 0.0
      %1361 = vmatprep.subr.mxu0 0.0
      %1362 = vmatpush1.xpose.msra.mxu0 0.0
      %1363 = vmatprep.subr.mxu0 0.0
      %1364 = vmatpush1.xpose.msra.mxu0 0.0
      %1365 = vmatprep.subr.mxu0 0.0
      %1366 = vmatpush1.xpose.msra.mxu0 0.0
      %1367 = vmatprep.subr.mxu0 0.0
      %1368 = vmatpush1.xpose.msra.mxu0 0.0
      %1369 = vmatprep.subr.mxu0 0.0
      %1370 = vmatpush1.xpose.msra.mxu0 0.0
      %1371 = vmatprep.subr.mxu0 0.0
      %1372 = vmatpush1.xpose.msra.mxu0 0.0
      %1373 = vmatprep.subr.mxu0 0.0
      %1374 = vmatpush1.xpose.msra.mxu0 0.0
      %1375 = vmatprep.subr.mxu0 0.0
      %1376 = vmatpush1.xpose.msra.mxu0 0.0
      %1377 = vmatprep.subr.mxu0 0.0
      %1378 = vmatpush1.xpose.msra.mxu0 0.0
      %1379 = vmatprep.subr.mxu0 0.0
      %1380 = vmatpush1.xpose.msra.mxu0 0.0
      %1381 = vmatprep.subr.mxu0 0.0
      %1382 = vmatpush1.xpose.msra.mxu0 0.0
      %1383 = vmatprep.subr.mxu0 0.0
      %1384 = vmatpush1.xpose.msra.mxu0 0.0
      %1385 = vmatprep.subr.mxu0 0.0
      %1386 = vmatpush1.xpose.msra.mxu0 0.0
      %1387 = vmatprep.subr.mxu0 0.0
      %1388 = vmatpush1.xpose.msra.mxu0 0.0
      %1389 = vmatprep.mubr.f32.mxu0 0.0
      %1390 = vmatmul.mubr.f32.gmra.mrb[0].mxu0 %v1314
      %v1391 = vpop.f32.mrb[0].mxu0
      %v1392 = vadd.f32 0.0, %v1391
      %v1393 = vpop.f32.mrb[0].mxu0
      %1394 = vmatprep.mubr.f32.mxu0 0.0
      %1395 = vmatmul.mubr.f32.gmra.mrb[0].mxu0 %v1317
      %v1396 = vpop.f32.mrb[0].mxu0
      %v1397 = vadd.f32 0.0, %v1396
      %v1398 = vpop.f32.mrb[0].mxu0
      %1399 = vdwg.mxu0
      %v1400 = vmul.f32 %v1392, 0.17677669
      %v1401 = vmul.f32 %v1397, 0.17677669
      %v1402 = vadd.f32 %v1400, %v986
      %v1403 = vadd.f32 %v1401, %v987
      %vm1404 = vcmask 130048
      %v1405 = vsel %vm1404, %v1402, -inf
      %1406 = vmax.xlane.f32.xlu0 %v1405
      %v1407 = vpop.xlane.xlu0 %1406
      %v1408 = vsel %vm1404, %v1403, -inf
      %1409 = vmax.xlane.f32.xlu0 %v1408
      %v1410 = vpop.xlane.xlu0 %1409
      %v1411 = vsub.f32 %v1402, %v1407
      %v1412 = vsub.f32 %v1403, %v1410
      %v1413 = vmul.f32 %v1411, 1.442695
      %v1414 = vpow.pop %v1413
      %v1415 = vmul.f32 %v1412, 1.442695
      %v1416 = vpow.pop %v1415
      %v1417 = vsel %vm1404, %v1414, 0.0
      %1418 = vadd.xlane.f32.xlu0 %v1417
      %v1419 = vpop.xlane.xlu0 %1418
      %v1420 = vsel %vm1404, %v1416, 0.0
      %1421 = vadd.xlane.f32.xlu0 %v1420
      %v1422 = vpop.xlane.xlu0 %1421
      %v1423 = vrcp.pop %v1419
      %v1424 = vrcp.pop %v1422
      %v1425 = vmul.f32 %v1414, %v1423
      %v1426 = vmul.f32 %v1416, %v1424
      %v1428 = vsel %vm1404, %v1425, 0
      %v1431 = vsel %vm1404, %v1426, 0
      %1433 = vmatprep.subr.mxu0 0.0
      %1434 = vmatpush1.msra.mxu0 %v1304
      %1435 = vmatprep.subr.mxu0 0.0
      %1436 = vmatpush1.msra.mxu0 %v1309
      %1437 = vmatprep.subr.mxu0 0.0
      %1438 = vmatpush1.msra.mxu0 0.0
      %1439 = vmatprep.subr.mxu0 0.0
      %1440 = vmatpush1.msra.mxu0 0.0
      %1441 = vmatprep.subr.mxu0 0.0
      %1442 = vmatpush1.msra.mxu0 0.0
      %1443 = vmatprep.subr.mxu0 0.0
      %1444 = vmatpush1.msra.mxu0 0.0
      %1445 = vmatprep.subr.mxu0 0.0
      %1446 = vmatpush1.msra.mxu0 0.0
      %1447 = vmatprep.subr.mxu0 0.0
      %1448 = vmatpush1.msra.mxu0 0.0
      %1449 = vmatprep.subr.mxu0 0.0
      %1450 = vmatpush1.msra.mxu0 0.0
      %1451 = vmatprep.subr.mxu0 0.0
      %1452 = vmatpush1.msra.mxu0 0.0
      %1453 = vmatprep.subr.mxu0 0.0
      %1454 = vmatpush1.msra.mxu0 0.0
      %1455 = vmatprep.subr.mxu0 0.0
      %1456 = vmatpush1.msra.mxu0 0.0
      %1457 = vmatprep.subr.mxu0 0.0
      %1458 = vmatpush1.msra.mxu0 0.0
      %1459 = vmatprep.subr.mxu0 0.0
      %1460 = vmatpush1.msra.mxu0 0.0
      %1461 = vmatprep.subr.mxu0 0.0
      %1462 = vmatpush1.msra.mxu0 0.0
      %1463 = vmatprep.subr.mxu0 0.0
      %1464 = vmatpush1.msra.mxu0 0.0
      %1465 = vmatprep.subr.mxu0 0.0
      %1466 = vmatpush1.msra.mxu0 0.0
      %1467 = vmatprep.subr.mxu0 0.0
      %1468 = vmatpush1.msra.mxu0 0.0
      %1469 = vmatprep.subr.mxu0 0.0
      %1470 = vmatpush1.msra.mxu0 0.0
      %1471 = vmatprep.subr.mxu0 0.0
      %1472 = vmatpush1.msra.mxu0 0.0
      %1473 = vmatprep.subr.mxu0 0.0
      %1474 = vmatpush1.msra.mxu0 0.0
      %1475 = vmatprep.subr.mxu0 0.0
      %1476 = vmatpush1.msra.mxu0 0.0
      %1477 = vmatprep.subr.mxu0 0.0
      %1478 = vmatpush1.msra.mxu0 0.0
      %1479 = vmatprep.subr.mxu0 0.0
      %1480 = vmatpush1.msra.mxu0 0.0
      %1481 = vmatprep.subr.mxu0 0.0
      %1482 = vmatpush1.msra.mxu0 0.0
      %1483 = vmatprep.subr.mxu0 0.0
      %1484 = vmatpush1.msra.mxu0 0.0
      %1485 = vmatprep.subr.mxu0 0.0
      %1486 = vmatpush1.msra.mxu0 0.0
      %1487 = vmatprep.subr.mxu0 0.0
      %1488 = vmatpush1.msra.mxu0 0.0
      %1489 = vmatprep.subr.mxu0 0.0
      %1490 = vmatpush1.msra.mxu0 0.0
      %1491 = vmatprep.subr.mxu0 0.0
      %1492 = vmatpush1.msra.mxu0 0.0
      %1493 = vmatprep.subr.mxu0 0.0
      %1494 = vmatpush1.msra.mxu0 0.0
      %1495 = vmatprep.subr.mxu0 0.0
      %1496 = vmatpush1.msra.mxu0 0.0
      %1497 = vmatprep.mubr.f32.mxu0 0.0
      %1498 = vmatmul.mubr.f32.gmra.mrb[0].mxu0 %v1428
      %v1499 = vpop.f32.mrb[0].mxu0
      %v1500 = vadd.f32 0.0, %v1499
      %v1501 = vpop.f32.mrb[0].mxu0
      %1502 = vmatprep.mubr.f32.mxu0 0.0
      %1503 = vmatmul.mubr.f32.gmra.mrb[0].mxu0 %v1431
      %v1504 = vpop.f32.mrb[0].mxu0
      %v1505 = vadd.f32 0.0, %v1504
      %v1506 = vpop.f32.mrb[0].mxu0
      %1507 = vdwg.mxu0
      %v1508 = vld [vmem:[%s950] sm:$0xff]
      %v1509 = vld [vmem:[%s950 + $0x8] sm:$0xff]
      %v1510 = vld [vmem:[%s950 + $0x10] sm:$0xff]
      %v1511 = vld [vmem:[%s950 + $0x18] sm:$0xff]
      %s1512 = scalar_lea.vmem %s923, 64
      %v1513 = vld [vmem:[%s1512] sm:$0xff]
      %v1514 = vld [vmem:[%s1512 + $0x8] sm:$0xff]
      %v1515 = vld [vmem:[%s1512 + $0x10] sm:$0xff]
      %v1516 = vld [vmem:[%s1512 + $0x18] sm:$0xff]
      %v1517 = vld [vmem:[%s1512 + $0x20] sm:$0xff]
      %v1518 = vld [vmem:[%s1512 + $0x28] sm:$0xff]
      %v1519 = vld [vmem:[%s1512 + $0x30] sm:$0xff]
      %v1520 = vld [vmem:[%s1512 + $0x38] sm:$0xff]
      %s1521 = scalar_lea.vmem %s937, 1
      %v1522 = vld [vmem:[%s1521] sm:$0x1]
      %v1524 = vlaneseq
      %v1525 = vshrl.u32 %v1524, 7
      %v1526 = vsub.s32 0, %v1525
      %v1527 = vrot.slane %v1522, %v1526
      %1529 = vmatprep.subr.mxu0 0.0
      %1530 = vmatpush1.msra.mxu0 %v1513
      %1531 = vmatprep.subr.mxu0 0.0
      %1532 = vmatpush1.msra.mxu0 %v1514
      %1533 = vmatprep.subr.mxu0 0.0
      %1534 = vmatpush1.msra.mxu0 %v1515
      %1535 = vmatprep.subr.mxu0 0.0
      %1536 = vmatpush1.msra.mxu0 %v1516
      %1537 = vmatprep.subr.mxu0 0.0
      %1538 = vmatpush1.msra.mxu0 %v1517
      %1539 = vmatprep.subr.mxu0 0.0
      %1540 = vmatpush1.msra.mxu0 %v1518
      %1541 = vmatprep.subr.mxu0 0.0
      %1542 = vmatpush1.msra.mxu0 %v1519
      %1543 = vmatprep.subr.mxu0 0.0
      %1544 = vmatpush1.msra.mxu0 %v1520
      %1545 = vmatprep.subr.mxu0 0.0
      %1546 = vmatpush1.msra.mxu0 0.0
      %1547 = vmatprep.subr.mxu0 0.0
      %1548 = vmatpush1.msra.mxu0 0.0
      %1549 = vmatprep.subr.mxu0 0.0
      %1550 = vmatpush1.msra.mxu0 0.0
      %1551 = vmatprep.subr.mxu0 0.0
      %1552 = vmatpush1.msra.mxu0 0.0
      %1553 = vmatprep.subr.mxu0 0.0
      %1554 = vmatpush1.msra.mxu0 0.0
      %1555 = vmatprep.subr.mxu0 0.0
      %1556 = vmatpush1.msra.mxu0 0.0
      %1557 = vmatprep.subr.mxu0 0.0
      %1558 = vmatpush1.msra.mxu0 0.0
      %1559 = vmatprep.subr.mxu0 0.0
      %1560 = vmatpush1.msra.mxu0 0.0
      %1561 = vmatprep.subr.mxu0 0.0
      %1562 = vmatpush1.msra.mxu0 0.0
      %1563 = vmatprep.subr.mxu0 0.0
      %1564 = vmatpush1.msra.mxu0 0.0
      %1565 = vmatprep.subr.mxu0 0.0
      %1566 = vmatpush1.msra.mxu0 0.0
      %1567 = vmatprep.subr.mxu0 0.0
      %1568 = vmatpush1.msra.mxu0 0.0
      %1569 = vmatprep.subr.mxu0 0.0
      %1570 = vmatpush1.msra.mxu0 0.0
      %1571 = vmatprep.subr.mxu0 0.0
      %1572 = vmatpush1.msra.mxu0 0.0
      %1573 = vmatprep.subr.mxu0 0.0
      %1574 = vmatpush1.msra.mxu0 0.0
      %1575 = vmatprep.subr.mxu0 0.0
      %1576 = vmatpush1.msra.mxu0 0.0
      %1577 = vmatprep.subr.mxu0 0.0
      %1578 = vmatpush1.msra.mxu0 0.0
      %1579 = vmatprep.subr.mxu0 0.0
      %1580 = vmatpush1.msra.mxu0 0.0
      %1581 = vmatprep.subr.mxu0 0.0
      %1582 = vmatpush1.msra.mxu0 0.0
      %1583 = vmatprep.subr.mxu0 0.0
      %1584 = vmatpush1.msra.mxu0 0.0
      %1585 = vmatprep.subr.mxu0 0.0
      %1586 = vmatpush1.msra.mxu0 0.0
      %1587 = vmatprep.subr.mxu0 0.0
      %1588 = vmatpush1.msra.mxu0 0.0
      %1589 = vmatprep.subr.mxu0 0.0
      %1590 = vmatpush1.msra.mxu0 0.0
      %1591 = vmatprep.subr.mxu0 0.0
      %1592 = vmatpush1.msra.mxu0 0.0
      %1593 = vmatprep.mubr.f32.mxu0 0.0
      %1594 = vmatmul.mubr.f32.gmra.mrb[0].mxu0 %v1052
      %v1595 = vpop.f32.mrb[0].mxu0
      %v1596 = vadd.f32 %v1527, %v1595
      %v1597 = vpop.f32.mrb[0].mxu0
      %1598 = vmatprep.mubr.f32.mxu0 0.0
      %1599 = vmatmul.mubr.f32.gmra.mrb[0].mxu0 %v1055
      %v1600 = vpop.f32.mrb[0].mxu0
      %v1601 = vadd.f32 %v1527, %v1600
      %v1602 = vpop.f32.mrb[0].mxu0
      %1603 = vdwg.mxu0
      %s1604 = scalar_lea.vmem %s928, 64
      %v1605 = vld [vmem:[%s1604] sm:$0xff]
      %v1606 = vld [vmem:[%s1604 + $0x8] sm:$0xff]
      %v1607 = vld [vmem:[%s1604 + $0x10] sm:$0xff]
      %v1608 = vld [vmem:[%s1604 + $0x18] sm:$0xff]
      %v1609 = vld [vmem:[%s1604 + $0x20] sm:$0xff]
      %v1610 = vld [vmem:[%s1604 + $0x28] sm:$0xff]
      %v1611 = vld [vmem:[%s1604 + $0x30] sm:$0xff]
      %v1612 = vld [vmem:[%s1604 + $0x38] sm:$0xff]
      %s1613 = scalar_lea.vmem %s941, 1
      %v1614 = vld [vmem:[%s1613] sm:$0x1]
      %v1616 = vlaneseq
      %v1617 = vshrl.u32 %v1616, 7
      %v1618 = vsub.s32 0, %v1617
      %v1619 = vrot.slane %v1614, %v1618
      %1621 = vmatprep.subr.mxu0 0.0
      %1622 = vmatpush1.msra.mxu0 %v1605
      %1623 = vmatprep.subr.mxu0 0.0
      %1624 = vmatpush1.msra.mxu0 %v1606
      %1625 = vmatprep.subr.mxu0 0.0
      %1626 = vmatpush1.msra.mxu0 %v1607
      %1627 = vmatprep.subr.mxu0 0.0
      %1628 = vmatpush1.msra.mxu0 %v1608
      %1629 = vmatprep.subr.mxu0 0.0
      %1630 = vmatpush1.msra.mxu0 %v1609
      %1631 = vmatprep.subr.mxu0 0.0
      %1632 = vmatpush1.msra.mxu0 %v1610
      %1633 = vmatprep.subr.mxu0 0.0
      %1634 = vmatpush1.msra.mxu0 %v1611
      %1635 = vmatprep.subr.mxu0 0.0
      %1636 = vmatpush1.msra.mxu0 %v1612
      %1637 = vmatprep.subr.mxu0 0.0
      %1638 = vmatpush1.msra.mxu0 0.0
      %1639 = vmatprep.subr.mxu0 0.0
      %1640 = vmatpush1.msra.mxu0 0.0
      %1641 = vmatprep.subr.mxu0 0.0
      %1642 = vmatpush1.msra.mxu0 0.0
      %1643 = vmatprep.subr.mxu0 0.0
      %1644 = vmatpush1.msra.mxu0 0.0
      %1645 = vmatprep.subr.mxu0 0.0
      %1646 = vmatpush1.msra.mxu0 0.0
      %1647 = vmatprep.subr.mxu0 0.0
      %1648 = vmatpush1.msra.mxu0 0.0
      %1649 = vmatprep.subr.mxu0 0.0
      %1650 = vmatpush1.msra.mxu0 0.0
      %1651 = vmatprep.subr.mxu0 0.0
      %1652 = vmatpush1.msra.mxu0 0.0
      %1653 = vmatprep.subr.mxu0 0.0
      %1654 = vmatpush1.msra.mxu0 0.0
      %1655 = vmatprep.subr.mxu0 0.0
      %1656 = vmatpush1.msra.mxu0 0.0
      %1657 = vmatprep.subr.mxu0 0.0
      %1658 = vmatpush1.msra.mxu0 0.0
      %1659 = vmatprep.subr.mxu0 0.0
      %1660 = vmatpush1.msra.mxu0 0.0
      %1661 = vmatprep.subr.mxu0 0.0
      %1662 = vmatpush1.msra.mxu0 0.0
      %1663 = vmatprep.subr.mxu0 0.0
      %1664 = vmatpush1.msra.mxu0 0.0
      %1665 = vmatprep.subr.mxu0 0.0
      %1666 = vmatpush1.msra.mxu0 0.0
      %1667 = vmatprep.subr.mxu0 0.0
      %1668 = vmatpush1.msra.mxu0 0.0
      %1669 = vmatprep.subr.mxu0 0.0
      %1670 = vmatpush1.msra.mxu0 0.0
      %1671 = vmatprep.subr.mxu0 0.0
      %1672 = vmatpush1.msra.mxu0 0.0
      %1673 = vmatprep.subr.mxu0 0.0
      %1674 = vmatpush1.msra.mxu0 0.0
      %1675 = vmatprep.subr.mxu0 0.0
      %1676 = vmatpush1.msra.mxu0 0.0
      %1677 = vmatprep.subr.mxu0 0.0
      %1678 = vmatpush1.msra.mxu0 0.0
      %1679 = vmatprep.subr.mxu0 0.0
      %1680 = vmatpush1.msra.mxu0 0.0
      %1681 = vmatprep.subr.mxu0 0.0
      %1682 = vmatpush1.msra.mxu0 0.0
      %1683 = vmatprep.subr.mxu0 0.0
      %1684 = vmatpush1.msra.mxu0 0.0
      %1685 = vmatprep.mubr.f32.mxu0 0.0
      %1686 = vmatmul.mubr.f32.gmra.mrb[0].mxu0 %v1052
      %v1687 = vpop.f32.mrb[0].mxu0
      %v1688 = vadd.f32 %v1619, %v1687
      %v1689 = vpop.f32.mrb[0].mxu0
      %1690 = vmatprep.mubr.f32.mxu0 0.0
      %1691 = vmatmul.mubr.f32.gmra.mrb[0].mxu0 %v1055
      %v1692 = vpop.f32.mrb[0].mxu0
      %v1693 = vadd.f32 %v1619, %v1692
      %v1694 = vpop.f32.mrb[0].mxu0
      %1695 = vdwg.mxu0
      %s1696 = scalar_lea.vmem %s933, 64
      %v1697 = vld [vmem:[%s1696] sm:$0xff]
      %v1698 = vld [vmem:[%s1696 + $0x8] sm:$0xff]
      %v1699 = vld [vmem:[%s1696 + $0x10] sm:$0xff]
      %v1700 = vld [vmem:[%s1696 + $0x18] sm:$0xff]
      %v1701 = vld [vmem:[%s1696 + $0x20] sm:$0xff]
      %v1702 = vld [vmem:[%s1696 + $0x28] sm:$0xff]
      %v1703 = vld [vmem:[%s1696 + $0x30] sm:$0xff]
      %v1704 = vld [vmem:[%s1696 + $0x38] sm:$0xff]
      %s1705 = scalar_lea.vmem %s945, 1
      %v1706 = vld [vmem:[%s1705] sm:$0x1]
      %v1708 = vlaneseq
      %v1709 = vshrl.u32 %v1708, 7
      %v1710 = vsub.s32 0, %v1709
      %v1711 = vrot.slane %v1706, %v1710
      %1713 = vmatprep.subr.mxu0 0.0
      %1714 = vmatpush1.msra.mxu0 %v1697
      %1715 = vmatprep.subr.mxu0 0.0
      %1716 = vmatpush1.msra.mxu0 %v1698
      %1717 = vmatprep.subr.mxu0 0.0
      %1718 = vmatpush1.msra.mxu0 %v1699
      %1719 = vmatprep.subr.mxu0 0.0
      %1720 = vmatpush1.msra.mxu0 %v1700
      %1721 = vmatprep.subr.mxu0 0.0
      %1722 = vmatpush1.msra.mxu0 %v1701
      %1723 = vmatprep.subr.mxu0 0.0
      %1724 = vmatpush1.msra.mxu0 %v1702
      %1725 = vmatprep.subr.mxu0 0.0
      %1726 = vmatpush1.msra.mxu0 %v1703
      %1727 = vmatprep.subr.mxu0 0.0
      %1728 = vmatpush1.msra.mxu0 %v1704
      %1729 = vmatprep.subr.mxu0 0.0
      %1730 = vmatpush1.msra.mxu0 0.0
      %1731 = vmatprep.subr.mxu0 0.0
      %1732 = vmatpush1.msra.mxu0 0.0
      %1733 = vmatprep.subr.mxu0 0.0
      %1734 = vmatpush1.msra.mxu0 0.0
      %1735 = vmatprep.subr.mxu0 0.0
      %1736 = vmatpush1.msra.mxu0 0.0
      %1737 = vmatprep.subr.mxu0 0.0
      %1738 = vmatpush1.msra.mxu0 0.0
      %1739 = vmatprep.subr.mxu0 0.0
      %1740 = vmatpush1.msra.mxu0 0.0
      %1741 = vmatprep.subr.mxu0 0.0
      %1742 = vmatpush1.msra.mxu0 0.0
      %1743 = vmatprep.subr.mxu0 0.0
      %1744 = vmatpush1.msra.mxu0 0.0
      %1745 = vmatprep.subr.mxu0 0.0
      %1746 = vmatpush1.msra.mxu0 0.0
      %1747 = vmatprep.subr.mxu0 0.0
      %1748 = vmatpush1.msra.mxu0 0.0
      %1749 = vmatprep.subr.mxu0 0.0
      %1750 = vmatpush1.msra.mxu0 0.0
      %1751 = vmatprep.subr.mxu0 0.0
      %1752 = vmatpush1.msra.mxu0 0.0
      %1753 = vmatprep.subr.mxu0 0.0
      %1754 = vmatpush1.msra.mxu0 0.0
      %1755 = vmatprep.subr.mxu0 0.0
      %1756 = vmatpush1.msra.mxu0 0.0
      %1757 = vmatprep.subr.mxu0 0.0
      %1758 = vmatpush1.msra.mxu0 0.0
      %1759 = vmatprep.subr.mxu0 0.0
      %1760 = vmatpush1.msra.mxu0 0.0
      %1761 = vmatprep.subr.mxu0 0.0
      %1762 = vmatpush1.msra.mxu0 0.0
      %1763 = vmatprep.subr.mxu0 0.0
      %1764 = vmatpush1.msra.mxu0 0.0
      %1765 = vmatprep.subr.mxu0 0.0
      %1766 = vmatpush1.msra.mxu0 0.0
      %1767 = vmatprep.subr.mxu0 0.0
      %1768 = vmatpush1.msra.mxu0 0.0
      %1769 = vmatprep.subr.mxu0 0.0
      %1770 = vmatpush1.msra.mxu0 0.0
      %1771 = vmatprep.subr.mxu0 0.0
      %1772 = vmatpush1.msra.mxu0 0.0
      %1773 = vmatprep.subr.mxu0 0.0
      %1774 = vmatpush1.msra.mxu0 0.0
      %1775 = vmatprep.subr.mxu0 0.0
      %1776 = vmatpush1.msra.mxu0 0.0
      %1777 = vmatprep.mubr.f32.mxu0 0.0
      %1778 = vmatmul.mubr.f32.gmra.mrb[0].mxu0 %v1052
      %v1779 = vpop.f32.mrb[0].mxu0
      %v1780 = vadd.f32 %v1711, %v1779
      %v1781 = vpop.f32.mrb[0].mxu0
      %1782 = vmatprep.mubr.f32.mxu0 0.0
      %1783 = vmatmul.mubr.f32.gmra.mrb[0].mxu0 %v1055
      %v1784 = vpop.f32.mrb[0].mxu0
      %v1785 = vadd.f32 %v1711, %v1784
      %v1786 = vpop.f32.mrb[0].mxu0
      %1787 = vdwg.mxu0
      %v1789 = vsel %vm1312, %v1596, 0
      %v1792 = vsel %vm1312, %v1601, 0
      %v1795 = vsel %vm1312, %v1688, 0
      %v1798 = vsel %vm1312, %v1693, 0
      %1800 = vmatprep.subr.mxu0 0.0
      %1801 = vmatpush1.xpose.msra.mxu0 %v1795
      %1802 = vmatprep.subr.mxu0 0.0
      %1803 = vmatpush1.xpose.msra.mxu0 %v1798
      %1804 = vmatprep.subr.mxu0 0.0
      %1805 = vmatpush1.xpose.msra.mxu0 0.0
      %1806 = vmatprep.subr.mxu0 0.0
      %1807 = vmatpush1.xpose.msra.mxu0 0.0
      %1808 = vmatprep.subr.mxu0 0.0
      %1809 = vmatpush1.xpose.msra.mxu0 0.0
      %1810 = vmatprep.subr.mxu0 0.0
      %1811 = vmatpush1.xpose.msra.mxu0 0.0
      %1812 = vmatprep.subr.mxu0 0.0
      %1813 = vmatpush1.xpose.msra.mxu0 0.0
      %1814 = vmatprep.subr.mxu0 0.0
      %1815 = vmatpush1.xpose.msra.mxu0 0.0
      %1816 = vmatprep.subr.mxu0 0.0
      %1817 = vmatpush1.xpose.msra.mxu0 0.0
      %1818 = vmatprep.subr.mxu0 0.0
      %1819 = vmatpush1.xpose.msra.mxu0 0.0
      %1820 = vmatprep.subr.mxu0 0.0
      %1821 = vmatpush1.xpose.msra.mxu0 0.0
      %1822 = vmatprep.subr.mxu0 0.0
      %1823 = vmatpush1.xpose.msra.mxu0 0.0
      %1824 = vmatprep.subr.mxu0 0.0
      %1825 = vmatpush1.xpose.msra.mxu0 0.0
      %1826 = vmatprep.subr.mxu0 0.0
      %1827 = vmatpush1.xpose.msra.mxu0 0.0
      %1828 = vmatprep.subr.mxu0 0.0
      %1829 = vmatpush1.xpose.msra.mxu0 0.0
      %1830 = vmatprep.subr.mxu0 0.0
      %1831 = vmatpush1.xpose.msra.mxu0 0.0
      %1832 = vmatprep.subr.mxu0 0.0
      %1833 = vmatpush1.xpose.msra.mxu0 0.0
      %1834 = vmatprep.subr.mxu0 0.0
      %1835 = vmatpush1.xpose.msra.mxu0 0.0
      %1836 = vmatprep.subr.mxu0 0.0
      %1837 = vmatpush1.xpose.msra.mxu0 0.0
      %1838 = vmatprep.subr.mxu0 0.0
      %1839 = vmatpush1.xpose.msra.mxu0 0.0
      %1840 = vmatprep.subr.mxu0 0.0
      %1841 = vmatpush1.xpose.msra.mxu0 0.0
      %1842 = vmatprep.subr.mxu0 0.0
      %1843 = vmatpush1.xpose.msra.mxu0 0.0
      %1844 = vmatprep.subr.mxu0 0.0
      %1845 = vmatpush1.xpose.msra.mxu0 0.0
      %1846 = vmatprep.subr.mxu0 0.0
      %1847 = vmatpush1.xpose.msra.mxu0 0.0
      %1848 = vmatprep.subr.mxu0 0.0
      %1849 = vmatpush1.xpose.msra.mxu0 0.0
      %1850 = vmatprep.subr.mxu0 0.0
      %1851 = vmatpush1.xpose.msra.mxu0 0.0
      %1852 = vmatprep.subr.mxu0 0.0
      %1853 = vmatpush1.xpose.msra.mxu0 0.0
      %1854 = vmatprep.subr.mxu0 0.0
      %1855 = vmatpush1.xpose.msra.mxu0 0.0
      %1856 = vmatprep.subr.mxu0 0.0
      %1857 = vmatpush1.xpose.msra.mxu0 0.0
      %1858 = vmatprep.subr.mxu0 0.0
      %1859 = vmatpush1.xpose.msra.mxu0 0.0
      %1860 = vmatprep.subr.mxu0 0.0
      %1861 = vmatpush1.xpose.msra.mxu0 0.0
      %1862 = vmatprep.subr.mxu0 0.0
      %1863 = vmatpush1.xpose.msra.mxu0 0.0
      %1864 = vmatprep.mubr.f32.mxu0 0.0
      %1865 = vmatmul.mubr.f32.gmra.mrb[0].mxu0 %v1789
      %v1866 = vpop.f32.mrb[0].mxu0
      %v1867 = vadd.f32 0.0, %v1866
      %v1868 = vpop.f32.mrb[0].mxu0
      %1869 = vmatprep.mubr.f32.mxu0 0.0
      %1870 = vmatmul.mubr.f32.gmra.mrb[0].mxu0 %v1792
      %v1871 = vpop.f32.mrb[0].mxu0
      %v1872 = vadd.f32 0.0, %v1871
      %v1873 = vpop.f32.mrb[0].mxu0
      %1874 = vdwg.mxu0
      %v1875 = vmul.f32 %v1867, 0.17677669
      %v1876 = vmul.f32 %v1872, 0.17677669
      %v1877 = vadd.f32 %v1875, %v986
      %v1878 = vadd.f32 %v1876, %v987
      %v1879 = vsel %vm1404, %v1877, -inf
      %1880 = vmax.xlane.f32.xlu0 %v1879
      %v1881 = vpop.xlane.xlu0 %1880
      %v1882 = vsel %vm1404, %v1878, -inf
      %1883 = vmax.xlane.f32.xlu0 %v1882
      %v1884 = vpop.xlane.xlu0 %1883
      %v1885 = vsub.f32 %v1877, %v1881
      %v1886 = vsub.f32 %v1878, %v1884
      %v1887 = vmul.f32 %v1885, 1.442695
      %v1888 = vpow.pop %v1887
      %v1889 = vmul.f32 %v1886, 1.442695
      %v1890 = vpow.pop %v1889
      %v1891 = vsel %vm1404, %v1888, 0.0
      %1892 = vadd.xlane.f32.xlu0 %v1891
      %v1893 = vpop.xlane.xlu0 %1892
      %v1894 = vsel %vm1404, %v1890, 0.0
      %1895 = vadd.xlane.f32.xlu0 %v1894
      %v1896 = vpop.xlane.xlu0 %1895
      %v1897 = vrcp.pop %v1893
      %v1898 = vrcp.pop %v1896
      %v1899 = vmul.f32 %v1888, %v1897
      %v1900 = vmul.f32 %v1890, %v1898
      %v1902 = vsel %vm1404, %v1899, 0
      %v1905 = vsel %vm1404, %v1900, 0
      %1907 = vmatprep.subr.mxu0 0.0
      %1908 = vmatpush1.msra.mxu0 %v1780
      %1909 = vmatprep.subr.mxu0 0.0
      %1910 = vmatpush1.msra.mxu0 %v1785
      %1911 = vmatprep.subr.mxu0 0.0
      %1912 = vmatpush1.msra.mxu0 0.0
      %1913 = vmatprep.subr.mxu0 0.0
      %1914 = vmatpush1.msra.mxu0 0.0
      %1915 = vmatprep.subr.mxu0 0.0
      %1916 = vmatpush1.msra.mxu0 0.0
      %1917 = vmatprep.subr.mxu0 0.0
      %1918 = vmatpush1.msra.mxu0 0.0
      %1919 = vmatprep.subr.mxu0 0.0
      %1920 = vmatpush1.msra.mxu0 0.0
      %1921 = vmatprep.subr.mxu0 0.0
      %1922 = vmatpush1.msra.mxu0 0.0
      %1923 = vmatprep.subr.mxu0 0.0
      %1924 = vmatpush1.msra.mxu0 0.0
      %1925 = vmatprep.subr.mxu0 0.0
      %1926 = vmatpush1.msra.mxu0 0.0
      %1927 = vmatprep.subr.mxu0 0.0
      %1928 = vmatpush1.msra.mxu0 0.0
      %1929 = vmatprep.subr.mxu0 0.0
      %1930 = vmatpush1.msra.mxu0 0.0
      %1931 = vmatprep.subr.mxu0 0.0
      %1932 = vmatpush1.msra.mxu0 0.0
      %1933 = vmatprep.subr.mxu0 0.0
      %1934 = vmatpush1.msra.mxu0 0.0
      %1935 = vmatprep.subr.mxu0 0.0
      %1936 = vmatpush1.msra.mxu0 0.0
      %1937 = vmatprep.subr.mxu0 0.0
      %1938 = vmatpush1.msra.mxu0 0.0
      %1939 = vmatprep.subr.mxu0 0.0
      %1940 = vmatpush1.msra.mxu0 0.0
      %1941 = vmatprep.subr.mxu0 0.0
      %1942 = vmatpush1.msra.mxu0 0.0
      %1943 = vmatprep.subr.mxu0 0.0
      %1944 = vmatpush1.msra.mxu0 0.0
      %1945 = vmatprep.subr.mxu0 0.0
      %1946 = vmatpush1.msra.mxu0 0.0
      %1947 = vmatprep.subr.mxu0 0.0
      %1948 = vmatpush1.msra.mxu0 0.0
      %1949 = vmatprep.subr.mxu0 0.0
      %1950 = vmatpush1.msra.mxu0 0.0
      %1951 = vmatprep.subr.mxu0 0.0
      %1952 = vmatpush1.msra.mxu0 0.0
      %1953 = vmatprep.subr.mxu0 0.0
      %1954 = vmatpush1.msra.mxu0 0.0
      %1955 = vmatprep.subr.mxu0 0.0
      %1956 = vmatpush1.msra.mxu0 0.0
      %1957 = vmatprep.subr.mxu0 0.0
      %1958 = vmatpush1.msra.mxu0 0.0
      %1959 = vmatprep.subr.mxu0 0.0
      %1960 = vmatpush1.msra.mxu0 0.0
      %1961 = vmatprep.subr.mxu0 0.0
      %1962 = vmatpush1.msra.mxu0 0.0
      %1963 = vmatprep.subr.mxu0 0.0
      %1964 = vmatpush1.msra.mxu0 0.0
      %1965 = vmatprep.subr.mxu0 0.0
      %1966 = vmatpush1.msra.mxu0 0.0
      %1967 = vmatprep.subr.mxu0 0.0
      %1968 = vmatpush1.msra.mxu0 0.0
      %1969 = vmatprep.subr.mxu0 0.0
      %1970 = vmatpush1.msra.mxu0 0.0
      %1971 = vmatprep.mubr.f32.mxu0 0.0
      %1972 = vmatmul.mubr.f32.gmra.mrb[0].mxu0 %v1902
      %v1973 = vpop.f32.mrb[0].mxu0
      %v1974 = vadd.f32 0.0, %v1973
      %v1975 = vpop.f32.mrb[0].mxu0
      %1976 = vmatprep.mubr.f32.mxu0 0.0
      %1977 = vmatmul.mubr.f32.gmra.mrb[0].mxu0 %v1905
      %v1978 = vpop.f32.mrb[0].mxu0
      %v1979 = vadd.f32 0.0, %v1978
      %v1980 = vpop.f32.mrb[0].mxu0
      %1981 = vdwg.mxu0
      %s1982 = scalar_lea.vmem %s950, 32
      %v1983 = vld [vmem:[%s1982] sm:$0xff]
      %v1984 = vld [vmem:[%s1982 + $0x8] sm:$0xff]
      %v1985 = vld [vmem:[%s1982 + $0x10] sm:$0xff]
      %v1986 = vld [vmem:[%s1982 + $0x18] sm:$0xff]
      %v1988 = vsel %vm1312, %v1974, 0
      %v1991 = vsel %vm1312, %v1979, 0
      %1993 = vmatprep.subr.mxu0 0.0
      %1994 = vmatpush1.msra.mxu0 %v1983
      %1995 = vmatprep.subr.mxu0 0.0
      %1996 = vmatpush1.msra.mxu0 %v1984
      %1997 = vmatprep.subr.mxu0 0.0
      %1998 = vmatpush1.msra.mxu0 %v1985
      %1999 = vmatprep.subr.mxu0 0.0
      %2000 = vmatpush1.msra.mxu0 %v1986
      %2001 = vmatprep.subr.mxu0 0.0
      %2002 = vmatpush1.msra.mxu0 0.0
      %2003 = vmatprep.subr.mxu0 0.0
      %2004 = vmatpush1.msra.mxu0 0.0
      %2005 = vmatprep.subr.mxu0 0.0
      %2006 = vmatpush1.msra.mxu0 0.0
      %2007 = vmatprep.subr.mxu0 0.0
      %2008 = vmatpush1.msra.mxu0 0.0
      %2009 = vmatprep.subr.mxu0 0.0
      %2010 = vmatpush1.msra.mxu0 0.0
      %2011 = vmatprep.subr.mxu0 0.0
      %2012 = vmatpush1.msra.mxu0 0.0
      %2013 = vmatprep.subr.mxu0 0.0
      %2014 = vmatpush1.msra.mxu0 0.0
      %2015 = vmatprep.subr.mxu0 0.0
      %2016 = vmatpush1.msra.mxu0 0.0
      %2017 = vmatprep.subr.mxu0 0.0
      %2018 = vmatpush1.msra.mxu0 0.0
      %2019 = vmatprep.subr.mxu0 0.0
      %2020 = vmatpush1.msra.mxu0 0.0
      %2021 = vmatprep.subr.mxu0 0.0
      %2022 = vmatpush1.msra.mxu0 0.0
      %2023 = vmatprep.subr.mxu0 0.0
      %2024 = vmatpush1.msra.mxu0 0.0
      %2025 = vmatprep.subr.mxu0 0.0
      %2026 = vmatpush1.msra.mxu0 0.0
      %2027 = vmatprep.subr.mxu0 0.0
      %2028 = vmatpush1.msra.mxu0 0.0
      %2029 = vmatprep.subr.mxu0 0.0
      %2030 = vmatpush1.msra.mxu0 0.0
      %2031 = vmatprep.subr.mxu0 0.0
      %2032 = vmatpush1.msra.mxu0 0.0
      %2033 = vmatprep.subr.mxu0 0.0
      %2034 = vmatpush1.msra.mxu0 0.0
      %2035 = vmatprep.subr.mxu0 0.0
      %2036 = vmatpush1.msra.mxu0 0.0
      %2037 = vmatprep.subr.mxu0 0.0
      %2038 = vmatpush1.msra.mxu0 0.0
      %2039 = vmatprep.subr.mxu0 0.0
      %2040 = vmatpush1.msra.mxu0 0.0
      %2041 = vmatprep.subr.mxu0 0.0
      %2042 = vmatpush1.msra.mxu0 0.0
      %2043 = vmatprep.subr.mxu0 0.0
      %2044 = vmatpush1.msra.mxu0 0.0
      %2045 = vmatprep.subr.mxu0 0.0
      %2046 = vmatpush1.msra.mxu0 0.0
      %2047 = vmatprep.subr.mxu0 0.0
      %2048 = vmatpush1.msra.mxu0 0.0
      %2049 = vmatprep.subr.mxu0 0.0
      %2050 = vmatpush1.msra.mxu0 0.0
      %2051 = vmatprep.subr.mxu0 0.0
      %2052 = vmatpush1.msra.mxu0 0.0
      %2053 = vmatprep.subr.mxu0 0.0
      %2054 = vmatpush1.msra.mxu0 0.0
      %2055 = vmatprep.subr.mxu0 0.0
      %2056 = vmatpush1.msra.mxu0 0.0
      %2057 = vmatprep.mubr.f32.mxu0 0.0
      %2058 = vmatmul.mubr.f32.gmra.mrb[0].mxu0 %v1988
      %v2059 = vpop.f32.mrb[0].mxu0
      %v2060 = vadd.f32 0.0, %v2059
      %v2061 = vpop.f32.mrb[0].mxu0
      %2062 = vmatprep.mubr.f32.mxu0 0.0
      %2063 = vmatmul.mubr.f32.gmra.mrb[0].mxu0 %v1991
      %v2064 = vpop.f32.mrb[0].mxu0
      %v2065 = vadd.f32 0.0, %v2064
      %v2066 = vpop.f32.mrb[0].mxu0
      %2067 = vdwg.mxu0
      %v2069 = vsel %vm1312, %v1500, 0
      %v2072 = vsel %vm1312, %v1505, 0
      %2074 = vmatprep.subr.mxu0 0.0
      %2075 = vmatpush1.msra.mxu0 %v1508
      %2076 = vmatprep.subr.mxu0 0.0
      %2077 = vmatpush1.msra.mxu0 %v1509
      %2078 = vmatprep.subr.mxu0 0.0
      %2079 = vmatpush1.msra.mxu0 %v1510
      %2080 = vmatprep.subr.mxu0 0.0
      %2081 = vmatpush1.msra.mxu0 %v1511
      %2082 = vmatprep.subr.mxu0 0.0
      %2083 = vmatpush1.msra.mxu0 0.0
      %2084 = vmatprep.subr.mxu0 0.0
      %2085 = vmatpush1.msra.mxu0 0.0
      %2086 = vmatprep.subr.mxu0 0.0
      %2087 = vmatpush1.msra.mxu0 0.0
      %2088 = vmatprep.subr.mxu0 0.0
      %2089 = vmatpush1.msra.mxu0 0.0
      %2090 = vmatprep.subr.mxu0 0.0
      %2091 = vmatpush1.msra.mxu0 0.0
      %2092 = vmatprep.subr.mxu0 0.0
      %2093 = vmatpush1.msra.mxu0 0.0
      %2094 = vmatprep.subr.mxu0 0.0
      %2095 = vmatpush1.msra.mxu0 0.0
      %2096 = vmatprep.subr.mxu0 0.0
      %2097 = vmatpush1.msra.mxu0 0.0
      %2098 = vmatprep.subr.mxu0 0.0
      %2099 = vmatpush1.msra.mxu0 0.0
      %2100 = vmatprep.subr.mxu0 0.0
      %2101 = vmatpush1.msra.mxu0 0.0
      %2102 = vmatprep.subr.mxu0 0.0
      %2103 = vmatpush1.msra.mxu0 0.0
      %2104 = vmatprep.subr.mxu0 0.0
      %2105 = vmatpush1.msra.mxu0 0.0
      %2106 = vmatprep.subr.mxu0 0.0
      %2107 = vmatpush1.msra.mxu0 0.0
      %2108 = vmatprep.subr.mxu0 0.0
      %2109 = vmatpush1.msra.mxu0 0.0
      %2110 = vmatprep.subr.mxu0 0.0
      %2111 = vmatpush1.msra.mxu0 0.0
      %2112 = vmatprep.subr.mxu0 0.0
      %2113 = vmatpush1.msra.mxu0 0.0
      %2114 = vmatprep.subr.mxu0 0.0
      %2115 = vmatpush1.msra.mxu0 0.0
      %2116 = vmatprep.subr.mxu0 0.0
      %2117 = vmatpush1.msra.mxu0 0.0
      %2118 = vmatprep.subr.mxu0 0.0
      %2119 = vmatpush1.msra.mxu0 0.0
      %2120 = vmatprep.subr.mxu0 0.0
      %2121 = vmatpush1.msra.mxu0 0.0
      %2122 = vmatprep.subr.mxu0 0.0
      %2123 = vmatpush1.msra.mxu0 0.0
      %2124 = vmatprep.subr.mxu0 0.0
      %2125 = vmatpush1.msra.mxu0 0.0
      %2126 = vmatprep.subr.mxu0 0.0
      %2127 = vmatpush1.msra.mxu0 0.0
      %2128 = vmatprep.subr.mxu0 0.0
      %2129 = vmatpush1.msra.mxu0 0.0
      %2130 = vmatprep.subr.mxu0 0.0
      %2131 = vmatpush1.msra.mxu0 0.0
      %2132 = vmatprep.subr.mxu0 0.0
      %2133 = vmatpush1.msra.mxu0 0.0
      %2134 = vmatprep.subr.mxu0 0.0
      %2135 = vmatpush1.msra.mxu0 0.0
      %2136 = vmatprep.subr.mxu0 0.0
      %2137 = vmatpush1.msra.mxu0 0.0
      %2138 = vmatprep.mubr.f32.mxu0 0.0
      %2139 = vmatmul.mubr.f32.gmra.mrb[0].mxu0 %v2069
      %v2140 = vpop.f32.mrb[0].mxu0
      %v2141 = vadd.f32 %v2060, %v2140
      %v2142 = vpop.f32.mrb[0].mxu0
      %2143 = vmatprep.mubr.f32.mxu0 0.0
      %2144 = vmatmul.mubr.f32.gmra.mrb[0].mxu0 %v2072
      %v2145 = vpop.f32.mrb[0].mxu0
      %v2146 = vadd.f32 %v2065, %v2145
      %v2147 = vpop.f32.mrb[0].mxu0
      %2148 = vdwg.mxu0
      %v2149 = vadd.f32 %v988, %v2141
      %v2150 = vadd.f32 %v989, %v2146
      %v2151 = vld [vmem:[%s953] sm:$0x1]
      %v2153 = vlaneseq
      %v2154 = vshrl.u32 %v2153, 7
      %v2155 = vsub.s32 0, %v2154
      %v2156 = vrot.slane %v2151, %v2155
      %v2158 = vadd.f32 %v2149, %v2156
      %v2159 = vadd.f32 %v2150, %v2156
      %v2160 = vld [vmem:[%s956] sm:$0x1]
      %v2161 = vld [vmem:[%s959] sm:$0x1]
      %v2162 = vsel %vm992, %v2158, 0.0
      %2163 = vadd.xlane.f32.xlu0 %v2162
      %v2164 = vpop.xlane.xlu0 %2163
      %v2165 = vsel %vm992, %v2159, 0.0
      %2166 = vadd.xlane.f32.xlu0 %v2165
      %v2167 = vpop.xlane.xlu0 %2166
      %v2168 = vmul.f32 %v2164, %v999
      %v2169 = vmul.f32 %v2167, %v999
      %v2170 = vsub.f32 %v2158, %v2168
      %v2171 = vsub.f32 %v2159, %v2169
      %v2172 = vmul.f32 %v2170, %v2170
      %v2173 = vmul.f32 %v2171, %v2171
      %v2174 = vsel %vm992, %v2172, 0.0
      %2175 = vadd.xlane.f32.xlu0 %v2174
      %v2176 = vpop.xlane.xlu0 %2175
      %v2177 = vsel %vm992, %v2173, 0.0
      %2178 = vadd.xlane.f32.xlu0 %v2177
      %v2179 = vpop.xlane.xlu0 %2178
      %v2180 = vmul.f32 %v2176, %v999
      %v2181 = vmul.f32 %v2179, %v999
      %v2182 = vadd.f32 %v2180, 1e-05
      %v2183 = vadd.f32 %v2181, 1e-05
      %v2184 = vrsqrt.pop %v2182
      %v2185 = vrsqrt.pop %v2183
      %v2186 = vmul.f32 %v2170, %v2184
      %v2187 = vmul.f32 %v2171, %v2185
      %v2189 = vlaneseq
      %v2190 = vshrl.u32 %v2189, 7
      %v2191 = vsub.s32 0, %v2190
      %v2192 = vrot.slane %v2160, %v2191
      %v2194 = vmul.f32 %v2186, %v2192
      %v2195 = vmul.f32 %v2187, %v2192
      %v2197 = vlaneseq
      %v2198 = vshrl.u32 %v2197, 7
      %v2199 = vsub.s32 0, %v2198
      %v2200 = vrot.slane %v2161, %v2199
      %v2202 = vadd.f32 %v2194, %v2200
      %v2203 = vadd.f32 %v2195, %v2200
      %v2204 = vld [vmem:[%s964] sm:$0xff]
      %v2205 = vld [vmem:[%s964 + $0x8] sm:$0xff]
      %v2206 = vld [vmem:[%s964 + $0x10] sm:$0xff]
      %v2207 = vld [vmem:[%s964 + $0x18] sm:$0xff]
      %v2208 = vld [vmem:[%s964 + $0x20] sm:$0xff]
      %v2209 = vld [vmem:[%s964 + $0x28] sm:$0xff]
      %v2210 = vld [vmem:[%s964 + $0x30] sm:$0xff]
      %v2211 = vld [vmem:[%s964 + $0x38] sm:$0xff]
      %v2212 = vld [vmem:[%s964 + $0x40] sm:$0xff]
      %v2213 = vld [vmem:[%s964 + $0x48] sm:$0xff]
      %v2214 = vld [vmem:[%s964 + $0x50] sm:$0xff]
      %v2215 = vld [vmem:[%s964 + $0x58] sm:$0xff]
      %v2216 = vld [vmem:[%s964 + $0x60] sm:$0xff]
      %v2217 = vld [vmem:[%s964 + $0x68] sm:$0xff]
      %v2218 = vld [vmem:[%s964 + $0x70] sm:$0xff]
      %v2219 = vld [vmem:[%s964 + $0x78] sm:$0xff]
      %v2220 = vld [vmem:[%s968] sm:$0x3]
      %v2222 = vlaneseq
      %v2223 = vshrl.u32 %v2222, 7
      %v2224 = vsub.s32 0, %v2223
      %v2225 = vrot.slane %v2220, %v2224
      %v2226 = vlaneseq
      %v2227 = vshrl.u32 %v2226, 7
      %v2228 = vsub.s32 1, %v2227
      %v2229 = vrot.slane %v2220, %v2228
      %v2233 = vsel %vm992, %v2202, 0
      %v2236 = vsel %vm992, %v2203, 0
      %2238 = vmatprep.subr.mxu0 %v2205
      %2239 = vmatpush1.msra.mxu0 %v2204
      %2240 = vmatprep.subr.mxu0 %v2207
      %2241 = vmatpush1.msra.mxu0 %v2206
      %2242 = vmatprep.subr.mxu0 %v2209
      %2243 = vmatpush1.msra.mxu0 %v2208
      %2244 = vmatprep.subr.mxu0 %v2211
      %2245 = vmatpush1.msra.mxu0 %v2210
      %2246 = vmatprep.subr.mxu0 %v2213
      %2247 = vmatpush1.msra.mxu0 %v2212
      %2248 = vmatprep.subr.mxu0 %v2215
      %2249 = vmatpush1.msra.mxu0 %v2214
      %2250 = vmatprep.subr.mxu0 %v2217
      %2251 = vmatpush1.msra.mxu0 %v2216
      %2252 = vmatprep.subr.mxu0 %v2219
      %2253 = vmatpush1.msra.mxu0 %v2218
      %2254 = vmatprep.subr.mxu0 0.0
      %2255 = vmatpush1.msra.mxu0 0.0
      %2256 = vmatprep.subr.mxu0 0.0
      %2257 = vmatpush1.msra.mxu0 0.0
      %2258 = vmatprep.subr.mxu0 0.0
      %2259 = vmatpush1.msra.mxu0 0.0
      %2260 = vmatprep.subr.mxu0 0.0
      %2261 = vmatpush1.msra.mxu0 0.0
      %2262 = vmatprep.subr.mxu0 0.0
      %2263 = vmatpush1.msra.mxu0 0.0
      %2264 = vmatprep.subr.mxu0 0.0
      %2265 = vmatpush1.msra.mxu0 0.0
      %2266 = vmatprep.subr.mxu0 0.0
      %2267 = vmatpush1.msra.mxu0 0.0
      %2268 = vmatprep.subr.mxu0 0.0
      %2269 = vmatpush1.msra.mxu0 0.0
      %2270 = vmatprep.subr.mxu0 0.0
      %2271 = vmatpush1.msra.mxu0 0.0
      %2272 = vmatprep.subr.mxu0 0.0
      %2273 = vmatpush1.msra.mxu0 0.0
      %2274 = vmatprep.subr.mxu0 0.0
      %2275 = vmatpush1.msra.mxu0 0.0
      %2276 = vmatprep.subr.mxu0 0.0
      %2277 = vmatpush1.msra.mxu0 0.0
      %2278 = vmatprep.subr.mxu0 0.0
      %2279 = vmatpush1.msra.mxu0 0.0
      %2280 = vmatprep.subr.mxu0 0.0
      %2281 = vmatpush1.msra.mxu0 0.0
      %2282 = vmatprep.subr.mxu0 0.0
      %2283 = vmatpush1.msra.mxu0 0.0
      %2284 = vmatprep.subr.mxu0 0.0
      %2285 = vmatpush1.msra.mxu0 0.0
      %2286 = vmatprep.subr.mxu0 0.0
      %2287 = vmatpush1.msra.mxu0 0.0
      %2288 = vmatprep.subr.mxu0 0.0
      %2289 = vmatpush1.msra.mxu0 0.0
      %2290 = vmatprep.subr.mxu0 0.0
      %2291 = vmatpush1.msra.mxu0 0.0
      %2292 = vmatprep.subr.mxu0 0.0
      %2293 = vmatpush1.msra.mxu0 0.0
      %2294 = vmatprep.subr.mxu0 0.0
      %2295 = vmatpush1.msra.mxu0 0.0
      %2296 = vmatprep.subr.mxu0 0.0
      %2297 = vmatpush1.msra.mxu0 0.0
      %2298 = vmatprep.subr.mxu0 0.0
      %2299 = vmatpush1.msra.mxu0 0.0
      %2300 = vmatprep.subr.mxu0 0.0
      %2301 = vmatpush1.msra.mxu0 0.0
      %2302 = vmatprep.mubr.f32.mxu0 0.0
      %2303 = vmatmul.mubr.f32.gmra.mrb[0].mxu0 %v2233
      %v2304 = vpop.f32.mrb[0].mxu0
      %v2305 = vadd.f32 %v2225, %v2304
      %v2306 = vpop.f32.mrb[0].mxu0
      %v2307 = vadd.f32 %v2229, %v2306
      %2308 = vmatprep.mubr.f32.mxu0 0.0
      %2309 = vmatmul.mubr.f32.gmra.mrb[0].mxu0 %v2236
      %v2310 = vpop.f32.mrb[0].mxu0
      %v2311 = vadd.f32 %v2225, %v2310
      %v2312 = vpop.f32.mrb[0].mxu0
      %v2313 = vadd.f32 %v2229, %v2312
      %2314 = vdwg.mxu0
      %v2315 = vmul.f32 %v2305, 1.702
      %v2316 = vmul.f32 %v2307, 1.702
      %v2317 = vmul.f32 %v2311, 1.702
      %v2318 = vmul.f32 %v2313, 1.702
      %v2319 = vxor.u32 %v2315, 2147483648
      %v2320 = vxor.u32 %v2316, 2147483648
      %v2321 = vxor.u32 %v2317, 2147483648
      %v2322 = vxor.u32 %v2318, 2147483648
      %v2323 = vmul.f32 %v2319, 1.442695
      %v2324 = vpow.pop %v2323
      %v2325 = vmul.f32 %v2320, 1.442695
      %v2326 = vpow.pop %v2325
      %v2327 = vmul.f32 %v2321, 1.442695
      %v2328 = vpow.pop %v2327
      %v2329 = vmul.f32 %v2322, 1.442695
      %v2330 = vpow.pop %v2329
      %v2331 = vadd.f32 %v2324, 1.0
      %v2332 = vadd.f32 %v2326, 1.0
      %v2333 = vadd.f32 %v2328, 1.0
      %v2334 = vadd.f32 %v2330, 1.0
      %v2335 = vrcp.pop %v2331
      %v2336 = vmul.f32 1.0, %v2335
      %v2337 = vrcp.pop %v2332
      %v2338 = vmul.f32 1.0, %v2337
      %v2339 = vrcp.pop %v2333
      %v2340 = vmul.f32 1.0, %v2339
      %v2341 = vrcp.pop %v2334
      %v2342 = vmul.f32 1.0, %v2341
      %v2343 = vmul.f32 %v2305, %v2336
      %v2344 = vmul.f32 %v2307, %v2338
      %v2345 = vmul.f32 %v2311, %v2340
      %v2346 = vmul.f32 %v2313, %v2342
      %v2347 = vld [vmem:[%s973] sm:$0xff]
      %v2348 = vld [vmem:[%s973 + $0x8] sm:$0xff]
      %v2349 = vld [vmem:[%s973 + $0x10] sm:$0xff]
      %v2350 = vld [vmem:[%s973 + $0x18] sm:$0xff]
      %v2351 = vld [vmem:[%s973 + $0x20] sm:$0xff]
      %v2352 = vld [vmem:[%s973 + $0x28] sm:$0xff]
      %v2353 = vld [vmem:[%s973 + $0x30] sm:$0xff]
      %v2354 = vld [vmem:[%s973 + $0x38] sm:$0xff]
      %v2355 = vld [vmem:[%s973 + $0x40] sm:$0xff]
      %v2356 = vld [vmem:[%s973 + $0x48] sm:$0xff]
      %v2357 = vld [vmem:[%s973 + $0x50] sm:$0xff]
      %v2358 = vld [vmem:[%s973 + $0x58] sm:$0xff]
      %v2359 = vld [vmem:[%s973 + $0x60] sm:$0xff]
      %v2360 = vld [vmem:[%s973 + $0x68] sm:$0xff]
      %v2361 = vld [vmem:[%s973 + $0x70] sm:$0xff]
      %v2362 = vld [vmem:[%s973 + $0x78] sm:$0xff]
      %v2363 = vld [vmem:[%s973 + $0x80] sm:$0xff]
      %v2364 = vld [vmem:[%s973 + $0x88] sm:$0xff]
      %v2365 = vld [vmem:[%s973 + $0x90] sm:$0xff]
      %v2366 = vld [vmem:[%s973 + $0x98] sm:$0xff]
      %v2367 = vld [vmem:[%s973 + $0xa0] sm:$0xff]
      %v2368 = vld [vmem:[%s973 + $0xa8] sm:$0xff]
      %v2369 = vld [vmem:[%s973 + $0xb0] sm:$0xff]
      %v2370 = vld [vmem:[%s973 + $0xb8] sm:$0xff]
      %v2371 = vld [vmem:[%s973 + $0xc0] sm:$0xff]
      %v2372 = vld [vmem:[%s973 + $0xc8] sm:$0xff]
      %v2373 = vld [vmem:[%s973 + $0xd0] sm:$0xff]
      %v2374 = vld [vmem:[%s973 + $0xd8] sm:$0xff]
      %v2375 = vld [vmem:[%s973 + $0xe0] sm:$0xff]
      %v2376 = vld [vmem:[%s973 + $0xe8] sm:$0xff]
      %v2377 = vld [vmem:[%s973 + $0xf0] sm:$0xff]
      %v2378 = vld [vmem:[%s973 + $0xf8] sm:$0xff]
      %v2379 = vld [vmem:[%s976] sm:$0x1]
      %v2381 = vlaneseq
      %v2382 = vshrl.u32 %v2381, 7
      %v2383 = vsub.s32 0, %v2382
      %v2384 = vrot.slane %v2379, %v2383
      %2386 = vmatprep.subr.mxu0 0.0
      %2387 = vmatpush1.msra.mxu0 %v2347
      %2388 = vmatprep.subr.mxu0 0.0
      %2389 = vmatpush1.msra.mxu0 %v2348
      %2390 = vmatprep.subr.mxu0 0.0
      %2391 = vmatpush1.msra.mxu0 %v2349
      %2392 = vmatprep.subr.mxu0 0.0
      %2393 = vmatpush1.msra.mxu0 %v2350
      %2394 = vmatprep.subr.mxu0 0.0
      %2395 = vmatpush1.msra.mxu0 %v2351
      %2396 = vmatprep.subr.mxu0 0.0
      %2397 = vmatpush1.msra.mxu0 %v2352
      %2398 = vmatprep.subr.mxu0 0.0
      %2399 = vmatpush1.msra.mxu0 %v2353
      %2400 = vmatprep.subr.mxu0 0.0
      %2401 = vmatpush1.msra.mxu0 %v2354
      %2402 = vmatprep.subr.mxu0 0.0
      %2403 = vmatpush1.msra.mxu0 %v2355
      %2404 = vmatprep.subr.mxu0 0.0
      %2405 = vmatpush1.msra.mxu0 %v2356
      %2406 = vmatprep.subr.mxu0 0.0
      %2407 = vmatpush1.msra.mxu0 %v2357
      %2408 = vmatprep.subr.mxu0 0.0
      %2409 = vmatpush1.msra.mxu0 %v2358
      %2410 = vmatprep.subr.mxu0 0.0
      %2411 = vmatpush1.msra.mxu0 %v2359
      %2412 = vmatprep.subr.mxu0 0.0
      %2413 = vmatpush1.msra.mxu0 %v2360
      %2414 = vmatprep.subr.mxu0 0.0
      %2415 = vmatpush1.msra.mxu0 %v2361
      %2416 = vmatprep.subr.mxu0 0.0
      %2417 = vmatpush1.msra.mxu0 %v2362
      %2418 = vmatprep.subr.mxu0 0.0
      %2419 = vmatpush1.msra.mxu0 %v2363
      %2420 = vmatprep.subr.mxu0 0.0
      %2421 = vmatpush1.msra.mxu0 %v2364
      %2422 = vmatprep.subr.mxu0 0.0
      %2423 = vmatpush1.msra.mxu0 %v2365
      %2424 = vmatprep.subr.mxu0 0.0
      %2425 = vmatpush1.msra.mxu0 %v2366
      %2426 = vmatprep.subr.mxu0 0.0
      %2427 = vmatpush1.msra.mxu0 %v2367
      %2428 = vmatprep.subr.mxu0 0.0
      %2429 = vmatpush1.msra.mxu0 %v2368
      %2430 = vmatprep.subr.mxu0 0.0
      %2431 = vmatpush1.msra.mxu0 %v2369
      %2432 = vmatprep.subr.mxu0 0.0
      %2433 = vmatpush1.msra.mxu0 %v2370
      %2434 = vmatprep.subr.mxu0 0.0
      %2435 = vmatpush1.msra.mxu0 %v2371
      %2436 = vmatprep.subr.mxu0 0.0
      %2437 = vmatpush1.msra.mxu0 %v2372
      %2438 = vmatprep.subr.mxu0 0.0
      %2439 = vmatpush1.msra.mxu0 %v2373
      %2440 = vmatprep.subr.mxu0 0.0
      %2441 = vmatpush1.msra.mxu0 %v2374
      %2442 = vmatprep.subr.mxu0 0.0
      %2443 = vmatpush1.msra.mxu0 %v2375
      %2444 = vmatprep.subr.mxu0 0.0
      %2445 = vmatpush1.msra.mxu0 %v2376
      %2446 = vmatprep.subr.mxu0 0.0
      %2447 = vmatpush1.msra.mxu0 %v2377
      %2448 = vmatprep.subr.mxu0 0.0
      %2449 = vmatpush1.msra.mxu0 %v2378
      %2450 = vmatprep.mubr.f32.mxu0 %v2344
      %2451 = vmatmul.mubr.f32.gmra.mrb[0].mxu0 %v2343
      %v2452 = vpop.f32.mrb[0].mxu0
      %v2453 = vadd.f32 %v2384, %v2452
      %v2454 = vpop.f32.mrb[0].mxu0
      %2455 = vmatprep.mubr.f32.mxu0 %v2346
      %2456 = vmatmul.mubr.f32.gmra.mrb[0].mxu0 %v2345
      %v2457 = vpop.f32.mrb[0].mxu0
      %v2458 = vadd.f32 %v2384, %v2457
      %v2459 = vpop.f32.mrb[0].mxu0
      %2460 = vdwg.mxu0
      %v2461 = vadd.f32 %v2158, %v2453
      %v2462 = vadd.f32 %v2159, %v2458
      %2463 = vst.msk [vmem:[#allocation2] sm:$0xff] %vm992, %v2461
      %2464 = vst.msk [vmem:[#allocation2 + $0x8] sm:$0xff] %vm992, %v2462
      %p2465 = scmp.eq.s32.totalorder %s37, 1
      // Predicated region
      $region121: #{clip_forward.3} parent=115 // pred_check
        %p2466 = pneg %p2465
      $region122: #{clip_forward.3} parent=115 // pred_check_branch
        %2468 = sbr.rel (%p2466) target = $region124
      $region123: #{clip_forward.3} parent=115 // pred_region
        %v2469 = vld [vmem:[%s2] sm:$0x3]
        %v2471 = vsel %vm1404, %v2469, 0
        %2473 = vmatprep.subr.mxu0 0.0
        %2474 = vmatpush1.msra.mxu0 %v2461
        %2475 = vmatprep.subr.mxu0 0.0
        %2476 = vmatpush1.msra.mxu0 %v2462
        %2477 = vmatprep.subr.mxu0 0.0
        %2478 = vmatpush1.msra.mxu0 0.0
        %2479 = vmatprep.subr.mxu0 0.0
        %2480 = vmatpush1.msra.mxu0 0.0
        %2481 = vmatprep.subr.mxu0 0.0
        %2482 = vmatpush1.msra.mxu0 0.0
        %2483 = vmatprep.subr.mxu0 0.0
        %2484 = vmatpush1.msra.mxu0 0.0
        %2485 = vmatprep.subr.mxu0 0.0
        %2486 = vmatpush1.msra.mxu0 0.0
        %2487 = vmatprep.subr.mxu0 0.0
        %2488 = vmatpush1.msra.mxu0 0.0
        %2489 = vmatprep.subr.mxu0 0.0
        %2490 = vmatpush1.msra.mxu0 0.0
        %2491 = vmatprep.subr.mxu0 0.0
        %2492 = vmatpush1.msra.mxu0 0.0
        %2493 = vmatprep.subr.mxu0 0.0
        %2494 = vmatpush1.msra.mxu0 0.0
        %2495 = vmatprep.subr.mxu0 0.0
        %2496 = vmatpush1.msra.mxu0 0.0
        %2497 = vmatprep.subr.mxu0 0.0
        %2498 = vmatpush1.msra.mxu0 0.0
        %2499 = vmatprep.subr.mxu0 0.0
        %2500 = vmatpush1.msra.mxu0 0.0
        %2501 = vmatprep.subr.mxu0 0.0
        %2502 = vmatpush1.msra.mxu0 0.0
        %2503 = vmatprep.subr.mxu0 0.0
        %2504 = vmatpush1.msra.mxu0 0.0
        %2505 = vmatprep.subr.mxu0 0.0
        %2506 = vmatpush1.msra.mxu0 0.0
        %2507 = vmatprep.subr.mxu0 0.0
        %2508 = vmatpush1.msra.mxu0 0.0
        %2509 = vmatprep.subr.mxu0 0.0
        %2510 = vmatpush1.msra.mxu0 0.0
        %2511 = vmatprep.subr.mxu0 0.0
        %2512 = vmatpush1.msra.mxu0 0.0
        %2513 = vmatprep.subr.mxu0 0.0
        %2514 = vmatpush1.msra.mxu0 0.0
        %2515 = vmatprep.subr.mxu0 0.0
        %2516 = vmatpush1.msra.mxu0 0.0
        %2517 = vmatprep.subr.mxu0 0.0
        %2518 = vmatpush1.msra.mxu0 0.0
        %2519 = vmatprep.subr.mxu0 0.0
        %2520 = vmatpush1.msra.mxu0 0.0
        %2521 = vmatprep.subr.mxu0 0.0
        %2522 = vmatpush1.msra.mxu0 0.0
        %2523 = vmatprep.subr.mxu0 0.0
        %2524 = vmatpush1.msra.mxu0 0.0
        %2525 = vmatprep.subr.mxu0 0.0
        %2526 = vmatpush1.msra.mxu0 0.0
        %2527 = vmatprep.subr.mxu0 0.0
        %2528 = vmatpush1.msra.mxu0 0.0
        %2529 = vmatprep.subr.mxu0 0.0
        %2530 = vmatpush1.msra.mxu0 0.0
        %2531 = vmatprep.subr.mxu0 0.0
        %2532 = vmatpush1.msra.mxu0 0.0
        %2533 = vmatprep.subr.mxu0 0.0
        %2534 = vmatpush1.msra.mxu0 0.0
        %2535 = vmatprep.subr.mxu0 0.0
        %2536 = vmatpush1.msra.mxu0 0.0
        %2537 = vmatprep.mubr.f32.mxu0 0.0
        %2538 = vmatmul.mubr.f32.gmra.mrb[0].mxu0 %v2471
        %v2539 = vpop.f32.mrb[0].mxu0
        %v2540 = vadd.f32 0.0, %v2539
        %v2541 = vpop.f32.mrb[0].mxu0
        %2542 = vdwg.mxu0
        %v2543 = vld [vmem:[%s19] sm:$0x1]
        %v2544 = vld [vmem:[%s20] sm:$0x1]
        %vm2545 = vcmask 517120
        %v2546 = vsel %vm2545, %v2540, 0.0
        %2547 = vadd.xlane.f32.xlu0 %v2546
        %v2548 = vpop.xlane.xlu0 %2547
        %v2549 = vmul.f32 %v2548, %v999
        %v2550 = vsub.f32 %v2540, %v2549
        %v2551 = vmul.f32 %v2550, %v2550
        %v2552 = vsel %vm2545, %v2551, 0.0
        %2553 = vadd.xlane.f32.xlu0 %v2552
        %v2554 = vpop.xlane.xlu0 %2553
        %v2555 = vmul.f32 %v2554, %v999
        %v2556 = vadd.f32 %v2555, 1e-05
        %v2557 = vrsqrt.pop %v2556
        %v2558 = vmul.f32 %v2550, %v2557
        %v2560 = vlaneseq
        %v2561 = vshrl.u32 %v2560, 7
        %v2562 = vsub.s32 0, %v2561
        %v2563 = vrot.slane %v2543, %v2562
        %v2565 = vmul.f32 %v2558, %v2563
        %v2567 = vlaneseq
        %v2568 = vshrl.u32 %v2567, 7
        %v2569 = vsub.s32 0, %v2568
        %v2570 = vrot.slane %v2544, %v2569
        %v2572 = vadd.f32 %v2565, %v2570
        %v2573 = vld [vmem:[%s21] sm:$0xff]
        %v2574 = vld [vmem:[%s21 + $0x8] sm:$0xff]
        %v2575 = vld [vmem:[%s21 + $0x10] sm:$0xff]
        %v2576 = vld [vmem:[%s21 + $0x18] sm:$0xff]
        %v2577 = vld [vmem:[%s21 + $0x20] sm:$0xff]
        %v2578 = vld [vmem:[%s21 + $0x28] sm:$0xff]
        %v2579 = vld [vmem:[%s21 + $0x30] sm:$0xff]
        %v2580 = vld [vmem:[%s21 + $0x38] sm:$0xff]
        %v2582 = vsel %vm992, %v2572, 0
        %2584 = vmatprep.subr.mxu0 0.0
        %2585 = vmatpush1.msra.mxu0 %v2573
        %2586 = vmatprep.subr.mxu0 0.0
        %2587 = vmatpush1.msra.mxu0 %v2574
        %2588 = vmatprep.subr.mxu0 0.0
        %2589 = vmatpush1.msra.mxu0 %v2575
        %2590 = vmatprep.subr.mxu0 0.0
        %2591 = vmatpush1.msra.mxu0 %v2576
        %2592 = vmatprep.subr.mxu0 0.0
        %2593 = vmatpush1.msra.mxu0 %v2577
        %2594 = vmatprep.subr.mxu0 0.0
        %2595 = vmatpush1.msra.mxu0 %v2578
        %2596 = vmatprep.subr.mxu0 0.0
        %2597 = vmatpush1.msra.mxu0 %v2579
        %2598 = vmatprep.subr.mxu0 0.0
        %2599 = vmatpush1.msra.mxu0 %v2580
        %2600 = vmatprep.subr.mxu0 0.0
        %2601 = vmatpush1.msra.mxu0 0.0
        %2602 = vmatprep.subr.mxu0 0.0
        %2603 = vmatpush1.msra.mxu0 0.0
        %2604 = vmatprep.subr.mxu0 0.0
        %2605 = vmatpush1.msra.mxu0 0.0
        %2606 = vmatprep.subr.mxu0 0.0
        %2607 = vmatpush1.msra.mxu0 0.0
        %2608 = vmatprep.subr.mxu0 0.0
        %2609 = vmatpush1.msra.mxu0 0.0
        %2610 = vmatprep.subr.mxu0 0.0
        %2611 = vmatpush1.msra.mxu0 0.0
        %2612 = vmatprep.subr.mxu0 0.0
        %2613 = vmatpush1.msra.mxu0 0.0
        %2614 = vmatprep.subr.mxu0 0.0
        %2615 = vmatpush1.msra.mxu0 0.0
        %2616 = vmatprep.subr.mxu0 0.0
        %2617 = vmatpush1.msra.mxu0 0.0
        %2618 = vmatprep.subr.mxu0 0.0
        %2619 = vmatpush1.msra.mxu0 0.0
        %2620 = vmatprep.subr.mxu0 0.0
        %2621 = vmatpush1.msra.mxu0 0.0
        %2622 = vmatprep.subr.mxu0 0.0
        %2623 = vmatpush1.msra.mxu0 0.0
        %2624 = vmatprep.subr.mxu0 0.0
        %2625 = vmatpush1.msra.mxu0 0.0
        %2626 = vmatprep.subr.mxu0 0.0
        %2627 = vmatpush1.msra.mxu0 0.0
        %2628 = vmatprep.subr.mxu0 0.0
        %2629 = vmatpush1.msra.mxu0 0.0
        %2630 = vmatprep.subr.mxu0 0.0
        %2631 = vmatpush1.msra.mxu0 0.0
        %2632 = vmatprep.subr.mxu0 0.0
        %2633 = vmatpush1.msra.mxu0 0.0
        %2634 = vmatprep.subr.mxu0 0.0
        %2635 = vmatpush1.msra.mxu0 0.0
        %2636 = vmatprep.subr.mxu0 0.0
        %2637 = vmatpush1.msra.mxu0 0.0
        %2638 = vmatprep.subr.mxu0 0.0
        %2639 = vmatpush1.msra.mxu0 0.0
        %2640 = vmatprep.subr.mxu0 0.0
        %2641 = vmatpush1.msra.mxu0 0.0
        %2642 = vmatprep.subr.mxu0 0.0
        %2643 = vmatpush1.msra.mxu0 0.0
        %2644 = vmatprep.subr.mxu0 0.0
        %2645 = vmatpush1.msra.mxu0 0.0
        %2646 = vmatprep.subr.mxu0 0.0
        %2647 = vmatpush1.msra.mxu0 0.0
        %2648 = vmatprep.mubr.f32.mxu0 0.0
        %2649 = vmatmul.mubr.f32.gmra.mrb[0].mxu0 %v2582
        %v2650 = vpop.f32.mrb[0].mxu0
        %v2651 = vadd.f32 0.0, %v2650
        %v2652 = vpop.f32.mrb[0].mxu0
        %2653 = vdwg.mxu0
        %v2654 = vmul.f32 %v2651, %v2651
        %vm2655 = vcmask 254976
        %v2656 = vsel %vm2655, %v2654, 0.0
        %2657 = vadd.xlane.f32.xlu0 %v2656
        %v2658 = vpop.xlane.xlu0 %2657
        %v2659 = vrsqrt.pop %v2658
        %v2660 = vmul.f32 %v2651, %v2659
        %v2661 = vld [vmem:[%s22] sm:$0x3]
        %v2663 = vsel %vm1312, %v2661, 0
        %v2666 = vsel %vm1312, %v2660, 0
        %2668 = vmatprep.subr.mxu0 0.0
        %2669 = vmatpush1.xpose.msra.mxu0 %v2666
        %2670 = vmatprep.subr.mxu0 0.0
        %2671 = vmatpush1.xpose.msra.mxu0 0.0
        %2672 = vmatprep.subr.mxu0 0.0
        %2673 = vmatpush1.xpose.msra.mxu0 0.0
        %2674 = vmatprep.subr.mxu0 0.0
        %2675 = vmatpush1.xpose.msra.mxu0 0.0
        %2676 = vmatprep.subr.mxu0 0.0
        %2677 = vmatpush1.xpose.msra.mxu0 0.0
        %2678 = vmatprep.subr.mxu0 0.0
        %2679 = vmatpush1.xpose.msra.mxu0 0.0
        %2680 = vmatprep.subr.mxu0 0.0
        %2681 = vmatpush1.xpose.msra.mxu0 0.0
        %2682 = vmatprep.subr.mxu0 0.0
        %2683 = vmatpush1.xpose.msra.mxu0 0.0
        %2684 = vmatprep.subr.mxu0 0.0
        %2685 = vmatpush1.xpose.msra.mxu0 0.0
        %2686 = vmatprep.subr.mxu0 0.0
        %2687 = vmatpush1.xpose.msra.mxu0 0.0
        %2688 = vmatprep.subr.mxu0 0.0
        %2689 = vmatpush1.xpose.msra.mxu0 0.0
        %2690 = vmatprep.subr.mxu0 0.0
        %2691 = vmatpush1.xpose.msra.mxu0 0.0
        %2692 = vmatprep.subr.mxu0 0.0
        %2693 = vmatpush1.xpose.msra.mxu0 0.0
        %2694 = vmatprep.subr.mxu0 0.0
        %2695 = vmatpush1.xpose.msra.mxu0 0.0
        %2696 = vmatprep.subr.mxu0 0.0
        %2697 = vmatpush1.xpose.msra.mxu0 0.0
        %2698 = vmatprep.subr.mxu0 0.0
        %2699 = vmatpush1.xpose.msra.mxu0 0.0
        %2700 = vmatprep.subr.mxu0 0.0
        %2701 = vmatpush1.xpose.msra.mxu0 0.0
        %2702 = vmatprep.subr.mxu0 0.0
        %2703 = vmatpush1.xpose.msra.mxu0 0.0
        %2704 = vmatprep.subr.mxu0 0.0
        %2705 = vmatpush1.xpose.msra.mxu0 0.0
        %2706 = vmatprep.subr.mxu0 0.0
        %2707 = vmatpush1.xpose.msra.mxu0 0.0
        %2708 = vmatprep.subr.mxu0 0.0
        %2709 = vmatpush1.xpose.msra.mxu0 0.0
        %2710 = vmatprep.subr.mxu0 0.0
        %2711 = vmatpush1.xpose.msra.mxu0 0.0
        %2712 = vmatprep.subr.mxu0 0.0
        %2713 = vmatpush1.xpose.msra.mxu0 0.0
        %2714 = vmatprep.subr.mxu0 0.0
        %2715 = vmatpush1.xpose.msra.mxu0 0.0
        %2716 = vmatprep.subr.mxu0 0.0
        %2717 = vmatpush1.xpose.msra.mxu0 0.0
        %2718 = vmatprep.subr.mxu0 0.0
        %2719 = vmatpush1.xpose.msra.mxu0 0.0
        %2720 = vmatprep.subr.mxu0 0.0
        %2721 = vmatpush1.xpose.msra.mxu0 0.0
        %2722 = vmatprep.subr.mxu0 0.0
        %2723 = vmatpush1.xpose.msra.mxu0 0.0
        %2724 = vmatprep.subr.mxu0 0.0
        %2725 = vmatpush1.xpose.msra.mxu0 0.0
        %2726 = vmatprep.subr.mxu0 0.0
        %2727 = vmatpush1.xpose.msra.mxu0 0.0
        %2728 = vmatprep.subr.mxu0 0.0
        %2729 = vmatpush1.xpose.msra.mxu0 0.0
        %2730 = vmatprep.subr.mxu0 0.0
        %2731 = vmatpush1.xpose.msra.mxu0 0.0
        %2732 = vmatprep.mubr.f32.mxu0 0.0
        %2733 = vmatmul.mubr.f32.gmra.mrb[0].mxu0 %v2663
        %v2734 = vpop.f32.mrb[0].mxu0
        %v2735 = vadd.f32 0.0, %v2734
        %v2736 = vpop.f32.mrb[0].mxu0
        %2737 = vdwg.mxu0
        %v2738 = vld [vmem:[#allocation3] sm:$0x1]
        %v2740 = vlaneseq
        %v2741 = vshrl.u32 %v2740, 7
        %v2742 = vsub.s32 0, %v2741
        %v2743 = vrot.slane %v2738, %v2742
        %2744 = vset.pattern.permute.xlu0 0
        %2745 = vperm.xlu0 %2744, %v2743
        %v2746 = vpop.permute.xlu0 %2745
        %v2748 = vmul.f32 %v2746, %v2735
        %vm2749 = vcmask 9216
        %2750 = vst.msk [vmem:[%s24] sm:$0x3] %vm2749, %v2748
      $region124: #{clip_forward.3} parent=115 // pred_fallthru
        _
      // Predicated region
      $region125: #{clip_forward.3} parent=115 // pred_check
        %p2751 = pneg %p634
      $region126: #{clip_forward.3} parent=115 // pred_check_branch
        %2753 = sbr.rel (%p2751) target = $region128
      $region127: #{clip_forward.3} parent=115 // pred_region
        _
      $region128: #{clip_forward.3} parent=115 // pred_fallthru
        _
      // Predicated region
      $region129: #{clip_forward.3} parent=115 // pred_check
        %p2754 = pneg %p634
      $region130: #{clip_forward.3} parent=115 // pred_check_branch
        %2756 = sbr.rel (%p2754) target = $region132
      $region131: #{clip_forward.3} parent=115 // pred_region
        _
      $region132: #{clip_forward.3} parent=115 // pred_fallthru
        _
    $region116: #{clip_forward.3} parent=5 // pred_fallthru
      _
    %p2757 = scmp.le.s32.totalorder 2, %s32
    // Predicated region
    $region133: #{clip_forward.3} parent=5 // pred_check
      %p2758 = pneg %p2757
    $region134: #{clip_forward.3} parent=5 // pred_check_branch
      %2760 = sbr.rel (%p2758) target = $region136
    $region135: #{clip_forward.3} parent=5 // pred_region
      %s2761 = ssub.s32 %s32, 2
    $region136: #{clip_forward.3} parent=5 // pred_fallthru
      _
  $region6: #{clip_forward.3} parent=0 // loop_footer
    %s36 = sadd.s32 1, %s32
  $region7: #{clip_forward.3} parent=0 // loop_footer_branch
    %31 = sbr.rel target = $region3
  $region8: #{clip_forward.3} parent=0 // loop_exit
    _

</llo_original>
